<compile_context>
chip_gen: v5e
topology: v5e:2x2
jax: 0.10.0
libtpu: 0.0.40
codegen_flags: <defaults>
</compile_context>

<pallas_src>
import functools

import numpy as np
import jax
import jax.numpy as jnp
from jax import lax
from jax.experimental import pallas as pl
from jax.experimental.pallas import tpu as pltpu

NUM_CLASSES = 10
BN_EPS = 1e-5


# ---------------------------------------------------------------------------
# Kernel: one grid step == one fused conv(+BN+residual+ReLU) or the pool+FC.
# ---------------------------------------------------------------------------
def _resnet20_step_kernel(
        # scalar prefetch (SMEM) ------------------------------------------------
        sgrp_r, use_s_r, hmask_r, save_r, dst_r, add_r, relu_r,
        # streamed / resident inputs (VMEM) --------------------------------------
        x_ref, s_ref, b_ref, bias_ref,
        # output ------------------------------------------------------------------
        o_ref,
        # persistent VMEM scratch -------------------------------------------------
        x_scr, id_scr, rows_scr):
    step = pl.program_id(0)
    nsteps = pl.num_programs(0)
    f32, bf16 = jnp.float32, jnp.bfloat16
    rmax, lmax = o_ref.shape

    @pl.when(step == 0)
    def _():
        x_scr[...] = x_ref[...].astype(f32)          # feed bf16 input straight into the scratch
        id_scr[...] = jnp.zeros_like(id_scr)

    @pl.when(save_r[step] == 1)                      # identity = x   (c1 of no-downsample blocks)
    def _():
        id_scr[...] = x_scr[...]

    x_f = x_scr[...]
    xb = x_f.astype(bf16)

    # ---- build the 3 kh-tap row sets into rows_scr (RMAX, 3*LMAX) -------------
    @pl.when(use_s_r[step] == 0)                     # stride-1 3x3: sublane roll + boundary mask
    def _():
        hmask = hmask_r[step]                        # H-1 (H is a power of two)
        ho = lax.broadcasted_iota(jnp.int32, (rmax, lmax), 0) & hmask
        zero = jnp.zeros_like(x_f)
        up = jnp.where(ho != 0, pltpu.roll(x_f, 1, axis=0), zero)              # kh = 0  (row-1)
        dn = jnp.where(ho != hmask, pltpu.roll(x_f, rmax - 1, axis=0), zero)   # kh = 2  (row+1)
        rows_scr[:, 0 * lmax:1 * lmax] = up.astype(bf16)
        rows_scr[:, 1 * lmax:2 * lmax] = xb
        rows_scr[:, 2 * lmax:3 * lmax] = dn.astype(bf16)

    @pl.when(use_s_r[step] == 1)                     # strided conv / avg-pool: row-selection matmul
    def _():
        for kh in range(3):
            rows_scr[:, kh * lmax:(kh + 1) * lmax] = jnp.dot(
                s_ref[0, kh], xb, preferred_element_type=f32).astype(bf16)

    # ---- fused-tap matmul + f32 epilogue (bias / residual / ReLU) --------------
    acc = jnp.dot(rows_scr[...], b_ref[0], preferred_element_type=f32)   # (RMAX, LMAX)
    acc = acc + bias_ref[0]                                              # (1, LMAX) broadcast
    acc = acc + add_r[step].astype(f32) * id_scr[...]                    # residual add (flag 0/1)
    keep = 1.0 - relu_r[step].astype(f32)
    acc = jnp.maximum(acc, acc * keep)                                   # flag 1 -> relu, 0 -> id

    @pl.when(dst_r[step] == 1)                       # downsample conv: result is the identity
    def _():
        id_scr[...] = acc

    @pl.when(dst_r[step] == 0)
    def _():
        x_scr[...] = acc

    @pl.when(step == nsteps - 1)
    def _():
        o_ref[...] = acc                             # final logits slab (lane-dense)


def resnet20_forward(x_nchw, packed):
    rmax, lmax = packed["rmax"], packed["lmax"]
    s_all, b_all, bias_all = packed["s_all"], packed["b_all"], packed["bias_all"]
    nsteps, kmax = int(b_all.shape[0]), int(b_all.shape[1])

    n, c, h, w = x_nchw.shape
    # NCHW -> (N*H, W*C) lane-dense layout, zero-padded to the fixed kernel shape.
    x2 = jnp.transpose(x_nchw, (0, 2, 3, 1)).reshape(n * h, w * c)
    x2 = jnp.pad(x2, ((0, rmax - n * h), (0, lmax - w * c))).astype(jnp.bfloat16)

    grid_spec = pltpu.PrefetchScalarGridSpec(
        num_scalar_prefetch=7,
        grid=(nsteps,),
        in_specs=[
            pl.BlockSpec((rmax, lmax), lambda s, *_: (0, 0)),                       # x (resident)
            pl.BlockSpec((1, 3, rmax, rmax), lambda s, sg, *_: (sg[s], 0, 0, 0)),   # S group
            pl.BlockSpec((1, kmax, lmax), lambda s, *_: (s, 0, 0)),                 # fused B slab
            pl.BlockSpec((1, 1, lmax), lambda s, *_: (s, 0, 0)),                    # bias row
        ],
        out_specs=pl.BlockSpec((rmax, lmax), lambda s, *_: (0, 0)),
        scratch_shapes=[
            pltpu.VMEM((rmax, lmax), jnp.float32),        # activation
            pltpu.VMEM((rmax, lmax), jnp.float32),        # residual / identity
            pltpu.VMEM((rmax, 3 * lmax), jnp.bfloat16),   # fused kh-tap rows
        ],
    )
    out = pl.pallas_call(
        _resnet20_step_kernel,
        out_shape=jax.ShapeDtypeStruct((rmax, lmax), jnp.float32),
        grid_spec=grid_spec,
        compiler_params=pltpu.CompilerParams(
            dimension_semantics=("arbitrary",),           # sequential dependence across steps
            vmem_limit_bytes=32 * 1024 * 1024,
        ),
    )(packed["sgrp"], packed["use_s"], packed["hmask"], packed["save_id"],
      packed["dst_id"], packed["add_id"], packed["relu"],
      x2, s_all, b_all, bias_all)
    return out[:n, :NUM_CLASSES]


# ---------------------------------------------------------------------------
# Host-side packing: fold conv weights + BN + padding + stride into constants.
# ---------------------------------------------------------------------------
def pack_model(params, n, h, w):
    assert h == w and h % 4 == 0 and (h & (h - 1)) == 0, "needs power-of-two spatial size"
    rmax = ((n * h + 7) // 8) * 8
    lmax = max(((16 * w + 127) // 128) * 128, 128)       # widest activation row: 16 channels * W
    kmax = 3 * lmax

    def npa(a):
        return np.asarray(a, np.float32)

    def out_size(sz, k, stride, pad):
        return (sz + 2 * pad - k) // stride + 1

    def col_select(w_in, w_out, stride, off):
        sel = np.zeros((w_in, w_out), np.float32)
        for wo in range(w_out):
            wi = wo * stride + off
            if 0 <= wi < w_in:
                sel[wi, wo] = 1.0
        return sel

    def row_select(h_in, h_out, stride, off):
        s = np.zeros((rmax, rmax), np.float32)
        for i in range(n):
            for ho in range(h_out):
                hi = ho * stride + off
                if 0 <= hi < h_in:
                    s[i * h_out + ho, i * h_in + hi] = 1.0
        return s

    def bn_fold(bn):
        scale = npa(bn["gamma"]) / np.sqrt(npa(bn["var"]) + BN_EPS)
        return scale, npa(bn["beta"]) - npa(bn["mean"]) * scale

    def band_3x3(wc, scale, kh, w_in, stride):
        wc = npa(wc)
        cout, cin = wc.shape[0], wc.shape[1]
        w_out = out_size(w_in, 3, stride, 1)
        wt = np.transpose(wc, (2, 3, 1, 0)) * scale[None, None, None, :]    # (3,3,Cin,Cout)
        band = np.zeros((w_in, cin, w_out, cout), np.float32)
        for kw in range(3):
            band += np.einsum("wv,io->wivo", col_select(w_in, w_out, stride, kw - 1), wt[kh, kw])
        out = np.zeros((lmax, lmax), np.float32)
        out[:w_in * cin, :w_out * cout] = band.reshape(w_in * cin, w_out * cout)
        return out

    def band_1x1(wc, scale, w_in, stride):
        wc = npa(wc)
        cout, cin = wc.shape[0], wc.shape[1]
        w_out = out_size(w_in, 1, stride, 0)
        wt = wc[:, :, 0, 0].T * scale[None, :]                              # (Cin, Cout)
        band = np.einsum("wv,io->wivo", col_select(w_in, w_out, stride, 0), wt)
        out = np.zeros((lmax, lmax), np.float32)
        out[:w_in * cin, :w_out * cout] = band.reshape(w_in * cin, w_out * cout)
        return out

    def bias_row(bias, w_out):
        row = np.zeros((1, lmax), np.float32)
        t = np.tile(npa(bias), (w_out,))
        row[0, :t.shape[0]] = t
        return row

    b_slabs, bias_rows, s_groups = [], [], []
    meta = {k: [] for k in ("sgrp", "use_s", "hmask", "save_id", "dst_id", "add_id", "relu")}

    def push(slab, brow, *, sgrp, use_s, hmask, save_id, dst_id, add_id, relu):
        b_slabs.append(slab)
        bias_rows.append(brow)
        meta["sgrp"].append(sgrp)
        meta["use_s"].append(use_s)
        meta["hmask"].append(hmask)
        meta["save_id"].append(save_id)
        meta["dst_id"].append(dst_id)
        meta["add_id"].append(add_id)
        meta["relu"].append(relu)

    def conv3x3_step(wc, bn, h_in, w_in, stride, *, save_id=0, dst_id=0, add_id=0, relu=0):
        scale, bias = bn_fold(bn)
        h_out, w_out = out_size(h_in, 3, stride, 1), out_size(w_in, 3, stride, 1)
        slab = np.zeros((kmax, lmax), np.float32)
        for kh in range(3):
            slab[kh * lmax:(kh + 1) * lmax] = band_3x3(wc, scale, kh, w_in, stride)
        if stride == 1:
            sgrp, use_s, hmask = -1, 0, h_in - 1        # roll path (sgrp filled in later)
        else:
            s_groups.append(np.stack([row_select(h_in, h_out, stride, kh - 1) for kh in range(3)]))
            sgrp, use_s, hmask = len(s_groups) - 1, 1, 1
        push(slab, bias_row(bias, w_out), sgrp=sgrp, use_s=use_s, hmask=hmask,
             save_id=save_id, dst_id=dst_id, add_id=add_id, relu=relu)
        return h_out, w_out

    def conv1x1_step(wc, bn, h_in, w_in, stride, *, dst_id=0):
        scale, bias = bn_fold(bn)
        h_out, w_out = out_size(h_in, 1, stride, 0), out_size(w_in, 1, stride, 0)
        slab = np.zeros((kmax, lmax), np.float32)
        slab[:lmax] = band_1x1(wc, scale, w_in, stride)
        grp = np.zeros((3, rmax, rmax), np.float32)
        grp[0] = row_select(h_in, h_out, stride, 0)
        s_groups.append(grp)
        push(slab, bias_row(bias, w_out), sgrp=len(s_groups) - 1, use_s=1, hmask=1,
             save_id=0, dst_id=dst_id, add_id=0, relu=0)
        return h_out, w_out

    def pool_fc_step(w_fc, b_fc, h_in, w_in):
        w_fc, b_fc = npa(w_fc), npa(b_fc)
        slab = np.zeros((kmax, lmax), np.float32)
        fcb = np.tile(w_fc.T, (w_in, 1))                 # (W*Cin, num_classes)
        slab[:fcb.shape[0], :fcb.shape[1]] = fcb
        grp = np.zeros((3, rmax, rmax), np.float32)
        for i in range(n):
            grp[0, i, i * h_in:(i + 1) * h_in] = 1.0 / float(h_in * w_in)
        s_groups.append(grp)
        brow = np.zeros((1, lmax), np.float32)
        brow[0, :b_fc.shape[0]] = b_fc
        push(slab, brow, sgrp=len(s_groups) - 1, use_s=1, hmask=1,
             save_id=0, dst_id=0, add_id=0, relu=0)

    cur_h, cur_w = h, w
    cur_h, cur_w = conv3x3_step(params["stem"]["w"], params["stem"]["bn"], cur_h, cur_w, 1, relu=1)
    for lname, lstride in (("layer1", 1), ("layer2", 2), ("layer3", 2)):
        for bi, bp in enumerate(params[lname]):
            st = lstride if bi == 0 else 1
            in_h, in_w = cur_h, cur_w
            if "wd" in bp:                               # downsample first: it reads the block input
                conv1x1_step(bp["wd"], bp["bnd"], in_h, in_w, st, dst_id=1)
                cur_h, cur_w = conv3x3_step(bp["w1"], bp["bn1"], in_h, in_w, st, relu=1)
            else:
                cur_h, cur_w = conv3x3_step(bp["w1"], bp["bn1"], in_h, in_w, st, save_id=1, relu=1)
            cur_h, cur_w = conv3x3_step(bp["w2"], bp["bn2"], cur_h, cur_w, 1, add_id=1, relu=1)
    pool_fc_step(params["fc"]["w"], params["fc"]["b"], cur_h, cur_w)

    if not s_groups:                                     # never happens for resnet20, safety only
        s_groups.append(np.zeros((3, rmax, rmax), np.float32))

    # Roll-only steps point at the NEXT strided/pool S group so it is prefetched
    # (and never re-fetched) while the cheap roll steps run.
    sgrp = np.array(meta["sgrp"], np.int64)
    nxt = len(s_groups) - 1
    for i in range(len(sgrp) - 1, -1, -1):
        if sgrp[i] < 0:
            sgrp[i] = nxt
        else:
            nxt = sgrp[i]
    meta["sgrp"] = sgrp.tolist()

    packed = dict(
        rmax=rmax, lmax=lmax,
        s_all=jnp.asarray(np.stack(s_groups)).astype(jnp.bfloat16),     # (NGRP, 3, RMAX, RMAX)
        b_all=jnp.asarray(np.stack(b_slabs)).astype(jnp.bfloat16),      # (NSTEPS, 3*LMAX, LMAX)
        bias_all=jnp.asarray(np.stack(bias_rows)).astype(jnp.float32),  # (NSTEPS, 1, LMAX)
    )
    for k in ("sgrp", "use_s", "hmask", "save_id", "dst_id", "add_id", "relu"):
        packed[k] = jnp.asarray(np.array(meta[k], np.int32))
    return packed


# ---------------------------------------------------------------------------
# Deterministic parameter construction (matches the module __init__ semantics).
# ---------------------------------------------------------------------------
def _conv_w(key, cout, cin, k):
    std = (2.0 / (cout * k * k)) ** 0.5                  # kaiming_normal_, fan_out, relu
    return std * jax.random.normal(key, (cout, cin, k, k), jnp.float32)


def _bn_params(c):
    return dict(gamma=jnp.ones((c,), jnp.float32), beta=jnp.zeros((c,), jnp.float32),
                mean=jnp.zeros((c,), jnp.float32), var=jnp.ones((c,), jnp.float32))


def make_params(key):
    keys = iter(jax.random.split(key, 64))
    params = {"stem": {"w": _conv_w(next(keys), 16, 3, 3), "bn": _bn_params(16)}}
    inplanes = 16
    for name, planes, stride in (("layer1", 16, 1), ("layer2", 32, 2), ("layer3", 64, 2)):
        blocks = []
        for bi in range(3):
            st = stride if bi == 0 else 1
            blk = {"w1": _conv_w(next(keys), planes, inplanes, 3), "bn1": _bn_params(planes),
                   "w2": _conv_w(next(keys), planes, planes, 3), "bn2": _bn_params(planes)}
            if st != 1 or inplanes != planes:
                blk["wd"] = _conv_w(next(keys), planes, inplanes, 1)
                blk["bnd"] = _bn_params(planes)
            blocks.append(blk)
            inplanes = planes
        params[name] = blocks
    kw_, kb_ = jax.random.split(next(keys))
    bound = 1.0 / (64 ** 0.5)                            # PyTorch Linear default init
    params["fc"] = {"w": jax.random.uniform(kw_, (10, 64), jnp.float32, -bound, bound),
                    "b": jax.random.uniform(kb_, (10,), jnp.float32, -bound, bound)}
    return params


# ---------------------------------------------------------------------------
# Plain-JAX f32 reference (eval-mode BN), used only for a loose cross-check.
# ---------------------------------------------------------------------------
def reference_forward(params, x):
    def conv(x, w, stride):
        pad = ((1, 1), (1, 1)) if w.shape[2] == 3 else ((0, 0), (0, 0))
        return lax.conv_general_dilated(x, w, window_strides=(stride, stride), padding=pad,
                                        dimension_numbers=("NCHW", "OIHW", "NCHW"))

    def bn(x, p):
        scale = p["gamma"] / jnp.sqrt(p["var"] + BN_EPS)
        bias = p["beta"] - p["mean"] * scale
        return x * scale[None, :, None, None] + bias[None, :, None, None]

    y = jax.nn.relu(bn(conv(x, params["stem"]["w"], 1), params["stem"]["bn"]))
    for lname, lstride in (("layer1", 1), ("layer2", 2), ("layer3", 2)):
        for bi, bp in enumerate(params[lname]):
            st = lstride if bi == 0 else 1
            idn = y
            out = jax.nn.relu(bn(conv(y, bp["w1"], st), bp["bn1"]))
            out = bn(conv(out, bp["w2"], 1), bp["bn2"])
            if "wd" in bp:
                idn = bn(conv(y, bp["wd"], st), bp["bnd"])
            y = jax.nn.relu(out + idn)
    pooled = jnp.mean(y, axis=(2, 3))
    return pooled @ params["fc"]["w"].T + params["fc"]["b"]


if __name__ == "__main__":
    key = jax.random.PRNGKey(0)
    pkey, xkey = jax.random.split(key)
    params = make_params(pkey)

    # Small input, but N*H = 256 activation rows so every streamed weight slab feeds a
    # full-height MXU pass (addresses the "amortize the weight read" review item).
    N, C, H, W = 16, 3, 16, 16
    x = jax.random.normal(xkey, (N, C, H, W), jnp.float32)

    packed = pack_model(params, N, H, W)
    fwd = jax.jit(functools.partial(resnet20_forward, packed=packed))
    out = jax.block_until_ready(fwd(x))

    assert out.shape == (N, NUM_CLASSES) and out.dtype == jnp.float32
    assert bool(jnp.all(jnp.isfinite(out)))

    # Loose cross-check vs the f32 reference (kernel uses bf16 weights/activations on the MXU,
    # so a few percent relative deviation is expected; this only guards against wiring bugs).
    ref = reference_forward(params, x)
    err = float(jnp.max(jnp.abs(out - ref)))
    scale = float(jnp.max(jnp.abs(ref)))
    assert err <= 0.25 * scale + 0.25, (err, scale)

    print("KERNEL_OK")
</pallas_src>

<mosaic_0001>
module attributes {stable_mosaic.version = 11 : i64} {
  func.func @_resnet20_step_kernel(%arg0: i32, %arg1: memref<22xi32, #tpu.memory_space<smem>>, %arg2: memref<22xi32, #tpu.memory_space<smem>>, %arg3: memref<22xi32, #tpu.memory_space<smem>>, %arg4: memref<22xi32, #tpu.memory_space<smem>>, %arg5: memref<22xi32, #tpu.memory_space<smem>>, %arg6: memref<22xi32, #tpu.memory_space<smem>>, %arg7: memref<22xi32, #tpu.memory_space<smem>>, %arg8: memref<256x256xbf16, #tpu.memory_space<vmem>>, %arg9: memref<1x3x256x256xbf16, #tpu.memory_space<vmem>>, %arg10: memref<1x768x256xbf16, #tpu.memory_space<vmem>>, %arg11: memref<1x1x256xf32, #tpu.memory_space<vmem>>, %arg12: memref<256x256xf32, #tpu.memory_space<vmem>>, %arg13: memref<256x256xf32, #tpu.memory_space<vmem>>, %arg14: memref<256x256xf32, #tpu.memory_space<vmem>>, %arg15: memref<256x768xbf16, #tpu.memory_space<vmem>>) attributes {dimension_semantics = [#tpu.dimension_semantics<arbitrary>], iteration_bounds = array<i64: 22>, scalar_prefetch = 7 : i64, scratch_operands = 3 : i64, tpu.core_type = #tpu.core_type<tc>, window_params = [{pipeline_mode = #tpu.pipeline_mode<synchronous>, transform_indices = @transform_0, window_bounds = array<i64: 256, 256>}, {transform_indices = @transform_1, window_bounds = array<i64: 1, 3, 256, 256>}, {transform_indices = @transform_2, window_bounds = array<i64: 1, 768, 256>}, {transform_indices = @transform_3, window_bounds = array<i64: 1, 1, 256>}, {pipeline_mode = #tpu.pipeline_mode<synchronous>, transform_indices = @transform_4, window_bounds = array<i64: 256, 256>}]} {
    %c0_i32 = arith.constant 0 : i32
    %0 = arith.cmpi eq, %arg0, %c0_i32 : i32
    %1 = arith.extui %0 : i1 to i32
    %c0_i32_0 = arith.constant 0 : i32
    %2 = arith.cmpi ne, %1, %c0_i32_0 : i32
    scf.if %2 {
      %c0_23 = arith.constant 0 : index
      %c0_24 = arith.constant 0 : index
      %55 = vector.load %arg8[%c0_23, %c0_24] : memref<256x256xbf16, #tpu.memory_space<vmem>>, vector<256x256xbf16>
      %56 = arith.extf %55 : vector<256x256xbf16> to vector<256x256xf32>
      %c0_25 = arith.constant 0 : index
      %c0_26 = arith.constant 0 : index
      %57 = vector.load %arg13[%c0_25, %c0_26] : memref<256x256xf32, #tpu.memory_space<vmem>>, vector<256x256xf32>
      tpu.vector_store %arg13[%c0_25, %c0_26], %56 {strides = array<i32>} : memref<256x256xf32, #tpu.memory_space<vmem>>, vector<256x256xf32>,
      %cst_27 = arith.constant 0.000000e+00 : f32
      %58 = vector.broadcast %cst_27 : f32 to vector<256x256xf32>
      %c0_28 = arith.constant 0 : index
      %c0_29 = arith.constant 0 : index
      %59 = vector.load %arg14[%c0_28, %c0_29] : memref<256x256xf32, #tpu.memory_space<vmem>>, vector<256x256xf32>
      tpu.vector_store %arg14[%c0_28, %c0_29], %58 {strides = array<i32>} : memref<256x256xf32, #tpu.memory_space<vmem>>, vector<256x256xf32>,
    } else {
    }
    %3 = arith.index_cast %arg0 : i32 to index
    %4 = memref.load %arg4[%3] : memref<22xi32, #tpu.memory_space<smem>>
    %c1_i32 = arith.constant 1 : i32
    %5 = arith.cmpi eq, %4, %c1_i32 : i32
    %6 = arith.extui %5 : i1 to i32
    %c0_i32_1 = arith.constant 0 : i32
    %7 = arith.cmpi ne, %6, %c0_i32_1 : i32
    scf.if %7 {
      %c0_23 = arith.constant 0 : index
      %c0_24 = arith.constant 0 : index
      %55 = vector.load %arg13[%c0_23, %c0_24] : memref<256x256xf32, #tpu.memory_space<vmem>>, vector<256x256xf32>
      %c0_25 = arith.constant 0 : index
      %c0_26 = arith.constant 0 : index
      %56 = vector.load %arg14[%c0_25, %c0_26] : memref<256x256xf32, #tpu.memory_space<vmem>>, vector<256x256xf32>
      tpu.vector_store %arg14[%c0_25, %c0_26], %55 {strides = array<i32>} : memref<256x256xf32, #tpu.memory_space<vmem>>, vector<256x256xf32>,
    } else {
    }
    %c0 = arith.constant 0 : index
    %c0_2 = arith.constant 0 : index
    %8 = vector.load %arg13[%c0, %c0_2] : memref<256x256xf32, #tpu.memory_space<vmem>>, vector<256x256xf32>
    %9 = arith.truncf %8 : vector<256x256xf32> to vector<256x256xbf16>
    %10 = arith.index_cast %arg0 : i32 to index
    %11 = memref.load %arg2[%10] : memref<22xi32, #tpu.memory_space<smem>>
    %c0_i32_3 = arith.constant 0 : i32
    %12 = arith.cmpi eq, %11, %c0_i32_3 : i32
    %13 = arith.extui %12 : i1 to i32
    %c0_i32_4 = arith.constant 0 : i32
    %14 = arith.cmpi ne, %13, %c0_i32_4 : i32
    scf.if %14 {
      %55 = arith.index_cast %arg0 : i32 to index
      %56 = memref.load %arg3[%55] : memref<22xi32, #tpu.memory_space<smem>>
      %57 = tpu.iota {dimensions = array<i32: 0>} : vector<256x256xi32>
      %58 = vector.broadcast %56 : i32 to vector<256x256xi32>
      %59 = arith.andi %57, %58 : vector<256x256xi32>
      %cst_23 = arith.constant 0.000000e+00 : f32
      %60 = vector.broadcast %cst_23 : f32 to vector<256x256xf32>
      %c0_i32_24 = arith.constant 0 : i32
      %61 = vector.broadcast %c0_i32_24 : i32 to vector<256x256xi32>
      %62 = arith.cmpi ne, %59, %61 : vector<256x256xi32>
      %c1_i32_25 = arith.constant 1 : i32
      %63 = tpu.dynamic_rotate %8 by %c1_i32_25 dim 0 : vector<256x256xf32>, i32 -> vector<256x256xf32>
      %64 = arith.select %62, %63, %60 : vector<256x256xi1>, vector<256x256xf32>
      %65 = vector.broadcast %56 : i32 to vector<256x256xi32>
      %66 = arith.cmpi ne, %59, %65 : vector<256x256xi32>
      %c255_i32 = arith.constant 255 : i32
      %67 = tpu.dynamic_rotate %8 by %c255_i32 dim 0 : vector<256x256xf32>, i32 -> vector<256x256xf32>
      %68 = arith.select %66, %67, %60 : vector<256x256xi1>, vector<256x256xf32>
      %69 = arith.truncf %64 : vector<256x256xf32> to vector<256x256xbf16>
      %c0_26 = arith.constant 0 : index
      %c0_27 = arith.constant 0 : index
      %70 = vector.load %arg15[%c0_26, %c0_27] : memref<256x768xbf16, #tpu.memory_space<vmem>>, vector<256x256xbf16>
      tpu.vector_store %arg15[%c0_26, %c0_27], %69 {strides = array<i32>} : memref<256x768xbf16, #tpu.memory_space<vmem>>, vector<256x256xbf16>,
      %c0_28 = arith.constant 0 : index
      %c256 = arith.constant 256 : index
      %71 = vector.load %arg15[%c0_28, %c256] : memref<256x768xbf16, #tpu.memory_space<vmem>>, vector<256x256xbf16>
      tpu.vector_store %arg15[%c0_28, %c256], %9 {strides = array<i32>} : memref<256x768xbf16, #tpu.memory_space<vmem>>, vector<256x256xbf16>,
      %72 = arith.truncf %68 : vector<256x256xf32> to vector<256x256xbf16>
      %c0_29 = arith.constant 0 : index
      %c512 = arith.constant 512 : index
      %73 = vector.load %arg15[%c0_29, %c512] : memref<256x768xbf16, #tpu.memory_space<vmem>>, vector<256x256xbf16>
      tpu.vector_store %arg15[%c0_29, %c512], %72 {strides = array<i32>} : memref<256x768xbf16, #tpu.memory_space<vmem>>, vector<256x256xbf16>,
    } else {
    }
    %15 = arith.index_cast %arg0 : i32 to index
    %16 = memref.load %arg2[%15] : memref<22xi32, #tpu.memory_space<smem>>
    %c1_i32_5 = arith.constant 1 : i32
    %17 = arith.cmpi eq, %16, %c1_i32_5 : i32
    %18 = arith.extui %17 : i1 to i32
    %c0_i32_6 = arith.constant 0 : i32
    %19 = arith.cmpi ne, %18, %c0_i32_6 : i32
    scf.if %19 {
      %c0_23 = arith.constant 0 : index
      %c0_24 = arith.constant 0 : index
      %c0_25 = arith.constant 0 : index
      %c0_26 = arith.constant 0 : index
      %55 = vector.load %arg9[%c0_23, %c0_24, %c0_25, %c0_26] : memref<1x3x256x256xbf16, #tpu.memory_space<vmem>>, vector<1x1x256x256xbf16>
      %56 = vector.shape_cast %55 : vector<1x1x256x256xbf16> to vector<256x256xbf16>
      %cst_27 = arith.constant dense<0.000000e+00> : vector<256x256xf32>
      %57 = tpu.matmul %56, %9, %cst_27 {dimension_numbers = #tpu.dot_dimension_numbers<[1], [0], [0], [1], [0, 0, 1, 1], [], []>} : vector<256x256xbf16>, vector<256x256xbf16>, vector<256x256xf32> -> vector<256x256xf32>
      %58 = arith.truncf %57 : vector<256x256xf32> to vector<256x256xbf16>
      %c0_28 = arith.constant 0 : index
      %c0_29 = arith.constant 0 : index
      %59 = vector.load %arg15[%c0_28, %c0_29] : memref<256x768xbf16, #tpu.memory_space<vmem>>, vector<256x256xbf16>
      tpu.vector_store %arg15[%c0_28, %c0_29], %58 {strides = array<i32>} : memref<256x768xbf16, #tpu.memory_space<vmem>>, vector<256x256xbf16>,
      %c0_30 = arith.constant 0 : index
      %c1 = arith.constant 1 : index
      %c0_31 = arith.constant 0 : index
      %c0_32 = arith.constant 0 : index
      %60 = vector.load %arg9[%c0_30, %c1, %c0_31, %c0_32] : memref<1x3x256x256xbf16, #tpu.memory_space<vmem>>, vector<1x1x256x256xbf16>
      %61 = vector.shape_cast %60 : vector<1x1x256x256xbf16> to vector<256x256xbf16>
      %cst_33 = arith.constant dense<0.000000e+00> : vector<256x256xf32>
      %62 = tpu.matmul %61, %9, %cst_33 {dimension_numbers = #tpu.dot_dimension_numbers<[1], [0], [0], [1], [0, 0, 1, 1], [], []>} : vector<256x256xbf16>, vector<256x256xbf16>, vector<256x256xf32> -> vector<256x256xf32>
      %63 = arith.truncf %62 : vector<256x256xf32> to vector<256x256xbf16>
      %c0_34 = arith.constant 0 : index
      %c256 = arith.constant 256 : index
      %64 = vector.load %arg15[%c0_34, %c256] : memref<256x768xbf16, #tpu.memory_space<vmem>>, vector<256x256xbf16>
      tpu.vector_store %arg15[%c0_34, %c256], %63 {strides = array<i32>} : memref<256x768xbf16, #tpu.memory_space<vmem>>, vector<256x256xbf16>,
      %c0_35 = arith.constant 0 : index
      %c2 = arith.constant 2 : index
      %c0_36 = arith.constant 0 : index
      %c0_37 = arith.constant 0 : index
      %65 = vector.load %arg9[%c0_35, %c2, %c0_36, %c0_37] : memref<1x3x256x256xbf16, #tpu.memory_space<vmem>>, vector<1x1x256x256xbf16>
      %66 = vector.shape_cast %65 : vector<1x1x256x256xbf16> to vector<256x256xbf16>
      %cst_38 = arith.constant dense<0.000000e+00> : vector<256x256xf32>
      %67 = tpu.matmul %66, %9, %cst_38 {dimension_numbers = #tpu.dot_dimension_numbers<[1], [0], [0], [1], [0, 0, 1, 1], [], []>} : vector<256x256xbf16>, vector<256x256xbf16>, vector<256x256xf32> -> vector<256x256xf32>
      %68 = arith.truncf %67 : vector<256x256xf32> to vector<256x256xbf16>
      %c0_39 = arith.constant 0 : index
      %c512 = arith.constant 512 : index
      %69 = vector.load %arg15[%c0_39, %c512] : memref<256x768xbf16, #tpu.memory_space<vmem>>, vector<256x256xbf16>
      tpu.vector_store %arg15[%c0_39, %c512], %68 {strides = array<i32>} : memref<256x768xbf16, #tpu.memory_space<vmem>>, vector<256x256xbf16>,
    } else {
    }
    %c0_7 = arith.constant 0 : index
    %c0_8 = arith.constant 0 : index
    %20 = vector.load %arg15[%c0_7, %c0_8] : memref<256x768xbf16, #tpu.memory_space<vmem>>, vector<256x768xbf16>
    %c0_9 = arith.constant 0 : index
    %c0_10 = arith.constant 0 : index
    %c0_11 = arith.constant 0 : index
    %21 = vector.load %arg10[%c0_9, %c0_10, %c0_11] : memref<1x768x256xbf16, #tpu.memory_space<vmem>>, vector<1x768x256xbf16>
    %22 = vector.shape_cast %21 : vector<1x768x256xbf16> to vector<768x256xbf16>
    %cst = arith.constant dense<0.000000e+00> : vector<256x256xf32>
    %23 = tpu.matmul %20, %22, %cst {dimension_numbers = #tpu.dot_dimension_numbers<[1], [0], [0], [1], [0, 0, 1, 1], [], []>} : vector<256x768xbf16>, vector<768x256xbf16>, vector<256x256xf32> -> vector<256x256xf32>
    %c0_12 = arith.constant 0 : index
    %c0_13 = arith.constant 0 : index
    %c0_14 = arith.constant 0 : index
    %24 = vector.load %arg11[%c0_12, %c0_13, %c0_14] : memref<1x1x256xf32, #tpu.memory_space<vmem>>, vector<1x1x256xf32>
    %25 = vector.shape_cast %24 : vector<1x1x256xf32> to vector<1x256xf32>
    %26 = vector.broadcast %25 : vector<1x256xf32> to vector<256x256xf32>
    %27 = arith.addf %23, %26 : vector<256x256xf32>
    %28 = arith.index_cast %arg0 : i32 to index
    %29 = memref.load %arg6[%28] : memref<22xi32, #tpu.memory_space<smem>>
    %30 = arith.sitofp %29 : i32 to f32
    %c0_15 = arith.constant 0 : index
    %c0_16 = arith.constant 0 : index
    %31 = vector.load %arg14[%c0_15, %c0_16] : memref<256x256xf32, #tpu.memory_space<vmem>>, vector<256x256xf32>
    %32 = vector.broadcast %30 : f32 to vector<256x256xf32>
    %33 = arith.mulf %32, %31 : vector<256x256xf32>
    %34 = arith.addf %27, %33 : vector<256x256xf32>
    %35 = arith.index_cast %arg0 : i32 to index
    %36 = memref.load %arg7[%35] : memref<22xi32, #tpu.memory_space<smem>>
    %37 = arith.sitofp %36 : i32 to f32
    %cst_17 = arith.constant 1.000000e+00 : f32
    %38 = arith.subf %cst_17, %37 : f32
    %39 = vector.broadcast %38 : f32 to vector<256x256xf32>
    %40 = arith.mulf %34, %39 : vector<256x256xf32>
    %41 = arith.maximumf %34, %40 : vector<256x256xf32>
    %42 = arith.index_cast %arg0 : i32 to index
    %43 = memref.load %arg5[%42] : memref<22xi32, #tpu.memory_space<smem>>
    %c1_i32_18 = arith.constant 1 : i32
    %44 = arith.cmpi eq, %43, %c1_i32_18 : i32
    %45 = arith.extui %44 : i1 to i32
    %c0_i32_19 = arith.constant 0 : i32
    %46 = arith.cmpi ne, %45, %c0_i32_19 : i32
    scf.if %46 {
      %c0_23 = arith.constant 0 : index
      %c0_24 = arith.constant 0 : index
      %55 = vector.load %arg14[%c0_23, %c0_24] : memref<256x256xf32, #tpu.memory_space<vmem>>, vector<256x256xf32>
      tpu.vector_store %arg14[%c0_23, %c0_24], %41 {strides = array<i32>} : memref<256x256xf32, #tpu.memory_space<vmem>>, vector<256x256xf32>,
    } else {
    }
    %47 = arith.index_cast %arg0 : i32 to index
    %48 = memref.load %arg5[%47] : memref<22xi32, #tpu.memory_space<smem>>
    %c0_i32_20 = arith.constant 0 : i32
    %49 = arith.cmpi eq, %48, %c0_i32_20 : i32
    %50 = arith.extui %49 : i1 to i32
    %c0_i32_21 = arith.constant 0 : i32
    %51 = arith.cmpi ne, %50, %c0_i32_21 : i32
    scf.if %51 {
      %c0_23 = arith.constant 0 : index
      %c0_24 = arith.constant 0 : index
      %55 = vector.load %arg13[%c0_23, %c0_24] : memref<256x256xf32, #tpu.memory_space<vmem>>, vector<256x256xf32>
      tpu.vector_store %arg13[%c0_23, %c0_24], %41 {strides = array<i32>} : memref<256x256xf32, #tpu.memory_space<vmem>>, vector<256x256xf32>,
    } else {
    }
    %c21_i32 = arith.constant 21 : i32
    %52 = arith.cmpi eq, %arg0, %c21_i32 : i32
    %53 = arith.extui %52 : i1 to i32
    %c0_i32_22 = arith.constant 0 : i32
    %54 = arith.cmpi ne, %53, %c0_i32_22 : i32
    scf.if %54 {
      %c0_23 = arith.constant 0 : index
      %c0_24 = arith.constant 0 : index
      %55 = vector.load %arg12[%c0_23, %c0_24] : memref<256x256xf32, #tpu.memory_space<vmem>>, vector<256x256xf32>
      tpu.vector_store %arg12[%c0_23, %c0_24], %41 {strides = array<i32>} : memref<256x256xf32, #tpu.memory_space<vmem>>, vector<256x256xf32>,
    } else {
    }
    return
  }
  func.func @transform_0(%arg0: i32, %arg1: memref<22xi32, #tpu.memory_space<smem>>, %arg2: memref<22xi32, #tpu.memory_space<smem>>, %arg3: memref<22xi32, #tpu.memory_space<smem>>, %arg4: memref<22xi32, #tpu.memory_space<smem>>, %arg5: memref<22xi32, #tpu.memory_space<smem>>, %arg6: memref<22xi32, #tpu.memory_space<smem>>, %arg7: memref<22xi32, #tpu.memory_space<smem>>) -> (i32, i32) {
    %c0_i32 = arith.constant 0 : i32
    %c0_i32_0 = arith.constant 0 : i32
    %c0_i32_1 = arith.constant 0 : i32
    return %c0_i32, %c0_i32_0 : i32, i32
  }
  func.func @transform_1(%arg0: i32, %arg1: memref<22xi32, #tpu.memory_space<smem>>, %arg2: memref<22xi32, #tpu.memory_space<smem>>, %arg3: memref<22xi32, #tpu.memory_space<smem>>, %arg4: memref<22xi32, #tpu.memory_space<smem>>, %arg5: memref<22xi32, #tpu.memory_space<smem>>, %arg6: memref<22xi32, #tpu.memory_space<smem>>, %arg7: memref<22xi32, #tpu.memory_space<smem>>) -> (i32, i32, i32, i32) {
    %0 = arith.index_cast %arg0 : i32 to index
    %1 = memref.load %arg1[%0] : memref<22xi32, #tpu.memory_space<smem>>
    %c0_i32 = arith.constant 0 : i32
    %c0_i32_0 = arith.constant 0 : i32
    %c0_i32_1 = arith.constant 0 : i32
    %c0_i32_2 = arith.constant 0 : i32
    return %1, %c0_i32, %c0_i32_0, %c0_i32_1 : i32, i32, i32, i32
  }
  func.func @transform_2(%arg0: i32, %arg1: memref<22xi32, #tpu.memory_space<smem>>, %arg2: memref<22xi32, #tpu.memory_space<smem>>, %arg3: memref<22xi32, #tpu.memory_space<smem>>, %arg4: memref<22xi32, #tpu.memory_space<smem>>, %arg5: memref<22xi32, #tpu.memory_space<smem>>, %arg6: memref<22xi32, #tpu.memory_space<smem>>, %arg7: memref<22xi32, #tpu.memory_space<smem>>) -> (i32, i32, i32) {
    %c0_i32 = arith.constant 0 : i32
    %c0_i32_0 = arith.constant 0 : i32
    %c0_i32_1 = arith.constant 0 : i32
    return %arg0, %c0_i32, %c0_i32_0 : i32, i32, i32
  }
  func.func @transform_3(%arg0: i32, %arg1: memref<22xi32, #tpu.memory_space<smem>>, %arg2: memref<22xi32, #tpu.memory_space<smem>>, %arg3: memref<22xi32, #tpu.memory_space<smem>>, %arg4: memref<22xi32, #tpu.memory_space<smem>>, %arg5: memref<22xi32, #tpu.memory_space<smem>>, %arg6: memref<22xi32, #tpu.memory_space<smem>>, %arg7: memref<22xi32, #tpu.memory_space<smem>>) -> (i32, i32, i32) {
    %c0_i32 = arith.constant 0 : i32
    %c0_i32_0 = arith.constant 0 : i32
    %c0_i32_1 = arith.constant 0 : i32
    return %arg0, %c0_i32, %c0_i32_0 : i32, i32, i32
  }
  func.func @transform_4(%arg0: i32, %arg1: memref<22xi32, #tpu.memory_space<smem>>, %arg2: memref<22xi32, #tpu.memory_space<smem>>, %arg3: memref<22xi32, #tpu.memory_space<smem>>, %arg4: memref<22xi32, #tpu.memory_space<smem>>, %arg5: memref<22xi32, #tpu.memory_space<smem>>, %arg6: memref<22xi32, #tpu.memory_space<smem>>, %arg7: memref<22xi32, #tpu.memory_space<smem>>) -> (i32, i32) {
    %c0_i32 = arith.constant 0 : i32
    %c0_i32_0 = arith.constant 0 : i32
    %c0_i32_1 = arith.constant 0 : i32
    return %c0_i32, %c0_i32_0 : i32, i32
  }
}

</mosaic_0001>

<llo_original>
// kernel: resnet20_forward.1
$region0: #{resnet20_forward.1}
  #allocation0 [shape = 'u32[]', space=smem, size = 0x4, offset = 0x4, fixed_abs, tag = 'smem constant byte address 0x4 - core index']
  #allocation1 [shape = 'u32[72,128]{1,0:T(1,128)}', space=vmem, size = 0x9000, scoped, tag = 'internal scratch']
  #allocation2 [shape = 'f32[256,256]{1,0:T(8,128)}', space=vmem, size = 0x40000, scoped, tag = 'scratch operand']
  #allocation3 [shape = 'f32[256,256]{1,0:T(8,128)}', space=vmem, size = 0x40000, scoped, tag = 'scratch operand']
  #allocation4 [shape = 'bf16[256,768]{1,0:T(8,128)(2,1)}', space=vmem, size = 0x60000, scoped, tag = 'scratch operand']
  #allocation5 [shape = 's32[1]{0}', space=sflag, size = 0x4, scoped, tag = 'scoped memory for resnet20_forward.1']
  #allocation6 [shape = 'u8[512]{0}', space=smem, size = 0x200, scoped, tag = 'prefetched SMEM operand 0']
  #allocation7 [shape = 'u8[512]{0}', space=smem, size = 0x200, scoped, tag = 'prefetched SMEM operand 1']
  #allocation8 [shape = 'u8[512]{0}', space=smem, size = 0x200, scoped, tag = 'prefetched SMEM operand 2']
  #allocation9 [shape = 'u8[512]{0}', space=smem, size = 0x200, scoped, tag = 'prefetched SMEM operand 3']
  #allocation10 [shape = 'u8[512]{0}', space=smem, size = 0x200, scoped, tag = 'prefetched SMEM operand 4']
  #allocation11 [shape = 'u8[512]{0}', space=smem, size = 0x200, scoped, tag = 'prefetched SMEM operand 5']
  #allocation12 [shape = 'u8[512]{0}', space=smem, size = 0x200, scoped, tag = 'prefetched SMEM operand 6']
  %s0 = inlined_call_operand.hbm [shape: s32[22], index: 0, kind: input, shape index: {}]
  %s1 = inlined_call_operand.hbm [shape: s32[22], index: 1, kind: input, shape index: {}]
  %s2 = inlined_call_operand.hbm [shape: s32[22], index: 2, kind: input, shape index: {}]
  %s3 = inlined_call_operand.hbm [shape: s32[22], index: 3, kind: input, shape index: {}]
  %s4 = inlined_call_operand.hbm [shape: s32[22], index: 4, kind: input, shape index: {}]
  %s5 = inlined_call_operand.hbm [shape: s32[22], index: 5, kind: input, shape index: {}]
  %s6 = inlined_call_operand.hbm [shape: s32[22], index: 6, kind: input, shape index: {}]
  %s7 = inlined_call_operand.vmem [shape: bf16[256,256], index: 7, kind: input, shape index: {}]
  %s8 = inlined_call_operand.hbm [shape: bf16[5,3,256,256], index: 8, kind: input, shape index: {}]
  %s9 = inlined_call_operand.hbm [shape: bf16[22,768,256], index: 9, kind: input, shape index: {}]
  %s10 = inlined_call_operand.hbm [shape: f32[22,1,256], index: 10, kind: input, shape index: {}]
  %s11 = inlined_call_operand.vmem [shape: f32[256,256], index: 11, kind: output, shape index: {}]
  %s12 = sld [smem:[#allocation0]]
  $region89: #{resnet20_forward.1} parent=0
    _
  %s14 = ssub.s32 1, %s12
  %s15 = scalar_select 0, %s14, %s12
  %s17 = sshll.u32 %s0, 4
  %s18 = int_to_ptr.hbm [resolvable:$true] %s17
  %20 = dma.hbm_to_smem %s18, 16, [#allocation6], [#allocation5]
  %s22 = sshll.u32 %s1, 4
  %s23 = int_to_ptr.hbm [resolvable:$true] %s22
  %25 = dma.hbm_to_smem %s23, 16, [#allocation7], [#allocation5]
  %s27 = sshll.u32 %s2, 4
  %s28 = int_to_ptr.hbm [resolvable:$true] %s27
  %30 = dma.hbm_to_smem %s28, 16, [#allocation8], [#allocation5]
  %s32 = sshll.u32 %s3, 4
  %s33 = int_to_ptr.hbm [resolvable:$true] %s32
  %35 = dma.hbm_to_smem %s33, 16, [#allocation9], [#allocation5]
  %s37 = sshll.u32 %s4, 4
  %s38 = int_to_ptr.hbm [resolvable:$true] %s37
  %40 = dma.hbm_to_smem %s38, 16, [#allocation10], [#allocation5]
  %s42 = sshll.u32 %s5, 4
  %s43 = int_to_ptr.hbm [resolvable:$true] %s42
  %45 = dma.hbm_to_smem %s43, 16, [#allocation11], [#allocation5]
  %s47 = sshll.u32 %s6, 4
  %s48 = int_to_ptr.hbm [resolvable:$true] %s47
  %50 = dma.hbm_to_smem %s48, 16, [#allocation12], [#allocation5]
  %52 = dma.done [#allocation5], 112
  %53 = sfence
  $region1: #{resnet20_forward.1} parent=0
    #allocation13 [shape = 'u8[786432]{0}', space=vmem, size = 0xc0000, scoped, tag = 'input window, operand 8']
    #allocation14 [shape = 's32[2]{0}', space=sflag, size = 0x8, scoped, tag = 'scoped memory for resnet20_forward.1']
    #allocation15 [shape = 'u8[786432]{0}', space=vmem, size = 0xc0000, scoped, tag = 'input window, operand 9']
    #allocation16 [shape = 's32[2]{0}', space=sflag, size = 0x8, scoped, tag = 'scoped memory for resnet20_forward.1']
    #allocation17 [shape = 'u8[2048]{0}', space=vmem, size = 0x800, scoped, tag = 'input window, operand 10']
    %54 = vsyncpa [#allocation14], 0
    %s55 = scalar_lea.sflag [#allocation14], 1
    %56 = vsyncpa %s55, 0
    %57 = vsyncpa [#allocation16], 0
    %s58 = scalar_lea.sflag [#allocation16], 1
    %59 = vsyncpa %s58, 0
    loop: start=0, step=1, limit=24
    $region2: #{resnet20_forward.1} parent=1 // loop_pre_header
      _
    $region3: #{resnet20_forward.1} parent=1 // loop_header
      %s61 = sphi 0, %s65
      %p62 = scmp.ge.s32.totalorder %s61, 24
      %s69 = sphi 0, %s69
      %s71 = sphi 0, %s69
      %s72 = sphi 0, %s71
      %s86 = sphi 0, %s72
      %s94 = sphi 0, %s96
      %s97 = sphi 0, %s94
      %s98 = sphi 0, %s97
      %s114 = sphi 0, %s98
      %s120 = sphi 0, %s122
      %s123 = sphi 0, %s120
      %s124 = sphi 0, %s123
      %s140 = sphi 0, %s124
      %s146 = sphi 0, %s148
      %s149 = sphi 0, %s146
      %s150 = sphi 0, %s149
      %s166 = sphi 0, %s150
      %s170 = sphi 0, %s170
      %s172 = sphi 0, %s170
      %s173 = sphi 0, %s172
      %s187 = sphi 0, %s173
    $region4: #{resnet20_forward.1} parent=1 // loop_header_branch
      %64 = sbr.rel (%p62) target = $region8
    $region5: #{resnet20_forward.1} parent=1 // loop_body
      %s66 = ssub.s32 %s61, 1
      %s67 = ssub.s32 %s61, 2
      %s68 = sadd.s32 %s61, 1
      %s70 = sadd.s32 %s69, 1
      %p73 = scmp.eq.s32.totalorder %s61, 21
      %p74 = scmp.ne.s32.totalorder %s69, %s71
      %p75 = scmp.eq.s32.totalorder %s61, 0
      %p76 = por %p74, %p75
      %p77 = scmp.ne.s32.totalorder %s69, %s71
      %p78 = scmp.eq.s32.totalorder %s66, 21
      %p79 = por %p77, %p78
      %p80 = scmp.ne.s32.totalorder %s71, %s72
      %p81 = scmp.eq.s32.totalorder %s66, 0
      %p82 = por %p80, %p81
      %p83 = scmp.ne.s32.totalorder %s71, %s72
      %p84 = scmp.eq.s32.totalorder %s67, 21
      %p85 = por %p83, %p84
      %p87 = scmp.ne.s32.totalorder %s72, %s86
      %p88 = scmp.eq.s32.totalorder %s67, 0
      %p89 = por %p87, %p88
      %s90 = sld [smem:[#allocation6 + %s61]]
      %s91 = sld [smem:[#allocation6 + %s68]]
      %s92 = ssub.s32 %s90, %s91
      %p93 = scmp.eq.s32.totalorder %s92, 0
      %s95 = sadd.s32 %s94, 1
      %s96 = scalar_select %p93, %s94, %s95
      %p99 = pneg %p93
      %p100 = scmp.eq.s32.totalorder %s61, 21
      %p101 = por %p99, %p100
      %p102 = scmp.ne.s32.totalorder %s94, %s97
      %p103 = scmp.eq.s32.totalorder %s61, 0
      %p104 = por %p102, %p103
      %p105 = scmp.ne.s32.totalorder %s94, %s97
      %p106 = scmp.eq.s32.totalorder %s66, 21
      %p107 = por %p105, %p106
      %p108 = scmp.ne.s32.totalorder %s97, %s98
      %p109 = scmp.eq.s32.totalorder %s66, 0
      %p110 = por %p108, %p109
      %p111 = scmp.ne.s32.totalorder %s97, %s98
      %p112 = scmp.eq.s32.totalorder %s67, 21
      %p113 = por %p111, %p112
      %p115 = scmp.ne.s32.totalorder %s98, %s114
      %p116 = scmp.eq.s32.totalorder %s67, 0
      %p117 = por %p115, %p116
      %s118 = ssub.s32 %s61, %s68
      %p119 = scmp.eq.s32.totalorder %s118, 0
      %s121 = sadd.s32 %s120, 1
      %s122 = scalar_select %p119, %s120, %s121
      %p125 = pneg %p119
      %p126 = scmp.eq.s32.totalorder %s61, 21
      %p127 = por %p125, %p126
      %p128 = scmp.ne.s32.totalorder %s120, %s123
      %p129 = scmp.eq.s32.totalorder %s61, 0
      %p130 = por %p128, %p129
      %p131 = scmp.ne.s32.totalorder %s120, %s123
      %p132 = scmp.eq.s32.totalorder %s66, 21
      %p133 = por %p131, %p132
      %p134 = scmp.ne.s32.totalorder %s123, %s124
      %p135 = scmp.eq.s32.totalorder %s66, 0
      %p136 = por %p134, %p135
      %p137 = scmp.ne.s32.totalorder %s123, %s124
      %p138 = scmp.eq.s32.totalorder %s67, 21
      %p139 = por %p137, %p138
      %p141 = scmp.ne.s32.totalorder %s124, %s140
      %p142 = scmp.eq.s32.totalorder %s67, 0
      %p143 = por %p141, %p142
      %s144 = ssub.s32 %s61, %s68
      %p145 = scmp.eq.s32.totalorder %s144, 0
      %s147 = sadd.s32 %s146, 1
      %s148 = scalar_select %p145, %s146, %s147
      %p151 = pneg %p145
      %p152 = scmp.eq.s32.totalorder %s61, 21
      %p153 = por %p151, %p152
      %p154 = scmp.ne.s32.totalorder %s146, %s149
      %p155 = scmp.eq.s32.totalorder %s61, 0
      %p156 = por %p154, %p155
      %p157 = scmp.ne.s32.totalorder %s146, %s149
      %p158 = scmp.eq.s32.totalorder %s66, 21
      %p159 = por %p157, %p158
      %p160 = scmp.ne.s32.totalorder %s149, %s150
      %p161 = scmp.eq.s32.totalorder %s66, 0
      %p162 = por %p160, %p161
      %p163 = scmp.ne.s32.totalorder %s149, %s150
      %p164 = scmp.eq.s32.totalorder %s67, 21
      %p165 = por %p163, %p164
      %p167 = scmp.ne.s32.totalorder %s150, %s166
      %p168 = scmp.eq.s32.totalorder %s67, 0
      %p169 = por %p167, %p168
      %s171 = sadd.s32 %s170, 1
      %p174 = scmp.eq.s32.totalorder %s61, 21
      %p175 = scmp.ne.s32.totalorder %s170, %s172
      %p176 = scmp.eq.s32.totalorder %s61, 0
      %p177 = por %p175, %p176
      %p178 = scmp.ne.s32.totalorder %s170, %s172
      %p179 = scmp.eq.s32.totalorder %s66, 21
      %p180 = por %p178, %p179
      %p181 = scmp.ne.s32.totalorder %s172, %s173
      %p182 = scmp.eq.s32.totalorder %s66, 0
      %p183 = por %p181, %p182
      %p184 = scmp.ne.s32.totalorder %s172, %s173
      %p185 = scmp.eq.s32.totalorder %s67, 21
      %p186 = por %p184, %p185
      %p188 = scmp.ne.s32.totalorder %s173, %s187
      %p189 = scmp.eq.s32.totalorder %s67, 0
      %p190 = por %p188, %p189
      %p191 = scmp.le.s32.totalorder 1, %s61
      %p192 = scmp.lt.s32.totalorder %s61, 23
      %p193 = pnand %p191, %p192
      %p194 = pneg %p193
      // Predicated region
      $region9: #{resnet20_forward.1} parent=5 // pred_check
        _
      $region10: #{resnet20_forward.1} parent=5 // pred_check_branch
        %196 = sbr.rel (%p193) target = $region12
      $region11: #{resnet20_forward.1} parent=5 // pred_region
        %s197 = ssub.s32 %s61, 1
        // Predicated region
        $region13: #{resnet20_forward.1} parent=11 // pred_check
          %p198 = pneg %p82
        $region14: #{resnet20_forward.1} parent=11 // pred_check_branch
          %200 = sbr.rel (%p198) target = $region16
        $region15: #{resnet20_forward.1} parent=11 // pred_region
          _
        $region16: #{resnet20_forward.1} parent=11 // pred_fallthru
          _
      $region12: #{resnet20_forward.1} parent=5 // pred_fallthru
        _
      %p201 = scmp.lt.s32.totalorder %s61, 22
      // Predicated region
      $region17: #{resnet20_forward.1} parent=5 // pred_check
        %p202 = pneg %p201
      $region18: #{resnet20_forward.1} parent=5 // pred_check_branch
        %204 = sbr.rel (%p202) target = $region20
      $region19: #{resnet20_forward.1} parent=5 // pred_region
        // Predicated region
        $region21: #{resnet20_forward.1} parent=19 // pred_check
          %p205 = pneg %p104
        $region22: #{resnet20_forward.1} parent=19 // pred_check_branch
          %207 = sbr.rel (%p205) target = $region24
        $region23: #{resnet20_forward.1} parent=19 // pred_region
          %s208 = sand.u32 %s94, 1
          %s209 = scalar_lea.sflag [#allocation14], %s208
          %s210 = sand.u32 %s94, 1
          %s211 = smul.addr %s210, 768
          %s212 = scalar_lea.vmem [#allocation13], %s211
          %s213 = sld [smem:[#allocation6 + %s61]]
          %215 = vsyncadd %s209, 0
          %s216 = smul.addr %s213, 192
          %s217 = smul.addr %s216, 4
          %s218 = scalar_lea.hbm %s8, %s217
          %s219 = sshll.u32 %s218, 4
          %s220 = int_to_ptr.hbm [resolvable:$true] %s219
          %s221 = sshll.u32 %s212, 4
          %s222 = int_to_ptr.vmem [resolvable:$true] %s221
          %227 = dma.hbm_to_vmem [thread:$0]  %s220, 12288, %s222, %s209, 128, 128, 8
        $region24: #{resnet20_forward.1} parent=19 // pred_fallthru
          _
        // Predicated region
        $region25: #{resnet20_forward.1} parent=19 // pred_check
          %p228 = pneg %p130
        $region26: #{resnet20_forward.1} parent=19 // pred_check_branch
          %230 = sbr.rel (%p228) target = $region28
        $region27: #{resnet20_forward.1} parent=19 // pred_region
          %s231 = sand.u32 %s61, 1
          %s232 = scalar_lea.sflag [#allocation16], %s231
          %s233 = sand.u32 %s120, 1
          %s234 = smul.addr %s233, 768
          %s235 = scalar_lea.vmem [#allocation15], %s234
          %237 = vsyncadd %s232, 0
          %s238 = smul.addr %s61, 192
          %s239 = smul.addr %s238, 4
          %s240 = scalar_lea.hbm %s9, %s239
          %s241 = sshll.u32 %s240, 4
          %s242 = int_to_ptr.hbm [resolvable:$true] %s241
          %s243 = sshll.u32 %s235, 4
          %s244 = int_to_ptr.vmem [resolvable:$true] %s243
          %249 = dma.hbm_to_vmem [thread:$0]  %s242, 12288, %s244, %s232, 128, 128, 8
        $region28: #{resnet20_forward.1} parent=19 // pred_fallthru
          _
        // Predicated region
        $region29: #{resnet20_forward.1} parent=19 // pred_check
          %p250 = pneg %p156
        $region30: #{resnet20_forward.1} parent=19 // pred_check_branch
          %252 = sbr.rel (%p250) target = $region32
        $region31: #{resnet20_forward.1} parent=19 // pred_region
          %s253 = sand.u32 %s61, 1
          %s254 = scalar_lea.sflag [#allocation16], %s253
          %s255 = sand.u32 %s146, 1
          %s256 = smul.addr %s255, 2
          %s257 = scalar_lea.vmem [#allocation17], %s256
          %259 = vsyncadd %s254, 0
          %s260 = smul.addr %s61, 2
          %s261 = scalar_lea.hbm %s10, %s260
          %s263 = sshll.u32 %s261, 4
          %s264 = int_to_ptr.hbm [resolvable:$true] %s263
          %s265 = sshll.u32 %s257, 4
          %s266 = int_to_ptr.vmem [resolvable:$true] %s265
          %268 = dma.hbm_to_vmem [thread:$0]  %s264, 32, %s266, %s254
        $region32: #{resnet20_forward.1} parent=19 // pred_fallthru
          _
      $region20: #{resnet20_forward.1} parent=5 // pred_fallthru
        _
      %p269 = scmp.le.s32.totalorder 1, %s61
      %p270 = scmp.lt.s32.totalorder %s61, 23
      %p271 = pnand %p269, %p270
      %p272 = pneg %p271
      // Predicated region
      $region33: #{resnet20_forward.1} parent=5 // pred_check
        _
      $region34: #{resnet20_forward.1} parent=5 // pred_check_branch
        %274 = sbr.rel (%p271) target = $region36
      $region35: #{resnet20_forward.1} parent=5 // pred_region
        %s275 = ssub.s32 %s61, 1
        %s276 = sand.u32 %s97, 1
        %s277 = scalar_lea.sflag [#allocation14], %s276
        %s278 = sand.u32 %s97, 1
        %s279 = smul.addr %s278, 768
        %s280 = scalar_lea.vmem [#allocation13], %s279
        // Predicated region
        $region37: #{resnet20_forward.1} parent=35 // pred_check
          %p281 = pneg %p110
        $region38: #{resnet20_forward.1} parent=35 // pred_check_branch
          %283 = sbr.rel (%p281) target = $region40
        $region39: #{resnet20_forward.1} parent=35 // pred_region
          %285 = dma.done %s277, 12288
        $region40: #{resnet20_forward.1} parent=35 // pred_fallthru
          _
        %s286 = sand.u32 %s66, 1
        %s287 = scalar_lea.sflag [#allocation16], %s286
        %s288 = sand.u32 %s123, 1
        %s289 = smul.addr %s288, 768
        %s290 = scalar_lea.vmem [#allocation15], %s289
        // Predicated region
        $region41: #{resnet20_forward.1} parent=35 // pred_check
          %p291 = pneg %p136
        $region42: #{resnet20_forward.1} parent=35 // pred_check_branch
          %293 = sbr.rel (%p291) target = $region44
        $region43: #{resnet20_forward.1} parent=35 // pred_region
          %295 = dma.done %s287, 12288
        $region44: #{resnet20_forward.1} parent=35 // pred_fallthru
          _
        %s296 = sand.u32 %s66, 1
        %s297 = scalar_lea.sflag [#allocation16], %s296
        %s298 = sand.u32 %s149, 1
        %s299 = smul.addr %s298, 2
        %s300 = scalar_lea.vmem [#allocation17], %s299
        // Predicated region
        $region45: #{resnet20_forward.1} parent=35 // pred_check
          %p301 = pneg %p162
        $region46: #{resnet20_forward.1} parent=35 // pred_check_branch
          %303 = sbr.rel (%p301) target = $region48
        $region47: #{resnet20_forward.1} parent=35 // pred_region
          %305 = dma.done %s297, 32
        $region48: #{resnet20_forward.1} parent=35 // pred_fallthru
          _
        %p306 = pneg %p82
        %p307 = pneg %p79
        %s308 = sand.u32 %s97, 1
        %s309 = scalar_lea.sflag [#allocation14], %s308
        %s310 = sand.u32 %s97, 1
        %s311 = smul.addr %s310, 768
        %s312 = scalar_lea.vmem [#allocation13], %s311
        %p313 = pneg %p110
        %p314 = pneg %p107
        %s315 = sand.u32 %s66, 1
        %s316 = scalar_lea.sflag [#allocation16], %s315
        %s317 = sand.u32 %s123, 1
        %s318 = smul.addr %s317, 768
        %s319 = scalar_lea.vmem [#allocation15], %s318
        %p320 = pneg %p136
        %p321 = pneg %p133
        %s322 = sand.u32 %s66, 1
        %s323 = scalar_lea.sflag [#allocation16], %s322
        %s324 = sand.u32 %s149, 1
        %s325 = smul.addr %s324, 2
        %s326 = scalar_lea.vmem [#allocation17], %s325
        %p327 = pneg %p162
        %p328 = pneg %p159
        %p329 = pneg %p183
        %p330 = pneg %p180
        %s331 = sld [smem:[#allocation6 + %s66]]
        %p332 = scmp.eq.s32.totalorder %s66, 0
        // Predicated region
        $region49: #{resnet20_forward.1} parent=35 // pred_check
          %p333 = pneg %p332
        $region50: #{resnet20_forward.1} parent=35 // pred_check_branch
          %335 = sbr.rel (%p333) target = $region52
        $region51: #{resnet20_forward.1} parent=35 // pred_region
          %v336 = vld [vmem:[%s7] sm:$0xff]
          %v337 = vld [vmem:[%s7 + $0x8] sm:$0xff]
          %v338 = vld [vmem:[%s7 + $0x10] sm:$0xff]
          %v339 = vld [vmem:[%s7 + $0x18] sm:$0xff]
          %v340 = vld [vmem:[%s7 + $0x20] sm:$0xff]
          %v341 = vld [vmem:[%s7 + $0x28] sm:$0xff]
          %v342 = vld [vmem:[%s7 + $0x30] sm:$0xff]
          %v343 = vld [vmem:[%s7 + $0x38] sm:$0xff]
          %v344 = vld [vmem:[%s7 + $0x40] sm:$0xff]
          %v345 = vld [vmem:[%s7 + $0x48] sm:$0xff]
          %v346 = vld [vmem:[%s7 + $0x50] sm:$0xff]
          %v347 = vld [vmem:[%s7 + $0x58] sm:$0xff]
          %v348 = vld [vmem:[%s7 + $0x60] sm:$0xff]
          %v349 = vld [vmem:[%s7 + $0x68] sm:$0xff]
          %v350 = vld [vmem:[%s7 + $0x70] sm:$0xff]
          %v351 = vld [vmem:[%s7 + $0x78] sm:$0xff]
          %v352 = vld [vmem:[%s7 + $0x80] sm:$0xff]
          %v353 = vld [vmem:[%s7 + $0x88] sm:$0xff]
          %v354 = vld [vmem:[%s7 + $0x90] sm:$0xff]
          %v355 = vld [vmem:[%s7 + $0x98] sm:$0xff]
          %v356 = vld [vmem:[%s7 + $0xa0] sm:$0xff]
          %v357 = vld [vmem:[%s7 + $0xa8] sm:$0xff]
          %v358 = vld [vmem:[%s7 + $0xb0] sm:$0xff]
          %v359 = vld [vmem:[%s7 + $0xb8] sm:$0xff]
          %v360 = vld [vmem:[%s7 + $0xc0] sm:$0xff]
          %v361 = vld [vmem:[%s7 + $0xc8] sm:$0xff]
          %v362 = vld [vmem:[%s7 + $0xd0] sm:$0xff]
          %v363 = vld [vmem:[%s7 + $0xd8] sm:$0xff]
          %v364 = vld [vmem:[%s7 + $0xe0] sm:$0xff]
          %v365 = vld [vmem:[%s7 + $0xe8] sm:$0xff]
          %v366 = vld [vmem:[%s7 + $0xf0] sm:$0xff]
          %v367 = vld [vmem:[%s7 + $0xf8] sm:$0xff]
          %v368 = vunpack.c.l.bf16 %v336
          %v369 = vunpack.c.h.bf16 %v336
          %v370 = vunpack.c.l.bf16 %v337
          %v371 = vunpack.c.h.bf16 %v337
          %v372 = vunpack.c.l.bf16 %v338
          %v373 = vunpack.c.h.bf16 %v338
          %v374 = vunpack.c.l.bf16 %v339
          %v375 = vunpack.c.h.bf16 %v339
          %v376 = vunpack.c.l.bf16 %v340
          %v377 = vunpack.c.h.bf16 %v340
          %v378 = vunpack.c.l.bf16 %v341
          %v379 = vunpack.c.h.bf16 %v341
          %v380 = vunpack.c.l.bf16 %v342
          %v381 = vunpack.c.h.bf16 %v342
          %v382 = vunpack.c.l.bf16 %v343
          %v383 = vunpack.c.h.bf16 %v343
          %v384 = vunpack.c.l.bf16 %v344
          %v385 = vunpack.c.h.bf16 %v344
          %v386 = vunpack.c.l.bf16 %v345
          %v387 = vunpack.c.h.bf16 %v345
          %v388 = vunpack.c.l.bf16 %v346
          %v389 = vunpack.c.h.bf16 %v346
          %v390 = vunpack.c.l.bf16 %v347
          %v391 = vunpack.c.h.bf16 %v347
          %v392 = vunpack.c.l.bf16 %v348
          %v393 = vunpack.c.h.bf16 %v348
          %v394 = vunpack.c.l.bf16 %v349
          %v395 = vunpack.c.h.bf16 %v349
          %v396 = vunpack.c.l.bf16 %v350
          %v397 = vunpack.c.h.bf16 %v350
          %v398 = vunpack.c.l.bf16 %v351
          %v399 = vunpack.c.h.bf16 %v351
          %v400 = vunpack.c.l.bf16 %v352
          %v401 = vunpack.c.h.bf16 %v352
          %v402 = vunpack.c.l.bf16 %v353
          %v403 = vunpack.c.h.bf16 %v353
          %v404 = vunpack.c.l.bf16 %v354
          %v405 = vunpack.c.h.bf16 %v354
          %v406 = vunpack.c.l.bf16 %v355
          %v407 = vunpack.c.h.bf16 %v355
          %v408 = vunpack.c.l.bf16 %v356
          %v409 = vunpack.c.h.bf16 %v356
          %v410 = vunpack.c.l.bf16 %v357
          %v411 = vunpack.c.h.bf16 %v357
          %v412 = vunpack.c.l.bf16 %v358
          %v413 = vunpack.c.h.bf16 %v358
          %v414 = vunpack.c.l.bf16 %v359
          %v415 = vunpack.c.h.bf16 %v359
          %v416 = vunpack.c.l.bf16 %v360
          %v417 = vunpack.c.h.bf16 %v360
          %v418 = vunpack.c.l.bf16 %v361
          %v419 = vunpack.c.h.bf16 %v361
          %v420 = vunpack.c.l.bf16 %v362
          %v421 = vunpack.c.h.bf16 %v362
          %v422 = vunpack.c.l.bf16 %v363
          %v423 = vunpack.c.h.bf16 %v363
          %v424 = vunpack.c.l.bf16 %v364
          %v425 = vunpack.c.h.bf16 %v364
          %v426 = vunpack.c.l.bf16 %v365
          %v427 = vunpack.c.h.bf16 %v365
          %v428 = vunpack.c.l.bf16 %v366
          %v429 = vunpack.c.h.bf16 %v366
          %v430 = vunpack.c.l.bf16 %v367
          %v431 = vunpack.c.h.bf16 %v367
          %432 = vst [vmem:[#allocation2] sm:$0xff] %v368
          %433 = vst [vmem:[#allocation2 + $0x8] sm:$0xff] %v369
          %434 = vst [vmem:[#allocation2 + $0x10] sm:$0xff] %v370
          %435 = vst [vmem:[#allocation2 + $0x18] sm:$0xff] %v371
          %436 = vst [vmem:[#allocation2 + $0x20] sm:$0xff] %v372
          %437 = vst [vmem:[#allocation2 + $0x28] sm:$0xff] %v373
          %438 = vst [vmem:[#allocation2 + $0x30] sm:$0xff] %v374
          %439 = vst [vmem:[#allocation2 + $0x38] sm:$0xff] %v375
          %440 = vst [vmem:[#allocation2 + $0x40] sm:$0xff] %v376
          %441 = vst [vmem:[#allocation2 + $0x48] sm:$0xff] %v377
          %442 = vst [vmem:[#allocation2 + $0x50] sm:$0xff] %v378
          %443 = vst [vmem:[#allocation2 + $0x58] sm:$0xff] %v379
          %444 = vst [vmem:[#allocation2 + $0x60] sm:$0xff] %v380
          %445 = vst [vmem:[#allocation2 + $0x68] sm:$0xff] %v381
          %446 = vst [vmem:[#allocation2 + $0x70] sm:$0xff] %v382
          %447 = vst [vmem:[#allocation2 + $0x78] sm:$0xff] %v383
          %448 = vst [vmem:[#allocation2 + $0x80] sm:$0xff] %v384
          %449 = vst [vmem:[#allocation2 + $0x88] sm:$0xff] %v385
          %450 = vst [vmem:[#allocation2 + $0x90] sm:$0xff] %v386
          %451 = vst [vmem:[#allocation2 + $0x98] sm:$0xff] %v387
          %452 = vst [vmem:[#allocation2 + $0xa0] sm:$0xff] %v388
          %453 = vst [vmem:[#allocation2 + $0xa8] sm:$0xff] %v389
          %454 = vst [vmem:[#allocation2 + $0xb0] sm:$0xff] %v390
          %455 = vst [vmem:[#allocation2 + $0xb8] sm:$0xff] %v391
          %456 = vst [vmem:[#allocation2 + $0xc0] sm:$0xff] %v392
          %457 = vst [vmem:[#allocation2 + $0xc8] sm:$0xff] %v393
          %458 = vst [vmem:[#allocation2 + $0xd0] sm:$0xff] %v394
          %459 = vst [vmem:[#allocation2 + $0xd8] sm:$0xff] %v395
          %460 = vst [vmem:[#allocation2 + $0xe0] sm:$0xff] %v396
          %461 = vst [vmem:[#allocation2 + $0xe8] sm:$0xff] %v397
          %462 = vst [vmem:[#allocation2 + $0xf0] sm:$0xff] %v398
          %463 = vst [vmem:[#allocation2 + $0xf8] sm:$0xff] %v399
          %464 = vst [vmem:[#allocation2 + $0x100] sm:$0xff] %v400
          %465 = vst [vmem:[#allocation2 + $0x108] sm:$0xff] %v401
          %466 = vst [vmem:[#allocation2 + $0x110] sm:$0xff] %v402
          %467 = vst [vmem:[#allocation2 + $0x118] sm:$0xff] %v403
          %468 = vst [vmem:[#allocation2 + $0x120] sm:$0xff] %v404
          %469 = vst [vmem:[#allocation2 + $0x128] sm:$0xff] %v405
          %470 = vst [vmem:[#allocation2 + $0x130] sm:$0xff] %v406
          %471 = vst [vmem:[#allocation2 + $0x138] sm:$0xff] %v407
          %472 = vst [vmem:[#allocation2 + $0x140] sm:$0xff] %v408
          %473 = vst [vmem:[#allocation2 + $0x148] sm:$0xff] %v409
          %474 = vst [vmem:[#allocation2 + $0x150] sm:$0xff] %v410
          %475 = vst [vmem:[#allocation2 + $0x158] sm:$0xff] %v411
          %476 = vst [vmem:[#allocation2 + $0x160] sm:$0xff] %v412
          %477 = vst [vmem:[#allocation2 + $0x168] sm:$0xff] %v413
          %478 = vst [vmem:[#allocation2 + $0x170] sm:$0xff] %v414
          %479 = vst [vmem:[#allocation2 + $0x178] sm:$0xff] %v415
          %480 = vst [vmem:[#allocation2 + $0x180] sm:$0xff] %v416
          %481 = vst [vmem:[#allocation2 + $0x188] sm:$0xff] %v417
          %482 = vst [vmem:[#allocation2 + $0x190] sm:$0xff] %v418
          %483 = vst [vmem:[#allocation2 + $0x198] sm:$0xff] %v419
          %484 = vst [vmem:[#allocation2 + $0x1a0] sm:$0xff] %v420
          %485 = vst [vmem:[#allocation2 + $0x1a8] sm:$0xff] %v421
          %486 = vst [vmem:[#allocation2 + $0x1b0] sm:$0xff] %v422
          %487 = vst [vmem:[#allocation2 + $0x1b8] sm:$0xff] %v423
          %488 = vst [vmem:[#allocation2 + $0x1c0] sm:$0xff] %v424
          %489 = vst [vmem:[#allocation2 + $0x1c8] sm:$0xff] %v425
          %490 = vst [vmem:[#allocation2 + $0x1d0] sm:$0xff] %v426
          %491 = vst [vmem:[#allocation2 + $0x1d8] sm:$0xff] %v427
          %492 = vst [vmem:[#allocation2 + $0x1e0] sm:$0xff] %v428
          %493 = vst [vmem:[#allocation2 + $0x1e8] sm:$0xff] %v429
          %494 = vst [vmem:[#allocation2 + $0x1f0] sm:$0xff] %v430
          %495 = vst [vmem:[#allocation2 + $0x1f8] sm:$0xff] %v431
          %496 = vst [vmem:[#allocation3] sm:$0xff] 0.0
          %497 = vst [vmem:[#allocation3 + $0x8] sm:$0xff] 0.0
          %498 = vst [vmem:[#allocation3 + $0x10] sm:$0xff] 0.0
          %499 = vst [vmem:[#allocation3 + $0x18] sm:$0xff] 0.0
          %500 = vst [vmem:[#allocation3 + $0x20] sm:$0xff] 0.0
          %501 = vst [vmem:[#allocation3 + $0x28] sm:$0xff] 0.0
          %502 = vst [vmem:[#allocation3 + $0x30] sm:$0xff] 0.0
          %503 = vst [vmem:[#allocation3 + $0x38] sm:$0xff] 0.0
          %504 = vst [vmem:[#allocation3 + $0x40] sm:$0xff] 0.0
          %505 = vst [vmem:[#allocation3 + $0x48] sm:$0xff] 0.0
          %506 = vst [vmem:[#allocation3 + $0x50] sm:$0xff] 0.0
          %507 = vst [vmem:[#allocation3 + $0x58] sm:$0xff] 0.0
          %508 = vst [vmem:[#allocation3 + $0x60] sm:$0xff] 0.0
          %509 = vst [vmem:[#allocation3 + $0x68] sm:$0xff] 0.0
          %510 = vst [vmem:[#allocation3 + $0x70] sm:$0xff] 0.0
          %511 = vst [vmem:[#allocation3 + $0x78] sm:$0xff] 0.0
          %512 = vst [vmem:[#allocation3 + $0x80] sm:$0xff] 0.0
          %513 = vst [vmem:[#allocation3 + $0x88] sm:$0xff] 0.0
          %514 = vst [vmem:[#allocation3 + $0x90] sm:$0xff] 0.0
          %515 = vst [vmem:[#allocation3 + $0x98] sm:$0xff] 0.0
          %516 = vst [vmem:[#allocation3 + $0xa0] sm:$0xff] 0.0
          %517 = vst [vmem:[#allocation3 + $0xa8] sm:$0xff] 0.0
          %518 = vst [vmem:[#allocation3 + $0xb0] sm:$0xff] 0.0
          %519 = vst [vmem:[#allocation3 + $0xb8] sm:$0xff] 0.0
          %520 = vst [vmem:[#allocation3 + $0xc0] sm:$0xff] 0.0
          %521 = vst [vmem:[#allocation3 + $0xc8] sm:$0xff] 0.0
          %522 = vst [vmem:[#allocation3 + $0xd0] sm:$0xff] 0.0
          %523 = vst [vmem:[#allocation3 + $0xd8] sm:$0xff] 0.0
          %524 = vst [vmem:[#allocation3 + $0xe0] sm:$0xff] 0.0
          %525 = vst [vmem:[#allocation3 + $0xe8] sm:$0xff] 0.0
          %526 = vst [vmem:[#allocation3 + $0xf0] sm:$0xff] 0.0
          %527 = vst [vmem:[#allocation3 + $0xf8] sm:$0xff] 0.0
          %528 = vst [vmem:[#allocation3 + $0x100] sm:$0xff] 0.0
          %529 = vst [vmem:[#allocation3 + $0x108] sm:$0xff] 0.0
          %530 = vst [vmem:[#allocation3 + $0x110] sm:$0xff] 0.0
          %531 = vst [vmem:[#allocation3 + $0x118] sm:$0xff] 0.0
          %532 = vst [vmem:[#allocation3 + $0x120] sm:$0xff] 0.0
          %533 = vst [vmem:[#allocation3 + $0x128] sm:$0xff] 0.0
          %534 = vst [vmem:[#allocation3 + $0x130] sm:$0xff] 0.0
          %535 = vst [vmem:[#allocation3 + $0x138] sm:$0xff] 0.0
          %536 = vst [vmem:[#allocation3 + $0x140] sm:$0xff] 0.0
          %537 = vst [vmem:[#allocation3 + $0x148] sm:$0xff] 0.0
          %538 = vst [vmem:[#allocation3 + $0x150] sm:$0xff] 0.0
          %539 = vst [vmem:[#allocation3 + $0x158] sm:$0xff] 0.0
          %540 = vst [vmem:[#allocation3 + $0x160] sm:$0xff] 0.0
          %541 = vst [vmem:[#allocation3 + $0x168] sm:$0xff] 0.0
          %542 = vst [vmem:[#allocation3 + $0x170] sm:$0xff] 0.0
          %543 = vst [vmem:[#allocation3 + $0x178] sm:$0xff] 0.0
          %544 = vst [vmem:[#allocation3 + $0x180] sm:$0xff] 0.0
          %545 = vst [vmem:[#allocation3 + $0x188] sm:$0xff] 0.0
          %546 = vst [vmem:[#allocation3 + $0x190] sm:$0xff] 0.0
          %547 = vst [vmem:[#allocation3 + $0x198] sm:$0xff] 0.0
          %548 = vst [vmem:[#allocation3 + $0x1a0] sm:$0xff] 0.0
          %549 = vst [vmem:[#allocation3 + $0x1a8] sm:$0xff] 0.0
          %550 = vst [vmem:[#allocation3 + $0x1b0] sm:$0xff] 0.0
          %551 = vst [vmem:[#allocation3 + $0x1b8] sm:$0xff] 0.0
          %552 = vst [vmem:[#allocation3 + $0x1c0] sm:$0xff] 0.0
          %553 = vst [vmem:[#allocation3 + $0x1c8] sm:$0xff] 0.0
          %554 = vst [vmem:[#allocation3 + $0x1d0] sm:$0xff] 0.0
          %555 = vst [vmem:[#allocation3 + $0x1d8] sm:$0xff] 0.0
          %556 = vst [vmem:[#allocation3 + $0x1e0] sm:$0xff] 0.0
          %557 = vst [vmem:[#allocation3 + $0x1e8] sm:$0xff] 0.0
          %558 = vst [vmem:[#allocation3 + $0x1f0] sm:$0xff] 0.0
          %559 = vst [vmem:[#allocation3 + $0x1f8] sm:$0xff] 0.0
        $region52: #{resnet20_forward.1} parent=35 // pred_fallthru
          _
        %s560 = sld [smem:[#allocation9 + %s66]]
        %p561 = scmp.eq.s32.totalorder %s560, 1
        // Predicated region
        $region53: #{resnet20_forward.1} parent=35 // pred_check
          %p562 = pneg %p561
        $region54: #{resnet20_forward.1} parent=35 // pred_check_branch
          %564 = sbr.rel (%p562) target = $region56
        $region55: #{resnet20_forward.1} parent=35 // pred_region
          %v565 = vld [vmem:[#allocation2] sm:$0xff]
          %v566 = vld [vmem:[#allocation2 + $0x8] sm:$0xff]
          %v567 = vld [vmem:[#allocation2 + $0x10] sm:$0xff]
          %v568 = vld [vmem:[#allocation2 + $0x18] sm:$0xff]
          %v569 = vld [vmem:[#allocation2 + $0x20] sm:$0xff]
          %v570 = vld [vmem:[#allocation2 + $0x28] sm:$0xff]
          %v571 = vld [vmem:[#allocation2 + $0x30] sm:$0xff]
          %v572 = vld [vmem:[#allocation2 + $0x38] sm:$0xff]
          %v573 = vld [vmem:[#allocation2 + $0x40] sm:$0xff]
          %v574 = vld [vmem:[#allocation2 + $0x48] sm:$0xff]
          %v575 = vld [vmem:[#allocation2 + $0x50] sm:$0xff]
          %v576 = vld [vmem:[#allocation2 + $0x58] sm:$0xff]
          %v577 = vld [vmem:[#allocation2 + $0x60] sm:$0xff]
          %v578 = vld [vmem:[#allocation2 + $0x68] sm:$0xff]
          %v579 = vld [vmem:[#allocation2 + $0x70] sm:$0xff]
          %v580 = vld [vmem:[#allocation2 + $0x78] sm:$0xff]
          %v581 = vld [vmem:[#allocation2 + $0x80] sm:$0xff]
          %v582 = vld [vmem:[#allocation2 + $0x88] sm:$0xff]
          %v583 = vld [vmem:[#allocation2 + $0x90] sm:$0xff]
          %v584 = vld [vmem:[#allocation2 + $0x98] sm:$0xff]
          %v585 = vld [vmem:[#allocation2 + $0xa0] sm:$0xff]
          %v586 = vld [vmem:[#allocation2 + $0xa8] sm:$0xff]
          %v587 = vld [vmem:[#allocation2 + $0xb0] sm:$0xff]
          %v588 = vld [vmem:[#allocation2 + $0xb8] sm:$0xff]
          %v589 = vld [vmem:[#allocation2 + $0xc0] sm:$0xff]
          %v590 = vld [vmem:[#allocation2 + $0xc8] sm:$0xff]
          %v591 = vld [vmem:[#allocation2 + $0xd0] sm:$0xff]
          %v592 = vld [vmem:[#allocation2 + $0xd8] sm:$0xff]
          %v593 = vld [vmem:[#allocation2 + $0xe0] sm:$0xff]
          %v594 = vld [vmem:[#allocation2 + $0xe8] sm:$0xff]
          %v595 = vld [vmem:[#allocation2 + $0xf0] sm:$0xff]
          %v596 = vld [vmem:[#allocation2 + $0xf8] sm:$0xff]
          %v597 = vld [vmem:[#allocation2 + $0x100] sm:$0xff]
          %v598 = vld [vmem:[#allocation2 + $0x108] sm:$0xff]
          %v599 = vld [vmem:[#allocation2 + $0x110] sm:$0xff]
          %v600 = vld [vmem:[#allocation2 + $0x118] sm:$0xff]
          %v601 = vld [vmem:[#allocation2 + $0x120] sm:$0xff]
          %v602 = vld [vmem:[#allocation2 + $0x128] sm:$0xff]
          %v603 = vld [vmem:[#allocation2 + $0x130] sm:$0xff]
          %v604 = vld [vmem:[#allocation2 + $0x138] sm:$0xff]
          %v605 = vld [vmem:[#allocation2 + $0x140] sm:$0xff]
          %v606 = vld [vmem:[#allocation2 + $0x148] sm:$0xff]
          %v607 = vld [vmem:[#allocation2 + $0x150] sm:$0xff]
          %v608 = vld [vmem:[#allocation2 + $0x158] sm:$0xff]
          %v609 = vld [vmem:[#allocation2 + $0x160] sm:$0xff]
          %v610 = vld [vmem:[#allocation2 + $0x168] sm:$0xff]
          %v611 = vld [vmem:[#allocation2 + $0x170] sm:$0xff]
          %v612 = vld [vmem:[#allocation2 + $0x178] sm:$0xff]
          %v613 = vld [vmem:[#allocation2 + $0x180] sm:$0xff]
          %v614 = vld [vmem:[#allocation2 + $0x188] sm:$0xff]
          %v615 = vld [vmem:[#allocation2 + $0x190] sm:$0xff]
          %v616 = vld [vmem:[#allocation2 + $0x198] sm:$0xff]
          %v617 = vld [vmem:[#allocation2 + $0x1a0] sm:$0xff]
          %v618 = vld [vmem:[#allocation2 + $0x1a8] sm:$0xff]
          %v619 = vld [vmem:[#allocation2 + $0x1b0] sm:$0xff]
          %v620 = vld [vmem:[#allocation2 + $0x1b8] sm:$0xff]
          %v621 = vld [vmem:[#allocation2 + $0x1c0] sm:$0xff]
          %v622 = vld [vmem:[#allocation2 + $0x1c8] sm:$0xff]
          %v623 = vld [vmem:[#allocation2 + $0x1d0] sm:$0xff]
          %v624 = vld [vmem:[#allocation2 + $0x1d8] sm:$0xff]
          %v625 = vld [vmem:[#allocation2 + $0x1e0] sm:$0xff]
          %v626 = vld [vmem:[#allocation2 + $0x1e8] sm:$0xff]
          %v627 = vld [vmem:[#allocation2 + $0x1f0] sm:$0xff]
          %v628 = vld [vmem:[#allocation2 + $0x1f8] sm:$0xff]
          %629 = vst [vmem:[#allocation3] sm:$0xff] %v565
          %630 = vst [vmem:[#allocation3 + $0x8] sm:$0xff] %v566
          %631 = vst [vmem:[#allocation3 + $0x10] sm:$0xff] %v567
          %632 = vst [vmem:[#allocation3 + $0x18] sm:$0xff] %v568
          %633 = vst [vmem:[#allocation3 + $0x20] sm:$0xff] %v569
          %634 = vst [vmem:[#allocation3 + $0x28] sm:$0xff] %v570
          %635 = vst [vmem:[#allocation3 + $0x30] sm:$0xff] %v571
          %636 = vst [vmem:[#allocation3 + $0x38] sm:$0xff] %v572
          %637 = vst [vmem:[#allocation3 + $0x40] sm:$0xff] %v573
          %638 = vst [vmem:[#allocation3 + $0x48] sm:$0xff] %v574
          %639 = vst [vmem:[#allocation3 + $0x50] sm:$0xff] %v575
          %640 = vst [vmem:[#allocation3 + $0x58] sm:$0xff] %v576
          %641 = vst [vmem:[#allocation3 + $0x60] sm:$0xff] %v577
          %642 = vst [vmem:[#allocation3 + $0x68] sm:$0xff] %v578
          %643 = vst [vmem:[#allocation3 + $0x70] sm:$0xff] %v579
          %644 = vst [vmem:[#allocation3 + $0x78] sm:$0xff] %v580
          %645 = vst [vmem:[#allocation3 + $0x80] sm:$0xff] %v581
          %646 = vst [vmem:[#allocation3 + $0x88] sm:$0xff] %v582
          %647 = vst [vmem:[#allocation3 + $0x90] sm:$0xff] %v583
          %648 = vst [vmem:[#allocation3 + $0x98] sm:$0xff] %v584
          %649 = vst [vmem:[#allocation3 + $0xa0] sm:$0xff] %v585
          %650 = vst [vmem:[#allocation3 + $0xa8] sm:$0xff] %v586
          %651 = vst [vmem:[#allocation3 + $0xb0] sm:$0xff] %v587
          %652 = vst [vmem:[#allocation3 + $0xb8] sm:$0xff] %v588
          %653 = vst [vmem:[#allocation3 + $0xc0] sm:$0xff] %v589
          %654 = vst [vmem:[#allocation3 + $0xc8] sm:$0xff] %v590
          %655 = vst [vmem:[#allocation3 + $0xd0] sm:$0xff] %v591
          %656 = vst [vmem:[#allocation3 + $0xd8] sm:$0xff] %v592
          %657 = vst [vmem:[#allocation3 + $0xe0] sm:$0xff] %v593
          %658 = vst [vmem:[#allocation3 + $0xe8] sm:$0xff] %v594
          %659 = vst [vmem:[#allocation3 + $0xf0] sm:$0xff] %v595
          %660 = vst [vmem:[#allocation3 + $0xf8] sm:$0xff] %v596
          %661 = vst [vmem:[#allocation3 + $0x100] sm:$0xff] %v597
          %662 = vst [vmem:[#allocation3 + $0x108] sm:$0xff] %v598
          %663 = vst [vmem:[#allocation3 + $0x110] sm:$0xff] %v599
          %664 = vst [vmem:[#allocation3 + $0x118] sm:$0xff] %v600
          %665 = vst [vmem:[#allocation3 + $0x120] sm:$0xff] %v601
          %666 = vst [vmem:[#allocation3 + $0x128] sm:$0xff] %v602
          %667 = vst [vmem:[#allocation3 + $0x130] sm:$0xff] %v603
          %668 = vst [vmem:[#allocation3 + $0x138] sm:$0xff] %v604
          %669 = vst [vmem:[#allocation3 + $0x140] sm:$0xff] %v605
          %670 = vst [vmem:[#allocation3 + $0x148] sm:$0xff] %v606
          %671 = vst [vmem:[#allocation3 + $0x150] sm:$0xff] %v607
          %672 = vst [vmem:[#allocation3 + $0x158] sm:$0xff] %v608
          %673 = vst [vmem:[#allocation3 + $0x160] sm:$0xff] %v609
          %674 = vst [vmem:[#allocation3 + $0x168] sm:$0xff] %v610
          %675 = vst [vmem:[#allocation3 + $0x170] sm:$0xff] %v611
          %676 = vst [vmem:[#allocation3 + $0x178] sm:$0xff] %v612
          %677 = vst [vmem:[#allocation3 + $0x180] sm:$0xff] %v613
          %678 = vst [vmem:[#allocation3 + $0x188] sm:$0xff] %v614
          %679 = vst [vmem:[#allocation3 + $0x190] sm:$0xff] %v615
          %680 = vst [vmem:[#allocation3 + $0x198] sm:$0xff] %v616
          %681 = vst [vmem:[#allocation3 + $0x1a0] sm:$0xff] %v617
          %682 = vst [vmem:[#allocation3 + $0x1a8] sm:$0xff] %v618
          %683 = vst [vmem:[#allocation3 + $0x1b0] sm:$0xff] %v619
          %684 = vst [vmem:[#allocation3 + $0x1b8] sm:$0xff] %v620
          %685 = vst [vmem:[#allocation3 + $0x1c0] sm:$0xff] %v621
          %686 = vst [vmem:[#allocation3 + $0x1c8] sm:$0xff] %v622
          %687 = vst [vmem:[#allocation3 + $0x1d0] sm:$0xff] %v623
          %688 = vst [vmem:[#allocation3 + $0x1d8] sm:$0xff] %v624
          %689 = vst [vmem:[#allocation3 + $0x1e0] sm:$0xff] %v625
          %690 = vst [vmem:[#allocation3 + $0x1e8] sm:$0xff] %v626
          %691 = vst [vmem:[#allocation3 + $0x1f0] sm:$0xff] %v627
          %692 = vst [vmem:[#allocation3 + $0x1f8] sm:$0xff] %v628
        $region56: #{resnet20_forward.1} parent=35 // pred_fallthru
          _
        %v693 = vld [vmem:[#allocation2] sm:$0xff]
        %v694 = vld [vmem:[#allocation2 + $0x8] sm:$0xff]
        %v695 = vld [vmem:[#allocation2 + $0x10] sm:$0xff]
        %v696 = vld [vmem:[#allocation2 + $0x18] sm:$0xff]
        %v697 = vld [vmem:[#allocation2 + $0x20] sm:$0xff]
        %v698 = vld [vmem:[#allocation2 + $0x28] sm:$0xff]
        %v699 = vld [vmem:[#allocation2 + $0x30] sm:$0xff]
        %v700 = vld [vmem:[#allocation2 + $0x38] sm:$0xff]
        %v701 = vld [vmem:[#allocation2 + $0x40] sm:$0xff]
        %v702 = vld [vmem:[#allocation2 + $0x48] sm:$0xff]
        %v703 = vld [vmem:[#allocation2 + $0x50] sm:$0xff]
        %v704 = vld [vmem:[#allocation2 + $0x58] sm:$0xff]
        %v705 = vld [vmem:[#allocation2 + $0x60] sm:$0xff]
        %v706 = vld [vmem:[#allocation2 + $0x68] sm:$0xff]
        %v707 = vld [vmem:[#allocation2 + $0x70] sm:$0xff]
        %v708 = vld [vmem:[#allocation2 + $0x78] sm:$0xff]
        %v709 = vld [vmem:[#allocation2 + $0x80] sm:$0xff]
        %v710 = vld [vmem:[#allocation2 + $0x88] sm:$0xff]
        %v711 = vld [vmem:[#allocation2 + $0x90] sm:$0xff]
        %v712 = vld [vmem:[#allocation2 + $0x98] sm:$0xff]
        %v713 = vld [vmem:[#allocation2 + $0xa0] sm:$0xff]
        %v714 = vld [vmem:[#allocation2 + $0xa8] sm:$0xff]
        %v715 = vld [vmem:[#allocation2 + $0xb0] sm:$0xff]
        %v716 = vld [vmem:[#allocation2 + $0xb8] sm:$0xff]
        %v717 = vld [vmem:[#allocation2 + $0xc0] sm:$0xff]
        %v718 = vld [vmem:[#allocation2 + $0xc8] sm:$0xff]
        %v719 = vld [vmem:[#allocation2 + $0xd0] sm:$0xff]
        %v720 = vld [vmem:[#allocation2 + $0xd8] sm:$0xff]
        %v721 = vld [vmem:[#allocation2 + $0xe0] sm:$0xff]
        %v722 = vld [vmem:[#allocation2 + $0xe8] sm:$0xff]
        %v723 = vld [vmem:[#allocation2 + $0xf0] sm:$0xff]
        %v724 = vld [vmem:[#allocation2 + $0xf8] sm:$0xff]
        %v725 = vld [vmem:[#allocation2 + $0x100] sm:$0xff]
        %v726 = vld [vmem:[#allocation2 + $0x108] sm:$0xff]
        %v727 = vld [vmem:[#allocation2 + $0x110] sm:$0xff]
        %v728 = vld [vmem:[#allocation2 + $0x118] sm:$0xff]
        %v729 = vld [vmem:[#allocation2 + $0x120] sm:$0xff]
        %v730 = vld [vmem:[#allocation2 + $0x128] sm:$0xff]
        %v731 = vld [vmem:[#allocation2 + $0x130] sm:$0xff]
        %v732 = vld [vmem:[#allocation2 + $0x138] sm:$0xff]
        %v733 = vld [vmem:[#allocation2 + $0x140] sm:$0xff]
        %v734 = vld [vmem:[#allocation2 + $0x148] sm:$0xff]
        %v735 = vld [vmem:[#allocation2 + $0x150] sm:$0xff]
        %v736 = vld [vmem:[#allocation2 + $0x158] sm:$0xff]
        %v737 = vld [vmem:[#allocation2 + $0x160] sm:$0xff]
        %v738 = vld [vmem:[#allocation2 + $0x168] sm:$0xff]
        %v739 = vld [vmem:[#allocation2 + $0x170] sm:$0xff]
        %v740 = vld [vmem:[#allocation2 + $0x178] sm:$0xff]
        %v741 = vld [vmem:[#allocation2 + $0x180] sm:$0xff]
        %v742 = vld [vmem:[#allocation2 + $0x188] sm:$0xff]
        %v743 = vld [vmem:[#allocation2 + $0x190] sm:$0xff]
        %v744 = vld [vmem:[#allocation2 + $0x198] sm:$0xff]
        %v745 = vld [vmem:[#allocation2 + $0x1a0] sm:$0xff]
        %v746 = vld [vmem:[#allocation2 + $0x1a8] sm:$0xff]
        %v747 = vld [vmem:[#allocation2 + $0x1b0] sm:$0xff]
        %v748 = vld [vmem:[#allocation2 + $0x1b8] sm:$0xff]
        %v749 = vld [vmem:[#allocation2 + $0x1c0] sm:$0xff]
        %v750 = vld [vmem:[#allocation2 + $0x1c8] sm:$0xff]
        %v751 = vld [vmem:[#allocation2 + $0x1d0] sm:$0xff]
        %v752 = vld [vmem:[#allocation2 + $0x1d8] sm:$0xff]
        %v753 = vld [vmem:[#allocation2 + $0x1e0] sm:$0xff]
        %v754 = vld [vmem:[#allocation2 + $0x1e8] sm:$0xff]
        %v755 = vld [vmem:[#allocation2 + $0x1f0] sm:$0xff]
        %v756 = vld [vmem:[#allocation2 + $0x1f8] sm:$0xff]
        %v757 = vpack.c.bf16 %v694, %v693
        %v758 = vpack.c.bf16 %v696, %v695
        %v759 = vpack.c.bf16 %v698, %v697
        %v760 = vpack.c.bf16 %v700, %v699
        %v761 = vpack.c.bf16 %v702, %v701
        %v762 = vpack.c.bf16 %v704, %v703
        %v763 = vpack.c.bf16 %v706, %v705
        %v764 = vpack.c.bf16 %v708, %v707
        %v765 = vpack.c.bf16 %v710, %v709
        %v766 = vpack.c.bf16 %v712, %v711
        %v767 = vpack.c.bf16 %v714, %v713
        %v768 = vpack.c.bf16 %v716, %v715
        %v769 = vpack.c.bf16 %v718, %v717
        %v770 = vpack.c.bf16 %v720, %v719
        %v771 = vpack.c.bf16 %v722, %v721
        %v772 = vpack.c.bf16 %v724, %v723
        %v773 = vpack.c.bf16 %v726, %v725
        %v774 = vpack.c.bf16 %v728, %v727
        %v775 = vpack.c.bf16 %v730, %v729
        %v776 = vpack.c.bf16 %v732, %v731
        %v777 = vpack.c.bf16 %v734, %v733
        %v778 = vpack.c.bf16 %v736, %v735
        %v779 = vpack.c.bf16 %v738, %v737
        %v780 = vpack.c.bf16 %v740, %v739
        %v781 = vpack.c.bf16 %v742, %v741
        %v782 = vpack.c.bf16 %v744, %v743
        %v783 = vpack.c.bf16 %v746, %v745
        %v784 = vpack.c.bf16 %v748, %v747
        %v785 = vpack.c.bf16 %v750, %v749
        %v786 = vpack.c.bf16 %v752, %v751
        %v787 = vpack.c.bf16 %v754, %v753
        %v788 = vpack.c.bf16 %v756, %v755
        %s789 = sld [smem:[#allocation7 + %s66]]
        %p790 = scmp.eq.s32.totalorder %s789, 0
        // Predicated region
        $region57: #{resnet20_forward.1} parent=35 // pred_check
          %p791 = pneg %p790
        $region58: #{resnet20_forward.1} parent=35 // pred_check_branch
          %793 = sbr.rel (%p791) target = $region60
        $region59: #{resnet20_forward.1} parent=35 // pred_region
          %s794 = sld [smem:[#allocation8 + %s66]]
          %v795 = vlaneseq
          %v796 = vshrl.u32 %v795, 7
          %v797 = vadd.s32 %v796, 8
          %v798 = vadd.s32 %v796, 16
          %v799 = vadd.s32 %v796, 24
          %v800 = vadd.s32 %v796, 32
          %v801 = vadd.s32 %v796, 40
          %v802 = vadd.s32 %v796, 48
          %v803 = vadd.s32 %v796, 56
          %v804 = vadd.s32 %v796, 64
          %v805 = vadd.s32 %v796, 72
          %v806 = vadd.s32 %v796, 80
          %v807 = vadd.s32 %v796, 88
          %v808 = vadd.s32 %v796, 96
          %v809 = vadd.s32 %v796, 104
          %v810 = vadd.s32 %v796, 112
          %v811 = vadd.s32 %v796, 120
          %v812 = vadd.s32 %v796, 128
          %v813 = vadd.s32 %v796, 136
          %v814 = vadd.s32 %v796, 144
          %v815 = vadd.s32 %v796, 152
          %v816 = vadd.s32 %v796, 160
          %v817 = vadd.s32 %v796, 168
          %v818 = vadd.s32 %v796, 176
          %v819 = vadd.s32 %v796, 184
          %v820 = vadd.s32 %v796, 192
          %v821 = vadd.s32 %v796, 200
          %v822 = vadd.s32 %v796, 208
          %v823 = vadd.s32 %v796, 216
          %v824 = vadd.s32 %v796, 224
          %v825 = vadd.s32 %v796, 232
          %v826 = vadd.s32 %v796, 240
          %v827 = vadd.s32 %v796, 248
          %v828 = vstv %s794
          %v829 = vand.u32 %v796, %v828
          %v830 = vand.u32 %v797, %v828
          %v831 = vand.u32 %v798, %v828
          %v832 = vand.u32 %v799, %v828
          %v833 = vand.u32 %v800, %v828
          %v834 = vand.u32 %v801, %v828
          %v835 = vand.u32 %v802, %v828
          %v836 = vand.u32 %v803, %v828
          %v837 = vand.u32 %v804, %v828
          %v838 = vand.u32 %v805, %v828
          %v839 = vand.u32 %v806, %v828
          %v840 = vand.u32 %v807, %v828
          %v841 = vand.u32 %v808, %v828
          %v842 = vand.u32 %v809, %v828
          %v843 = vand.u32 %v810, %v828
          %v844 = vand.u32 %v811, %v828
          %v845 = vand.u32 %v812, %v828
          %v846 = vand.u32 %v813, %v828
          %v847 = vand.u32 %v814, %v828
          %v848 = vand.u32 %v815, %v828
          %v849 = vand.u32 %v816, %v828
          %v850 = vand.u32 %v817, %v828
          %v851 = vand.u32 %v818, %v828
          %v852 = vand.u32 %v819, %v828
          %v853 = vand.u32 %v820, %v828
          %v854 = vand.u32 %v821, %v828
          %v855 = vand.u32 %v822, %v828
          %v856 = vand.u32 %v823, %v828
          %v857 = vand.u32 %v824, %v828
          %v858 = vand.u32 %v825, %v828
          %v859 = vand.u32 %v826, %v828
          %v860 = vand.u32 %v827, %v828
          %vm861 = vcmp.ne.s32.totalorder %v829, 0
          %vm862 = vcmp.ne.s32.totalorder %v830, 0
          %vm863 = vcmp.ne.s32.totalorder %v831, 0
          %vm864 = vcmp.ne.s32.totalorder %v832, 0
          %vm865 = vcmp.ne.s32.totalorder %v833, 0
          %vm866 = vcmp.ne.s32.totalorder %v834, 0
          %vm867 = vcmp.ne.s32.totalorder %v835, 0
          %vm868 = vcmp.ne.s32.totalorder %v836, 0
          %vm869 = vcmp.ne.s32.totalorder %v837, 0
          %vm870 = vcmp.ne.s32.totalorder %v838, 0
          %vm871 = vcmp.ne.s32.totalorder %v839, 0
          %vm872 = vcmp.ne.s32.totalorder %v840, 0
          %vm873 = vcmp.ne.s32.totalorder %v841, 0
          %vm874 = vcmp.ne.s32.totalorder %v842, 0
          %vm875 = vcmp.ne.s32.totalorder %v843, 0
          %vm876 = vcmp.ne.s32.totalorder %v844, 0
          %vm877 = vcmp.ne.s32.totalorder %v845, 0
          %vm878 = vcmp.ne.s32.totalorder %v846, 0
          %vm879 = vcmp.ne.s32.totalorder %v847, 0
          %vm880 = vcmp.ne.s32.totalorder %v848, 0
          %vm881 = vcmp.ne.s32.totalorder %v849, 0
          %vm882 = vcmp.ne.s32.totalorder %v850, 0
          %vm883 = vcmp.ne.s32.totalorder %v851, 0
          %vm884 = vcmp.ne.s32.totalorder %v852, 0
          %vm885 = vcmp.ne.s32.totalorder %v853, 0
          %vm886 = vcmp.ne.s32.totalorder %v854, 0
          %vm887 = vcmp.ne.s32.totalorder %v855, 0
          %vm888 = vcmp.ne.s32.totalorder %v856, 0
          %vm889 = vcmp.ne.s32.totalorder %v857, 0
          %vm890 = vcmp.ne.s32.totalorder %v858, 0
          %vm891 = vcmp.ne.s32.totalorder %v859, 0
          %vm892 = vcmp.ne.s32.totalorder %v860, 0
          %v893 = vrot.slane %v693, 7
          %v894 = vrot.slane %v694, 7
          %v895 = vrot.slane %v695, 7
          %v896 = vrot.slane %v696, 7
          %v897 = vrot.slane %v697, 7
          %v898 = vrot.slane %v698, 7
          %v899 = vrot.slane %v699, 7
          %v900 = vrot.slane %v700, 7
          %v901 = vrot.slane %v701, 7
          %v902 = vrot.slane %v702, 7
          %v903 = vrot.slane %v703, 7
          %v904 = vrot.slane %v704, 7
          %v905 = vrot.slane %v705, 7
          %v906 = vrot.slane %v706, 7
          %v907 = vrot.slane %v707, 7
          %v908 = vrot.slane %v708, 7
          %v909 = vrot.slane %v709, 7
          %v910 = vrot.slane %v710, 7
          %v911 = vrot.slane %v711, 7
          %v912 = vrot.slane %v712, 7
          %v913 = vrot.slane %v713, 7
          %v914 = vrot.slane %v714, 7
          %v915 = vrot.slane %v715, 7
          %v916 = vrot.slane %v716, 7
          %v917 = vrot.slane %v717, 7
          %v918 = vrot.slane %v718, 7
          %v919 = vrot.slane %v719, 7
          %v920 = vrot.slane %v720, 7
          %v921 = vrot.slane %v721, 7
          %v922 = vrot.slane %v722, 7
          %v923 = vrot.slane %v723, 7
          %v924 = vrot.slane %v724, 7
          %v925 = vrot.slane %v725, 7
          %v926 = vrot.slane %v726, 7
          %v927 = vrot.slane %v727, 7
          %v928 = vrot.slane %v728, 7
          %v929 = vrot.slane %v729, 7
          %v930 = vrot.slane %v730, 7
          %v931 = vrot.slane %v731, 7
          %v932 = vrot.slane %v732, 7
          %v933 = vrot.slane %v733, 7
          %v934 = vrot.slane %v734, 7
          %v935 = vrot.slane %v735, 7
          %v936 = vrot.slane %v736, 7
          %v937 = vrot.slane %v737, 7
          %v938 = vrot.slane %v738, 7
          %v939 = vrot.slane %v739, 7
          %v940 = vrot.slane %v740, 7
          %v941 = vrot.slane %v741, 7
          %v942 = vrot.slane %v742, 7
          %v943 = vrot.slane %v743, 7
          %v944 = vrot.slane %v744, 7
          %v945 = vrot.slane %v745, 7
          %v946 = vrot.slane %v746, 7
          %v947 = vrot.slane %v747, 7
          %v948 = vrot.slane %v748, 7
          %v949 = vrot.slane %v749, 7
          %v950 = vrot.slane %v750, 7
          %v951 = vrot.slane %v751, 7
          %v952 = vrot.slane %v752, 7
          %v953 = vrot.slane %v753, 7
          %v954 = vrot.slane %v754, 7
          %v955 = vrot.slane %v755, 7
          %v956 = vrot.slane %v756, 7
          %vm957 = vcmp.lt.s32.totalorder %v796, 1
          %v958 = vsel %vm957, %v953, %v955
          %v959 = vsel %vm957, %v954, %v956
          %v960 = vsel %vm957, %v951, %v953
          %v961 = vsel %vm957, %v952, %v954
          %v962 = vsel %vm957, %v949, %v951
          %v963 = vsel %vm957, %v950, %v952
          %v964 = vsel %vm957, %v947, %v949
          %v965 = vsel %vm957, %v948, %v950
          %v966 = vsel %vm957, %v945, %v947
          %v967 = vsel %vm957, %v946, %v948
          %v968 = vsel %vm957, %v943, %v945
          %v969 = vsel %vm957, %v944, %v946
          %v970 = vsel %vm957, %v941, %v943
          %v971 = vsel %vm957, %v942, %v944
          %v972 = vsel %vm957, %v939, %v941
          %v973 = vsel %vm957, %v940, %v942
          %v974 = vsel %vm957, %v937, %v939
          %v975 = vsel %vm957, %v938, %v940
          %v976 = vsel %vm957, %v935, %v937
          %v977 = vsel %vm957, %v936, %v938
          %v978 = vsel %vm957, %v933, %v935
          %v979 = vsel %vm957, %v934, %v936
          %v980 = vsel %vm957, %v931, %v933
          %v981 = vsel %vm957, %v932, %v934
          %v982 = vsel %vm957, %v929, %v931
          %v983 = vsel %vm957, %v930, %v932
          %v984 = vsel %vm957, %v927, %v929
          %v985 = vsel %vm957, %v928, %v930
          %v986 = vsel %vm957, %v925, %v927
          %v987 = vsel %vm957, %v926, %v928
          %v988 = vsel %vm957, %v923, %v925
          %v989 = vsel %vm957, %v924, %v926
          %v990 = vsel %vm957, %v921, %v923
          %v991 = vsel %vm957, %v922, %v924
          %v992 = vsel %vm957, %v919, %v921
          %v993 = vsel %vm957, %v920, %v922
          %v994 = vsel %vm957, %v917, %v919
          %v995 = vsel %vm957, %v918, %v920
          %v996 = vsel %vm957, %v915, %v917
          %v997 = vsel %vm957, %v916, %v918
          %v998 = vsel %vm957, %v913, %v915
          %v999 = vsel %vm957, %v914, %v916
          %v1000 = vsel %vm957, %v911, %v913
          %v1001 = vsel %vm957, %v912, %v914
          %v1002 = vsel %vm957, %v909, %v911
          %v1003 = vsel %vm957, %v910, %v912
          %v1004 = vsel %vm957, %v907, %v909
          %v1005 = vsel %vm957, %v908, %v910
          %v1006 = vsel %vm957, %v905, %v907
          %v1007 = vsel %vm957, %v906, %v908
          %v1008 = vsel %vm957, %v903, %v905
          %v1009 = vsel %vm957, %v904, %v906
          %v1010 = vsel %vm957, %v901, %v903
          %v1011 = vsel %vm957, %v902, %v904
          %v1012 = vsel %vm957, %v899, %v901
          %v1013 = vsel %vm957, %v900, %v902
          %v1014 = vsel %vm957, %v897, %v899
          %v1015 = vsel %vm957, %v898, %v900
          %v1016 = vsel %vm957, %v895, %v897
          %v1017 = vsel %vm957, %v896, %v898
          %v1018 = vsel %vm957, %v893, %v895
          %v1019 = vsel %vm957, %v894, %v896
          %v1020 = vsel %vm957, %v955, %v893
          %v1021 = vsel %vm957, %v956, %v894
          %v1022 = vsel %vm861, %v1020, 0.0
          %v1023 = vsel %vm861, %v1021, 0.0
          %v1024 = vsel %vm862, %v1018, 0.0
          %v1025 = vsel %vm862, %v1019, 0.0
          %v1026 = vsel %vm863, %v1016, 0.0
          %v1027 = vsel %vm863, %v1017, 0.0
          %v1028 = vsel %vm864, %v1014, 0.0
          %v1029 = vsel %vm864, %v1015, 0.0
          %v1030 = vsel %vm865, %v1012, 0.0
          %v1031 = vsel %vm865, %v1013, 0.0
          %v1032 = vsel %vm866, %v1010, 0.0
          %v1033 = vsel %vm866, %v1011, 0.0
          %v1034 = vsel %vm867, %v1008, 0.0
          %v1035 = vsel %vm867, %v1009, 0.0
          %v1036 = vsel %vm868, %v1006, 0.0
          %v1037 = vsel %vm868, %v1007, 0.0
          %v1038 = vsel %vm869, %v1004, 0.0
          %v1039 = vsel %vm869, %v1005, 0.0
          %v1040 = vsel %vm870, %v1002, 0.0
          %v1041 = vsel %vm870, %v1003, 0.0
          %v1042 = vsel %vm871, %v1000, 0.0
          %v1043 = vsel %vm871, %v1001, 0.0
          %v1044 = vsel %vm872, %v998, 0.0
          %v1045 = vsel %vm872, %v999, 0.0
          %v1046 = vsel %vm873, %v996, 0.0
          %v1047 = vsel %vm873, %v997, 0.0
          %v1048 = vsel %vm874, %v994, 0.0
          %v1049 = vsel %vm874, %v995, 0.0
          %v1050 = vsel %vm875, %v992, 0.0
          %v1051 = vsel %vm875, %v993, 0.0
          %v1052 = vsel %vm876, %v990, 0.0
          %v1053 = vsel %vm876, %v991, 0.0
          %v1054 = vsel %vm877, %v988, 0.0
          %v1055 = vsel %vm877, %v989, 0.0
          %v1056 = vsel %vm878, %v986, 0.0
          %v1057 = vsel %vm878, %v987, 0.0
          %v1058 = vsel %vm879, %v984, 0.0
          %v1059 = vsel %vm879, %v985, 0.0
          %v1060 = vsel %vm880, %v982, 0.0
          %v1061 = vsel %vm880, %v983, 0.0
          %v1062 = vsel %vm881, %v980, 0.0
          %v1063 = vsel %vm881, %v981, 0.0
          %v1064 = vsel %vm882, %v978, 0.0
          %v1065 = vsel %vm882, %v979, 0.0
          %v1066 = vsel %vm883, %v976, 0.0
          %v1067 = vsel %vm883, %v977, 0.0
          %v1068 = vsel %vm884, %v974, 0.0
          %v1069 = vsel %vm884, %v975, 0.0
          %v1070 = vsel %vm885, %v972, 0.0
          %v1071 = vsel %vm885, %v973, 0.0
          %v1072 = vsel %vm886, %v970, 0.0
          %v1073 = vsel %vm886, %v971, 0.0
          %v1074 = vsel %vm887, %v968, 0.0
          %v1075 = vsel %vm887, %v969, 0.0
          %v1076 = vsel %vm888, %v966, 0.0
          %v1077 = vsel %vm888, %v967, 0.0
          %v1078 = vsel %vm889, %v964, 0.0
          %v1079 = vsel %vm889, %v965, 0.0
          %v1080 = vsel %vm890, %v962, 0.0
          %v1081 = vsel %vm890, %v963, 0.0
          %v1082 = vsel %vm891, %v960, 0.0
          %v1083 = vsel %vm891, %v961, 0.0
          %v1084 = vsel %vm892, %v958, 0.0
          %v1085 = vsel %vm892, %v959, 0.0
          %vm1086 = vcmp.ne.s32.totalorder %v829, %v828
          %vm1087 = vcmp.ne.s32.totalorder %v830, %v828
          %vm1088 = vcmp.ne.s32.totalorder %v831, %v828
          %vm1089 = vcmp.ne.s32.totalorder %v832, %v828
          %vm1090 = vcmp.ne.s32.totalorder %v833, %v828
          %vm1091 = vcmp.ne.s32.totalorder %v834, %v828
          %vm1092 = vcmp.ne.s32.totalorder %v835, %v828
          %vm1093 = vcmp.ne.s32.totalorder %v836, %v828
          %vm1094 = vcmp.ne.s32.totalorder %v837, %v828
          %vm1095 = vcmp.ne.s32.totalorder %v838, %v828
          %vm1096 = vcmp.ne.s32.totalorder %v839, %v828
          %vm1097 = vcmp.ne.s32.totalorder %v840, %v828
          %vm1098 = vcmp.ne.s32.totalorder %v841, %v828
          %vm1099 = vcmp.ne.s32.totalorder %v842, %v828
          %vm1100 = vcmp.ne.s32.totalorder %v843, %v828
          %vm1101 = vcmp.ne.s32.totalorder %v844, %v828
          %vm1102 = vcmp.ne.s32.totalorder %v845, %v828
          %vm1103 = vcmp.ne.s32.totalorder %v846, %v828
          %vm1104 = vcmp.ne.s32.totalorder %v847, %v828
          %vm1105 = vcmp.ne.s32.totalorder %v848, %v828
          %vm1106 = vcmp.ne.s32.totalorder %v849, %v828
          %vm1107 = vcmp.ne.s32.totalorder %v850, %v828
          %vm1108 = vcmp.ne.s32.totalorder %v851, %v828
          %vm1109 = vcmp.ne.s32.totalorder %v852, %v828
          %vm1110 = vcmp.ne.s32.totalorder %v853, %v828
          %vm1111 = vcmp.ne.s32.totalorder %v854, %v828
          %vm1112 = vcmp.ne.s32.totalorder %v855, %v828
          %vm1113 = vcmp.ne.s32.totalorder %v856, %v828
          %vm1114 = vcmp.ne.s32.totalorder %v857, %v828
          %vm1115 = vcmp.ne.s32.totalorder %v858, %v828
          %vm1116 = vcmp.ne.s32.totalorder %v859, %v828
          %vm1117 = vcmp.ne.s32.totalorder %v860, %v828
          %v1118 = vrot.slane %v693, 1
          %v1119 = vrot.slane %v694, 1
          %v1120 = vrot.slane %v695, 1
          %v1121 = vrot.slane %v696, 1
          %v1122 = vrot.slane %v697, 1
          %v1123 = vrot.slane %v698, 1
          %v1124 = vrot.slane %v699, 1
          %v1125 = vrot.slane %v700, 1
          %v1126 = vrot.slane %v701, 1
          %v1127 = vrot.slane %v702, 1
          %v1128 = vrot.slane %v703, 1
          %v1129 = vrot.slane %v704, 1
          %v1130 = vrot.slane %v705, 1
          %v1131 = vrot.slane %v706, 1
          %v1132 = vrot.slane %v707, 1
          %v1133 = vrot.slane %v708, 1
          %v1134 = vrot.slane %v709, 1
          %v1135 = vrot.slane %v710, 1
          %v1136 = vrot.slane %v711, 1
          %v1137 = vrot.slane %v712, 1
          %v1138 = vrot.slane %v713, 1
          %v1139 = vrot.slane %v714, 1
          %v1140 = vrot.slane %v715, 1
          %v1141 = vrot.slane %v716, 1
          %v1142 = vrot.slane %v717, 1
          %v1143 = vrot.slane %v718, 1
          %v1144 = vrot.slane %v719, 1
          %v1145 = vrot.slane %v720, 1
          %v1146 = vrot.slane %v721, 1
          %v1147 = vrot.slane %v722, 1
          %v1148 = vrot.slane %v723, 1
          %v1149 = vrot.slane %v724, 1
          %v1150 = vrot.slane %v725, 1
          %v1151 = vrot.slane %v726, 1
          %v1152 = vrot.slane %v727, 1
          %v1153 = vrot.slane %v728, 1
          %v1154 = vrot.slane %v729, 1
          %v1155 = vrot.slane %v730, 1
          %v1156 = vrot.slane %v731, 1
          %v1157 = vrot.slane %v732, 1
          %v1158 = vrot.slane %v733, 1
          %v1159 = vrot.slane %v734, 1
          %v1160 = vrot.slane %v735, 1
          %v1161 = vrot.slane %v736, 1
          %v1162 = vrot.slane %v737, 1
          %v1163 = vrot.slane %v738, 1
          %v1164 = vrot.slane %v739, 1
          %v1165 = vrot.slane %v740, 1
          %v1166 = vrot.slane %v741, 1
          %v1167 = vrot.slane %v742, 1
          %v1168 = vrot.slane %v743, 1
          %v1169 = vrot.slane %v744, 1
          %v1170 = vrot.slane %v745, 1
          %v1171 = vrot.slane %v746, 1
          %v1172 = vrot.slane %v747, 1
          %v1173 = vrot.slane %v748, 1
          %v1174 = vrot.slane %v749, 1
          %v1175 = vrot.slane %v750, 1
          %v1176 = vrot.slane %v751, 1
          %v1177 = vrot.slane %v752, 1
          %v1178 = vrot.slane %v753, 1
          %v1179 = vrot.slane %v754, 1
          %v1180 = vrot.slane %v755, 1
          %v1181 = vrot.slane %v756, 1
          %vm1182 = vcmp.lt.s32.totalorder %v796, 7
          %v1183 = vsel %vm1182, %v1178, %v1180
          %v1184 = vsel %vm1182, %v1179, %v1181
          %v1185 = vsel %vm1182, %v1176, %v1178
          %v1186 = vsel %vm1182, %v1177, %v1179
          %v1187 = vsel %vm1182, %v1174, %v1176
          %v1188 = vsel %vm1182, %v1175, %v1177
          %v1189 = vsel %vm1182, %v1172, %v1174
          %v1190 = vsel %vm1182, %v1173, %v1175
          %v1191 = vsel %vm1182, %v1170, %v1172
          %v1192 = vsel %vm1182, %v1171, %v1173
          %v1193 = vsel %vm1182, %v1168, %v1170
          %v1194 = vsel %vm1182, %v1169, %v1171
          %v1195 = vsel %vm1182, %v1166, %v1168
          %v1196 = vsel %vm1182, %v1167, %v1169
          %v1197 = vsel %vm1182, %v1164, %v1166
          %v1198 = vsel %vm1182, %v1165, %v1167
          %v1199 = vsel %vm1182, %v1162, %v1164
          %v1200 = vsel %vm1182, %v1163, %v1165
          %v1201 = vsel %vm1182, %v1160, %v1162
          %v1202 = vsel %vm1182, %v1161, %v1163
          %v1203 = vsel %vm1182, %v1158, %v1160
          %v1204 = vsel %vm1182, %v1159, %v1161
          %v1205 = vsel %vm1182, %v1156, %v1158
          %v1206 = vsel %vm1182, %v1157, %v1159
          %v1207 = vsel %vm1182, %v1154, %v1156
          %v1208 = vsel %vm1182, %v1155, %v1157
          %v1209 = vsel %vm1182, %v1152, %v1154
          %v1210 = vsel %vm1182, %v1153, %v1155
          %v1211 = vsel %vm1182, %v1150, %v1152
          %v1212 = vsel %vm1182, %v1151, %v1153
          %v1213 = vsel %vm1182, %v1148, %v1150
          %v1214 = vsel %vm1182, %v1149, %v1151
          %v1215 = vsel %vm1182, %v1146, %v1148
          %v1216 = vsel %vm1182, %v1147, %v1149
          %v1217 = vsel %vm1182, %v1144, %v1146
          %v1218 = vsel %vm1182, %v1145, %v1147
          %v1219 = vsel %vm1182, %v1142, %v1144
          %v1220 = vsel %vm1182, %v1143, %v1145
          %v1221 = vsel %vm1182, %v1140, %v1142
          %v1222 = vsel %vm1182, %v1141, %v1143
          %v1223 = vsel %vm1182, %v1138, %v1140
          %v1224 = vsel %vm1182, %v1139, %v1141
          %v1225 = vsel %vm1182, %v1136, %v1138
          %v1226 = vsel %vm1182, %v1137, %v1139
          %v1227 = vsel %vm1182, %v1134, %v1136
          %v1228 = vsel %vm1182, %v1135, %v1137
          %v1229 = vsel %vm1182, %v1132, %v1134
          %v1230 = vsel %vm1182, %v1133, %v1135
          %v1231 = vsel %vm1182, %v1130, %v1132
          %v1232 = vsel %vm1182, %v1131, %v1133
          %v1233 = vsel %vm1182, %v1128, %v1130
          %v1234 = vsel %vm1182, %v1129, %v1131
          %v1235 = vsel %vm1182, %v1126, %v1128
          %v1236 = vsel %vm1182, %v1127, %v1129
          %v1237 = vsel %vm1182, %v1124, %v1126
          %v1238 = vsel %vm1182, %v1125, %v1127
          %v1239 = vsel %vm1182, %v1122, %v1124
          %v1240 = vsel %vm1182, %v1123, %v1125
          %v1241 = vsel %vm1182, %v1120, %v1122
          %v1242 = vsel %vm1182, %v1121, %v1123
          %v1243 = vsel %vm1182, %v1118, %v1120
          %v1244 = vsel %vm1182, %v1119, %v1121
          %v1245 = vsel %vm1182, %v1180, %v1118
          %v1246 = vsel %vm1182, %v1181, %v1119
          %v1247 = vsel %vm1086, %v1243, 0.0
          %v1248 = vsel %vm1086, %v1244, 0.0
          %v1249 = vsel %vm1087, %v1241, 0.0
          %v1250 = vsel %vm1087, %v1242, 0.0
          %v1251 = vsel %vm1088, %v1239, 0.0
          %v1252 = vsel %vm1088, %v1240, 0.0
          %v1253 = vsel %vm1089, %v1237, 0.0
          %v1254 = vsel %vm1089, %v1238, 0.0
          %v1255 = vsel %vm1090, %v1235, 0.0
          %v1256 = vsel %vm1090, %v1236, 0.0
          %v1257 = vsel %vm1091, %v1233, 0.0
          %v1258 = vsel %vm1091, %v1234, 0.0
          %v1259 = vsel %vm1092, %v1231, 0.0
          %v1260 = vsel %vm1092, %v1232, 0.0
          %v1261 = vsel %vm1093, %v1229, 0.0
          %v1262 = vsel %vm1093, %v1230, 0.0
          %v1263 = vsel %vm1094, %v1227, 0.0
          %v1264 = vsel %vm1094, %v1228, 0.0
          %v1265 = vsel %vm1095, %v1225, 0.0
          %v1266 = vsel %vm1095, %v1226, 0.0
          %v1267 = vsel %vm1096, %v1223, 0.0
          %v1268 = vsel %vm1096, %v1224, 0.0
          %v1269 = vsel %vm1097, %v1221, 0.0
          %v1270 = vsel %vm1097, %v1222, 0.0
          %v1271 = vsel %vm1098, %v1219, 0.0
          %v1272 = vsel %vm1098, %v1220, 0.0
          %v1273 = vsel %vm1099, %v1217, 0.0
          %v1274 = vsel %vm1099, %v1218, 0.0
          %v1275 = vsel %vm1100, %v1215, 0.0
          %v1276 = vsel %vm1100, %v1216, 0.0
          %v1277 = vsel %vm1101, %v1213, 0.0
          %v1278 = vsel %vm1101, %v1214, 0.0
          %v1279 = vsel %vm1102, %v1211, 0.0
          %v1280 = vsel %vm1102, %v1212, 0.0
          %v1281 = vsel %vm1103, %v1209, 0.0
          %v1282 = vsel %vm1103, %v1210, 0.0
          %v1283 = vsel %vm1104, %v1207, 0.0
          %v1284 = vsel %vm1104, %v1208, 0.0
          %v1285 = vsel %vm1105, %v1205, 0.0
          %v1286 = vsel %vm1105, %v1206, 0.0
          %v1287 = vsel %vm1106, %v1203, 0.0
          %v1288 = vsel %vm1106, %v1204, 0.0
          %v1289 = vsel %vm1107, %v1201, 0.0
          %v1290 = vsel %vm1107, %v1202, 0.0
          %v1291 = vsel %vm1108, %v1199, 0.0
          %v1292 = vsel %vm1108, %v1200, 0.0
          %v1293 = vsel %vm1109, %v1197, 0.0
          %v1294 = vsel %vm1109, %v1198, 0.0
          %v1295 = vsel %vm1110, %v1195, 0.0
          %v1296 = vsel %vm1110, %v1196, 0.0
          %v1297 = vsel %vm1111, %v1193, 0.0
          %v1298 = vsel %vm1111, %v1194, 0.0
          %v1299 = vsel %vm1112, %v1191, 0.0
          %v1300 = vsel %vm1112, %v1192, 0.0
          %v1301 = vsel %vm1113, %v1189, 0.0
          %v1302 = vsel %vm1113, %v1190, 0.0
          %v1303 = vsel %vm1114, %v1187, 0.0
          %v1304 = vsel %vm1114, %v1188, 0.0
          %v1305 = vsel %vm1115, %v1185, 0.0
          %v1306 = vsel %vm1115, %v1186, 0.0
          %v1307 = vsel %vm1116, %v1183, 0.0
          %v1308 = vsel %vm1116, %v1184, 0.0
          %v1309 = vsel %vm1117, %v1245, 0.0
          %v1310 = vsel %vm1117, %v1246, 0.0
          %v1311 = vpack.c.bf16 %v1023, %v1022
          %v1312 = vpack.c.bf16 %v1025, %v1024
          %v1313 = vpack.c.bf16 %v1027, %v1026
          %v1314 = vpack.c.bf16 %v1029, %v1028
          %v1315 = vpack.c.bf16 %v1031, %v1030
          %v1316 = vpack.c.bf16 %v1033, %v1032
          %v1317 = vpack.c.bf16 %v1035, %v1034
          %v1318 = vpack.c.bf16 %v1037, %v1036
          %v1319 = vpack.c.bf16 %v1039, %v1038
          %v1320 = vpack.c.bf16 %v1041, %v1040
          %v1321 = vpack.c.bf16 %v1043, %v1042
          %v1322 = vpack.c.bf16 %v1045, %v1044
          %v1323 = vpack.c.bf16 %v1047, %v1046
          %v1324 = vpack.c.bf16 %v1049, %v1048
          %v1325 = vpack.c.bf16 %v1051, %v1050
          %v1326 = vpack.c.bf16 %v1053, %v1052
          %v1327 = vpack.c.bf16 %v1055, %v1054
          %v1328 = vpack.c.bf16 %v1057, %v1056
          %v1329 = vpack.c.bf16 %v1059, %v1058
          %v1330 = vpack.c.bf16 %v1061, %v1060
          %v1331 = vpack.c.bf16 %v1063, %v1062
          %v1332 = vpack.c.bf16 %v1065, %v1064
          %v1333 = vpack.c.bf16 %v1067, %v1066
          %v1334 = vpack.c.bf16 %v1069, %v1068
          %v1335 = vpack.c.bf16 %v1071, %v1070
          %v1336 = vpack.c.bf16 %v1073, %v1072
          %v1337 = vpack.c.bf16 %v1075, %v1074
          %v1338 = vpack.c.bf16 %v1077, %v1076
          %v1339 = vpack.c.bf16 %v1079, %v1078
          %v1340 = vpack.c.bf16 %v1081, %v1080
          %v1341 = vpack.c.bf16 %v1083, %v1082
          %v1342 = vpack.c.bf16 %v1085, %v1084
          %1343 = vst [vmem:[#allocation4] sm:$0xff] %v1311
          %1344 = vst [vmem:[#allocation4 + $0x18] sm:$0xff] %v1312
          %1345 = vst [vmem:[#allocation4 + $0x30] sm:$0xff] %v1313
          %1346 = vst [vmem:[#allocation4 + $0x48] sm:$0xff] %v1314
          %1347 = vst [vmem:[#allocation4 + $0x60] sm:$0xff] %v1315
          %1348 = vst [vmem:[#allocation4 + $0x78] sm:$0xff] %v1316
          %1349 = vst [vmem:[#allocation4 + $0x90] sm:$0xff] %v1317
          %1350 = vst [vmem:[#allocation4 + $0xa8] sm:$0xff] %v1318
          %1351 = vst [vmem:[#allocation4 + $0xc0] sm:$0xff] %v1319
          %1352 = vst [vmem:[#allocation4 + $0xd8] sm:$0xff] %v1320
          %1353 = vst [vmem:[#allocation4 + $0xf0] sm:$0xff] %v1321
          %1354 = vst [vmem:[#allocation4 + $0x108] sm:$0xff] %v1322
          %1355 = vst [vmem:[#allocation4 + $0x120] sm:$0xff] %v1323
          %1356 = vst [vmem:[#allocation4 + $0x138] sm:$0xff] %v1324
          %1357 = vst [vmem:[#allocation4 + $0x150] sm:$0xff] %v1325
          %1358 = vst [vmem:[#allocation4 + $0x168] sm:$0xff] %v1326
          %1359 = vst [vmem:[#allocation4 + $0x180] sm:$0xff] %v1327
          %1360 = vst [vmem:[#allocation4 + $0x198] sm:$0xff] %v1328
          %1361 = vst [vmem:[#allocation4 + $0x1b0] sm:$0xff] %v1329
          %1362 = vst [vmem:[#allocation4 + $0x1c8] sm:$0xff] %v1330
          %1363 = vst [vmem:[#allocation4 + $0x1e0] sm:$0xff] %v1331
          %1364 = vst [vmem:[#allocation4 + $0x1f8] sm:$0xff] %v1332
          %1365 = vst [vmem:[#allocation4 + $0x210] sm:$0xff] %v1333
          %1366 = vst [vmem:[#allocation4 + $0x228] sm:$0xff] %v1334
          %1367 = vst [vmem:[#allocation4 + $0x240] sm:$0xff] %v1335
          %1368 = vst [vmem:[#allocation4 + $0x258] sm:$0xff] %v1336
          %1369 = vst [vmem:[#allocation4 + $0x270] sm:$0xff] %v1337
          %1370 = vst [vmem:[#allocation4 + $0x288] sm:$0xff] %v1338
          %1371 = vst [vmem:[#allocation4 + $0x2a0] sm:$0xff] %v1339
          %1372 = vst [vmem:[#allocation4 + $0x2b8] sm:$0xff] %v1340
          %1373 = vst [vmem:[#allocation4 + $0x2d0] sm:$0xff] %v1341
          %1374 = vst [vmem:[#allocation4 + $0x2e8] sm:$0xff] %v1342
          %1375 = vst [vmem:[#allocation4 + $0x8] sm:$0xff] %v757
          %1376 = vst [vmem:[#allocation4 + $0x20] sm:$0xff] %v758
          %1377 = vst [vmem:[#allocation4 + $0x38] sm:$0xff] %v759
          %1378 = vst [vmem:[#allocation4 + $0x50] sm:$0xff] %v760
          %1379 = vst [vmem:[#allocation4 + $0x68] sm:$0xff] %v761
          %1380 = vst [vmem:[#allocation4 + $0x80] sm:$0xff] %v762
          %1381 = vst [vmem:[#allocation4 + $0x98] sm:$0xff] %v763
          %1382 = vst [vmem:[#allocation4 + $0xb0] sm:$0xff] %v764
          %1383 = vst [vmem:[#allocation4 + $0xc8] sm:$0xff] %v765
          %1384 = vst [vmem:[#allocation4 + $0xe0] sm:$0xff] %v766
          %1385 = vst [vmem:[#allocation4 + $0xf8] sm:$0xff] %v767
          %1386 = vst [vmem:[#allocation4 + $0x110] sm:$0xff] %v768
          %1387 = vst [vmem:[#allocation4 + $0x128] sm:$0xff] %v769
          %1388 = vst [vmem:[#allocation4 + $0x140] sm:$0xff] %v770
          %1389 = vst [vmem:[#allocation4 + $0x158] sm:$0xff] %v771
          %1390 = vst [vmem:[#allocation4 + $0x170] sm:$0xff] %v772
          %1391 = vst [vmem:[#allocation4 + $0x188] sm:$0xff] %v773
          %1392 = vst [vmem:[#allocation4 + $0x1a0] sm:$0xff] %v774
          %1393 = vst [vmem:[#allocation4 + $0x1b8] sm:$0xff] %v775
          %1394 = vst [vmem:[#allocation4 + $0x1d0] sm:$0xff] %v776
          %1395 = vst [vmem:[#allocation4 + $0x1e8] sm:$0xff] %v777
          %1396 = vst [vmem:[#allocation4 + $0x200] sm:$0xff] %v778
          %1397 = vst [vmem:[#allocation4 + $0x218] sm:$0xff] %v779
          %1398 = vst [vmem:[#allocation4 + $0x230] sm:$0xff] %v780
          %1399 = vst [vmem:[#allocation4 + $0x248] sm:$0xff] %v781
          %1400 = vst [vmem:[#allocation4 + $0x260] sm:$0xff] %v782
          %1401 = vst [vmem:[#allocation4 + $0x278] sm:$0xff] %v783
          %1402 = vst [vmem:[#allocation4 + $0x290] sm:$0xff] %v784
          %1403 = vst [vmem:[#allocation4 + $0x2a8] sm:$0xff] %v785
          %1404 = vst [vmem:[#allocation4 + $0x2c0] sm:$0xff] %v786
          %1405 = vst [vmem:[#allocation4 + $0x2d8] sm:$0xff] %v787
          %1406 = vst [vmem:[#allocation4 + $0x2f0] sm:$0xff] %v788
          %v1407 = vpack.c.bf16 %v1248, %v1247
          %v1408 = vpack.c.bf16 %v1250, %v1249
          %v1409 = vpack.c.bf16 %v1252, %v1251
          %v1410 = vpack.c.bf16 %v1254, %v1253
          %v1411 = vpack.c.bf16 %v1256, %v1255
          %v1412 = vpack.c.bf16 %v1258, %v1257
          %v1413 = vpack.c.bf16 %v1260, %v1259
          %v1414 = vpack.c.bf16 %v1262, %v1261
          %v1415 = vpack.c.bf16 %v1264, %v1263
          %v1416 = vpack.c.bf16 %v1266, %v1265
          %v1417 = vpack.c.bf16 %v1268, %v1267
          %v1418 = vpack.c.bf16 %v1270, %v1269
          %v1419 = vpack.c.bf16 %v1272, %v1271
          %v1420 = vpack.c.bf16 %v1274, %v1273
          %v1421 = vpack.c.bf16 %v1276, %v1275
          %v1422 = vpack.c.bf16 %v1278, %v1277
          %v1423 = vpack.c.bf16 %v1280, %v1279
          %v1424 = vpack.c.bf16 %v1282, %v1281
          %v1425 = vpack.c.bf16 %v1284, %v1283
          %v1426 = vpack.c.bf16 %v1286, %v1285
          %v1427 = vpack.c.bf16 %v1288, %v1287
          %v1428 = vpack.c.bf16 %v1290, %v1289
          %v1429 = vpack.c.bf16 %v1292, %v1291
          %v1430 = vpack.c.bf16 %v1294, %v1293
          %v1431 = vpack.c.bf16 %v1296, %v1295
          %v1432 = vpack.c.bf16 %v1298, %v1297
          %v1433 = vpack.c.bf16 %v1300, %v1299
          %v1434 = vpack.c.bf16 %v1302, %v1301
          %v1435 = vpack.c.bf16 %v1304, %v1303
          %v1436 = vpack.c.bf16 %v1306, %v1305
          %v1437 = vpack.c.bf16 %v1308, %v1307
          %v1438 = vpack.c.bf16 %v1310, %v1309
          %1439 = vst [vmem:[#allocation4 + $0x10] sm:$0xff] %v1407
          %1440 = vst [vmem:[#allocation4 + $0x28] sm:$0xff] %v1408
          %1441 = vst [vmem:[#allocation4 + $0x40] sm:$0xff] %v1409
          %1442 = vst [vmem:[#allocation4 + $0x58] sm:$0xff] %v1410
          %1443 = vst [vmem:[#allocation4 + $0x70] sm:$0xff] %v1411
          %1444 = vst [vmem:[#allocation4 + $0x88] sm:$0xff] %v1412
          %1445 = vst [vmem:[#allocation4 + $0xa0] sm:$0xff] %v1413
          %1446 = vst [vmem:[#allocation4 + $0xb8] sm:$0xff] %v1414
          %1447 = vst [vmem:[#allocation4 + $0xd0] sm:$0xff] %v1415
          %1448 = vst [vmem:[#allocation4 + $0xe8] sm:$0xff] %v1416
          %1449 = vst [vmem:[#allocation4 + $0x100] sm:$0xff] %v1417
          %1450 = vst [vmem:[#allocation4 + $0x118] sm:$0xff] %v1418
          %1451 = vst [vmem:[#allocation4 + $0x130] sm:$0xff] %v1419
          %1452 = vst [vmem:[#allocation4 + $0x148] sm:$0xff] %v1420
          %1453 = vst [vmem:[#allocation4 + $0x160] sm:$0xff] %v1421
          %1454 = vst [vmem:[#allocation4 + $0x178] sm:$0xff] %v1422
          %1455 = vst [vmem:[#allocation4 + $0x190] sm:$0xff] %v1423
          %1456 = vst [vmem:[#allocation4 + $0x1a8] sm:$0xff] %v1424
          %1457 = vst [vmem:[#allocation4 + $0x1c0] sm:$0xff] %v1425
          %1458 = vst [vmem:[#allocation4 + $0x1d8] sm:$0xff] %v1426
          %1459 = vst [vmem:[#allocation4 + $0x1f0] sm:$0xff] %v1427
          %1460 = vst [vmem:[#allocation4 + $0x208] sm:$0xff] %v1428
          %1461 = vst [vmem:[#allocation4 + $0x220] sm:$0xff] %v1429
          %1462 = vst [vmem:[#allocation4 + $0x238] sm:$0xff] %v1430
          %1463 = vst [vmem:[#allocation4 + $0x250] sm:$0xff] %v1431
          %1464 = vst [vmem:[#allocation4 + $0x268] sm:$0xff] %v1432
          %1465 = vst [vmem:[#allocation4 + $0x280] sm:$0xff] %v1433
          %1466 = vst [vmem:[#allocation4 + $0x298] sm:$0xff] %v1434
          %1467 = vst [vmem:[#allocation4 + $0x2b0] sm:$0xff] %v1435
          %1468 = vst [vmem:[#allocation4 + $0x2c8] sm:$0xff] %v1436
          %1469 = vst [vmem:[#allocation4 + $0x2e0] sm:$0xff] %v1437
          %1470 = vst [vmem:[#allocation4 + $0x2f8] sm:$0xff] %v1438
        $region60: #{resnet20_forward.1} parent=35 // pred_fallthru
          _
        %s1471 = sld [smem:[#allocation7 + %s66]]
        %p1472 = scmp.eq.s32.totalorder %s1471, 1
        // Predicated region
        $region61: #{resnet20_forward.1} parent=35 // pred_check
          %p1473 = pneg %p1472
        $region62: #{resnet20_forward.1} parent=35 // pred_check_branch
          %1475 = sbr.rel (%p1473) target = $region64
        $region63: #{resnet20_forward.1} parent=35 // pred_region
          %v1476 = vld [vmem:[%s280] sm:$0xff]
          %v1477 = vld [vmem:[%s280 + $0x8] sm:$0xff]
          %v1478 = vld [vmem:[%s280 + $0x10] sm:$0xff]
          %v1479 = vld [vmem:[%s280 + $0x18] sm:$0xff]
          %v1480 = vld [vmem:[%s280 + $0x20] sm:$0xff]
          %v1481 = vld [vmem:[%s280 + $0x28] sm:$0xff]
          %v1482 = vld [vmem:[%s280 + $0x30] sm:$0xff]
          %v1483 = vld [vmem:[%s280 + $0x38] sm:$0xff]
          %v1484 = vld [vmem:[%s280 + $0x40] sm:$0xff]
          %v1485 = vld [vmem:[%s280 + $0x48] sm:$0xff]
          %v1486 = vld [vmem:[%s280 + $0x50] sm:$0xff]
          %v1487 = vld [vmem:[%s280 + $0x58] sm:$0xff]
          %v1488 = vld [vmem:[%s280 + $0x60] sm:$0xff]
          %v1489 = vld [vmem:[%s280 + $0x68] sm:$0xff]
          %v1490 = vld [vmem:[%s280 + $0x70] sm:$0xff]
          %v1491 = vld [vmem:[%s280 + $0x78] sm:$0xff]
          %v1492 = vld [vmem:[%s280 + $0x80] sm:$0xff]
          %v1493 = vld [vmem:[%s280 + $0x88] sm:$0xff]
          %v1494 = vld [vmem:[%s280 + $0x90] sm:$0xff]
          %v1495 = vld [vmem:[%s280 + $0x98] sm:$0xff]
          %v1496 = vld [vmem:[%s280 + $0xa0] sm:$0xff]
          %v1497 = vld [vmem:[%s280 + $0xa8] sm:$0xff]
          %v1498 = vld [vmem:[%s280 + $0xb0] sm:$0xff]
          %v1499 = vld [vmem:[%s280 + $0xb8] sm:$0xff]
          %v1500 = vld [vmem:[%s280 + $0xc0] sm:$0xff]
          %v1501 = vld [vmem:[%s280 + $0xc8] sm:$0xff]
          %v1502 = vld [vmem:[%s280 + $0xd0] sm:$0xff]
          %v1503 = vld [vmem:[%s280 + $0xd8] sm:$0xff]
          %v1504 = vld [vmem:[%s280 + $0xe0] sm:$0xff]
          %v1505 = vld [vmem:[%s280 + $0xe8] sm:$0xff]
          %v1506 = vld [vmem:[%s280 + $0xf0] sm:$0xff]
          %v1507 = vld [vmem:[%s280 + $0xf8] sm:$0xff]
          %v1540 = vunpack.c.l.b16 %v1476
          %v1541 = vunpack.c.h.b16 %v1476
          %v1542 = vunpack.c.l.b16 %v1477
          %v1543 = vunpack.c.h.b16 %v1477
          %v1544 = vunpack.c.l.b16 %v1478
          %v1545 = vunpack.c.h.b16 %v1478
          %v1546 = vunpack.c.l.b16 %v1479
          %v1547 = vunpack.c.h.b16 %v1479
          %v1548 = vunpack.c.l.b16 %v1480
          %v1549 = vunpack.c.h.b16 %v1480
          %v1550 = vunpack.c.l.b16 %v1481
          %v1551 = vunpack.c.h.b16 %v1481
          %v1552 = vunpack.c.l.b16 %v1482
          %v1553 = vunpack.c.h.b16 %v1482
          %v1554 = vunpack.c.l.b16 %v1483
          %v1555 = vunpack.c.h.b16 %v1483
          %v1556 = vunpack.c.l.b16 %v1484
          %v1557 = vunpack.c.h.b16 %v1484
          %v1558 = vunpack.c.l.b16 %v1485
          %v1559 = vunpack.c.h.b16 %v1485
          %v1560 = vunpack.c.l.b16 %v1486
          %v1561 = vunpack.c.h.b16 %v1486
          %v1562 = vunpack.c.l.b16 %v1487
          %v1563 = vunpack.c.h.b16 %v1487
          %v1564 = vunpack.c.l.b16 %v1488
          %v1565 = vunpack.c.h.b16 %v1488
          %v1566 = vunpack.c.l.b16 %v1489
          %v1567 = vunpack.c.h.b16 %v1489
          %v1568 = vunpack.c.l.b16 %v1490
          %v1569 = vunpack.c.h.b16 %v1490
          %v1570 = vunpack.c.l.b16 %v1491
          %v1571 = vunpack.c.h.b16 %v1491
          %v1572 = vunpack.c.l.b16 %v1492
          %v1573 = vunpack.c.h.b16 %v1492
          %v1574 = vunpack.c.l.b16 %v1493
          %v1575 = vunpack.c.h.b16 %v1493
          %v1576 = vunpack.c.l.b16 %v1494
          %v1577 = vunpack.c.h.b16 %v1494
          %v1578 = vunpack.c.l.b16 %v1495
          %v1579 = vunpack.c.h.b16 %v1495
          %v1580 = vunpack.c.l.b16 %v1496
          %v1581 = vunpack.c.h.b16 %v1496
          %v1582 = vunpack.c.l.b16 %v1497
          %v1583 = vunpack.c.h.b16 %v1497
          %v1584 = vunpack.c.l.b16 %v1498
          %v1585 = vunpack.c.h.b16 %v1498
          %v1586 = vunpack.c.l.b16 %v1499
          %v1587 = vunpack.c.h.b16 %v1499
          %v1588 = vunpack.c.l.b16 %v1500
          %v1589 = vunpack.c.h.b16 %v1500
          %v1590 = vunpack.c.l.b16 %v1501
          %v1591 = vunpack.c.h.b16 %v1501
          %v1592 = vunpack.c.l.b16 %v1502
          %v1593 = vunpack.c.h.b16 %v1502
          %v1594 = vunpack.c.l.b16 %v1503
          %v1595 = vunpack.c.h.b16 %v1503
          %v1596 = vunpack.c.l.b16 %v1504
          %v1597 = vunpack.c.h.b16 %v1504
          %v1598 = vunpack.c.l.b16 %v1505
          %v1599 = vunpack.c.h.b16 %v1505
          %v1600 = vunpack.c.l.b16 %v1506
          %v1601 = vunpack.c.h.b16 %v1506
          %v1602 = vunpack.c.l.b16 %v1507
          %v1603 = vunpack.c.h.b16 %v1507
          %v1604 = vpack.c.b16 %v1542, %v1540
          %v1605 = vpack.c.b16 %v1543, %v1541
          %v1606 = vpack.c.b16 %v1546, %v1544
          %v1607 = vpack.c.b16 %v1547, %v1545
          %v1608 = vpack.c.b16 %v1550, %v1548
          %v1609 = vpack.c.b16 %v1551, %v1549
          %v1610 = vpack.c.b16 %v1554, %v1552
          %v1611 = vpack.c.b16 %v1555, %v1553
          %v1612 = vpack.c.b16 %v1558, %v1556
          %v1613 = vpack.c.b16 %v1559, %v1557
          %v1614 = vpack.c.b16 %v1562, %v1560
          %v1615 = vpack.c.b16 %v1563, %v1561
          %v1616 = vpack.c.b16 %v1566, %v1564
          %v1617 = vpack.c.b16 %v1567, %v1565
          %v1618 = vpack.c.b16 %v1570, %v1568
          %v1619 = vpack.c.b16 %v1571, %v1569
          %v1620 = vpack.c.b16 %v1574, %v1572
          %v1621 = vpack.c.b16 %v1575, %v1573
          %v1622 = vpack.c.b16 %v1578, %v1576
          %v1623 = vpack.c.b16 %v1579, %v1577
          %v1624 = vpack.c.b16 %v1582, %v1580
          %v1625 = vpack.c.b16 %v1583, %v1581
          %v1626 = vpack.c.b16 %v1586, %v1584
          %v1627 = vpack.c.b16 %v1587, %v1585
          %v1628 = vpack.c.b16 %v1590, %v1588
          %v1629 = vpack.c.b16 %v1591, %v1589
          %v1630 = vpack.c.b16 %v1594, %v1592
          %v1631 = vpack.c.b16 %v1595, %v1593
          %v1632 = vpack.c.b16 %v1598, %v1596
          %v1633 = vpack.c.b16 %v1599, %v1597
          %v1634 = vpack.c.b16 %v1602, %v1600
          %v1635 = vpack.c.b16 %v1603, %v1601
          %v1700 = vunpack.c.l.b16 %v757
          %v1701 = vunpack.c.h.b16 %v757
          %v1702 = vunpack.c.l.b16 %v758
          %v1703 = vunpack.c.h.b16 %v758
          %v1704 = vunpack.c.l.b16 %v759
          %v1705 = vunpack.c.h.b16 %v759
          %v1706 = vunpack.c.l.b16 %v760
          %v1707 = vunpack.c.h.b16 %v760
          %v1708 = vunpack.c.l.b16 %v761
          %v1709 = vunpack.c.h.b16 %v761
          %v1710 = vunpack.c.l.b16 %v762
          %v1711 = vunpack.c.h.b16 %v762
          %v1712 = vunpack.c.l.b16 %v763
          %v1713 = vunpack.c.h.b16 %v763
          %v1714 = vunpack.c.l.b16 %v764
          %v1715 = vunpack.c.h.b16 %v764
          %v1716 = vunpack.c.l.b16 %v765
          %v1717 = vunpack.c.h.b16 %v765
          %v1718 = vunpack.c.l.b16 %v766
          %v1719 = vunpack.c.h.b16 %v766
          %v1720 = vunpack.c.l.b16 %v767
          %v1721 = vunpack.c.h.b16 %v767
          %v1722 = vunpack.c.l.b16 %v768
          %v1723 = vunpack.c.h.b16 %v768
          %v1724 = vunpack.c.l.b16 %v769
          %v1725 = vunpack.c.h.b16 %v769
          %v1726 = vunpack.c.l.b16 %v770
          %v1727 = vunpack.c.h.b16 %v770
          %v1728 = vunpack.c.l.b16 %v771
          %v1729 = vunpack.c.h.b16 %v771
          %v1730 = vunpack.c.l.b16 %v772
          %v1731 = vunpack.c.h.b16 %v772
          %v1732 = vunpack.c.l.b16 %v773
          %v1733 = vunpack.c.h.b16 %v773
          %v1734 = vunpack.c.l.b16 %v774
          %v1735 = vunpack.c.h.b16 %v774
          %v1736 = vunpack.c.l.b16 %v775
          %v1737 = vunpack.c.h.b16 %v775
          %v1738 = vunpack.c.l.b16 %v776
          %v1739 = vunpack.c.h.b16 %v776
          %v1740 = vunpack.c.l.b16 %v777
          %v1741 = vunpack.c.h.b16 %v777
          %v1742 = vunpack.c.l.b16 %v778
          %v1743 = vunpack.c.h.b16 %v778
          %v1744 = vunpack.c.l.b16 %v779
          %v1745 = vunpack.c.h.b16 %v779
          %v1746 = vunpack.c.l.b16 %v780
          %v1747 = vunpack.c.h.b16 %v780
          %v1748 = vunpack.c.l.b16 %v781
          %v1749 = vunpack.c.h.b16 %v781
          %v1750 = vunpack.c.l.b16 %v782
          %v1751 = vunpack.c.h.b16 %v782
          %v1752 = vunpack.c.l.b16 %v783
          %v1753 = vunpack.c.h.b16 %v783
          %v1754 = vunpack.c.l.b16 %v784
          %v1755 = vunpack.c.h.b16 %v784
          %v1756 = vunpack.c.l.b16 %v785
          %v1757 = vunpack.c.h.b16 %v785
          %v1758 = vunpack.c.l.b16 %v786
          %v1759 = vunpack.c.h.b16 %v786
          %v1760 = vunpack.c.l.b16 %v787
          %v1761 = vunpack.c.h.b16 %v787
          %v1762 = vunpack.c.l.b16 %v788
          %v1763 = vunpack.c.h.b16 %v788
          %v1764 = vpack.c.b16 %v1702, %v1700
          %v1765 = vpack.c.b16 %v1703, %v1701
          %v1766 = vpack.c.b16 %v1706, %v1704
          %v1767 = vpack.c.b16 %v1707, %v1705
          %v1768 = vpack.c.b16 %v1710, %v1708
          %v1769 = vpack.c.b16 %v1711, %v1709
          %v1770 = vpack.c.b16 %v1714, %v1712
          %v1771 = vpack.c.b16 %v1715, %v1713
          %v1772 = vpack.c.b16 %v1718, %v1716
          %v1773 = vpack.c.b16 %v1719, %v1717
          %v1774 = vpack.c.b16 %v1722, %v1720
          %v1775 = vpack.c.b16 %v1723, %v1721
          %v1776 = vpack.c.b16 %v1726, %v1724
          %v1777 = vpack.c.b16 %v1727, %v1725
          %v1778 = vpack.c.b16 %v1730, %v1728
          %v1779 = vpack.c.b16 %v1731, %v1729
          %v1780 = vpack.c.b16 %v1734, %v1732
          %v1781 = vpack.c.b16 %v1735, %v1733
          %v1782 = vpack.c.b16 %v1738, %v1736
          %v1783 = vpack.c.b16 %v1739, %v1737
          %v1784 = vpack.c.b16 %v1742, %v1740
          %v1785 = vpack.c.b16 %v1743, %v1741
          %v1786 = vpack.c.b16 %v1746, %v1744
          %v1787 = vpack.c.b16 %v1747, %v1745
          %v1788 = vpack.c.b16 %v1750, %v1748
          %v1789 = vpack.c.b16 %v1751, %v1749
          %v1790 = vpack.c.b16 %v1754, %v1752
          %v1791 = vpack.c.b16 %v1755, %v1753
          %v1792 = vpack.c.b16 %v1758, %v1756
          %v1793 = vpack.c.b16 %v1759, %v1757
          %v1794 = vpack.c.b16 %v1762, %v1760
          %v1795 = vpack.c.b16 %v1763, %v1761
          %1828 = vmatpush.bf16.msra.mxu0 %v1778
          %1829 = vmatpush.bf16.msra.mxu0 %v1776
          %1830 = vmatpush.bf16.msra.mxu0 %v1774
          %1831 = vmatpush.bf16.msra.mxu0 %v1772
          %1832 = vmatpush.bf16.msra.mxu0 %v1770
          %1833 = vmatpush.bf16.msra.mxu0 %v1768
          %1834 = vmatpush.bf16.msra.mxu0 %v1766
          %1835 = vmatpush.bf16.msra.mxu0 %v1764
          %1836 = vmatmul.bf16.gmra.mxu0 %v1604
          %v1837 = vpop.f32.mrf.mxu0
          %v1838 = vadd.f32 0.0, %v1837
          %v1839 = vpop.f32.mrf.mxu0
          %v1840 = vadd.f32 0.0, %v1839
          %1841 = vmatmul.bf16.gmra.mxu0 %v1606
          %v1842 = vpop.f32.mrf.mxu0
          %v1843 = vadd.f32 0.0, %v1842
          %v1844 = vpop.f32.mrf.mxu0
          %v1845 = vadd.f32 0.0, %v1844
          %1846 = vmatmul.bf16.gmra.mxu0 %v1608
          %v1847 = vpop.f32.mrf.mxu0
          %v1848 = vadd.f32 0.0, %v1847
          %v1849 = vpop.f32.mrf.mxu0
          %v1850 = vadd.f32 0.0, %v1849
          %1851 = vmatmul.bf16.gmra.mxu0 %v1610
          %v1852 = vpop.f32.mrf.mxu0
          %v1853 = vadd.f32 0.0, %v1852
          %v1854 = vpop.f32.mrf.mxu0
          %v1855 = vadd.f32 0.0, %v1854
          %1856 = vmatmul.bf16.gmra.mxu0 %v1612
          %v1857 = vpop.f32.mrf.mxu0
          %v1858 = vadd.f32 0.0, %v1857
          %v1859 = vpop.f32.mrf.mxu0
          %v1860 = vadd.f32 0.0, %v1859
          %1861 = vmatmul.bf16.gmra.mxu0 %v1614
          %v1862 = vpop.f32.mrf.mxu0
          %v1863 = vadd.f32 0.0, %v1862
          %v1864 = vpop.f32.mrf.mxu0
          %v1865 = vadd.f32 0.0, %v1864
          %1866 = vmatmul.bf16.gmra.mxu0 %v1616
          %v1867 = vpop.f32.mrf.mxu0
          %v1868 = vadd.f32 0.0, %v1867
          %v1869 = vpop.f32.mrf.mxu0
          %v1870 = vadd.f32 0.0, %v1869
          %1871 = vmatmul.bf16.gmra.mxu0 %v1618
          %v1872 = vpop.f32.mrf.mxu0
          %v1873 = vadd.f32 0.0, %v1872
          %v1874 = vpop.f32.mrf.mxu0
          %v1875 = vadd.f32 0.0, %v1874
          %1876 = vmatmul.bf16.gmra.mxu0 %v1620
          %v1877 = vpop.f32.mrf.mxu0
          %v1878 = vadd.f32 0.0, %v1877
          %v1879 = vpop.f32.mrf.mxu0
          %v1880 = vadd.f32 0.0, %v1879
          %1881 = vmatmul.bf16.gmra.mxu0 %v1622
          %v1882 = vpop.f32.mrf.mxu0
          %v1883 = vadd.f32 0.0, %v1882
          %v1884 = vpop.f32.mrf.mxu0
          %v1885 = vadd.f32 0.0, %v1884
          %1886 = vmatmul.bf16.gmra.mxu0 %v1624
          %v1887 = vpop.f32.mrf.mxu0
          %v1888 = vadd.f32 0.0, %v1887
          %v1889 = vpop.f32.mrf.mxu0
          %v1890 = vadd.f32 0.0, %v1889
          %1891 = vmatmul.bf16.gmra.mxu0 %v1626
          %v1892 = vpop.f32.mrf.mxu0
          %v1893 = vadd.f32 0.0, %v1892
          %v1894 = vpop.f32.mrf.mxu0
          %v1895 = vadd.f32 0.0, %v1894
          %1896 = vmatmul.bf16.gmra.mxu0 %v1628
          %v1897 = vpop.f32.mrf.mxu0
          %v1898 = vadd.f32 0.0, %v1897
          %v1899 = vpop.f32.mrf.mxu0
          %v1900 = vadd.f32 0.0, %v1899
          %1901 = vmatmul.bf16.gmra.mxu0 %v1630
          %v1902 = vpop.f32.mrf.mxu0
          %v1903 = vadd.f32 0.0, %v1902
          %v1904 = vpop.f32.mrf.mxu0
          %v1905 = vadd.f32 0.0, %v1904
          %1906 = vmatmul.bf16.gmra.mxu0 %v1632
          %v1907 = vpop.f32.mrf.mxu0
          %v1908 = vadd.f32 0.0, %v1907
          %v1909 = vpop.f32.mrf.mxu0
          %v1910 = vadd.f32 0.0, %v1909
          %1911 = vmatmul.bf16.gmra.mxu0 %v1634
          %v1912 = vpop.f32.mrf.mxu0
          %v1913 = vadd.f32 0.0, %v1912
          %v1914 = vpop.f32.mrf.mxu0
          %v1915 = vadd.f32 0.0, %v1914
          %1916 = vdwg.mxu0
          %1917 = vmatpush.bf16.msra.mxu0 %v1794
          %1918 = vmatpush.bf16.msra.mxu0 %v1792
          %1919 = vmatpush.bf16.msra.mxu0 %v1790
          %1920 = vmatpush.bf16.msra.mxu0 %v1788
          %1921 = vmatpush.bf16.msra.mxu0 %v1786
          %1922 = vmatpush.bf16.msra.mxu0 %v1784
          %1923 = vmatpush.bf16.msra.mxu0 %v1782
          %1924 = vmatpush.bf16.msra.mxu0 %v1780
          %1925 = vmatmul.bf16.gmra.mxu0 %v1605
          %v1926 = vpop.f32.mrf.mxu0
          %v1927 = vadd.f32 %v1838, %v1926
          %v1928 = vpop.f32.mrf.mxu0
          %v1929 = vadd.f32 %v1840, %v1928
          %1930 = vmatmul.bf16.gmra.mxu0 %v1607
          %v1931 = vpop.f32.mrf.mxu0
          %v1932 = vadd.f32 %v1843, %v1931
          %v1933 = vpop.f32.mrf.mxu0
          %v1934 = vadd.f32 %v1845, %v1933
          %1935 = vmatmul.bf16.gmra.mxu0 %v1609
          %v1936 = vpop.f32.mrf.mxu0
          %v1937 = vadd.f32 %v1848, %v1936
          %v1938 = vpop.f32.mrf.mxu0
          %v1939 = vadd.f32 %v1850, %v1938
          %1940 = vmatmul.bf16.gmra.mxu0 %v1611
          %v1941 = vpop.f32.mrf.mxu0
          %v1942 = vadd.f32 %v1853, %v1941
          %v1943 = vpop.f32.mrf.mxu0
          %v1944 = vadd.f32 %v1855, %v1943
          %1945 = vmatmul.bf16.gmra.mxu0 %v1613
          %v1946 = vpop.f32.mrf.mxu0
          %v1947 = vadd.f32 %v1858, %v1946
          %v1948 = vpop.f32.mrf.mxu0
          %v1949 = vadd.f32 %v1860, %v1948
          %1950 = vmatmul.bf16.gmra.mxu0 %v1615
          %v1951 = vpop.f32.mrf.mxu0
          %v1952 = vadd.f32 %v1863, %v1951
          %v1953 = vpop.f32.mrf.mxu0
          %v1954 = vadd.f32 %v1865, %v1953
          %1955 = vmatmul.bf16.gmra.mxu0 %v1617
          %v1956 = vpop.f32.mrf.mxu0
          %v1957 = vadd.f32 %v1868, %v1956
          %v1958 = vpop.f32.mrf.mxu0
          %v1959 = vadd.f32 %v1870, %v1958
          %1960 = vmatmul.bf16.gmra.mxu0 %v1619
          %v1961 = vpop.f32.mrf.mxu0
          %v1962 = vadd.f32 %v1873, %v1961
          %v1963 = vpop.f32.mrf.mxu0
          %v1964 = vadd.f32 %v1875, %v1963
          %1965 = vmatmul.bf16.gmra.mxu0 %v1621
          %v1966 = vpop.f32.mrf.mxu0
          %v1967 = vadd.f32 %v1878, %v1966
          %v1968 = vpop.f32.mrf.mxu0
          %v1969 = vadd.f32 %v1880, %v1968
          %1970 = vmatmul.bf16.gmra.mxu0 %v1623
          %v1971 = vpop.f32.mrf.mxu0
          %v1972 = vadd.f32 %v1883, %v1971
          %v1973 = vpop.f32.mrf.mxu0
          %v1974 = vadd.f32 %v1885, %v1973
          %1975 = vmatmul.bf16.gmra.mxu0 %v1625
          %v1976 = vpop.f32.mrf.mxu0
          %v1977 = vadd.f32 %v1888, %v1976
          %v1978 = vpop.f32.mrf.mxu0
          %v1979 = vadd.f32 %v1890, %v1978
          %1980 = vmatmul.bf16.gmra.mxu0 %v1627
          %v1981 = vpop.f32.mrf.mxu0
          %v1982 = vadd.f32 %v1893, %v1981
          %v1983 = vpop.f32.mrf.mxu0
          %v1984 = vadd.f32 %v1895, %v1983
          %1985 = vmatmul.bf16.gmra.mxu0 %v1629
          %v1986 = vpop.f32.mrf.mxu0
          %v1987 = vadd.f32 %v1898, %v1986
          %v1988 = vpop.f32.mrf.mxu0
          %v1989 = vadd.f32 %v1900, %v1988
          %1990 = vmatmul.bf16.gmra.mxu0 %v1631
          %v1991 = vpop.f32.mrf.mxu0
          %v1992 = vadd.f32 %v1903, %v1991
          %v1993 = vpop.f32.mrf.mxu0
          %v1994 = vadd.f32 %v1905, %v1993
          %1995 = vmatmul.bf16.gmra.mxu0 %v1633
          %v1996 = vpop.f32.mrf.mxu0
          %v1997 = vadd.f32 %v1908, %v1996
          %v1998 = vpop.f32.mrf.mxu0
          %v1999 = vadd.f32 %v1910, %v1998
          %2000 = vmatmul.bf16.gmra.mxu0 %v1635
          %v2001 = vpop.f32.mrf.mxu0
          %v2002 = vadd.f32 %v1913, %v2001
          %v2003 = vpop.f32.mrf.mxu0
          %v2004 = vadd.f32 %v1915, %v2003
          %2005 = vdwg.mxu0
          %2006 = vmatpush.bf16.msra.mxu0 %v1779
          %2007 = vmatpush.bf16.msra.mxu0 %v1777
          %2008 = vmatpush.bf16.msra.mxu0 %v1775
          %2009 = vmatpush.bf16.msra.mxu0 %v1773
          %2010 = vmatpush.bf16.msra.mxu0 %v1771
          %2011 = vmatpush.bf16.msra.mxu0 %v1769
          %2012 = vmatpush.bf16.msra.mxu0 %v1767
          %2013 = vmatpush.bf16.msra.mxu0 %v1765
          %2014 = vmatmul.bf16.gmra.mxu0 %v1604
          %v2015 = vpop.f32.mrf.mxu0
          %v2016 = vadd.f32 0.0, %v2015
          %v2017 = vpop.f32.mrf.mxu0
          %v2018 = vadd.f32 0.0, %v2017
          %2019 = vmatmul.bf16.gmra.mxu0 %v1606
          %v2020 = vpop.f32.mrf.mxu0
          %v2021 = vadd.f32 0.0, %v2020
          %v2022 = vpop.f32.mrf.mxu0
          %v2023 = vadd.f32 0.0, %v2022
          %2024 = vmatmul.bf16.gmra.mxu0 %v1608
          %v2025 = vpop.f32.mrf.mxu0
          %v2026 = vadd.f32 0.0, %v2025
          %v2027 = vpop.f32.mrf.mxu0
          %v2028 = vadd.f32 0.0, %v2027
          %2029 = vmatmul.bf16.gmra.mxu0 %v1610
          %v2030 = vpop.f32.mrf.mxu0
          %v2031 = vadd.f32 0.0, %v2030
          %v2032 = vpop.f32.mrf.mxu0
          %v2033 = vadd.f32 0.0, %v2032
          %2034 = vmatmul.bf16.gmra.mxu0 %v1612
          %v2035 = vpop.f32.mrf.mxu0
          %v2036 = vadd.f32 0.0, %v2035
          %v2037 = vpop.f32.mrf.mxu0
          %v2038 = vadd.f32 0.0, %v2037
          %2039 = vmatmul.bf16.gmra.mxu0 %v1614
          %v2040 = vpop.f32.mrf.mxu0
          %v2041 = vadd.f32 0.0, %v2040
          %v2042 = vpop.f32.mrf.mxu0
          %v2043 = vadd.f32 0.0, %v2042
          %2044 = vmatmul.bf16.gmra.mxu0 %v1616
          %v2045 = vpop.f32.mrf.mxu0
          %v2046 = vadd.f32 0.0, %v2045
          %v2047 = vpop.f32.mrf.mxu0
          %v2048 = vadd.f32 0.0, %v2047
          %2049 = vmatmul.bf16.gmra.mxu0 %v1618
          %v2050 = vpop.f32.mrf.mxu0
          %v2051 = vadd.f32 0.0, %v2050
          %v2052 = vpop.f32.mrf.mxu0
          %v2053 = vadd.f32 0.0, %v2052
          %2054 = vmatmul.bf16.gmra.mxu0 %v1620
          %v2055 = vpop.f32.mrf.mxu0
          %v2056 = vadd.f32 0.0, %v2055
          %v2057 = vpop.f32.mrf.mxu0
          %v2058 = vadd.f32 0.0, %v2057
          %2059 = vmatmul.bf16.gmra.mxu0 %v1622
          %v2060 = vpop.f32.mrf.mxu0
          %v2061 = vadd.f32 0.0, %v2060
          %v2062 = vpop.f32.mrf.mxu0
          %v2063 = vadd.f32 0.0, %v2062
          %2064 = vmatmul.bf16.gmra.mxu0 %v1624
          %v2065 = vpop.f32.mrf.mxu0
          %v2066 = vadd.f32 0.0, %v2065
          %v2067 = vpop.f32.mrf.mxu0
          %v2068 = vadd.f32 0.0, %v2067
          %2069 = vmatmul.bf16.gmra.mxu0 %v1626
          %v2070 = vpop.f32.mrf.mxu0
          %v2071 = vadd.f32 0.0, %v2070
          %v2072 = vpop.f32.mrf.mxu0
          %v2073 = vadd.f32 0.0, %v2072
          %2074 = vmatmul.bf16.gmra.mxu0 %v1628
          %v2075 = vpop.f32.mrf.mxu0
          %v2076 = vadd.f32 0.0, %v2075
          %v2077 = vpop.f32.mrf.mxu0
          %v2078 = vadd.f32 0.0, %v2077
          %2079 = vmatmul.bf16.gmra.mxu0 %v1630
          %v2080 = vpop.f32.mrf.mxu0
          %v2081 = vadd.f32 0.0, %v2080
          %v2082 = vpop.f32.mrf.mxu0
          %v2083 = vadd.f32 0.0, %v2082
          %2084 = vmatmul.bf16.gmra.mxu0 %v1632
          %v2085 = vpop.f32.mrf.mxu0
          %v2086 = vadd.f32 0.0, %v2085
          %v2087 = vpop.f32.mrf.mxu0
          %v2088 = vadd.f32 0.0, %v2087
          %2089 = vmatmul.bf16.gmra.mxu0 %v1634
          %v2090 = vpop.f32.mrf.mxu0
          %v2091 = vadd.f32 0.0, %v2090
          %v2092 = vpop.f32.mrf.mxu0
          %v2093 = vadd.f32 0.0, %v2092
          %2094 = vdwg.mxu0
          %2095 = vmatpush.bf16.msra.mxu0 %v1795
          %2096 = vmatpush.bf16.msra.mxu0 %v1793
          %2097 = vmatpush.bf16.msra.mxu0 %v1791
          %2098 = vmatpush.bf16.msra.mxu0 %v1789
          %2099 = vmatpush.bf16.msra.mxu0 %v1787
          %2100 = vmatpush.bf16.msra.mxu0 %v1785
          %2101 = vmatpush.bf16.msra.mxu0 %v1783
          %2102 = vmatpush.bf16.msra.mxu0 %v1781
          %2103 = vmatmul.bf16.gmra.mxu0 %v1605
          %v2104 = vpop.f32.mrf.mxu0
          %v2105 = vadd.f32 %v2016, %v2104
          %v2106 = vpop.f32.mrf.mxu0
          %v2107 = vadd.f32 %v2018, %v2106
          %2108 = vmatmul.bf16.gmra.mxu0 %v1607
          %v2109 = vpop.f32.mrf.mxu0
          %v2110 = vadd.f32 %v2021, %v2109
          %v2111 = vpop.f32.mrf.mxu0
          %v2112 = vadd.f32 %v2023, %v2111
          %2113 = vmatmul.bf16.gmra.mxu0 %v1609
          %v2114 = vpop.f32.mrf.mxu0
          %v2115 = vadd.f32 %v2026, %v2114
          %v2116 = vpop.f32.mrf.mxu0
          %v2117 = vadd.f32 %v2028, %v2116
          %2118 = vmatmul.bf16.gmra.mxu0 %v1611
          %v2119 = vpop.f32.mrf.mxu0
          %v2120 = vadd.f32 %v2031, %v2119
          %v2121 = vpop.f32.mrf.mxu0
          %v2122 = vadd.f32 %v2033, %v2121
          %2123 = vmatmul.bf16.gmra.mxu0 %v1613
          %v2124 = vpop.f32.mrf.mxu0
          %v2125 = vadd.f32 %v2036, %v2124
          %v2126 = vpop.f32.mrf.mxu0
          %v2127 = vadd.f32 %v2038, %v2126
          %2128 = vmatmul.bf16.gmra.mxu0 %v1615
          %v2129 = vpop.f32.mrf.mxu0
          %v2130 = vadd.f32 %v2041, %v2129
          %v2131 = vpop.f32.mrf.mxu0
          %v2132 = vadd.f32 %v2043, %v2131
          %2133 = vmatmul.bf16.gmra.mxu0 %v1617
          %v2134 = vpop.f32.mrf.mxu0
          %v2135 = vadd.f32 %v2046, %v2134
          %v2136 = vpop.f32.mrf.mxu0
          %v2137 = vadd.f32 %v2048, %v2136
          %2138 = vmatmul.bf16.gmra.mxu0 %v1619
          %v2139 = vpop.f32.mrf.mxu0
          %v2140 = vadd.f32 %v2051, %v2139
          %v2141 = vpop.f32.mrf.mxu0
          %v2142 = vadd.f32 %v2053, %v2141
          %2143 = vmatmul.bf16.gmra.mxu0 %v1621
          %v2144 = vpop.f32.mrf.mxu0
          %v2145 = vadd.f32 %v2056, %v2144
          %v2146 = vpop.f32.mrf.mxu0
          %v2147 = vadd.f32 %v2058, %v2146
          %2148 = vmatmul.bf16.gmra.mxu0 %v1623
          %v2149 = vpop.f32.mrf.mxu0
          %v2150 = vadd.f32 %v2061, %v2149
          %v2151 = vpop.f32.mrf.mxu0
          %v2152 = vadd.f32 %v2063, %v2151
          %2153 = vmatmul.bf16.gmra.mxu0 %v1625
          %v2154 = vpop.f32.mrf.mxu0
          %v2155 = vadd.f32 %v2066, %v2154
          %v2156 = vpop.f32.mrf.mxu0
          %v2157 = vadd.f32 %v2068, %v2156
          %2158 = vmatmul.bf16.gmra.mxu0 %v1627
          %v2159 = vpop.f32.mrf.mxu0
          %v2160 = vadd.f32 %v2071, %v2159
          %v2161 = vpop.f32.mrf.mxu0
          %v2162 = vadd.f32 %v2073, %v2161
          %2163 = vmatmul.bf16.gmra.mxu0 %v1629
          %v2164 = vpop.f32.mrf.mxu0
          %v2165 = vadd.f32 %v2076, %v2164
          %v2166 = vpop.f32.mrf.mxu0
          %v2167 = vadd.f32 %v2078, %v2166
          %2168 = vmatmul.bf16.gmra.mxu0 %v1631
          %v2169 = vpop.f32.mrf.mxu0
          %v2170 = vadd.f32 %v2081, %v2169
          %v2171 = vpop.f32.mrf.mxu0
          %v2172 = vadd.f32 %v2083, %v2171
          %2173 = vmatmul.bf16.gmra.mxu0 %v1633
          %v2174 = vpop.f32.mrf.mxu0
          %v2175 = vadd.f32 %v2086, %v2174
          %v2176 = vpop.f32.mrf.mxu0
          %v2177 = vadd.f32 %v2088, %v2176
          %2178 = vmatmul.bf16.gmra.mxu0 %v1635
          %v2179 = vpop.f32.mrf.mxu0
          %v2180 = vadd.f32 %v2091, %v2179
          %v2181 = vpop.f32.mrf.mxu0
          %v2182 = vadd.f32 %v2093, %v2181
          %2183 = vdwg.mxu0
          %v2184 = vpack.c.bf16 %v2105, %v1927
          %v2185 = vpack.c.bf16 %v2107, %v1929
          %v2186 = vpack.c.bf16 %v2110, %v1932
          %v2187 = vpack.c.bf16 %v2112, %v1934
          %v2188 = vpack.c.bf16 %v2115, %v1937
          %v2189 = vpack.c.bf16 %v2117, %v1939
          %v2190 = vpack.c.bf16 %v2120, %v1942
          %v2191 = vpack.c.bf16 %v2122, %v1944
          %v2192 = vpack.c.bf16 %v2125, %v1947
          %v2193 = vpack.c.bf16 %v2127, %v1949
          %v2194 = vpack.c.bf16 %v2130, %v1952
          %v2195 = vpack.c.bf16 %v2132, %v1954
          %v2196 = vpack.c.bf16 %v2135, %v1957
          %v2197 = vpack.c.bf16 %v2137, %v1959
          %v2198 = vpack.c.bf16 %v2140, %v1962
          %v2199 = vpack.c.bf16 %v2142, %v1964
          %v2200 = vpack.c.bf16 %v2145, %v1967
          %v2201 = vpack.c.bf16 %v2147, %v1969
          %v2202 = vpack.c.bf16 %v2150, %v1972
          %v2203 = vpack.c.bf16 %v2152, %v1974
          %v2204 = vpack.c.bf16 %v2155, %v1977
          %v2205 = vpack.c.bf16 %v2157, %v1979
          %v2206 = vpack.c.bf16 %v2160, %v1982
          %v2207 = vpack.c.bf16 %v2162, %v1984
          %v2208 = vpack.c.bf16 %v2165, %v1987
          %v2209 = vpack.c.bf16 %v2167, %v1989
          %v2210 = vpack.c.bf16 %v2170, %v1992
          %v2211 = vpack.c.bf16 %v2172, %v1994
          %v2212 = vpack.c.bf16 %v2175, %v1997
          %v2213 = vpack.c.bf16 %v2177, %v1999
          %v2214 = vpack.c.bf16 %v2180, %v2002
          %v2215 = vpack.c.bf16 %v2182, %v2004
          %2216 = vst [vmem:[#allocation4] sm:$0xff] %v2184
          %2217 = vst [vmem:[#allocation4 + $0x18] sm:$0xff] %v2185
          %2218 = vst [vmem:[#allocation4 + $0x30] sm:$0xff] %v2186
          %2219 = vst [vmem:[#allocation4 + $0x48] sm:$0xff] %v2187
          %2220 = vst [vmem:[#allocation4 + $0x60] sm:$0xff] %v2188
          %2221 = vst [vmem:[#allocation4 + $0x78] sm:$0xff] %v2189
          %2222 = vst [vmem:[#allocation4 + $0x90] sm:$0xff] %v2190
          %2223 = vst [vmem:[#allocation4 + $0xa8] sm:$0xff] %v2191
          %2224 = vst [vmem:[#allocation4 + $0xc0] sm:$0xff] %v2192
          %2225 = vst [vmem:[#allocation4 + $0xd8] sm:$0xff] %v2193
          %2226 = vst [vmem:[#allocation4 + $0xf0] sm:$0xff] %v2194
          %2227 = vst [vmem:[#allocation4 + $0x108] sm:$0xff] %v2195
          %2228 = vst [vmem:[#allocation4 + $0x120] sm:$0xff] %v2196
          %2229 = vst [vmem:[#allocation4 + $0x138] sm:$0xff] %v2197
          %2230 = vst [vmem:[#allocation4 + $0x150] sm:$0xff] %v2198
          %2231 = vst [vmem:[#allocation4 + $0x168] sm:$0xff] %v2199
          %2232 = vst [vmem:[#allocation4 + $0x180] sm:$0xff] %v2200
          %2233 = vst [vmem:[#allocation4 + $0x198] sm:$0xff] %v2201
          %2234 = vst [vmem:[#allocation4 + $0x1b0] sm:$0xff] %v2202
          %2235 = vst [vmem:[#allocation4 + $0x1c8] sm:$0xff] %v2203
          %2236 = vst [vmem:[#allocation4 + $0x1e0] sm:$0xff] %v2204
          %2237 = vst [vmem:[#allocation4 + $0x1f8] sm:$0xff] %v2205
          %2238 = vst [vmem:[#allocation4 + $0x210] sm:$0xff] %v2206
          %2239 = vst [vmem:[#allocation4 + $0x228] sm:$0xff] %v2207
          %2240 = vst [vmem:[#allocation4 + $0x240] sm:$0xff] %v2208
          %2241 = vst [vmem:[#allocation4 + $0x258] sm:$0xff] %v2209
          %2242 = vst [vmem:[#allocation4 + $0x270] sm:$0xff] %v2210
          %2243 = vst [vmem:[#allocation4 + $0x288] sm:$0xff] %v2211
          %2244 = vst [vmem:[#allocation4 + $0x2a0] sm:$0xff] %v2212
          %2245 = vst [vmem:[#allocation4 + $0x2b8] sm:$0xff] %v2213
          %2246 = vst [vmem:[#allocation4 + $0x2d0] sm:$0xff] %v2214
          %2247 = vst [vmem:[#allocation4 + $0x2e8] sm:$0xff] %v2215
          %s2248 = scalar_lea.vmem %s280, 256 [#allocation13]
          %v2249 = vld [vmem:[%s2248] sm:$0xff]
          %v2250 = vld [vmem:[%s2248 + $0x8] sm:$0xff]
          %v2251 = vld [vmem:[%s2248 + $0x10] sm:$0xff]
          %v2252 = vld [vmem:[%s2248 + $0x18] sm:$0xff]
          %v2253 = vld [vmem:[%s2248 + $0x20] sm:$0xff]
          %v2254 = vld [vmem:[%s2248 + $0x28] sm:$0xff]
          %v2255 = vld [vmem:[%s2248 + $0x30] sm:$0xff]
          %v2256 = vld [vmem:[%s2248 + $0x38] sm:$0xff]
          %v2257 = vld [vmem:[%s2248 + $0x40] sm:$0xff]
          %v2258 = vld [vmem:[%s2248 + $0x48] sm:$0xff]
          %v2259 = vld [vmem:[%s2248 + $0x50] sm:$0xff]
          %v2260 = vld [vmem:[%s2248 + $0x58] sm:$0xff]
          %v2261 = vld [vmem:[%s2248 + $0x60] sm:$0xff]
          %v2262 = vld [vmem:[%s2248 + $0x68] sm:$0xff]
          %v2263 = vld [vmem:[%s2248 + $0x70] sm:$0xff]
          %v2264 = vld [vmem:[%s2248 + $0x78] sm:$0xff]
          %v2265 = vld [vmem:[%s2248 + $0x80] sm:$0xff]
          %v2266 = vld [vmem:[%s2248 + $0x88] sm:$0xff]
          %v2267 = vld [vmem:[%s2248 + $0x90] sm:$0xff]
          %v2268 = vld [vmem:[%s2248 + $0x98] sm:$0xff]
          %v2269 = vld [vmem:[%s2248 + $0xa0] sm:$0xff]
          %v2270 = vld [vmem:[%s2248 + $0xa8] sm:$0xff]
          %v2271 = vld [vmem:[%s2248 + $0xb0] sm:$0xff]
          %v2272 = vld [vmem:[%s2248 + $0xb8] sm:$0xff]
          %v2273 = vld [vmem:[%s2248 + $0xc0] sm:$0xff]
          %v2274 = vld [vmem:[%s2248 + $0xc8] sm:$0xff]
          %v2275 = vld [vmem:[%s2248 + $0xd0] sm:$0xff]
          %v2276 = vld [vmem:[%s2248 + $0xd8] sm:$0xff]
          %v2277 = vld [vmem:[%s2248 + $0xe0] sm:$0xff]
          %v2278 = vld [vmem:[%s2248 + $0xe8] sm:$0xff]
          %v2279 = vld [vmem:[%s2248 + $0xf0] sm:$0xff]
          %v2280 = vld [vmem:[%s2248 + $0xf8] sm:$0xff]
          %v2313 = vunpack.c.l.b16 %v2249
          %v2314 = vunpack.c.h.b16 %v2249
          %v2315 = vunpack.c.l.b16 %v2250
          %v2316 = vunpack.c.h.b16 %v2250
          %v2317 = vunpack.c.l.b16 %v2251
          %v2318 = vunpack.c.h.b16 %v2251
          %v2319 = vunpack.c.l.b16 %v2252
          %v2320 = vunpack.c.h.b16 %v2252
          %v2321 = vunpack.c.l.b16 %v2253
          %v2322 = vunpack.c.h.b16 %v2253
          %v2323 = vunpack.c.l.b16 %v2254
          %v2324 = vunpack.c.h.b16 %v2254
          %v2325 = vunpack.c.l.b16 %v2255
          %v2326 = vunpack.c.h.b16 %v2255
          %v2327 = vunpack.c.l.b16 %v2256
          %v2328 = vunpack.c.h.b16 %v2256
          %v2329 = vunpack.c.l.b16 %v2257
          %v2330 = vunpack.c.h.b16 %v2257
          %v2331 = vunpack.c.l.b16 %v2258
          %v2332 = vunpack.c.h.b16 %v2258
          %v2333 = vunpack.c.l.b16 %v2259
          %v2334 = vunpack.c.h.b16 %v2259
          %v2335 = vunpack.c.l.b16 %v2260
          %v2336 = vunpack.c.h.b16 %v2260
          %v2337 = vunpack.c.l.b16 %v2261
          %v2338 = vunpack.c.h.b16 %v2261
          %v2339 = vunpack.c.l.b16 %v2262
          %v2340 = vunpack.c.h.b16 %v2262
          %v2341 = vunpack.c.l.b16 %v2263
          %v2342 = vunpack.c.h.b16 %v2263
          %v2343 = vunpack.c.l.b16 %v2264
          %v2344 = vunpack.c.h.b16 %v2264
          %v2345 = vunpack.c.l.b16 %v2265
          %v2346 = vunpack.c.h.b16 %v2265
          %v2347 = vunpack.c.l.b16 %v2266
          %v2348 = vunpack.c.h.b16 %v2266
          %v2349 = vunpack.c.l.b16 %v2267
          %v2350 = vunpack.c.h.b16 %v2267
          %v2351 = vunpack.c.l.b16 %v2268
          %v2352 = vunpack.c.h.b16 %v2268
          %v2353 = vunpack.c.l.b16 %v2269
          %v2354 = vunpack.c.h.b16 %v2269
          %v2355 = vunpack.c.l.b16 %v2270
          %v2356 = vunpack.c.h.b16 %v2270
          %v2357 = vunpack.c.l.b16 %v2271
          %v2358 = vunpack.c.h.b16 %v2271
          %v2359 = vunpack.c.l.b16 %v2272
          %v2360 = vunpack.c.h.b16 %v2272
          %v2361 = vunpack.c.l.b16 %v2273
          %v2362 = vunpack.c.h.b16 %v2273
          %v2363 = vunpack.c.l.b16 %v2274
          %v2364 = vunpack.c.h.b16 %v2274
          %v2365 = vunpack.c.l.b16 %v2275
          %v2366 = vunpack.c.h.b16 %v2275
          %v2367 = vunpack.c.l.b16 %v2276
          %v2368 = vunpack.c.h.b16 %v2276
          %v2369 = vunpack.c.l.b16 %v2277
          %v2370 = vunpack.c.h.b16 %v2277
          %v2371 = vunpack.c.l.b16 %v2278
          %v2372 = vunpack.c.h.b16 %v2278
          %v2373 = vunpack.c.l.b16 %v2279
          %v2374 = vunpack.c.h.b16 %v2279
          %v2375 = vunpack.c.l.b16 %v2280
          %v2376 = vunpack.c.h.b16 %v2280
          %v2377 = vpack.c.b16 %v2315, %v2313
          %v2378 = vpack.c.b16 %v2316, %v2314
          %v2379 = vpack.c.b16 %v2319, %v2317
          %v2380 = vpack.c.b16 %v2320, %v2318
          %v2381 = vpack.c.b16 %v2323, %v2321
          %v2382 = vpack.c.b16 %v2324, %v2322
          %v2383 = vpack.c.b16 %v2327, %v2325
          %v2384 = vpack.c.b16 %v2328, %v2326
          %v2385 = vpack.c.b16 %v2331, %v2329
          %v2386 = vpack.c.b16 %v2332, %v2330
          %v2387 = vpack.c.b16 %v2335, %v2333
          %v2388 = vpack.c.b16 %v2336, %v2334
          %v2389 = vpack.c.b16 %v2339, %v2337
          %v2390 = vpack.c.b16 %v2340, %v2338
          %v2391 = vpack.c.b16 %v2343, %v2341
          %v2392 = vpack.c.b16 %v2344, %v2342
          %v2393 = vpack.c.b16 %v2347, %v2345
          %v2394 = vpack.c.b16 %v2348, %v2346
          %v2395 = vpack.c.b16 %v2351, %v2349
          %v2396 = vpack.c.b16 %v2352, %v2350
          %v2397 = vpack.c.b16 %v2355, %v2353
          %v2398 = vpack.c.b16 %v2356, %v2354
          %v2399 = vpack.c.b16 %v2359, %v2357
          %v2400 = vpack.c.b16 %v2360, %v2358
          %v2401 = vpack.c.b16 %v2363, %v2361
          %v2402 = vpack.c.b16 %v2364, %v2362
          %v2403 = vpack.c.b16 %v2367, %v2365
          %v2404 = vpack.c.b16 %v2368, %v2366
          %v2405 = vpack.c.b16 %v2371, %v2369
          %v2406 = vpack.c.b16 %v2372, %v2370
          %v2407 = vpack.c.b16 %v2375, %v2373
          %v2408 = vpack.c.b16 %v2376, %v2374
          %2441 = vmatpush.bf16.msra.mxu0 %v1778
          %2442 = vmatpush.bf16.msra.mxu0 %v1776
          %2443 = vmatpush.bf16.msra.mxu0 %v1774
          %2444 = vmatpush.bf16.msra.mxu0 %v1772
          %2445 = vmatpush.bf16.msra.mxu0 %v1770
          %2446 = vmatpush.bf16.msra.mxu0 %v1768
          %2447 = vmatpush.bf16.msra.mxu0 %v1766
          %2448 = vmatpush.bf16.msra.mxu0 %v1764
          %2449 = vmatmul.bf16.gmra.mxu0 %v2377
          %v2450 = vpop.f32.mrf.mxu0
          %v2451 = vadd.f32 0.0, %v2450
          %v2452 = vpop.f32.mrf.mxu0
          %v2453 = vadd.f32 0.0, %v2452
          %2454 = vmatmul.bf16.gmra.mxu0 %v2379
          %v2455 = vpop.f32.mrf.mxu0
          %v2456 = vadd.f32 0.0, %v2455
          %v2457 = vpop.f32.mrf.mxu0
          %v2458 = vadd.f32 0.0, %v2457
          %2459 = vmatmul.bf16.gmra.mxu0 %v2381
          %v2460 = vpop.f32.mrf.mxu0
          %v2461 = vadd.f32 0.0, %v2460
          %v2462 = vpop.f32.mrf.mxu0
          %v2463 = vadd.f32 0.0, %v2462
          %2464 = vmatmul.bf16.gmra.mxu0 %v2383
          %v2465 = vpop.f32.mrf.mxu0
          %v2466 = vadd.f32 0.0, %v2465
          %v2467 = vpop.f32.mrf.mxu0
          %v2468 = vadd.f32 0.0, %v2467
          %2469 = vmatmul.bf16.gmra.mxu0 %v2385
          %v2470 = vpop.f32.mrf.mxu0
          %v2471 = vadd.f32 0.0, %v2470
          %v2472 = vpop.f32.mrf.mxu0
          %v2473 = vadd.f32 0.0, %v2472
          %2474 = vmatmul.bf16.gmra.mxu0 %v2387
          %v2475 = vpop.f32.mrf.mxu0
          %v2476 = vadd.f32 0.0, %v2475
          %v2477 = vpop.f32.mrf.mxu0
          %v2478 = vadd.f32 0.0, %v2477
          %2479 = vmatmul.bf16.gmra.mxu0 %v2389
          %v2480 = vpop.f32.mrf.mxu0
          %v2481 = vadd.f32 0.0, %v2480
          %v2482 = vpop.f32.mrf.mxu0
          %v2483 = vadd.f32 0.0, %v2482
          %2484 = vmatmul.bf16.gmra.mxu0 %v2391
          %v2485 = vpop.f32.mrf.mxu0
          %v2486 = vadd.f32 0.0, %v2485
          %v2487 = vpop.f32.mrf.mxu0
          %v2488 = vadd.f32 0.0, %v2487
          %2489 = vmatmul.bf16.gmra.mxu0 %v2393
          %v2490 = vpop.f32.mrf.mxu0
          %v2491 = vadd.f32 0.0, %v2490
          %v2492 = vpop.f32.mrf.mxu0
          %v2493 = vadd.f32 0.0, %v2492
          %2494 = vmatmul.bf16.gmra.mxu0 %v2395
          %v2495 = vpop.f32.mrf.mxu0
          %v2496 = vadd.f32 0.0, %v2495
          %v2497 = vpop.f32.mrf.mxu0
          %v2498 = vadd.f32 0.0, %v2497
          %2499 = vmatmul.bf16.gmra.mxu0 %v2397
          %v2500 = vpop.f32.mrf.mxu0
          %v2501 = vadd.f32 0.0, %v2500
          %v2502 = vpop.f32.mrf.mxu0
          %v2503 = vadd.f32 0.0, %v2502
          %2504 = vmatmul.bf16.gmra.mxu0 %v2399
          %v2505 = vpop.f32.mrf.mxu0
          %v2506 = vadd.f32 0.0, %v2505
          %v2507 = vpop.f32.mrf.mxu0
          %v2508 = vadd.f32 0.0, %v2507
          %2509 = vmatmul.bf16.gmra.mxu0 %v2401
          %v2510 = vpop.f32.mrf.mxu0
          %v2511 = vadd.f32 0.0, %v2510
          %v2512 = vpop.f32.mrf.mxu0
          %v2513 = vadd.f32 0.0, %v2512
          %2514 = vmatmul.bf16.gmra.mxu0 %v2403
          %v2515 = vpop.f32.mrf.mxu0
          %v2516 = vadd.f32 0.0, %v2515
          %v2517 = vpop.f32.mrf.mxu0
          %v2518 = vadd.f32 0.0, %v2517
          %2519 = vmatmul.bf16.gmra.mxu0 %v2405
          %v2520 = vpop.f32.mrf.mxu0
          %v2521 = vadd.f32 0.0, %v2520
          %v2522 = vpop.f32.mrf.mxu0
          %v2523 = vadd.f32 0.0, %v2522
          %2524 = vmatmul.bf16.gmra.mxu0 %v2407
          %v2525 = vpop.f32.mrf.mxu0
          %v2526 = vadd.f32 0.0, %v2525
          %v2527 = vpop.f32.mrf.mxu0
          %v2528 = vadd.f32 0.0, %v2527
          %2529 = vdwg.mxu0
          %2530 = vmatpush.bf16.msra.mxu0 %v1794
          %2531 = vmatpush.bf16.msra.mxu0 %v1792
          %2532 = vmatpush.bf16.msra.mxu0 %v1790
          %2533 = vmatpush.bf16.msra.mxu0 %v1788
          %2534 = vmatpush.bf16.msra.mxu0 %v1786
          %2535 = vmatpush.bf16.msra.mxu0 %v1784
          %2536 = vmatpush.bf16.msra.mxu0 %v1782
          %2537 = vmatpush.bf16.msra.mxu0 %v1780
          %2538 = vmatmul.bf16.gmra.mxu0 %v2378
          %v2539 = vpop.f32.mrf.mxu0
          %v2540 = vadd.f32 %v2451, %v2539
          %v2541 = vpop.f32.mrf.mxu0
          %v2542 = vadd.f32 %v2453, %v2541
          %2543 = vmatmul.bf16.gmra.mxu0 %v2380
          %v2544 = vpop.f32.mrf.mxu0
          %v2545 = vadd.f32 %v2456, %v2544
          %v2546 = vpop.f32.mrf.mxu0
          %v2547 = vadd.f32 %v2458, %v2546
          %2548 = vmatmul.bf16.gmra.mxu0 %v2382
          %v2549 = vpop.f32.mrf.mxu0
          %v2550 = vadd.f32 %v2461, %v2549
          %v2551 = vpop.f32.mrf.mxu0
          %v2552 = vadd.f32 %v2463, %v2551
          %2553 = vmatmul.bf16.gmra.mxu0 %v2384
          %v2554 = vpop.f32.mrf.mxu0
          %v2555 = vadd.f32 %v2466, %v2554
          %v2556 = vpop.f32.mrf.mxu0
          %v2557 = vadd.f32 %v2468, %v2556
          %2558 = vmatmul.bf16.gmra.mxu0 %v2386
          %v2559 = vpop.f32.mrf.mxu0
          %v2560 = vadd.f32 %v2471, %v2559
          %v2561 = vpop.f32.mrf.mxu0
          %v2562 = vadd.f32 %v2473, %v2561
          %2563 = vmatmul.bf16.gmra.mxu0 %v2388
          %v2564 = vpop.f32.mrf.mxu0
          %v2565 = vadd.f32 %v2476, %v2564
          %v2566 = vpop.f32.mrf.mxu0
          %v2567 = vadd.f32 %v2478, %v2566
          %2568 = vmatmul.bf16.gmra.mxu0 %v2390
          %v2569 = vpop.f32.mrf.mxu0
          %v2570 = vadd.f32 %v2481, %v2569
          %v2571 = vpop.f32.mrf.mxu0
          %v2572 = vadd.f32 %v2483, %v2571
          %2573 = vmatmul.bf16.gmra.mxu0 %v2392
          %v2574 = vpop.f32.mrf.mxu0
          %v2575 = vadd.f32 %v2486, %v2574
          %v2576 = vpop.f32.mrf.mxu0
          %v2577 = vadd.f32 %v2488, %v2576
          %2578 = vmatmul.bf16.gmra.mxu0 %v2394
          %v2579 = vpop.f32.mrf.mxu0
          %v2580 = vadd.f32 %v2491, %v2579
          %v2581 = vpop.f32.mrf.mxu0
          %v2582 = vadd.f32 %v2493, %v2581
          %2583 = vmatmul.bf16.gmra.mxu0 %v2396
          %v2584 = vpop.f32.mrf.mxu0
          %v2585 = vadd.f32 %v2496, %v2584
          %v2586 = vpop.f32.mrf.mxu0
          %v2587 = vadd.f32 %v2498, %v2586
          %2588 = vmatmul.bf16.gmra.mxu0 %v2398
          %v2589 = vpop.f32.mrf.mxu0
          %v2590 = vadd.f32 %v2501, %v2589
          %v2591 = vpop.f32.mrf.mxu0
          %v2592 = vadd.f32 %v2503, %v2591
          %2593 = vmatmul.bf16.gmra.mxu0 %v2400
          %v2594 = vpop.f32.mrf.mxu0
          %v2595 = vadd.f32 %v2506, %v2594
          %v2596 = vpop.f32.mrf.mxu0
          %v2597 = vadd.f32 %v2508, %v2596
          %2598 = vmatmul.bf16.gmra.mxu0 %v2402
          %v2599 = vpop.f32.mrf.mxu0
          %v2600 = vadd.f32 %v2511, %v2599
          %v2601 = vpop.f32.mrf.mxu0
          %v2602 = vadd.f32 %v2513, %v2601
          %2603 = vmatmul.bf16.gmra.mxu0 %v2404
          %v2604 = vpop.f32.mrf.mxu0
          %v2605 = vadd.f32 %v2516, %v2604
          %v2606 = vpop.f32.mrf.mxu0
          %v2607 = vadd.f32 %v2518, %v2606
          %2608 = vmatmul.bf16.gmra.mxu0 %v2406
          %v2609 = vpop.f32.mrf.mxu0
          %v2610 = vadd.f32 %v2521, %v2609
          %v2611 = vpop.f32.mrf.mxu0
          %v2612 = vadd.f32 %v2523, %v2611
          %2613 = vmatmul.bf16.gmra.mxu0 %v2408
          %v2614 = vpop.f32.mrf.mxu0
          %v2615 = vadd.f32 %v2526, %v2614
          %v2616 = vpop.f32.mrf.mxu0
          %v2617 = vadd.f32 %v2528, %v2616
          %2618 = vdwg.mxu0
          %2619 = vmatpush.bf16.msra.mxu0 %v1779
          %2620 = vmatpush.bf16.msra.mxu0 %v1777
          %2621 = vmatpush.bf16.msra.mxu0 %v1775
          %2622 = vmatpush.bf16.msra.mxu0 %v1773
          %2623 = vmatpush.bf16.msra.mxu0 %v1771
          %2624 = vmatpush.bf16.msra.mxu0 %v1769
          %2625 = vmatpush.bf16.msra.mxu0 %v1767
          %2626 = vmatpush.bf16.msra.mxu0 %v1765
          %2627 = vmatmul.bf16.gmra.mxu0 %v2377
          %v2628 = vpop.f32.mrf.mxu0
          %v2629 = vadd.f32 0.0, %v2628
          %v2630 = vpop.f32.mrf.mxu0
          %v2631 = vadd.f32 0.0, %v2630
          %2632 = vmatmul.bf16.gmra.mxu0 %v2379
          %v2633 = vpop.f32.mrf.mxu0
          %v2634 = vadd.f32 0.0, %v2633
          %v2635 = vpop.f32.mrf.mxu0
          %v2636 = vadd.f32 0.0, %v2635
          %2637 = vmatmul.bf16.gmra.mxu0 %v2381
          %v2638 = vpop.f32.mrf.mxu0
          %v2639 = vadd.f32 0.0, %v2638
          %v2640 = vpop.f32.mrf.mxu0
          %v2641 = vadd.f32 0.0, %v2640
          %2642 = vmatmul.bf16.gmra.mxu0 %v2383
          %v2643 = vpop.f32.mrf.mxu0
          %v2644 = vadd.f32 0.0, %v2643
          %v2645 = vpop.f32.mrf.mxu0
          %v2646 = vadd.f32 0.0, %v2645
          %2647 = vmatmul.bf16.gmra.mxu0 %v2385
          %v2648 = vpop.f32.mrf.mxu0
          %v2649 = vadd.f32 0.0, %v2648
          %v2650 = vpop.f32.mrf.mxu0
          %v2651 = vadd.f32 0.0, %v2650
          %2652 = vmatmul.bf16.gmra.mxu0 %v2387
          %v2653 = vpop.f32.mrf.mxu0
          %v2654 = vadd.f32 0.0, %v2653
          %v2655 = vpop.f32.mrf.mxu0
          %v2656 = vadd.f32 0.0, %v2655
          %2657 = vmatmul.bf16.gmra.mxu0 %v2389
          %v2658 = vpop.f32.mrf.mxu0
          %v2659 = vadd.f32 0.0, %v2658
          %v2660 = vpop.f32.mrf.mxu0
          %v2661 = vadd.f32 0.0, %v2660
          %2662 = vmatmul.bf16.gmra.mxu0 %v2391
          %v2663 = vpop.f32.mrf.mxu0
          %v2664 = vadd.f32 0.0, %v2663
          %v2665 = vpop.f32.mrf.mxu0
          %v2666 = vadd.f32 0.0, %v2665
          %2667 = vmatmul.bf16.gmra.mxu0 %v2393
          %v2668 = vpop.f32.mrf.mxu0
          %v2669 = vadd.f32 0.0, %v2668
          %v2670 = vpop.f32.mrf.mxu0
          %v2671 = vadd.f32 0.0, %v2670
          %2672 = vmatmul.bf16.gmra.mxu0 %v2395
          %v2673 = vpop.f32.mrf.mxu0
          %v2674 = vadd.f32 0.0, %v2673
          %v2675 = vpop.f32.mrf.mxu0
          %v2676 = vadd.f32 0.0, %v2675
          %2677 = vmatmul.bf16.gmra.mxu0 %v2397
          %v2678 = vpop.f32.mrf.mxu0
          %v2679 = vadd.f32 0.0, %v2678
          %v2680 = vpop.f32.mrf.mxu0
          %v2681 = vadd.f32 0.0, %v2680
          %2682 = vmatmul.bf16.gmra.mxu0 %v2399
          %v2683 = vpop.f32.mrf.mxu0
          %v2684 = vadd.f32 0.0, %v2683
          %v2685 = vpop.f32.mrf.mxu0
          %v2686 = vadd.f32 0.0, %v2685
          %2687 = vmatmul.bf16.gmra.mxu0 %v2401
          %v2688 = vpop.f32.mrf.mxu0
          %v2689 = vadd.f32 0.0, %v2688
          %v2690 = vpop.f32.mrf.mxu0
          %v2691 = vadd.f32 0.0, %v2690
          %2692 = vmatmul.bf16.gmra.mxu0 %v2403
          %v2693 = vpop.f32.mrf.mxu0
          %v2694 = vadd.f32 0.0, %v2693
          %v2695 = vpop.f32.mrf.mxu0
          %v2696 = vadd.f32 0.0, %v2695
          %2697 = vmatmul.bf16.gmra.mxu0 %v2405
          %v2698 = vpop.f32.mrf.mxu0
          %v2699 = vadd.f32 0.0, %v2698
          %v2700 = vpop.f32.mrf.mxu0
          %v2701 = vadd.f32 0.0, %v2700
          %2702 = vmatmul.bf16.gmra.mxu0 %v2407
          %v2703 = vpop.f32.mrf.mxu0
          %v2704 = vadd.f32 0.0, %v2703
          %v2705 = vpop.f32.mrf.mxu0
          %v2706 = vadd.f32 0.0, %v2705
          %2707 = vdwg.mxu0
          %2708 = vmatpush.bf16.msra.mxu0 %v1795
          %2709 = vmatpush.bf16.msra.mxu0 %v1793
          %2710 = vmatpush.bf16.msra.mxu0 %v1791
          %2711 = vmatpush.bf16.msra.mxu0 %v1789
          %2712 = vmatpush.bf16.msra.mxu0 %v1787
          %2713 = vmatpush.bf16.msra.mxu0 %v1785
          %2714 = vmatpush.bf16.msra.mxu0 %v1783
          %2715 = vmatpush.bf16.msra.mxu0 %v1781
          %2716 = vmatmul.bf16.gmra.mxu0 %v2378
          %v2717 = vpop.f32.mrf.mxu0
          %v2718 = vadd.f32 %v2629, %v2717
          %v2719 = vpop.f32.mrf.mxu0
          %v2720 = vadd.f32 %v2631, %v2719
          %2721 = vmatmul.bf16.gmra.mxu0 %v2380
          %v2722 = vpop.f32.mrf.mxu0
          %v2723 = vadd.f32 %v2634, %v2722
          %v2724 = vpop.f32.mrf.mxu0
          %v2725 = vadd.f32 %v2636, %v2724
          %2726 = vmatmul.bf16.gmra.mxu0 %v2382
          %v2727 = vpop.f32.mrf.mxu0
          %v2728 = vadd.f32 %v2639, %v2727
          %v2729 = vpop.f32.mrf.mxu0
          %v2730 = vadd.f32 %v2641, %v2729
          %2731 = vmatmul.bf16.gmra.mxu0 %v2384
          %v2732 = vpop.f32.mrf.mxu0
          %v2733 = vadd.f32 %v2644, %v2732
          %v2734 = vpop.f32.mrf.mxu0
          %v2735 = vadd.f32 %v2646, %v2734
          %2736 = vmatmul.bf16.gmra.mxu0 %v2386
          %v2737 = vpop.f32.mrf.mxu0
          %v2738 = vadd.f32 %v2649, %v2737
          %v2739 = vpop.f32.mrf.mxu0
          %v2740 = vadd.f32 %v2651, %v2739
          %2741 = vmatmul.bf16.gmra.mxu0 %v2388
          %v2742 = vpop.f32.mrf.mxu0
          %v2743 = vadd.f32 %v2654, %v2742
          %v2744 = vpop.f32.mrf.mxu0
          %v2745 = vadd.f32 %v2656, %v2744
          %2746 = vmatmul.bf16.gmra.mxu0 %v2390
          %v2747 = vpop.f32.mrf.mxu0
          %v2748 = vadd.f32 %v2659, %v2747
          %v2749 = vpop.f32.mrf.mxu0
          %v2750 = vadd.f32 %v2661, %v2749
          %2751 = vmatmul.bf16.gmra.mxu0 %v2392
          %v2752 = vpop.f32.mrf.mxu0
          %v2753 = vadd.f32 %v2664, %v2752
          %v2754 = vpop.f32.mrf.mxu0
          %v2755 = vadd.f32 %v2666, %v2754
          %2756 = vmatmul.bf16.gmra.mxu0 %v2394
          %v2757 = vpop.f32.mrf.mxu0
          %v2758 = vadd.f32 %v2669, %v2757
          %v2759 = vpop.f32.mrf.mxu0
          %v2760 = vadd.f32 %v2671, %v2759
          %2761 = vmatmul.bf16.gmra.mxu0 %v2396
          %v2762 = vpop.f32.mrf.mxu0
          %v2763 = vadd.f32 %v2674, %v2762
          %v2764 = vpop.f32.mrf.mxu0
          %v2765 = vadd.f32 %v2676, %v2764
          %2766 = vmatmul.bf16.gmra.mxu0 %v2398
          %v2767 = vpop.f32.mrf.mxu0
          %v2768 = vadd.f32 %v2679, %v2767
          %v2769 = vpop.f32.mrf.mxu0
          %v2770 = vadd.f32 %v2681, %v2769
          %2771 = vmatmul.bf16.gmra.mxu0 %v2400
          %v2772 = vpop.f32.mrf.mxu0
          %v2773 = vadd.f32 %v2684, %v2772
          %v2774 = vpop.f32.mrf.mxu0
          %v2775 = vadd.f32 %v2686, %v2774
          %2776 = vmatmul.bf16.gmra.mxu0 %v2402
          %v2777 = vpop.f32.mrf.mxu0
          %v2778 = vadd.f32 %v2689, %v2777
          %v2779 = vpop.f32.mrf.mxu0
          %v2780 = vadd.f32 %v2691, %v2779
          %2781 = vmatmul.bf16.gmra.mxu0 %v2404
          %v2782 = vpop.f32.mrf.mxu0
          %v2783 = vadd.f32 %v2694, %v2782
          %v2784 = vpop.f32.mrf.mxu0
          %v2785 = vadd.f32 %v2696, %v2784
          %2786 = vmatmul.bf16.gmra.mxu0 %v2406
          %v2787 = vpop.f32.mrf.mxu0
          %v2788 = vadd.f32 %v2699, %v2787
          %v2789 = vpop.f32.mrf.mxu0
          %v2790 = vadd.f32 %v2701, %v2789
          %2791 = vmatmul.bf16.gmra.mxu0 %v2408
          %v2792 = vpop.f32.mrf.mxu0
          %v2793 = vadd.f32 %v2704, %v2792
          %v2794 = vpop.f32.mrf.mxu0
          %v2795 = vadd.f32 %v2706, %v2794
          %2796 = vdwg.mxu0
          %v2797 = vpack.c.bf16 %v2718, %v2540
          %v2798 = vpack.c.bf16 %v2720, %v2542
          %v2799 = vpack.c.bf16 %v2723, %v2545
          %v2800 = vpack.c.bf16 %v2725, %v2547
          %v2801 = vpack.c.bf16 %v2728, %v2550
          %v2802 = vpack.c.bf16 %v2730, %v2552
          %v2803 = vpack.c.bf16 %v2733, %v2555
          %v2804 = vpack.c.bf16 %v2735, %v2557
          %v2805 = vpack.c.bf16 %v2738, %v2560
          %v2806 = vpack.c.bf16 %v2740, %v2562
          %v2807 = vpack.c.bf16 %v2743, %v2565
          %v2808 = vpack.c.bf16 %v2745, %v2567
          %v2809 = vpack.c.bf16 %v2748, %v2570
          %v2810 = vpack.c.bf16 %v2750, %v2572
          %v2811 = vpack.c.bf16 %v2753, %v2575
          %v2812 = vpack.c.bf16 %v2755, %v2577
          %v2813 = vpack.c.bf16 %v2758, %v2580
          %v2814 = vpack.c.bf16 %v2760, %v2582
          %v2815 = vpack.c.bf16 %v2763, %v2585
          %v2816 = vpack.c.bf16 %v2765, %v2587
          %v2817 = vpack.c.bf16 %v2768, %v2590
          %v2818 = vpack.c.bf16 %v2770, %v2592
          %v2819 = vpack.c.bf16 %v2773, %v2595
          %v2820 = vpack.c.bf16 %v2775, %v2597
          %v2821 = vpack.c.bf16 %v2778, %v2600
          %v2822 = vpack.c.bf16 %v2780, %v2602
          %v2823 = vpack.c.bf16 %v2783, %v2605
          %v2824 = vpack.c.bf16 %v2785, %v2607
          %v2825 = vpack.c.bf16 %v2788, %v2610
          %v2826 = vpack.c.bf16 %v2790, %v2612
          %v2827 = vpack.c.bf16 %v2793, %v2615
          %v2828 = vpack.c.bf16 %v2795, %v2617
          %2829 = vst [vmem:[#allocation4 + $0x8] sm:$0xff] %v2797
          %2830 = vst [vmem:[#allocation4 + $0x20] sm:$0xff] %v2798
          %2831 = vst [vmem:[#allocation4 + $0x38] sm:$0xff] %v2799
          %2832 = vst [vmem:[#allocation4 + $0x50] sm:$0xff] %v2800
          %2833 = vst [vmem:[#allocation4 + $0x68] sm:$0xff] %v2801
          %2834 = vst [vmem:[#allocation4 + $0x80] sm:$0xff] %v2802
          %2835 = vst [vmem:[#allocation4 + $0x98] sm:$0xff] %v2803
          %2836 = vst [vmem:[#allocation4 + $0xb0] sm:$0xff] %v2804
          %2837 = vst [vmem:[#allocation4 + $0xc8] sm:$0xff] %v2805
          %2838 = vst [vmem:[#allocation4 + $0xe0] sm:$0xff] %v2806
          %2839 = vst [vmem:[#allocation4 + $0xf8] sm:$0xff] %v2807
          %2840 = vst [vmem:[#allocation4 + $0x110] sm:$0xff] %v2808
          %2841 = vst [vmem:[#allocation4 + $0x128] sm:$0xff] %v2809
          %2842 = vst [vmem:[#allocation4 + $0x140] sm:$0xff] %v2810
          %2843 = vst [vmem:[#allocation4 + $0x158] sm:$0xff] %v2811
          %2844 = vst [vmem:[#allocation4 + $0x170] sm:$0xff] %v2812
          %2845 = vst [vmem:[#allocation4 + $0x188] sm:$0xff] %v2813
          %2846 = vst [vmem:[#allocation4 + $0x1a0] sm:$0xff] %v2814
          %2847 = vst [vmem:[#allocation4 + $0x1b8] sm:$0xff] %v2815
          %2848 = vst [vmem:[#allocation4 + $0x1d0] sm:$0xff] %v2816
          %2849 = vst [vmem:[#allocation4 + $0x1e8] sm:$0xff] %v2817
          %2850 = vst [vmem:[#allocation4 + $0x200] sm:$0xff] %v2818
          %2851 = vst [vmem:[#allocation4 + $0x218] sm:$0xff] %v2819
          %2852 = vst [vmem:[#allocation4 + $0x230] sm:$0xff] %v2820
          %2853 = vst [vmem:[#allocation4 + $0x248] sm:$0xff] %v2821
          %2854 = vst [vmem:[#allocation4 + $0x260] sm:$0xff] %v2822
          %2855 = vst [vmem:[#allocation4 + $0x278] sm:$0xff] %v2823
          %2856 = vst [vmem:[#allocation4 + $0x290] sm:$0xff] %v2824
          %2857 = vst [vmem:[#allocation4 + $0x2a8] sm:$0xff] %v2825
          %2858 = vst [vmem:[#allocation4 + $0x2c0] sm:$0xff] %v2826
          %2859 = vst [vmem:[#allocation4 + $0x2d8] sm:$0xff] %v2827
          %2860 = vst [vmem:[#allocation4 + $0x2f0] sm:$0xff] %v2828
          %s2861 = scalar_lea.vmem %s280, 512 [#allocation13]
          %v2862 = vld [vmem:[%s2861] sm:$0xff]
          %v2863 = vld [vmem:[%s2861 + $0x8] sm:$0xff]
          %v2864 = vld [vmem:[%s2861 + $0x10] sm:$0xff]
          %v2865 = vld [vmem:[%s2861 + $0x18] sm:$0xff]
          %v2866 = vld [vmem:[%s2861 + $0x20] sm:$0xff]
          %v2867 = vld [vmem:[%s2861 + $0x28] sm:$0xff]
          %v2868 = vld [vmem:[%s2861 + $0x30] sm:$0xff]
          %v2869 = vld [vmem:[%s2861 + $0x38] sm:$0xff]
          %v2870 = vld [vmem:[%s2861 + $0x40] sm:$0xff]
          %v2871 = vld [vmem:[%s2861 + $0x48] sm:$0xff]
          %v2872 = vld [vmem:[%s2861 + $0x50] sm:$0xff]
          %v2873 = vld [vmem:[%s2861 + $0x58] sm:$0xff]
          %v2874 = vld [vmem:[%s2861 + $0x60] sm:$0xff]
          %v2875 = vld [vmem:[%s2861 + $0x68] sm:$0xff]
          %v2876 = vld [vmem:[%s2861 + $0x70] sm:$0xff]
          %v2877 = vld [vmem:[%s2861 + $0x78] sm:$0xff]
          %v2878 = vld [vmem:[%s2861 + $0x80] sm:$0xff]
          %v2879 = vld [vmem:[%s2861 + $0x88] sm:$0xff]
          %v2880 = vld [vmem:[%s2861 + $0x90] sm:$0xff]
          %v2881 = vld [vmem:[%s2861 + $0x98] sm:$0xff]
          %v2882 = vld [vmem:[%s2861 + $0xa0] sm:$0xff]
          %v2883 = vld [vmem:[%s2861 + $0xa8] sm:$0xff]
          %v2884 = vld [vmem:[%s2861 + $0xb0] sm:$0xff]
          %v2885 = vld [vmem:[%s2861 + $0xb8] sm:$0xff]
          %v2886 = vld [vmem:[%s2861 + $0xc0] sm:$0xff]
          %v2887 = vld [vmem:[%s2861 + $0xc8] sm:$0xff]
          %v2888 = vld [vmem:[%s2861 + $0xd0] sm:$0xff]
          %v2889 = vld [vmem:[%s2861 + $0xd8] sm:$0xff]
          %v2890 = vld [vmem:[%s2861 + $0xe0] sm:$0xff]
          %v2891 = vld [vmem:[%s2861 + $0xe8] sm:$0xff]
          %v2892 = vld [vmem:[%s2861 + $0xf0] sm:$0xff]
          %v2893 = vld [vmem:[%s2861 + $0xf8] sm:$0xff]
          %v2926 = vunpack.c.l.b16 %v2862
          %v2927 = vunpack.c.h.b16 %v2862
          %v2928 = vunpack.c.l.b16 %v2863
          %v2929 = vunpack.c.h.b16 %v2863
          %v2930 = vunpack.c.l.b16 %v2864
          %v2931 = vunpack.c.h.b16 %v2864
          %v2932 = vunpack.c.l.b16 %v2865
          %v2933 = vunpack.c.h.b16 %v2865
          %v2934 = vunpack.c.l.b16 %v2866
          %v2935 = vunpack.c.h.b16 %v2866
          %v2936 = vunpack.c.l.b16 %v2867
          %v2937 = vunpack.c.h.b16 %v2867
          %v2938 = vunpack.c.l.b16 %v2868
          %v2939 = vunpack.c.h.b16 %v2868
          %v2940 = vunpack.c.l.b16 %v2869
          %v2941 = vunpack.c.h.b16 %v2869
          %v2942 = vunpack.c.l.b16 %v2870
          %v2943 = vunpack.c.h.b16 %v2870
          %v2944 = vunpack.c.l.b16 %v2871
          %v2945 = vunpack.c.h.b16 %v2871
          %v2946 = vunpack.c.l.b16 %v2872
          %v2947 = vunpack.c.h.b16 %v2872
          %v2948 = vunpack.c.l.b16 %v2873
          %v2949 = vunpack.c.h.b16 %v2873
          %v2950 = vunpack.c.l.b16 %v2874
          %v2951 = vunpack.c.h.b16 %v2874
          %v2952 = vunpack.c.l.b16 %v2875
          %v2953 = vunpack.c.h.b16 %v2875
          %v2954 = vunpack.c.l.b16 %v2876
          %v2955 = vunpack.c.h.b16 %v2876
          %v2956 = vunpack.c.l.b16 %v2877
          %v2957 = vunpack.c.h.b16 %v2877
          %v2958 = vunpack.c.l.b16 %v2878
          %v2959 = vunpack.c.h.b16 %v2878
          %v2960 = vunpack.c.l.b16 %v2879
          %v2961 = vunpack.c.h.b16 %v2879
          %v2962 = vunpack.c.l.b16 %v2880
          %v2963 = vunpack.c.h.b16 %v2880
          %v2964 = vunpack.c.l.b16 %v2881
          %v2965 = vunpack.c.h.b16 %v2881
          %v2966 = vunpack.c.l.b16 %v2882
          %v2967 = vunpack.c.h.b16 %v2882
          %v2968 = vunpack.c.l.b16 %v2883
          %v2969 = vunpack.c.h.b16 %v2883
          %v2970 = vunpack.c.l.b16 %v2884
          %v2971 = vunpack.c.h.b16 %v2884
          %v2972 = vunpack.c.l.b16 %v2885
          %v2973 = vunpack.c.h.b16 %v2885
          %v2974 = vunpack.c.l.b16 %v2886
          %v2975 = vunpack.c.h.b16 %v2886
          %v2976 = vunpack.c.l.b16 %v2887
          %v2977 = vunpack.c.h.b16 %v2887
          %v2978 = vunpack.c.l.b16 %v2888
          %v2979 = vunpack.c.h.b16 %v2888
          %v2980 = vunpack.c.l.b16 %v2889
          %v2981 = vunpack.c.h.b16 %v2889
          %v2982 = vunpack.c.l.b16 %v2890
          %v2983 = vunpack.c.h.b16 %v2890
          %v2984 = vunpack.c.l.b16 %v2891
          %v2985 = vunpack.c.h.b16 %v2891
          %v2986 = vunpack.c.l.b16 %v2892
          %v2987 = vunpack.c.h.b16 %v2892
          %v2988 = vunpack.c.l.b16 %v2893
          %v2989 = vunpack.c.h.b16 %v2893
          %v2990 = vpack.c.b16 %v2928, %v2926
          %v2991 = vpack.c.b16 %v2929, %v2927
          %v2992 = vpack.c.b16 %v2932, %v2930
          %v2993 = vpack.c.b16 %v2933, %v2931
          %v2994 = vpack.c.b16 %v2936, %v2934
          %v2995 = vpack.c.b16 %v2937, %v2935
          %v2996 = vpack.c.b16 %v2940, %v2938
          %v2997 = vpack.c.b16 %v2941, %v2939
          %v2998 = vpack.c.b16 %v2944, %v2942
          %v2999 = vpack.c.b16 %v2945, %v2943
          %v3000 = vpack.c.b16 %v2948, %v2946
          %v3001 = vpack.c.b16 %v2949, %v2947
          %v3002 = vpack.c.b16 %v2952, %v2950
          %v3003 = vpack.c.b16 %v2953, %v2951
          %v3004 = vpack.c.b16 %v2956, %v2954
          %v3005 = vpack.c.b16 %v2957, %v2955
          %v3006 = vpack.c.b16 %v2960, %v2958
          %v3007 = vpack.c.b16 %v2961, %v2959
          %v3008 = vpack.c.b16 %v2964, %v2962
          %v3009 = vpack.c.b16 %v2965, %v2963
          %v3010 = vpack.c.b16 %v2968, %v2966
          %v3011 = vpack.c.b16 %v2969, %v2967
          %v3012 = vpack.c.b16 %v2972, %v2970
          %v3013 = vpack.c.b16 %v2973, %v2971
          %v3014 = vpack.c.b16 %v2976, %v2974
          %v3015 = vpack.c.b16 %v2977, %v2975
          %v3016 = vpack.c.b16 %v2980, %v2978
          %v3017 = vpack.c.b16 %v2981, %v2979
          %v3018 = vpack.c.b16 %v2984, %v2982
          %v3019 = vpack.c.b16 %v2985, %v2983
          %v3020 = vpack.c.b16 %v2988, %v2986
          %v3021 = vpack.c.b16 %v2989, %v2987
          %3054 = vmatpush.bf16.msra.mxu0 %v1778
          %3055 = vmatpush.bf16.msra.mxu0 %v1776
          %3056 = vmatpush.bf16.msra.mxu0 %v1774
          %3057 = vmatpush.bf16.msra.mxu0 %v1772
          %3058 = vmatpush.bf16.msra.mxu0 %v1770
          %3059 = vmatpush.bf16.msra.mxu0 %v1768
          %3060 = vmatpush.bf16.msra.mxu0 %v1766
          %3061 = vmatpush.bf16.msra.mxu0 %v1764
          %3062 = vmatmul.bf16.gmra.mxu0 %v2990
          %v3063 = vpop.f32.mrf.mxu0
          %v3064 = vadd.f32 0.0, %v3063
          %v3065 = vpop.f32.mrf.mxu0
          %v3066 = vadd.f32 0.0, %v3065
          %3067 = vmatmul.bf16.gmra.mxu0 %v2992
          %v3068 = vpop.f32.mrf.mxu0
          %v3069 = vadd.f32 0.0, %v3068
          %v3070 = vpop.f32.mrf.mxu0
          %v3071 = vadd.f32 0.0, %v3070
          %3072 = vmatmul.bf16.gmra.mxu0 %v2994
          %v3073 = vpop.f32.mrf.mxu0
          %v3074 = vadd.f32 0.0, %v3073
          %v3075 = vpop.f32.mrf.mxu0
          %v3076 = vadd.f32 0.0, %v3075
          %3077 = vmatmul.bf16.gmra.mxu0 %v2996
          %v3078 = vpop.f32.mrf.mxu0
          %v3079 = vadd.f32 0.0, %v3078
          %v3080 = vpop.f32.mrf.mxu0
          %v3081 = vadd.f32 0.0, %v3080
          %3082 = vmatmul.bf16.gmra.mxu0 %v2998
          %v3083 = vpop.f32.mrf.mxu0
          %v3084 = vadd.f32 0.0, %v3083
          %v3085 = vpop.f32.mrf.mxu0
          %v3086 = vadd.f32 0.0, %v3085
          %3087 = vmatmul.bf16.gmra.mxu0 %v3000
          %v3088 = vpop.f32.mrf.mxu0
          %v3089 = vadd.f32 0.0, %v3088
          %v3090 = vpop.f32.mrf.mxu0
          %v3091 = vadd.f32 0.0, %v3090
          %3092 = vmatmul.bf16.gmra.mxu0 %v3002
          %v3093 = vpop.f32.mrf.mxu0
          %v3094 = vadd.f32 0.0, %v3093
          %v3095 = vpop.f32.mrf.mxu0
          %v3096 = vadd.f32 0.0, %v3095
          %3097 = vmatmul.bf16.gmra.mxu0 %v3004
          %v3098 = vpop.f32.mrf.mxu0
          %v3099 = vadd.f32 0.0, %v3098
          %v3100 = vpop.f32.mrf.mxu0
          %v3101 = vadd.f32 0.0, %v3100
          %3102 = vmatmul.bf16.gmra.mxu0 %v3006
          %v3103 = vpop.f32.mrf.mxu0
          %v3104 = vadd.f32 0.0, %v3103
          %v3105 = vpop.f32.mrf.mxu0
          %v3106 = vadd.f32 0.0, %v3105
          %3107 = vmatmul.bf16.gmra.mxu0 %v3008
          %v3108 = vpop.f32.mrf.mxu0
          %v3109 = vadd.f32 0.0, %v3108
          %v3110 = vpop.f32.mrf.mxu0
          %v3111 = vadd.f32 0.0, %v3110
          %3112 = vmatmul.bf16.gmra.mxu0 %v3010
          %v3113 = vpop.f32.mrf.mxu0
          %v3114 = vadd.f32 0.0, %v3113
          %v3115 = vpop.f32.mrf.mxu0
          %v3116 = vadd.f32 0.0, %v3115
          %3117 = vmatmul.bf16.gmra.mxu0 %v3012
          %v3118 = vpop.f32.mrf.mxu0
          %v3119 = vadd.f32 0.0, %v3118
          %v3120 = vpop.f32.mrf.mxu0
          %v3121 = vadd.f32 0.0, %v3120
          %3122 = vmatmul.bf16.gmra.mxu0 %v3014
          %v3123 = vpop.f32.mrf.mxu0
          %v3124 = vadd.f32 0.0, %v3123
          %v3125 = vpop.f32.mrf.mxu0
          %v3126 = vadd.f32 0.0, %v3125
          %3127 = vmatmul.bf16.gmra.mxu0 %v3016
          %v3128 = vpop.f32.mrf.mxu0
          %v3129 = vadd.f32 0.0, %v3128
          %v3130 = vpop.f32.mrf.mxu0
          %v3131 = vadd.f32 0.0, %v3130
          %3132 = vmatmul.bf16.gmra.mxu0 %v3018
          %v3133 = vpop.f32.mrf.mxu0
          %v3134 = vadd.f32 0.0, %v3133
          %v3135 = vpop.f32.mrf.mxu0
          %v3136 = vadd.f32 0.0, %v3135
          %3137 = vmatmul.bf16.gmra.mxu0 %v3020
          %v3138 = vpop.f32.mrf.mxu0
          %v3139 = vadd.f32 0.0, %v3138
          %v3140 = vpop.f32.mrf.mxu0
          %v3141 = vadd.f32 0.0, %v3140
          %3142 = vdwg.mxu0
          %3143 = vmatpush.bf16.msra.mxu0 %v1794
          %3144 = vmatpush.bf16.msra.mxu0 %v1792
          %3145 = vmatpush.bf16.msra.mxu0 %v1790
          %3146 = vmatpush.bf16.msra.mxu0 %v1788
          %3147 = vmatpush.bf16.msra.mxu0 %v1786
          %3148 = vmatpush.bf16.msra.mxu0 %v1784
          %3149 = vmatpush.bf16.msra.mxu0 %v1782
          %3150 = vmatpush.bf16.msra.mxu0 %v1780
          %3151 = vmatmul.bf16.gmra.mxu0 %v2991
          %v3152 = vpop.f32.mrf.mxu0
          %v3153 = vadd.f32 %v3064, %v3152
          %v3154 = vpop.f32.mrf.mxu0
          %v3155 = vadd.f32 %v3066, %v3154
          %3156 = vmatmul.bf16.gmra.mxu0 %v2993
          %v3157 = vpop.f32.mrf.mxu0
          %v3158 = vadd.f32 %v3069, %v3157
          %v3159 = vpop.f32.mrf.mxu0
          %v3160 = vadd.f32 %v3071, %v3159
          %3161 = vmatmul.bf16.gmra.mxu0 %v2995
          %v3162 = vpop.f32.mrf.mxu0
          %v3163 = vadd.f32 %v3074, %v3162
          %v3164 = vpop.f32.mrf.mxu0
          %v3165 = vadd.f32 %v3076, %v3164
          %3166 = vmatmul.bf16.gmra.mxu0 %v2997
          %v3167 = vpop.f32.mrf.mxu0
          %v3168 = vadd.f32 %v3079, %v3167
          %v3169 = vpop.f32.mrf.mxu0
          %v3170 = vadd.f32 %v3081, %v3169
          %3171 = vmatmul.bf16.gmra.mxu0 %v2999
          %v3172 = vpop.f32.mrf.mxu0
          %v3173 = vadd.f32 %v3084, %v3172
          %v3174 = vpop.f32.mrf.mxu0
          %v3175 = vadd.f32 %v3086, %v3174
          %3176 = vmatmul.bf16.gmra.mxu0 %v3001
          %v3177 = vpop.f32.mrf.mxu0
          %v3178 = vadd.f32 %v3089, %v3177
          %v3179 = vpop.f32.mrf.mxu0
          %v3180 = vadd.f32 %v3091, %v3179
          %3181 = vmatmul.bf16.gmra.mxu0 %v3003
          %v3182 = vpop.f32.mrf.mxu0
          %v3183 = vadd.f32 %v3094, %v3182
          %v3184 = vpop.f32.mrf.mxu0
          %v3185 = vadd.f32 %v3096, %v3184
          %3186 = vmatmul.bf16.gmra.mxu0 %v3005
          %v3187 = vpop.f32.mrf.mxu0
          %v3188 = vadd.f32 %v3099, %v3187
          %v3189 = vpop.f32.mrf.mxu0
          %v3190 = vadd.f32 %v3101, %v3189
          %3191 = vmatmul.bf16.gmra.mxu0 %v3007
          %v3192 = vpop.f32.mrf.mxu0
          %v3193 = vadd.f32 %v3104, %v3192
          %v3194 = vpop.f32.mrf.mxu0
          %v3195 = vadd.f32 %v3106, %v3194
          %3196 = vmatmul.bf16.gmra.mxu0 %v3009
          %v3197 = vpop.f32.mrf.mxu0
          %v3198 = vadd.f32 %v3109, %v3197
          %v3199 = vpop.f32.mrf.mxu0
          %v3200 = vadd.f32 %v3111, %v3199
          %3201 = vmatmul.bf16.gmra.mxu0 %v3011
          %v3202 = vpop.f32.mrf.mxu0
          %v3203 = vadd.f32 %v3114, %v3202
          %v3204 = vpop.f32.mrf.mxu0
          %v3205 = vadd.f32 %v3116, %v3204
          %3206 = vmatmul.bf16.gmra.mxu0 %v3013
          %v3207 = vpop.f32.mrf.mxu0
          %v3208 = vadd.f32 %v3119, %v3207
          %v3209 = vpop.f32.mrf.mxu0
          %v3210 = vadd.f32 %v3121, %v3209
          %3211 = vmatmul.bf16.gmra.mxu0 %v3015
          %v3212 = vpop.f32.mrf.mxu0
          %v3213 = vadd.f32 %v3124, %v3212
          %v3214 = vpop.f32.mrf.mxu0
          %v3215 = vadd.f32 %v3126, %v3214
          %3216 = vmatmul.bf16.gmra.mxu0 %v3017
          %v3217 = vpop.f32.mrf.mxu0
          %v3218 = vadd.f32 %v3129, %v3217
          %v3219 = vpop.f32.mrf.mxu0
          %v3220 = vadd.f32 %v3131, %v3219
          %3221 = vmatmul.bf16.gmra.mxu0 %v3019
          %v3222 = vpop.f32.mrf.mxu0
          %v3223 = vadd.f32 %v3134, %v3222
          %v3224 = vpop.f32.mrf.mxu0
          %v3225 = vadd.f32 %v3136, %v3224
          %3226 = vmatmul.bf16.gmra.mxu0 %v3021
          %v3227 = vpop.f32.mrf.mxu0
          %v3228 = vadd.f32 %v3139, %v3227
          %v3229 = vpop.f32.mrf.mxu0
          %v3230 = vadd.f32 %v3141, %v3229
          %3231 = vdwg.mxu0
          %3232 = vmatpush.bf16.msra.mxu0 %v1779
          %3233 = vmatpush.bf16.msra.mxu0 %v1777
          %3234 = vmatpush.bf16.msra.mxu0 %v1775
          %3235 = vmatpush.bf16.msra.mxu0 %v1773
          %3236 = vmatpush.bf16.msra.mxu0 %v1771
          %3237 = vmatpush.bf16.msra.mxu0 %v1769
          %3238 = vmatpush.bf16.msra.mxu0 %v1767
          %3239 = vmatpush.bf16.msra.mxu0 %v1765
          %3240 = vmatmul.bf16.gmra.mxu0 %v2990
          %v3241 = vpop.f32.mrf.mxu0
          %v3242 = vadd.f32 0.0, %v3241
          %v3243 = vpop.f32.mrf.mxu0
          %v3244 = vadd.f32 0.0, %v3243
          %3245 = vmatmul.bf16.gmra.mxu0 %v2992
          %v3246 = vpop.f32.mrf.mxu0
          %v3247 = vadd.f32 0.0, %v3246
          %v3248 = vpop.f32.mrf.mxu0
          %v3249 = vadd.f32 0.0, %v3248
          %3250 = vmatmul.bf16.gmra.mxu0 %v2994
          %v3251 = vpop.f32.mrf.mxu0
          %v3252 = vadd.f32 0.0, %v3251
          %v3253 = vpop.f32.mrf.mxu0
          %v3254 = vadd.f32 0.0, %v3253
          %3255 = vmatmul.bf16.gmra.mxu0 %v2996
          %v3256 = vpop.f32.mrf.mxu0
          %v3257 = vadd.f32 0.0, %v3256
          %v3258 = vpop.f32.mrf.mxu0
          %v3259 = vadd.f32 0.0, %v3258
          %3260 = vmatmul.bf16.gmra.mxu0 %v2998
          %v3261 = vpop.f32.mrf.mxu0
          %v3262 = vadd.f32 0.0, %v3261
          %v3263 = vpop.f32.mrf.mxu0
          %v3264 = vadd.f32 0.0, %v3263
          %3265 = vmatmul.bf16.gmra.mxu0 %v3000
          %v3266 = vpop.f32.mrf.mxu0
          %v3267 = vadd.f32 0.0, %v3266
          %v3268 = vpop.f32.mrf.mxu0
          %v3269 = vadd.f32 0.0, %v3268
          %3270 = vmatmul.bf16.gmra.mxu0 %v3002
          %v3271 = vpop.f32.mrf.mxu0
          %v3272 = vadd.f32 0.0, %v3271
          %v3273 = vpop.f32.mrf.mxu0
          %v3274 = vadd.f32 0.0, %v3273
          %3275 = vmatmul.bf16.gmra.mxu0 %v3004
          %v3276 = vpop.f32.mrf.mxu0
          %v3277 = vadd.f32 0.0, %v3276
          %v3278 = vpop.f32.mrf.mxu0
          %v3279 = vadd.f32 0.0, %v3278
          %3280 = vmatmul.bf16.gmra.mxu0 %v3006
          %v3281 = vpop.f32.mrf.mxu0
          %v3282 = vadd.f32 0.0, %v3281
          %v3283 = vpop.f32.mrf.mxu0
          %v3284 = vadd.f32 0.0, %v3283
          %3285 = vmatmul.bf16.gmra.mxu0 %v3008
          %v3286 = vpop.f32.mrf.mxu0
          %v3287 = vadd.f32 0.0, %v3286
          %v3288 = vpop.f32.mrf.mxu0
          %v3289 = vadd.f32 0.0, %v3288
          %3290 = vmatmul.bf16.gmra.mxu0 %v3010
          %v3291 = vpop.f32.mrf.mxu0
          %v3292 = vadd.f32 0.0, %v3291
          %v3293 = vpop.f32.mrf.mxu0
          %v3294 = vadd.f32 0.0, %v3293
          %3295 = vmatmul.bf16.gmra.mxu0 %v3012
          %v3296 = vpop.f32.mrf.mxu0
          %v3297 = vadd.f32 0.0, %v3296
          %v3298 = vpop.f32.mrf.mxu0
          %v3299 = vadd.f32 0.0, %v3298
          %3300 = vmatmul.bf16.gmra.mxu0 %v3014
          %v3301 = vpop.f32.mrf.mxu0
          %v3302 = vadd.f32 0.0, %v3301
          %v3303 = vpop.f32.mrf.mxu0
          %v3304 = vadd.f32 0.0, %v3303
          %3305 = vmatmul.bf16.gmra.mxu0 %v3016
          %v3306 = vpop.f32.mrf.mxu0
          %v3307 = vadd.f32 0.0, %v3306
          %v3308 = vpop.f32.mrf.mxu0
          %v3309 = vadd.f32 0.0, %v3308
          %3310 = vmatmul.bf16.gmra.mxu0 %v3018
          %v3311 = vpop.f32.mrf.mxu0
          %v3312 = vadd.f32 0.0, %v3311
          %v3313 = vpop.f32.mrf.mxu0
          %v3314 = vadd.f32 0.0, %v3313
          %3315 = vmatmul.bf16.gmra.mxu0 %v3020
          %v3316 = vpop.f32.mrf.mxu0
          %v3317 = vadd.f32 0.0, %v3316
          %v3318 = vpop.f32.mrf.mxu0
          %v3319 = vadd.f32 0.0, %v3318
          %3320 = vdwg.mxu0
          %3321 = vmatpush.bf16.msra.mxu0 %v1795
          %3322 = vmatpush.bf16.msra.mxu0 %v1793
          %3323 = vmatpush.bf16.msra.mxu0 %v1791
          %3324 = vmatpush.bf16.msra.mxu0 %v1789
          %3325 = vmatpush.bf16.msra.mxu0 %v1787
          %3326 = vmatpush.bf16.msra.mxu0 %v1785
          %3327 = vmatpush.bf16.msra.mxu0 %v1783
          %3328 = vmatpush.bf16.msra.mxu0 %v1781
          %3329 = vmatmul.bf16.gmra.mxu0 %v2991
          %v3330 = vpop.f32.mrf.mxu0
          %v3331 = vadd.f32 %v3242, %v3330
          %v3332 = vpop.f32.mrf.mxu0
          %v3333 = vadd.f32 %v3244, %v3332
          %3334 = vmatmul.bf16.gmra.mxu0 %v2993
          %v3335 = vpop.f32.mrf.mxu0
          %v3336 = vadd.f32 %v3247, %v3335
          %v3337 = vpop.f32.mrf.mxu0
          %v3338 = vadd.f32 %v3249, %v3337
          %3339 = vmatmul.bf16.gmra.mxu0 %v2995
          %v3340 = vpop.f32.mrf.mxu0
          %v3341 = vadd.f32 %v3252, %v3340
          %v3342 = vpop.f32.mrf.mxu0
          %v3343 = vadd.f32 %v3254, %v3342
          %3344 = vmatmul.bf16.gmra.mxu0 %v2997
          %v3345 = vpop.f32.mrf.mxu0
          %v3346 = vadd.f32 %v3257, %v3345
          %v3347 = vpop.f32.mrf.mxu0
          %v3348 = vadd.f32 %v3259, %v3347
          %3349 = vmatmul.bf16.gmra.mxu0 %v2999
          %v3350 = vpop.f32.mrf.mxu0
          %v3351 = vadd.f32 %v3262, %v3350
          %v3352 = vpop.f32.mrf.mxu0
          %v3353 = vadd.f32 %v3264, %v3352
          %3354 = vmatmul.bf16.gmra.mxu0 %v3001
          %v3355 = vpop.f32.mrf.mxu0
          %v3356 = vadd.f32 %v3267, %v3355
          %v3357 = vpop.f32.mrf.mxu0
          %v3358 = vadd.f32 %v3269, %v3357
          %3359 = vmatmul.bf16.gmra.mxu0 %v3003
          %v3360 = vpop.f32.mrf.mxu0
          %v3361 = vadd.f32 %v3272, %v3360
          %v3362 = vpop.f32.mrf.mxu0
          %v3363 = vadd.f32 %v3274, %v3362
          %3364 = vmatmul.bf16.gmra.mxu0 %v3005
          %v3365 = vpop.f32.mrf.mxu0
          %v3366 = vadd.f32 %v3277, %v3365
          %v3367 = vpop.f32.mrf.mxu0
          %v3368 = vadd.f32 %v3279, %v3367
          %3369 = vmatmul.bf16.gmra.mxu0 %v3007
          %v3370 = vpop.f32.mrf.mxu0
          %v3371 = vadd.f32 %v3282, %v3370
          %v3372 = vpop.f32.mrf.mxu0
          %v3373 = vadd.f32 %v3284, %v3372
          %3374 = vmatmul.bf16.gmra.mxu0 %v3009
          %v3375 = vpop.f32.mrf.mxu0
          %v3376 = vadd.f32 %v3287, %v3375
          %v3377 = vpop.f32.mrf.mxu0
          %v3378 = vadd.f32 %v3289, %v3377
          %3379 = vmatmul.bf16.gmra.mxu0 %v3011
          %v3380 = vpop.f32.mrf.mxu0
          %v3381 = vadd.f32 %v3292, %v3380
          %v3382 = vpop.f32.mrf.mxu0
          %v3383 = vadd.f32 %v3294, %v3382
          %3384 = vmatmul.bf16.gmra.mxu0 %v3013
          %v3385 = vpop.f32.mrf.mxu0
          %v3386 = vadd.f32 %v3297, %v3385
          %v3387 = vpop.f32.mrf.mxu0
          %v3388 = vadd.f32 %v3299, %v3387
          %3389 = vmatmul.bf16.gmra.mxu0 %v3015
          %v3390 = vpop.f32.mrf.mxu0
          %v3391 = vadd.f32 %v3302, %v3390
          %v3392 = vpop.f32.mrf.mxu0
          %v3393 = vadd.f32 %v3304, %v3392
          %3394 = vmatmul.bf16.gmra.mxu0 %v3017
          %v3395 = vpop.f32.mrf.mxu0
          %v3396 = vadd.f32 %v3307, %v3395
          %v3397 = vpop.f32.mrf.mxu0
          %v3398 = vadd.f32 %v3309, %v3397
          %3399 = vmatmul.bf16.gmra.mxu0 %v3019
          %v3400 = vpop.f32.mrf.mxu0
          %v3401 = vadd.f32 %v3312, %v3400
          %v3402 = vpop.f32.mrf.mxu0
          %v3403 = vadd.f32 %v3314, %v3402
          %3404 = vmatmul.bf16.gmra.mxu0 %v3021
          %v3405 = vpop.f32.mrf.mxu0
          %v3406 = vadd.f32 %v3317, %v3405
          %v3407 = vpop.f32.mrf.mxu0
          %v3408 = vadd.f32 %v3319, %v3407
          %3409 = vdwg.mxu0
          %v3410 = vpack.c.bf16 %v3331, %v3153
          %v3411 = vpack.c.bf16 %v3333, %v3155
          %v3412 = vpack.c.bf16 %v3336, %v3158
          %v3413 = vpack.c.bf16 %v3338, %v3160
          %v3414 = vpack.c.bf16 %v3341, %v3163
          %v3415 = vpack.c.bf16 %v3343, %v3165
          %v3416 = vpack.c.bf16 %v3346, %v3168
          %v3417 = vpack.c.bf16 %v3348, %v3170
          %v3418 = vpack.c.bf16 %v3351, %v3173
          %v3419 = vpack.c.bf16 %v3353, %v3175
          %v3420 = vpack.c.bf16 %v3356, %v3178
          %v3421 = vpack.c.bf16 %v3358, %v3180
          %v3422 = vpack.c.bf16 %v3361, %v3183
          %v3423 = vpack.c.bf16 %v3363, %v3185
          %v3424 = vpack.c.bf16 %v3366, %v3188
          %v3425 = vpack.c.bf16 %v3368, %v3190
          %v3426 = vpack.c.bf16 %v3371, %v3193
          %v3427 = vpack.c.bf16 %v3373, %v3195
          %v3428 = vpack.c.bf16 %v3376, %v3198
          %v3429 = vpack.c.bf16 %v3378, %v3200
          %v3430 = vpack.c.bf16 %v3381, %v3203
          %v3431 = vpack.c.bf16 %v3383, %v3205
          %v3432 = vpack.c.bf16 %v3386, %v3208
          %v3433 = vpack.c.bf16 %v3388, %v3210
          %v3434 = vpack.c.bf16 %v3391, %v3213
          %v3435 = vpack.c.bf16 %v3393, %v3215
          %v3436 = vpack.c.bf16 %v3396, %v3218
          %v3437 = vpack.c.bf16 %v3398, %v3220
          %v3438 = vpack.c.bf16 %v3401, %v3223
          %v3439 = vpack.c.bf16 %v3403, %v3225
          %v3440 = vpack.c.bf16 %v3406, %v3228
          %v3441 = vpack.c.bf16 %v3408, %v3230
          %3442 = vst [vmem:[#allocation4 + $0x10] sm:$0xff] %v3410
          %3443 = vst [vmem:[#allocation4 + $0x28] sm:$0xff] %v3411
          %3444 = vst [vmem:[#allocation4 + $0x40] sm:$0xff] %v3412
          %3445 = vst [vmem:[#allocation4 + $0x58] sm:$0xff] %v3413
          %3446 = vst [vmem:[#allocation4 + $0x70] sm:$0xff] %v3414
          %3447 = vst [vmem:[#allocation4 + $0x88] sm:$0xff] %v3415
          %3448 = vst [vmem:[#allocation4 + $0xa0] sm:$0xff] %v3416
          %3449 = vst [vmem:[#allocation4 + $0xb8] sm:$0xff] %v3417
          %3450 = vst [vmem:[#allocation4 + $0xd0] sm:$0xff] %v3418
          %3451 = vst [vmem:[#allocation4 + $0xe8] sm:$0xff] %v3419
          %3452 = vst [vmem:[#allocation4 + $0x100] sm:$0xff] %v3420
          %3453 = vst [vmem:[#allocation4 + $0x118] sm:$0xff] %v3421
          %3454 = vst [vmem:[#allocation4 + $0x130] sm:$0xff] %v3422
          %3455 = vst [vmem:[#allocation4 + $0x148] sm:$0xff] %v3423
          %3456 = vst [vmem:[#allocation4 + $0x160] sm:$0xff] %v3424
          %3457 = vst [vmem:[#allocation4 + $0x178] sm:$0xff] %v3425
          %3458 = vst [vmem:[#allocation4 + $0x190] sm:$0xff] %v3426
          %3459 = vst [vmem:[#allocation4 + $0x1a8] sm:$0xff] %v3427
          %3460 = vst [vmem:[#allocation4 + $0x1c0] sm:$0xff] %v3428
          %3461 = vst [vmem:[#allocation4 + $0x1d8] sm:$0xff] %v3429
          %3462 = vst [vmem:[#allocation4 + $0x1f0] sm:$0xff] %v3430
          %3463 = vst [vmem:[#allocation4 + $0x208] sm:$0xff] %v3431
          %3464 = vst [vmem:[#allocation4 + $0x220] sm:$0xff] %v3432
          %3465 = vst [vmem:[#allocation4 + $0x238] sm:$0xff] %v3433
          %3466 = vst [vmem:[#allocation4 + $0x250] sm:$0xff] %v3434
          %3467 = vst [vmem:[#allocation4 + $0x268] sm:$0xff] %v3435
          %3468 = vst [vmem:[#allocation4 + $0x280] sm:$0xff] %v3436
          %3469 = vst [vmem:[#allocation4 + $0x298] sm:$0xff] %v3437
          %3470 = vst [vmem:[#allocation4 + $0x2b0] sm:$0xff] %v3438
          %3471 = vst [vmem:[#allocation4 + $0x2c8] sm:$0xff] %v3439
          %3472 = vst [vmem:[#allocation4 + $0x2e0] sm:$0xff] %v3440
          %3473 = vst [vmem:[#allocation4 + $0x2f8] sm:$0xff] %v3441
        $region64: #{resnet20_forward.1} parent=35 // pred_fallthru
          _
        %v3474 = vld [vmem:[#allocation4] sm:$0xff]
        %v3475 = vld [vmem:[#allocation4 + $0x8] sm:$0xff]
        %v3476 = vld [vmem:[#allocation4 + $0x10] sm:$0xff]
        %v3477 = vld [vmem:[#allocation4 + $0x18] sm:$0xff]
        %v3478 = vld [vmem:[#allocation4 + $0x20] sm:$0xff]
        %v3479 = vld [vmem:[#allocation4 + $0x28] sm:$0xff]
        %v3480 = vld [vmem:[#allocation4 + $0x30] sm:$0xff]
        %v3481 = vld [vmem:[#allocation4 + $0x38] sm:$0xff]
        %v3482 = vld [vmem:[#allocation4 + $0x40] sm:$0xff]
        %v3483 = vld [vmem:[#allocation4 + $0x48] sm:$0xff]
        %v3484 = vld [vmem:[#allocation4 + $0x50] sm:$0xff]
        %v3485 = vld [vmem:[#allocation4 + $0x58] sm:$0xff]
        %v3486 = vld [vmem:[#allocation4 + $0x60] sm:$0xff]
        %v3487 = vld [vmem:[#allocation4 + $0x68] sm:$0xff]
        %v3488 = vld [vmem:[#allocation4 + $0x70] sm:$0xff]
        %v3489 = vld [vmem:[#allocation4 + $0x78] sm:$0xff]
        %v3490 = vld [vmem:[#allocation4 + $0x80] sm:$0xff]
        %v3491 = vld [vmem:[#allocation4 + $0x88] sm:$0xff]
        %v3492 = vld [vmem:[#allocation4 + $0x90] sm:$0xff]
        %v3493 = vld [vmem:[#allocation4 + $0x98] sm:$0xff]
        %v3494 = vld [vmem:[#allocation4 + $0xa0] sm:$0xff]
        %v3495 = vld [vmem:[#allocation4 + $0xa8] sm:$0xff]
        %v3496 = vld [vmem:[#allocation4 + $0xb0] sm:$0xff]
        %v3497 = vld [vmem:[#allocation4 + $0xb8] sm:$0xff]
        %v3498 = vld [vmem:[#allocation4 + $0xc0] sm:$0xff]
        %v3499 = vld [vmem:[#allocation4 + $0xc8] sm:$0xff]
        %v3500 = vld [vmem:[#allocation4 + $0xd0] sm:$0xff]
        %v3501 = vld [vmem:[#allocation4 + $0xd8] sm:$0xff]
        %v3502 = vld [vmem:[#allocation4 + $0xe0] sm:$0xff]
        %v3503 = vld [vmem:[#allocation4 + $0xe8] sm:$0xff]
        %v3504 = vld [vmem:[#allocation4 + $0xf0] sm:$0xff]
        %v3505 = vld [vmem:[#allocation4 + $0xf8] sm:$0xff]
        %v3506 = vld [vmem:[#allocation4 + $0x100] sm:$0xff]
        %v3507 = vld [vmem:[#allocation4 + $0x108] sm:$0xff]
        %v3508 = vld [vmem:[#allocation4 + $0x110] sm:$0xff]
        %v3509 = vld [vmem:[#allocation4 + $0x118] sm:$0xff]
        %v3510 = vld [vmem:[#allocation4 + $0x120] sm:$0xff]
        %v3511 = vld [vmem:[#allocation4 + $0x128] sm:$0xff]
        %v3512 = vld [vmem:[#allocation4 + $0x130] sm:$0xff]
        %v3513 = vld [vmem:[#allocation4 + $0x138] sm:$0xff]
        %v3514 = vld [vmem:[#allocation4 + $0x140] sm:$0xff]
        %v3515 = vld [vmem:[#allocation4 + $0x148] sm:$0xff]
        %v3516 = vld [vmem:[#allocation4 + $0x150] sm:$0xff]
        %v3517 = vld [vmem:[#allocation4 + $0x158] sm:$0xff]
        %v3518 = vld [vmem:[#allocation4 + $0x160] sm:$0xff]
        %v3519 = vld [vmem:[#allocation4 + $0x168] sm:$0xff]
        %v3520 = vld [vmem:[#allocation4 + $0x170] sm:$0xff]
        %v3521 = vld [vmem:[#allocation4 + $0x178] sm:$0xff]
        %v3522 = vld [vmem:[#allocation4 + $0x180] sm:$0xff]
        %v3523 = vld [vmem:[#allocation4 + $0x188] sm:$0xff]
        %v3524 = vld [vmem:[#allocation4 + $0x190] sm:$0xff]
        %v3525 = vld [vmem:[#allocation4 + $0x198] sm:$0xff]
        %v3526 = vld [vmem:[#allocation4 + $0x1a0] sm:$0xff]
        %v3527 = vld [vmem:[#allocation4 + $0x1a8] sm:$0xff]
        %v3528 = vld [vmem:[#allocation4 + $0x1b0] sm:$0xff]
        %v3529 = vld [vmem:[#allocation4 + $0x1b8] sm:$0xff]
        %v3530 = vld [vmem:[#allocation4 + $0x1c0] sm:$0xff]
        %v3531 = vld [vmem:[#allocation4 + $0x1c8] sm:$0xff]
        %v3532 = vld [vmem:[#allocation4 + $0x1d0] sm:$0xff]
        %v3533 = vld [vmem:[#allocation4 + $0x1d8] sm:$0xff]
        %v3534 = vld [vmem:[#allocation4 + $0x1e0] sm:$0xff]
        %v3535 = vld [vmem:[#allocation4 + $0x1e8] sm:$0xff]
        %v3536 = vld [vmem:[#allocation4 + $0x1f0] sm:$0xff]
        %v3537 = vld [vmem:[#allocation4 + $0x1f8] sm:$0xff]
        %v3538 = vld [vmem:[#allocation4 + $0x200] sm:$0xff]
        %v3539 = vld [vmem:[#allocation4 + $0x208] sm:$0xff]
        %v3540 = vld [vmem:[#allocation4 + $0x210] sm:$0xff]
        %v3541 = vld [vmem:[#allocation4 + $0x218] sm:$0xff]
        %v3542 = vld [vmem:[#allocation4 + $0x220] sm:$0xff]
        %v3543 = vld [vmem:[#allocation4 + $0x228] sm:$0xff]
        %v3544 = vld [vmem:[#allocation4 + $0x230] sm:$0xff]
        %v3545 = vld [vmem:[#allocation4 + $0x238] sm:$0xff]
        %v3546 = vld [vmem:[#allocation4 + $0x240] sm:$0xff]
        %v3547 = vld [vmem:[#allocation4 + $0x248] sm:$0xff]
        %v3548 = vld [vmem:[#allocation4 + $0x250] sm:$0xff]
        %v3549 = vld [vmem:[#allocation4 + $0x258] sm:$0xff]
        %v3550 = vld [vmem:[#allocation4 + $0x260] sm:$0xff]
        %v3551 = vld [vmem:[#allocation4 + $0x268] sm:$0xff]
        %v3552 = vld [vmem:[#allocation4 + $0x270] sm:$0xff]
        %v3553 = vld [vmem:[#allocation4 + $0x278] sm:$0xff]
        %v3554 = vld [vmem:[#allocation4 + $0x280] sm:$0xff]
        %v3555 = vld [vmem:[#allocation4 + $0x288] sm:$0xff]
        %v3556 = vld [vmem:[#allocation4 + $0x290] sm:$0xff]
        %v3557 = vld [vmem:[#allocation4 + $0x298] sm:$0xff]
        %v3558 = vld [vmem:[#allocation4 + $0x2a0] sm:$0xff]
        %v3559 = vld [vmem:[#allocation4 + $0x2a8] sm:$0xff]
        %v3560 = vld [vmem:[#allocation4 + $0x2b0] sm:$0xff]
        %v3561 = vld [vmem:[#allocation4 + $0x2b8] sm:$0xff]
        %v3562 = vld [vmem:[#allocation4 + $0x2c0] sm:$0xff]
        %v3563 = vld [vmem:[#allocation4 + $0x2c8] sm:$0xff]
        %v3564 = vld [vmem:[#allocation4 + $0x2d0] sm:$0xff]
        %v3565 = vld [vmem:[#allocation4 + $0x2d8] sm:$0xff]
        %v3566 = vld [vmem:[#allocation4 + $0x2e0] sm:$0xff]
        %v3567 = vld [vmem:[#allocation4 + $0x2e8] sm:$0xff]
        %v3568 = vld [vmem:[#allocation4 + $0x2f0] sm:$0xff]
        %v3569 = vld [vmem:[#allocation4 + $0x2f8] sm:$0xff]
        %v3570 = vld [vmem:[%s290] sm:$0xff]
        %v3571 = vld [vmem:[%s290 + $0x8] sm:$0xff]
        %v3572 = vld [vmem:[%s290 + $0x10] sm:$0xff]
        %v3573 = vld [vmem:[%s290 + $0x18] sm:$0xff]
        %v3574 = vld [vmem:[%s290 + $0x20] sm:$0xff]
        %v3575 = vld [vmem:[%s290 + $0x28] sm:$0xff]
        %v3576 = vld [vmem:[%s290 + $0x30] sm:$0xff]
        %v3577 = vld [vmem:[%s290 + $0x38] sm:$0xff]
        %v3578 = vld [vmem:[%s290 + $0x40] sm:$0xff]
        %v3579 = vld [vmem:[%s290 + $0x48] sm:$0xff]
        %v3580 = vld [vmem:[%s290 + $0x50] sm:$0xff]
        %v3581 = vld [vmem:[%s290 + $0x58] sm:$0xff]
        %v3582 = vld [vmem:[%s290 + $0x60] sm:$0xff]
        %v3583 = vld [vmem:[%s290 + $0x68] sm:$0xff]
        %v3584 = vld [vmem:[%s290 + $0x70] sm:$0xff]
        %v3585 = vld [vmem:[%s290 + $0x78] sm:$0xff]
        %v3586 = vld [vmem:[%s290 + $0x80] sm:$0xff]
        %v3587 = vld [vmem:[%s290 + $0x88] sm:$0xff]
        %v3588 = vld [vmem:[%s290 + $0x90] sm:$0xff]
        %v3589 = vld [vmem:[%s290 + $0x98] sm:$0xff]
        %v3590 = vld [vmem:[%s290 + $0xa0] sm:$0xff]
        %v3591 = vld [vmem:[%s290 + $0xa8] sm:$0xff]
        %v3592 = vld [vmem:[%s290 + $0xb0] sm:$0xff]
        %v3593 = vld [vmem:[%s290 + $0xb8] sm:$0xff]
        %v3594 = vld [vmem:[%s290 + $0xc0] sm:$0xff]
        %v3595 = vld [vmem:[%s290 + $0xc8] sm:$0xff]
        %v3596 = vld [vmem:[%s290 + $0xd0] sm:$0xff]
        %v3597 = vld [vmem:[%s290 + $0xd8] sm:$0xff]
        %v3598 = vld [vmem:[%s290 + $0xe0] sm:$0xff]
        %v3599 = vld [vmem:[%s290 + $0xe8] sm:$0xff]
        %v3600 = vld [vmem:[%s290 + $0xf0] sm:$0xff]
        %v3601 = vld [vmem:[%s290 + $0xf8] sm:$0xff]
        %v3602 = vld [vmem:[%s290 + $0x100] sm:$0xff]
        %v3603 = vld [vmem:[%s290 + $0x108] sm:$0xff]
        %v3604 = vld [vmem:[%s290 + $0x110] sm:$0xff]
        %v3605 = vld [vmem:[%s290 + $0x118] sm:$0xff]
        %v3606 = vld [vmem:[%s290 + $0x120] sm:$0xff]
        %v3607 = vld [vmem:[%s290 + $0x128] sm:$0xff]
        %v3608 = vld [vmem:[%s290 + $0x130] sm:$0xff]
        %v3609 = vld [vmem:[%s290 + $0x138] sm:$0xff]
        %v3610 = vld [vmem:[%s290 + $0x140] sm:$0xff]
        %v3611 = vld [vmem:[%s290 + $0x148] sm:$0xff]
        %v3612 = vld [vmem:[%s290 + $0x150] sm:$0xff]
        %v3613 = vld [vmem:[%s290 + $0x158] sm:$0xff]
        %v3614 = vld [vmem:[%s290 + $0x160] sm:$0xff]
        %v3615 = vld [vmem:[%s290 + $0x168] sm:$0xff]
        %v3616 = vld [vmem:[%s290 + $0x170] sm:$0xff]
        %v3617 = vld [vmem:[%s290 + $0x178] sm:$0xff]
        %v3618 = vld [vmem:[%s290 + $0x180] sm:$0xff]
        %v3619 = vld [vmem:[%s290 + $0x188] sm:$0xff]
        %v3620 = vld [vmem:[%s290 + $0x190] sm:$0xff]
        %v3621 = vld [vmem:[%s290 + $0x198] sm:$0xff]
        %v3622 = vld [vmem:[%s290 + $0x1a0] sm:$0xff]
        %v3623 = vld [vmem:[%s290 + $0x1a8] sm:$0xff]
        %v3624 = vld [vmem:[%s290 + $0x1b0] sm:$0xff]
        %v3625 = vld [vmem:[%s290 + $0x1b8] sm:$0xff]
        %v3626 = vld [vmem:[%s290 + $0x1c0] sm:$0xff]
        %v3627 = vld [vmem:[%s290 + $0x1c8] sm:$0xff]
        %v3628 = vld [vmem:[%s290 + $0x1d0] sm:$0xff]
        %v3629 = vld [vmem:[%s290 + $0x1d8] sm:$0xff]
        %v3630 = vld [vmem:[%s290 + $0x1e0] sm:$0xff]
        %v3631 = vld [vmem:[%s290 + $0x1e8] sm:$0xff]
        %v3632 = vld [vmem:[%s290 + $0x1f0] sm:$0xff]
        %v3633 = vld [vmem:[%s290 + $0x1f8] sm:$0xff]
        %v3634 = vld [vmem:[%s290 + $0x200] sm:$0xff]
        %v3635 = vld [vmem:[%s290 + $0x208] sm:$0xff]
        %v3636 = vld [vmem:[%s290 + $0x210] sm:$0xff]
        %v3637 = vld [vmem:[%s290 + $0x218] sm:$0xff]
        %v3638 = vld [vmem:[%s290 + $0x220] sm:$0xff]
        %v3639 = vld [vmem:[%s290 + $0x228] sm:$0xff]
        %v3640 = vld [vmem:[%s290 + $0x230] sm:$0xff]
        %v3641 = vld [vmem:[%s290 + $0x238] sm:$0xff]
        %v3642 = vld [vmem:[%s290 + $0x240] sm:$0xff]
        %v3643 = vld [vmem:[%s290 + $0x248] sm:$0xff]
        %v3644 = vld [vmem:[%s290 + $0x250] sm:$0xff]
        %v3645 = vld [vmem:[%s290 + $0x258] sm:$0xff]
        %v3646 = vld [vmem:[%s290 + $0x260] sm:$0xff]
        %v3647 = vld [vmem:[%s290 + $0x268] sm:$0xff]
        %v3648 = vld [vmem:[%s290 + $0x270] sm:$0xff]
        %v3649 = vld [vmem:[%s290 + $0x278] sm:$0xff]
        %v3650 = vld [vmem:[%s290 + $0x280] sm:$0xff]
        %v3651 = vld [vmem:[%s290 + $0x288] sm:$0xff]
        %v3652 = vld [vmem:[%s290 + $0x290] sm:$0xff]
        %v3653 = vld [vmem:[%s290 + $0x298] sm:$0xff]
        %v3654 = vld [vmem:[%s290 + $0x2a0] sm:$0xff]
        %v3655 = vld [vmem:[%s290 + $0x2a8] sm:$0xff]
        %v3656 = vld [vmem:[%s290 + $0x2b0] sm:$0xff]
        %v3657 = vld [vmem:[%s290 + $0x2b8] sm:$0xff]
        %v3658 = vld [vmem:[%s290 + $0x2c0] sm:$0xff]
        %v3659 = vld [vmem:[%s290 + $0x2c8] sm:$0xff]
        %v3660 = vld [vmem:[%s290 + $0x2d0] sm:$0xff]
        %v3661 = vld [vmem:[%s290 + $0x2d8] sm:$0xff]
        %v3662 = vld [vmem:[%s290 + $0x2e0] sm:$0xff]
        %v3663 = vld [vmem:[%s290 + $0x2e8] sm:$0xff]
        %v3664 = vld [vmem:[%s290 + $0x2f0] sm:$0xff]
        %v3665 = vld [vmem:[%s290 + $0x2f8] sm:$0xff]
        %v3666 = vld [vmem:[%s300] sm:$0x3]
        %v3668 = vperm.slane %v3666, 0
        %v3669 = vperm.slane %v3666, 1
        %v3768 = vunpack.c.l.b16 %v3474
        %v3769 = vunpack.c.h.b16 %v3474
        %v3770 = vunpack.c.l.b16 %v3475
        %v3771 = vunpack.c.h.b16 %v3475
        %v3772 = vunpack.c.l.b16 %v3476
        %v3773 = vunpack.c.h.b16 %v3476
        %v3774 = vunpack.c.l.b16 %v3477
        %v3775 = vunpack.c.h.b16 %v3477
        %v3776 = vunpack.c.l.b16 %v3478
        %v3777 = vunpack.c.h.b16 %v3478
        %v3778 = vunpack.c.l.b16 %v3479
        %v3779 = vunpack.c.h.b16 %v3479
        %v3780 = vunpack.c.l.b16 %v3480
        %v3781 = vunpack.c.h.b16 %v3480
        %v3782 = vunpack.c.l.b16 %v3481
        %v3783 = vunpack.c.h.b16 %v3481
        %v3784 = vunpack.c.l.b16 %v3482
        %v3785 = vunpack.c.h.b16 %v3482
        %v3786 = vunpack.c.l.b16 %v3483
        %v3787 = vunpack.c.h.b16 %v3483
        %v3788 = vunpack.c.l.b16 %v3484
        %v3789 = vunpack.c.h.b16 %v3484
        %v3790 = vunpack.c.l.b16 %v3485
        %v3791 = vunpack.c.h.b16 %v3485
        %v3792 = vunpack.c.l.b16 %v3486
        %v3793 = vunpack.c.h.b16 %v3486
        %v3794 = vunpack.c.l.b16 %v3487
        %v3795 = vunpack.c.h.b16 %v3487
        %v3796 = vunpack.c.l.b16 %v3488
        %v3797 = vunpack.c.h.b16 %v3488
        %v3798 = vunpack.c.l.b16 %v3489
        %v3799 = vunpack.c.h.b16 %v3489
        %v3800 = vunpack.c.l.b16 %v3490
        %v3801 = vunpack.c.h.b16 %v3490
        %v3802 = vunpack.c.l.b16 %v3491
        %v3803 = vunpack.c.h.b16 %v3491
        %v3804 = vunpack.c.l.b16 %v3492
        %v3805 = vunpack.c.h.b16 %v3492
        %v3806 = vunpack.c.l.b16 %v3493
        %v3807 = vunpack.c.h.b16 %v3493
        %v3808 = vunpack.c.l.b16 %v3494
        %v3809 = vunpack.c.h.b16 %v3494
        %v3810 = vunpack.c.l.b16 %v3495
        %v3811 = vunpack.c.h.b16 %v3495
        %v3812 = vunpack.c.l.b16 %v3496
        %v3813 = vunpack.c.h.b16 %v3496
        %v3814 = vunpack.c.l.b16 %v3497
        %v3815 = vunpack.c.h.b16 %v3497
        %v3816 = vunpack.c.l.b16 %v3498
        %v3817 = vunpack.c.h.b16 %v3498
        %v3818 = vunpack.c.l.b16 %v3499
        %v3819 = vunpack.c.h.b16 %v3499
        %v3820 = vunpack.c.l.b16 %v3500
        %v3821 = vunpack.c.h.b16 %v3500
        %v3822 = vunpack.c.l.b16 %v3501
        %v3823 = vunpack.c.h.b16 %v3501
        %v3824 = vunpack.c.l.b16 %v3502
        %v3825 = vunpack.c.h.b16 %v3502
        %v3826 = vunpack.c.l.b16 %v3503
        %v3827 = vunpack.c.h.b16 %v3503
        %v3828 = vunpack.c.l.b16 %v3504
        %v3829 = vunpack.c.h.b16 %v3504
        %v3830 = vunpack.c.l.b16 %v3505
        %v3831 = vunpack.c.h.b16 %v3505
        %v3832 = vunpack.c.l.b16 %v3506
        %v3833 = vunpack.c.h.b16 %v3506
        %v3834 = vunpack.c.l.b16 %v3507
        %v3835 = vunpack.c.h.b16 %v3507
        %v3836 = vunpack.c.l.b16 %v3508
        %v3837 = vunpack.c.h.b16 %v3508
        %v3838 = vunpack.c.l.b16 %v3509
        %v3839 = vunpack.c.h.b16 %v3509
        %v3840 = vunpack.c.l.b16 %v3510
        %v3841 = vunpack.c.h.b16 %v3510
        %v3842 = vunpack.c.l.b16 %v3511
        %v3843 = vunpack.c.h.b16 %v3511
        %v3844 = vunpack.c.l.b16 %v3512
        %v3845 = vunpack.c.h.b16 %v3512
        %v3846 = vunpack.c.l.b16 %v3513
        %v3847 = vunpack.c.h.b16 %v3513
        %v3848 = vunpack.c.l.b16 %v3514
        %v3849 = vunpack.c.h.b16 %v3514
        %v3850 = vunpack.c.l.b16 %v3515
        %v3851 = vunpack.c.h.b16 %v3515
        %v3852 = vunpack.c.l.b16 %v3516
        %v3853 = vunpack.c.h.b16 %v3516
        %v3854 = vunpack.c.l.b16 %v3517
        %v3855 = vunpack.c.h.b16 %v3517
        %v3856 = vunpack.c.l.b16 %v3518
        %v3857 = vunpack.c.h.b16 %v3518
        %v3858 = vunpack.c.l.b16 %v3519
        %v3859 = vunpack.c.h.b16 %v3519
        %v3860 = vunpack.c.l.b16 %v3520
        %v3861 = vunpack.c.h.b16 %v3520
        %v3862 = vunpack.c.l.b16 %v3521
        %v3863 = vunpack.c.h.b16 %v3521
        %v3864 = vunpack.c.l.b16 %v3522
        %v3865 = vunpack.c.h.b16 %v3522
        %v3866 = vunpack.c.l.b16 %v3523
        %v3867 = vunpack.c.h.b16 %v3523
        %v3868 = vunpack.c.l.b16 %v3524
        %v3869 = vunpack.c.h.b16 %v3524
        %v3870 = vunpack.c.l.b16 %v3525
        %v3871 = vunpack.c.h.b16 %v3525
        %v3872 = vunpack.c.l.b16 %v3526
        %v3873 = vunpack.c.h.b16 %v3526
        %v3874 = vunpack.c.l.b16 %v3527
        %v3875 = vunpack.c.h.b16 %v3527
        %v3876 = vunpack.c.l.b16 %v3528
        %v3877 = vunpack.c.h.b16 %v3528
        %v3878 = vunpack.c.l.b16 %v3529
        %v3879 = vunpack.c.h.b16 %v3529
        %v3880 = vunpack.c.l.b16 %v3530
        %v3881 = vunpack.c.h.b16 %v3530
        %v3882 = vunpack.c.l.b16 %v3531
        %v3883 = vunpack.c.h.b16 %v3531
        %v3884 = vunpack.c.l.b16 %v3532
        %v3885 = vunpack.c.h.b16 %v3532
        %v3886 = vunpack.c.l.b16 %v3533
        %v3887 = vunpack.c.h.b16 %v3533
        %v3888 = vunpack.c.l.b16 %v3534
        %v3889 = vunpack.c.h.b16 %v3534
        %v3890 = vunpack.c.l.b16 %v3535
        %v3891 = vunpack.c.h.b16 %v3535
        %v3892 = vunpack.c.l.b16 %v3536
        %v3893 = vunpack.c.h.b16 %v3536
        %v3894 = vunpack.c.l.b16 %v3537
        %v3895 = vunpack.c.h.b16 %v3537
        %v3896 = vunpack.c.l.b16 %v3538
        %v3897 = vunpack.c.h.b16 %v3538
        %v3898 = vunpack.c.l.b16 %v3539
        %v3899 = vunpack.c.h.b16 %v3539
        %v3900 = vunpack.c.l.b16 %v3540
        %v3901 = vunpack.c.h.b16 %v3540
        %v3902 = vunpack.c.l.b16 %v3541
        %v3903 = vunpack.c.h.b16 %v3541
        %v3904 = vunpack.c.l.b16 %v3542
        %v3905 = vunpack.c.h.b16 %v3542
        %v3906 = vunpack.c.l.b16 %v3543
        %v3907 = vunpack.c.h.b16 %v3543
        %v3908 = vunpack.c.l.b16 %v3544
        %v3909 = vunpack.c.h.b16 %v3544
        %v3910 = vunpack.c.l.b16 %v3545
        %v3911 = vunpack.c.h.b16 %v3545
        %v3912 = vunpack.c.l.b16 %v3546
        %v3913 = vunpack.c.h.b16 %v3546
        %v3914 = vunpack.c.l.b16 %v3547
        %v3915 = vunpack.c.h.b16 %v3547
        %v3916 = vunpack.c.l.b16 %v3548
        %v3917 = vunpack.c.h.b16 %v3548
        %v3918 = vunpack.c.l.b16 %v3549
        %v3919 = vunpack.c.h.b16 %v3549
        %v3920 = vunpack.c.l.b16 %v3550
        %v3921 = vunpack.c.h.b16 %v3550
        %v3922 = vunpack.c.l.b16 %v3551
        %v3923 = vunpack.c.h.b16 %v3551
        %v3924 = vunpack.c.l.b16 %v3552
        %v3925 = vunpack.c.h.b16 %v3552
        %v3926 = vunpack.c.l.b16 %v3553
        %v3927 = vunpack.c.h.b16 %v3553
        %v3928 = vunpack.c.l.b16 %v3554
        %v3929 = vunpack.c.h.b16 %v3554
        %v3930 = vunpack.c.l.b16 %v3555
        %v3931 = vunpack.c.h.b16 %v3555
        %v3932 = vunpack.c.l.b16 %v3556
        %v3933 = vunpack.c.h.b16 %v3556
        %v3934 = vunpack.c.l.b16 %v3557
        %v3935 = vunpack.c.h.b16 %v3557
        %v3936 = vunpack.c.l.b16 %v3558
        %v3937 = vunpack.c.h.b16 %v3558
        %v3938 = vunpack.c.l.b16 %v3559
        %v3939 = vunpack.c.h.b16 %v3559
        %v3940 = vunpack.c.l.b16 %v3560
        %v3941 = vunpack.c.h.b16 %v3560
        %v3942 = vunpack.c.l.b16 %v3561
        %v3943 = vunpack.c.h.b16 %v3561
        %v3944 = vunpack.c.l.b16 %v3562
        %v3945 = vunpack.c.h.b16 %v3562
        %v3946 = vunpack.c.l.b16 %v3563
        %v3947 = vunpack.c.h.b16 %v3563
        %v3948 = vunpack.c.l.b16 %v3564
        %v3949 = vunpack.c.h.b16 %v3564
        %v3950 = vunpack.c.l.b16 %v3565
        %v3951 = vunpack.c.h.b16 %v3565
        %v3952 = vunpack.c.l.b16 %v3566
        %v3953 = vunpack.c.h.b16 %v3566
        %v3954 = vunpack.c.l.b16 %v3567
        %v3955 = vunpack.c.h.b16 %v3567
        %v3956 = vunpack.c.l.b16 %v3568
        %v3957 = vunpack.c.h.b16 %v3568
        %v3958 = vunpack.c.l.b16 %v3569
        %v3959 = vunpack.c.h.b16 %v3569
        %v3960 = vpack.c.b16 %v3774, %v3768
        %v3961 = vpack.c.b16 %v3775, %v3769
        %v3962 = vpack.c.b16 %v3776, %v3770
        %v3963 = vpack.c.b16 %v3777, %v3771
        %v3964 = vpack.c.b16 %v3778, %v3772
        %v3965 = vpack.c.b16 %v3779, %v3773
        %v3966 = vpack.c.b16 %v3786, %v3780
        %v3967 = vpack.c.b16 %v3787, %v3781
        %v3968 = vpack.c.b16 %v3788, %v3782
        %v3969 = vpack.c.b16 %v3789, %v3783
        %v3970 = vpack.c.b16 %v3790, %v3784
        %v3971 = vpack.c.b16 %v3791, %v3785
        %v3972 = vpack.c.b16 %v3798, %v3792
        %v3973 = vpack.c.b16 %v3799, %v3793
        %v3974 = vpack.c.b16 %v3800, %v3794
        %v3975 = vpack.c.b16 %v3801, %v3795
        %v3976 = vpack.c.b16 %v3802, %v3796
        %v3977 = vpack.c.b16 %v3803, %v3797
        %v3978 = vpack.c.b16 %v3810, %v3804
        %v3979 = vpack.c.b16 %v3811, %v3805
        %v3980 = vpack.c.b16 %v3812, %v3806
        %v3981 = vpack.c.b16 %v3813, %v3807
        %v3982 = vpack.c.b16 %v3814, %v3808
        %v3983 = vpack.c.b16 %v3815, %v3809
        %v3984 = vpack.c.b16 %v3822, %v3816
        %v3985 = vpack.c.b16 %v3823, %v3817
        %v3986 = vpack.c.b16 %v3824, %v3818
        %v3987 = vpack.c.b16 %v3825, %v3819
        %v3988 = vpack.c.b16 %v3826, %v3820
        %v3989 = vpack.c.b16 %v3827, %v3821
        %v3990 = vpack.c.b16 %v3834, %v3828
        %v3991 = vpack.c.b16 %v3835, %v3829
        %v3992 = vpack.c.b16 %v3836, %v3830
        %v3993 = vpack.c.b16 %v3837, %v3831
        %v3994 = vpack.c.b16 %v3838, %v3832
        %v3995 = vpack.c.b16 %v3839, %v3833
        %v3996 = vpack.c.b16 %v3846, %v3840
        %v3997 = vpack.c.b16 %v3847, %v3841
        %v3998 = vpack.c.b16 %v3848, %v3842
        %v3999 = vpack.c.b16 %v3849, %v3843
        %v4000 = vpack.c.b16 %v3850, %v3844
        %v4001 = vpack.c.b16 %v3851, %v3845
        %v4002 = vpack.c.b16 %v3858, %v3852
        %v4003 = vpack.c.b16 %v3859, %v3853
        %v4004 = vpack.c.b16 %v3860, %v3854
        %v4005 = vpack.c.b16 %v3861, %v3855
        %v4006 = vpack.c.b16 %v3862, %v3856
        %v4007 = vpack.c.b16 %v3863, %v3857
        %v4008 = vpack.c.b16 %v3870, %v3864
        %v4009 = vpack.c.b16 %v3871, %v3865
        %v4010 = vpack.c.b16 %v3872, %v3866
        %v4011 = vpack.c.b16 %v3873, %v3867
        %v4012 = vpack.c.b16 %v3874, %v3868
        %v4013 = vpack.c.b16 %v3875, %v3869
        %v4014 = vpack.c.b16 %v3882, %v3876
        %v4015 = vpack.c.b16 %v3883, %v3877
        %v4016 = vpack.c.b16 %v3884, %v3878
        %v4017 = vpack.c.b16 %v3885, %v3879
        %v4018 = vpack.c.b16 %v3886, %v3880
        %v4019 = vpack.c.b16 %v3887, %v3881
        %v4020 = vpack.c.b16 %v3894, %v3888
        %v4021 = vpack.c.b16 %v3895, %v3889
        %v4022 = vpack.c.b16 %v3896, %v3890
        %v4023 = vpack.c.b16 %v3897, %v3891
        %v4024 = vpack.c.b16 %v3898, %v3892
        %v4025 = vpack.c.b16 %v3899, %v3893
        %v4026 = vpack.c.b16 %v3906, %v3900
        %v4027 = vpack.c.b16 %v3907, %v3901
        %v4028 = vpack.c.b16 %v3908, %v3902
        %v4029 = vpack.c.b16 %v3909, %v3903
        %v4030 = vpack.c.b16 %v3910, %v3904
        %v4031 = vpack.c.b16 %v3911, %v3905
        %v4032 = vpack.c.b16 %v3918, %v3912
        %v4033 = vpack.c.b16 %v3919, %v3913
        %v4034 = vpack.c.b16 %v3920, %v3914
        %v4035 = vpack.c.b16 %v3921, %v3915
        %v4036 = vpack.c.b16 %v3922, %v3916
        %v4037 = vpack.c.b16 %v3923, %v3917
        %v4038 = vpack.c.b16 %v3930, %v3924
        %v4039 = vpack.c.b16 %v3931, %v3925
        %v4040 = vpack.c.b16 %v3932, %v3926
        %v4041 = vpack.c.b16 %v3933, %v3927
        %v4042 = vpack.c.b16 %v3934, %v3928
        %v4043 = vpack.c.b16 %v3935, %v3929
        %v4044 = vpack.c.b16 %v3942, %v3936
        %v4045 = vpack.c.b16 %v3943, %v3937
        %v4046 = vpack.c.b16 %v3944, %v3938
        %v4047 = vpack.c.b16 %v3945, %v3939
        %v4048 = vpack.c.b16 %v3946, %v3940
        %v4049 = vpack.c.b16 %v3947, %v3941
        %v4050 = vpack.c.b16 %v3954, %v3948
        %v4051 = vpack.c.b16 %v3955, %v3949
        %v4052 = vpack.c.b16 %v3956, %v3950
        %v4053 = vpack.c.b16 %v3957, %v3951
        %v4054 = vpack.c.b16 %v3958, %v3952
        %v4055 = vpack.c.b16 %v3959, %v3953
        %v4248 = vunpack.c.l.b16 %v3570
        %v4249 = vunpack.c.h.b16 %v3570
        %v4250 = vunpack.c.l.b16 %v3571
        %v4251 = vunpack.c.h.b16 %v3571
        %v4252 = vunpack.c.l.b16 %v3572
        %v4253 = vunpack.c.h.b16 %v3572
        %v4254 = vunpack.c.l.b16 %v3573
        %v4255 = vunpack.c.h.b16 %v3573
        %v4256 = vunpack.c.l.b16 %v3574
        %v4257 = vunpack.c.h.b16 %v3574
        %v4258 = vunpack.c.l.b16 %v3575
        %v4259 = vunpack.c.h.b16 %v3575
        %v4260 = vunpack.c.l.b16 %v3576
        %v4261 = vunpack.c.h.b16 %v3576
        %v4262 = vunpack.c.l.b16 %v3577
        %v4263 = vunpack.c.h.b16 %v3577
        %v4264 = vunpack.c.l.b16 %v3578
        %v4265 = vunpack.c.h.b16 %v3578
        %v4266 = vunpack.c.l.b16 %v3579
        %v4267 = vunpack.c.h.b16 %v3579
        %v4268 = vunpack.c.l.b16 %v3580
        %v4269 = vunpack.c.h.b16 %v3580
        %v4270 = vunpack.c.l.b16 %v3581
        %v4271 = vunpack.c.h.b16 %v3581
        %v4272 = vunpack.c.l.b16 %v3582
        %v4273 = vunpack.c.h.b16 %v3582
        %v4274 = vunpack.c.l.b16 %v3583
        %v4275 = vunpack.c.h.b16 %v3583
        %v4276 = vunpack.c.l.b16 %v3584
        %v4277 = vunpack.c.h.b16 %v3584
        %v4278 = vunpack.c.l.b16 %v3585
        %v4279 = vunpack.c.h.b16 %v3585
        %v4280 = vunpack.c.l.b16 %v3586
        %v4281 = vunpack.c.h.b16 %v3586
        %v4282 = vunpack.c.l.b16 %v3587
        %v4283 = vunpack.c.h.b16 %v3587
        %v4284 = vunpack.c.l.b16 %v3588
        %v4285 = vunpack.c.h.b16 %v3588
        %v4286 = vunpack.c.l.b16 %v3589
        %v4287 = vunpack.c.h.b16 %v3589
        %v4288 = vunpack.c.l.b16 %v3590
        %v4289 = vunpack.c.h.b16 %v3590
        %v4290 = vunpack.c.l.b16 %v3591
        %v4291 = vunpack.c.h.b16 %v3591
        %v4292 = vunpack.c.l.b16 %v3592
        %v4293 = vunpack.c.h.b16 %v3592
        %v4294 = vunpack.c.l.b16 %v3593
        %v4295 = vunpack.c.h.b16 %v3593
        %v4296 = vunpack.c.l.b16 %v3594
        %v4297 = vunpack.c.h.b16 %v3594
        %v4298 = vunpack.c.l.b16 %v3595
        %v4299 = vunpack.c.h.b16 %v3595
        %v4300 = vunpack.c.l.b16 %v3596
        %v4301 = vunpack.c.h.b16 %v3596
        %v4302 = vunpack.c.l.b16 %v3597
        %v4303 = vunpack.c.h.b16 %v3597
        %v4304 = vunpack.c.l.b16 %v3598
        %v4305 = vunpack.c.h.b16 %v3598
        %v4306 = vunpack.c.l.b16 %v3599
        %v4307 = vunpack.c.h.b16 %v3599
        %v4308 = vunpack.c.l.b16 %v3600
        %v4309 = vunpack.c.h.b16 %v3600
        %v4310 = vunpack.c.l.b16 %v3601
        %v4311 = vunpack.c.h.b16 %v3601
        %v4312 = vunpack.c.l.b16 %v3602
        %v4313 = vunpack.c.h.b16 %v3602
        %v4314 = vunpack.c.l.b16 %v3603
        %v4315 = vunpack.c.h.b16 %v3603
        %v4316 = vunpack.c.l.b16 %v3604
        %v4317 = vunpack.c.h.b16 %v3604
        %v4318 = vunpack.c.l.b16 %v3605
        %v4319 = vunpack.c.h.b16 %v3605
        %v4320 = vunpack.c.l.b16 %v3606
        %v4321 = vunpack.c.h.b16 %v3606
        %v4322 = vunpack.c.l.b16 %v3607
        %v4323 = vunpack.c.h.b16 %v3607
        %v4324 = vunpack.c.l.b16 %v3608
        %v4325 = vunpack.c.h.b16 %v3608
        %v4326 = vunpack.c.l.b16 %v3609
        %v4327 = vunpack.c.h.b16 %v3609
        %v4328 = vunpack.c.l.b16 %v3610
        %v4329 = vunpack.c.h.b16 %v3610
        %v4330 = vunpack.c.l.b16 %v3611
        %v4331 = vunpack.c.h.b16 %v3611
        %v4332 = vunpack.c.l.b16 %v3612
        %v4333 = vunpack.c.h.b16 %v3612
        %v4334 = vunpack.c.l.b16 %v3613
        %v4335 = vunpack.c.h.b16 %v3613
        %v4336 = vunpack.c.l.b16 %v3614
        %v4337 = vunpack.c.h.b16 %v3614
        %v4338 = vunpack.c.l.b16 %v3615
        %v4339 = vunpack.c.h.b16 %v3615
        %v4340 = vunpack.c.l.b16 %v3616
        %v4341 = vunpack.c.h.b16 %v3616
        %v4342 = vunpack.c.l.b16 %v3617
        %v4343 = vunpack.c.h.b16 %v3617
        %v4344 = vunpack.c.l.b16 %v3618
        %v4345 = vunpack.c.h.b16 %v3618
        %v4346 = vunpack.c.l.b16 %v3619
        %v4347 = vunpack.c.h.b16 %v3619
        %v4348 = vunpack.c.l.b16 %v3620
        %v4349 = vunpack.c.h.b16 %v3620
        %v4350 = vunpack.c.l.b16 %v3621
        %v4351 = vunpack.c.h.b16 %v3621
        %v4352 = vunpack.c.l.b16 %v3622
        %v4353 = vunpack.c.h.b16 %v3622
        %v4354 = vunpack.c.l.b16 %v3623
        %v4355 = vunpack.c.h.b16 %v3623
        %v4356 = vunpack.c.l.b16 %v3624
        %v4357 = vunpack.c.h.b16 %v3624
        %v4358 = vunpack.c.l.b16 %v3625
        %v4359 = vunpack.c.h.b16 %v3625
        %v4360 = vunpack.c.l.b16 %v3626
        %v4361 = vunpack.c.h.b16 %v3626
        %v4362 = vunpack.c.l.b16 %v3627
        %v4363 = vunpack.c.h.b16 %v3627
        %v4364 = vunpack.c.l.b16 %v3628
        %v4365 = vunpack.c.h.b16 %v3628
        %v4366 = vunpack.c.l.b16 %v3629
        %v4367 = vunpack.c.h.b16 %v3629
        %v4368 = vunpack.c.l.b16 %v3630
        %v4369 = vunpack.c.h.b16 %v3630
        %v4370 = vunpack.c.l.b16 %v3631
        %v4371 = vunpack.c.h.b16 %v3631
        %v4372 = vunpack.c.l.b16 %v3632
        %v4373 = vunpack.c.h.b16 %v3632
        %v4374 = vunpack.c.l.b16 %v3633
        %v4375 = vunpack.c.h.b16 %v3633
        %v4376 = vunpack.c.l.b16 %v3634
        %v4377 = vunpack.c.h.b16 %v3634
        %v4378 = vunpack.c.l.b16 %v3635
        %v4379 = vunpack.c.h.b16 %v3635
        %v4380 = vunpack.c.l.b16 %v3636
        %v4381 = vunpack.c.h.b16 %v3636
        %v4382 = vunpack.c.l.b16 %v3637
        %v4383 = vunpack.c.h.b16 %v3637
        %v4384 = vunpack.c.l.b16 %v3638
        %v4385 = vunpack.c.h.b16 %v3638
        %v4386 = vunpack.c.l.b16 %v3639
        %v4387 = vunpack.c.h.b16 %v3639
        %v4388 = vunpack.c.l.b16 %v3640
        %v4389 = vunpack.c.h.b16 %v3640
        %v4390 = vunpack.c.l.b16 %v3641
        %v4391 = vunpack.c.h.b16 %v3641
        %v4392 = vunpack.c.l.b16 %v3642
        %v4393 = vunpack.c.h.b16 %v3642
        %v4394 = vunpack.c.l.b16 %v3643
        %v4395 = vunpack.c.h.b16 %v3643
        %v4396 = vunpack.c.l.b16 %v3644
        %v4397 = vunpack.c.h.b16 %v3644
        %v4398 = vunpack.c.l.b16 %v3645
        %v4399 = vunpack.c.h.b16 %v3645
        %v4400 = vunpack.c.l.b16 %v3646
        %v4401 = vunpack.c.h.b16 %v3646
        %v4402 = vunpack.c.l.b16 %v3647
        %v4403 = vunpack.c.h.b16 %v3647
        %v4404 = vunpack.c.l.b16 %v3648
        %v4405 = vunpack.c.h.b16 %v3648
        %v4406 = vunpack.c.l.b16 %v3649
        %v4407 = vunpack.c.h.b16 %v3649
        %v4408 = vunpack.c.l.b16 %v3650
        %v4409 = vunpack.c.h.b16 %v3650
        %v4410 = vunpack.c.l.b16 %v3651
        %v4411 = vunpack.c.h.b16 %v3651
        %v4412 = vunpack.c.l.b16 %v3652
        %v4413 = vunpack.c.h.b16 %v3652
        %v4414 = vunpack.c.l.b16 %v3653
        %v4415 = vunpack.c.h.b16 %v3653
        %v4416 = vunpack.c.l.b16 %v3654
        %v4417 = vunpack.c.h.b16 %v3654
        %v4418 = vunpack.c.l.b16 %v3655
        %v4419 = vunpack.c.h.b16 %v3655
        %v4420 = vunpack.c.l.b16 %v3656
        %v4421 = vunpack.c.h.b16 %v3656
        %v4422 = vunpack.c.l.b16 %v3657
        %v4423 = vunpack.c.h.b16 %v3657
        %v4424 = vunpack.c.l.b16 %v3658
        %v4425 = vunpack.c.h.b16 %v3658
        %v4426 = vunpack.c.l.b16 %v3659
        %v4427 = vunpack.c.h.b16 %v3659
        %v4428 = vunpack.c.l.b16 %v3660
        %v4429 = vunpack.c.h.b16 %v3660
        %v4430 = vunpack.c.l.b16 %v3661
        %v4431 = vunpack.c.h.b16 %v3661
        %v4432 = vunpack.c.l.b16 %v3662
        %v4433 = vunpack.c.h.b16 %v3662
        %v4434 = vunpack.c.l.b16 %v3663
        %v4435 = vunpack.c.h.b16 %v3663
        %v4436 = vunpack.c.l.b16 %v3664
        %v4437 = vunpack.c.h.b16 %v3664
        %v4438 = vunpack.c.l.b16 %v3665
        %v4439 = vunpack.c.h.b16 %v3665
        %v4440 = vpack.c.b16 %v4250, %v4248
        %v4441 = vpack.c.b16 %v4251, %v4249
        %v4442 = vpack.c.b16 %v4254, %v4252
        %v4443 = vpack.c.b16 %v4255, %v4253
        %v4444 = vpack.c.b16 %v4258, %v4256
        %v4445 = vpack.c.b16 %v4259, %v4257
        %v4446 = vpack.c.b16 %v4262, %v4260
        %v4447 = vpack.c.b16 %v4263, %v4261
        %v4448 = vpack.c.b16 %v4266, %v4264
        %v4449 = vpack.c.b16 %v4267, %v4265
        %v4450 = vpack.c.b16 %v4270, %v4268
        %v4451 = vpack.c.b16 %v4271, %v4269
        %v4452 = vpack.c.b16 %v4274, %v4272
        %v4453 = vpack.c.b16 %v4275, %v4273
        %v4454 = vpack.c.b16 %v4278, %v4276
        %v4455 = vpack.c.b16 %v4279, %v4277
        %v4456 = vpack.c.b16 %v4282, %v4280
        %v4457 = vpack.c.b16 %v4283, %v4281
        %v4458 = vpack.c.b16 %v4286, %v4284
        %v4459 = vpack.c.b16 %v4287, %v4285
        %v4460 = vpack.c.b16 %v4290, %v4288
        %v4461 = vpack.c.b16 %v4291, %v4289
        %v4462 = vpack.c.b16 %v4294, %v4292
        %v4463 = vpack.c.b16 %v4295, %v4293
        %v4464 = vpack.c.b16 %v4298, %v4296
        %v4465 = vpack.c.b16 %v4299, %v4297
        %v4466 = vpack.c.b16 %v4302, %v4300
        %v4467 = vpack.c.b16 %v4303, %v4301
        %v4468 = vpack.c.b16 %v4306, %v4304
        %v4469 = vpack.c.b16 %v4307, %v4305
        %v4470 = vpack.c.b16 %v4310, %v4308
        %v4471 = vpack.c.b16 %v4311, %v4309
        %v4472 = vpack.c.b16 %v4314, %v4312
        %v4473 = vpack.c.b16 %v4315, %v4313
        %v4474 = vpack.c.b16 %v4318, %v4316
        %v4475 = vpack.c.b16 %v4319, %v4317
        %v4476 = vpack.c.b16 %v4322, %v4320
        %v4477 = vpack.c.b16 %v4323, %v4321
        %v4478 = vpack.c.b16 %v4326, %v4324
        %v4479 = vpack.c.b16 %v4327, %v4325
        %v4480 = vpack.c.b16 %v4330, %v4328
        %v4481 = vpack.c.b16 %v4331, %v4329
        %v4482 = vpack.c.b16 %v4334, %v4332
        %v4483 = vpack.c.b16 %v4335, %v4333
        %v4484 = vpack.c.b16 %v4338, %v4336
        %v4485 = vpack.c.b16 %v4339, %v4337
        %v4486 = vpack.c.b16 %v4342, %v4340
        %v4487 = vpack.c.b16 %v4343, %v4341
        %v4488 = vpack.c.b16 %v4346, %v4344
        %v4489 = vpack.c.b16 %v4347, %v4345
        %v4490 = vpack.c.b16 %v4350, %v4348
        %v4491 = vpack.c.b16 %v4351, %v4349
        %v4492 = vpack.c.b16 %v4354, %v4352
        %v4493 = vpack.c.b16 %v4355, %v4353
        %v4494 = vpack.c.b16 %v4358, %v4356
        %v4495 = vpack.c.b16 %v4359, %v4357
        %v4496 = vpack.c.b16 %v4362, %v4360
        %v4497 = vpack.c.b16 %v4363, %v4361
        %v4498 = vpack.c.b16 %v4366, %v4364
        %v4499 = vpack.c.b16 %v4367, %v4365
        %v4500 = vpack.c.b16 %v4370, %v4368
        %v4501 = vpack.c.b16 %v4371, %v4369
        %v4502 = vpack.c.b16 %v4374, %v4372
        %v4503 = vpack.c.b16 %v4375, %v4373
        %v4504 = vpack.c.b16 %v4378, %v4376
        %v4505 = vpack.c.b16 %v4379, %v4377
        %v4506 = vpack.c.b16 %v4382, %v4380
        %v4507 = vpack.c.b16 %v4383, %v4381
        %v4508 = vpack.c.b16 %v4386, %v4384
        %v4509 = vpack.c.b16 %v4387, %v4385
        %v4510 = vpack.c.b16 %v4390, %v4388
        %v4511 = vpack.c.b16 %v4391, %v4389
        %v4512 = vpack.c.b16 %v4394, %v4392
        %v4513 = vpack.c.b16 %v4395, %v4393
        %v4514 = vpack.c.b16 %v4398, %v4396
        %v4515 = vpack.c.b16 %v4399, %v4397
        %v4516 = vpack.c.b16 %v4402, %v4400
        %v4517 = vpack.c.b16 %v4403, %v4401
        %v4518 = vpack.c.b16 %v4406, %v4404
        %v4519 = vpack.c.b16 %v4407, %v4405
        %v4520 = vpack.c.b16 %v4410, %v4408
        %v4521 = vpack.c.b16 %v4411, %v4409
        %v4522 = vpack.c.b16 %v4414, %v4412
        %v4523 = vpack.c.b16 %v4415, %v4413
        %v4524 = vpack.c.b16 %v4418, %v4416
        %v4525 = vpack.c.b16 %v4419, %v4417
        %v4526 = vpack.c.b16 %v4422, %v4420
        %v4527 = vpack.c.b16 %v4423, %v4421
        %v4528 = vpack.c.b16 %v4426, %v4424
        %v4529 = vpack.c.b16 %v4427, %v4425
        %v4530 = vpack.c.b16 %v4430, %v4428
        %v4531 = vpack.c.b16 %v4431, %v4429
        %v4532 = vpack.c.b16 %v4434, %v4432
        %v4533 = vpack.c.b16 %v4435, %v4433
        %v4534 = vpack.c.b16 %v4438, %v4436
        %v4535 = vpack.c.b16 %v4439, %v4437
        %4632 = vmatpush.bf16.msra.mxu0 %v4454
        %4633 = vmatpush.bf16.msra.mxu0 %v4452
        %4634 = vmatpush.bf16.msra.mxu0 %v4450
        %4635 = vmatpush.bf16.msra.mxu0 %v4448
        %4636 = vmatpush.bf16.msra.mxu0 %v4446
        %4637 = vmatpush.bf16.msra.mxu0 %v4444
        %4638 = vmatpush.bf16.msra.mxu0 %v4442
        %4639 = vmatpush.bf16.msra.mxu0 %v4440
        %4640 = vmatmul.bf16.gmra.mxu0 %v3960
        %v4641 = vpop.f32.mrf.mxu0
        %v4642 = vadd.f32 %v3668, %v4641
        %v4643 = vpop.f32.mrf.mxu0
        %v4644 = vadd.f32 %v3668, %v4643
        %4645 = vmatmul.bf16.gmra.mxu0 %v3966
        %v4646 = vpop.f32.mrf.mxu0
        %v4647 = vadd.f32 %v3668, %v4646
        %v4648 = vpop.f32.mrf.mxu0
        %v4649 = vadd.f32 %v3668, %v4648
        %4650 = vmatmul.bf16.gmra.mxu0 %v3972
        %v4651 = vpop.f32.mrf.mxu0
        %v4652 = vadd.f32 %v3668, %v4651
        %v4653 = vpop.f32.mrf.mxu0
        %v4654 = vadd.f32 %v3668, %v4653
        %4655 = vmatmul.bf16.gmra.mxu0 %v3978
        %v4656 = vpop.f32.mrf.mxu0
        %v4657 = vadd.f32 %v3668, %v4656
        %v4658 = vpop.f32.mrf.mxu0
        %v4659 = vadd.f32 %v3668, %v4658
        %4660 = vmatmul.bf16.gmra.mxu0 %v3984
        %v4661 = vpop.f32.mrf.mxu0
        %v4662 = vadd.f32 %v3668, %v4661
        %v4663 = vpop.f32.mrf.mxu0
        %v4664 = vadd.f32 %v3668, %v4663
        %4665 = vmatmul.bf16.gmra.mxu0 %v3990
        %v4666 = vpop.f32.mrf.mxu0
        %v4667 = vadd.f32 %v3668, %v4666
        %v4668 = vpop.f32.mrf.mxu0
        %v4669 = vadd.f32 %v3668, %v4668
        %4670 = vmatmul.bf16.gmra.mxu0 %v3996
        %v4671 = vpop.f32.mrf.mxu0
        %v4672 = vadd.f32 %v3668, %v4671
        %v4673 = vpop.f32.mrf.mxu0
        %v4674 = vadd.f32 %v3668, %v4673
        %4675 = vmatmul.bf16.gmra.mxu0 %v4002
        %v4676 = vpop.f32.mrf.mxu0
        %v4677 = vadd.f32 %v3668, %v4676
        %v4678 = vpop.f32.mrf.mxu0
        %v4679 = vadd.f32 %v3668, %v4678
        %4680 = vmatmul.bf16.gmra.mxu0 %v4008
        %v4681 = vpop.f32.mrf.mxu0
        %v4682 = vadd.f32 %v3668, %v4681
        %v4683 = vpop.f32.mrf.mxu0
        %v4684 = vadd.f32 %v3668, %v4683
        %4685 = vmatmul.bf16.gmra.mxu0 %v4014
        %v4686 = vpop.f32.mrf.mxu0
        %v4687 = vadd.f32 %v3668, %v4686
        %v4688 = vpop.f32.mrf.mxu0
        %v4689 = vadd.f32 %v3668, %v4688
        %4690 = vmatmul.bf16.gmra.mxu0 %v4020
        %v4691 = vpop.f32.mrf.mxu0
        %v4692 = vadd.f32 %v3668, %v4691
        %v4693 = vpop.f32.mrf.mxu0
        %v4694 = vadd.f32 %v3668, %v4693
        %4695 = vmatmul.bf16.gmra.mxu0 %v4026
        %v4696 = vpop.f32.mrf.mxu0
        %v4697 = vadd.f32 %v3668, %v4696
        %v4698 = vpop.f32.mrf.mxu0
        %v4699 = vadd.f32 %v3668, %v4698
        %4700 = vmatmul.bf16.gmra.mxu0 %v4032
        %v4701 = vpop.f32.mrf.mxu0
        %v4702 = vadd.f32 %v3668, %v4701
        %v4703 = vpop.f32.mrf.mxu0
        %v4704 = vadd.f32 %v3668, %v4703
        %4705 = vmatmul.bf16.gmra.mxu0 %v4038
        %v4706 = vpop.f32.mrf.mxu0
        %v4707 = vadd.f32 %v3668, %v4706
        %v4708 = vpop.f32.mrf.mxu0
        %v4709 = vadd.f32 %v3668, %v4708
        %4710 = vmatmul.bf16.gmra.mxu0 %v4044
        %v4711 = vpop.f32.mrf.mxu0
        %v4712 = vadd.f32 %v3668, %v4711
        %v4713 = vpop.f32.mrf.mxu0
        %v4714 = vadd.f32 %v3668, %v4713
        %4715 = vmatmul.bf16.gmra.mxu0 %v4050
        %v4716 = vpop.f32.mrf.mxu0
        %v4717 = vadd.f32 %v3668, %v4716
        %v4718 = vpop.f32.mrf.mxu0
        %v4719 = vadd.f32 %v3668, %v4718
        %4720 = vdwg.mxu0
        %4721 = vmatpush.bf16.msra.mxu0 %v4470
        %4722 = vmatpush.bf16.msra.mxu0 %v4468
        %4723 = vmatpush.bf16.msra.mxu0 %v4466
        %4724 = vmatpush.bf16.msra.mxu0 %v4464
        %4725 = vmatpush.bf16.msra.mxu0 %v4462
        %4726 = vmatpush.bf16.msra.mxu0 %v4460
        %4727 = vmatpush.bf16.msra.mxu0 %v4458
        %4728 = vmatpush.bf16.msra.mxu0 %v4456
        %4729 = vmatmul.bf16.gmra.mxu0 %v3961
        %v4730 = vpop.f32.mrf.mxu0
        %v4731 = vadd.f32 %v4642, %v4730
        %v4732 = vpop.f32.mrf.mxu0
        %v4733 = vadd.f32 %v4644, %v4732
        %4734 = vmatmul.bf16.gmra.mxu0 %v3967
        %v4735 = vpop.f32.mrf.mxu0
        %v4736 = vadd.f32 %v4647, %v4735
        %v4737 = vpop.f32.mrf.mxu0
        %v4738 = vadd.f32 %v4649, %v4737
        %4739 = vmatmul.bf16.gmra.mxu0 %v3973
        %v4740 = vpop.f32.mrf.mxu0
        %v4741 = vadd.f32 %v4652, %v4740
        %v4742 = vpop.f32.mrf.mxu0
        %v4743 = vadd.f32 %v4654, %v4742
        %4744 = vmatmul.bf16.gmra.mxu0 %v3979
        %v4745 = vpop.f32.mrf.mxu0
        %v4746 = vadd.f32 %v4657, %v4745
        %v4747 = vpop.f32.mrf.mxu0
        %v4748 = vadd.f32 %v4659, %v4747
        %4749 = vmatmul.bf16.gmra.mxu0 %v3985
        %v4750 = vpop.f32.mrf.mxu0
        %v4751 = vadd.f32 %v4662, %v4750
        %v4752 = vpop.f32.mrf.mxu0
        %v4753 = vadd.f32 %v4664, %v4752
        %4754 = vmatmul.bf16.gmra.mxu0 %v3991
        %v4755 = vpop.f32.mrf.mxu0
        %v4756 = vadd.f32 %v4667, %v4755
        %v4757 = vpop.f32.mrf.mxu0
        %v4758 = vadd.f32 %v4669, %v4757
        %4759 = vmatmul.bf16.gmra.mxu0 %v3997
        %v4760 = vpop.f32.mrf.mxu0
        %v4761 = vadd.f32 %v4672, %v4760
        %v4762 = vpop.f32.mrf.mxu0
        %v4763 = vadd.f32 %v4674, %v4762
        %4764 = vmatmul.bf16.gmra.mxu0 %v4003
        %v4765 = vpop.f32.mrf.mxu0
        %v4766 = vadd.f32 %v4677, %v4765
        %v4767 = vpop.f32.mrf.mxu0
        %v4768 = vadd.f32 %v4679, %v4767
        %4769 = vmatmul.bf16.gmra.mxu0 %v4009
        %v4770 = vpop.f32.mrf.mxu0
        %v4771 = vadd.f32 %v4682, %v4770
        %v4772 = vpop.f32.mrf.mxu0
        %v4773 = vadd.f32 %v4684, %v4772
        %4774 = vmatmul.bf16.gmra.mxu0 %v4015
        %v4775 = vpop.f32.mrf.mxu0
        %v4776 = vadd.f32 %v4687, %v4775
        %v4777 = vpop.f32.mrf.mxu0
        %v4778 = vadd.f32 %v4689, %v4777
        %4779 = vmatmul.bf16.gmra.mxu0 %v4021
        %v4780 = vpop.f32.mrf.mxu0
        %v4781 = vadd.f32 %v4692, %v4780
        %v4782 = vpop.f32.mrf.mxu0
        %v4783 = vadd.f32 %v4694, %v4782
        %4784 = vmatmul.bf16.gmra.mxu0 %v4027
        %v4785 = vpop.f32.mrf.mxu0
        %v4786 = vadd.f32 %v4697, %v4785
        %v4787 = vpop.f32.mrf.mxu0
        %v4788 = vadd.f32 %v4699, %v4787
        %4789 = vmatmul.bf16.gmra.mxu0 %v4033
        %v4790 = vpop.f32.mrf.mxu0
        %v4791 = vadd.f32 %v4702, %v4790
        %v4792 = vpop.f32.mrf.mxu0
        %v4793 = vadd.f32 %v4704, %v4792
        %4794 = vmatmul.bf16.gmra.mxu0 %v4039
        %v4795 = vpop.f32.mrf.mxu0
        %v4796 = vadd.f32 %v4707, %v4795
        %v4797 = vpop.f32.mrf.mxu0
        %v4798 = vadd.f32 %v4709, %v4797
        %4799 = vmatmul.bf16.gmra.mxu0 %v4045
        %v4800 = vpop.f32.mrf.mxu0
        %v4801 = vadd.f32 %v4712, %v4800
        %v4802 = vpop.f32.mrf.mxu0
        %v4803 = vadd.f32 %v4714, %v4802
        %4804 = vmatmul.bf16.gmra.mxu0 %v4051
        %v4805 = vpop.f32.mrf.mxu0
        %v4806 = vadd.f32 %v4717, %v4805
        %v4807 = vpop.f32.mrf.mxu0
        %v4808 = vadd.f32 %v4719, %v4807
        %4809 = vdwg.mxu0
        %4810 = vmatpush.bf16.msra.mxu0 %v4486
        %4811 = vmatpush.bf16.msra.mxu0 %v4484
        %4812 = vmatpush.bf16.msra.mxu0 %v4482
        %4813 = vmatpush.bf16.msra.mxu0 %v4480
        %4814 = vmatpush.bf16.msra.mxu0 %v4478
        %4815 = vmatpush.bf16.msra.mxu0 %v4476
        %4816 = vmatpush.bf16.msra.mxu0 %v4474
        %4817 = vmatpush.bf16.msra.mxu0 %v4472
        %4818 = vmatmul.bf16.gmra.mxu0 %v3962
        %v4819 = vpop.f32.mrf.mxu0
        %v4820 = vadd.f32 %v4731, %v4819
        %v4821 = vpop.f32.mrf.mxu0
        %v4822 = vadd.f32 %v4733, %v4821
        %4823 = vmatmul.bf16.gmra.mxu0 %v3968
        %v4824 = vpop.f32.mrf.mxu0
        %v4825 = vadd.f32 %v4736, %v4824
        %v4826 = vpop.f32.mrf.mxu0
        %v4827 = vadd.f32 %v4738, %v4826
        %4828 = vmatmul.bf16.gmra.mxu0 %v3974
        %v4829 = vpop.f32.mrf.mxu0
        %v4830 = vadd.f32 %v4741, %v4829
        %v4831 = vpop.f32.mrf.mxu0
        %v4832 = vadd.f32 %v4743, %v4831
        %4833 = vmatmul.bf16.gmra.mxu0 %v3980
        %v4834 = vpop.f32.mrf.mxu0
        %v4835 = vadd.f32 %v4746, %v4834
        %v4836 = vpop.f32.mrf.mxu0
        %v4837 = vadd.f32 %v4748, %v4836
        %4838 = vmatmul.bf16.gmra.mxu0 %v3986
        %v4839 = vpop.f32.mrf.mxu0
        %v4840 = vadd.f32 %v4751, %v4839
        %v4841 = vpop.f32.mrf.mxu0
        %v4842 = vadd.f32 %v4753, %v4841
        %4843 = vmatmul.bf16.gmra.mxu0 %v3992
        %v4844 = vpop.f32.mrf.mxu0
        %v4845 = vadd.f32 %v4756, %v4844
        %v4846 = vpop.f32.mrf.mxu0
        %v4847 = vadd.f32 %v4758, %v4846
        %4848 = vmatmul.bf16.gmra.mxu0 %v3998
        %v4849 = vpop.f32.mrf.mxu0
        %v4850 = vadd.f32 %v4761, %v4849
        %v4851 = vpop.f32.mrf.mxu0
        %v4852 = vadd.f32 %v4763, %v4851
        %4853 = vmatmul.bf16.gmra.mxu0 %v4004
        %v4854 = vpop.f32.mrf.mxu0
        %v4855 = vadd.f32 %v4766, %v4854
        %v4856 = vpop.f32.mrf.mxu0
        %v4857 = vadd.f32 %v4768, %v4856
        %4858 = vmatmul.bf16.gmra.mxu0 %v4010
        %v4859 = vpop.f32.mrf.mxu0
        %v4860 = vadd.f32 %v4771, %v4859
        %v4861 = vpop.f32.mrf.mxu0
        %v4862 = vadd.f32 %v4773, %v4861
        %4863 = vmatmul.bf16.gmra.mxu0 %v4016
        %v4864 = vpop.f32.mrf.mxu0
        %v4865 = vadd.f32 %v4776, %v4864
        %v4866 = vpop.f32.mrf.mxu0
        %v4867 = vadd.f32 %v4778, %v4866
        %4868 = vmatmul.bf16.gmra.mxu0 %v4022
        %v4869 = vpop.f32.mrf.mxu0
        %v4870 = vadd.f32 %v4781, %v4869
        %v4871 = vpop.f32.mrf.mxu0
        %v4872 = vadd.f32 %v4783, %v4871
        %4873 = vmatmul.bf16.gmra.mxu0 %v4028
        %v4874 = vpop.f32.mrf.mxu0
        %v4875 = vadd.f32 %v4786, %v4874
        %v4876 = vpop.f32.mrf.mxu0
        %v4877 = vadd.f32 %v4788, %v4876
        %4878 = vmatmul.bf16.gmra.mxu0 %v4034
        %v4879 = vpop.f32.mrf.mxu0
        %v4880 = vadd.f32 %v4791, %v4879
        %v4881 = vpop.f32.mrf.mxu0
        %v4882 = vadd.f32 %v4793, %v4881
        %4883 = vmatmul.bf16.gmra.mxu0 %v4040
        %v4884 = vpop.f32.mrf.mxu0
        %v4885 = vadd.f32 %v4796, %v4884
        %v4886 = vpop.f32.mrf.mxu0
        %v4887 = vadd.f32 %v4798, %v4886
        %4888 = vmatmul.bf16.gmra.mxu0 %v4046
        %v4889 = vpop.f32.mrf.mxu0
        %v4890 = vadd.f32 %v4801, %v4889
        %v4891 = vpop.f32.mrf.mxu0
        %v4892 = vadd.f32 %v4803, %v4891
        %4893 = vmatmul.bf16.gmra.mxu0 %v4052
        %v4894 = vpop.f32.mrf.mxu0
        %v4895 = vadd.f32 %v4806, %v4894
        %v4896 = vpop.f32.mrf.mxu0
        %v4897 = vadd.f32 %v4808, %v4896
        %4898 = vdwg.mxu0
        %4899 = vmatpush.bf16.msra.mxu0 %v4502
        %4900 = vmatpush.bf16.msra.mxu0 %v4500
        %4901 = vmatpush.bf16.msra.mxu0 %v4498
        %4902 = vmatpush.bf16.msra.mxu0 %v4496
        %4903 = vmatpush.bf16.msra.mxu0 %v4494
        %4904 = vmatpush.bf16.msra.mxu0 %v4492
        %4905 = vmatpush.bf16.msra.mxu0 %v4490
        %4906 = vmatpush.bf16.msra.mxu0 %v4488
        %4907 = vmatmul.bf16.gmra.mxu0 %v3963
        %v4908 = vpop.f32.mrf.mxu0
        %v4909 = vadd.f32 %v4820, %v4908
        %v4910 = vpop.f32.mrf.mxu0
        %v4911 = vadd.f32 %v4822, %v4910
        %4912 = vmatmul.bf16.gmra.mxu0 %v3969
        %v4913 = vpop.f32.mrf.mxu0
        %v4914 = vadd.f32 %v4825, %v4913
        %v4915 = vpop.f32.mrf.mxu0
        %v4916 = vadd.f32 %v4827, %v4915
        %4917 = vmatmul.bf16.gmra.mxu0 %v3975
        %v4918 = vpop.f32.mrf.mxu0
        %v4919 = vadd.f32 %v4830, %v4918
        %v4920 = vpop.f32.mrf.mxu0
        %v4921 = vadd.f32 %v4832, %v4920
        %4922 = vmatmul.bf16.gmra.mxu0 %v3981
        %v4923 = vpop.f32.mrf.mxu0
        %v4924 = vadd.f32 %v4835, %v4923
        %v4925 = vpop.f32.mrf.mxu0
        %v4926 = vadd.f32 %v4837, %v4925
        %4927 = vmatmul.bf16.gmra.mxu0 %v3987
        %v4928 = vpop.f32.mrf.mxu0
        %v4929 = vadd.f32 %v4840, %v4928
        %v4930 = vpop.f32.mrf.mxu0
        %v4931 = vadd.f32 %v4842, %v4930
        %4932 = vmatmul.bf16.gmra.mxu0 %v3993
        %v4933 = vpop.f32.mrf.mxu0
        %v4934 = vadd.f32 %v4845, %v4933
        %v4935 = vpop.f32.mrf.mxu0
        %v4936 = vadd.f32 %v4847, %v4935
        %4937 = vmatmul.bf16.gmra.mxu0 %v3999
        %v4938 = vpop.f32.mrf.mxu0
        %v4939 = vadd.f32 %v4850, %v4938
        %v4940 = vpop.f32.mrf.mxu0
        %v4941 = vadd.f32 %v4852, %v4940
        %4942 = vmatmul.bf16.gmra.mxu0 %v4005
        %v4943 = vpop.f32.mrf.mxu0
        %v4944 = vadd.f32 %v4855, %v4943
        %v4945 = vpop.f32.mrf.mxu0
        %v4946 = vadd.f32 %v4857, %v4945
        %4947 = vmatmul.bf16.gmra.mxu0 %v4011
        %v4948 = vpop.f32.mrf.mxu0
        %v4949 = vadd.f32 %v4860, %v4948
        %v4950 = vpop.f32.mrf.mxu0
        %v4951 = vadd.f32 %v4862, %v4950
        %4952 = vmatmul.bf16.gmra.mxu0 %v4017
        %v4953 = vpop.f32.mrf.mxu0
        %v4954 = vadd.f32 %v4865, %v4953
        %v4955 = vpop.f32.mrf.mxu0
        %v4956 = vadd.f32 %v4867, %v4955
        %4957 = vmatmul.bf16.gmra.mxu0 %v4023
        %v4958 = vpop.f32.mrf.mxu0
        %v4959 = vadd.f32 %v4870, %v4958
        %v4960 = vpop.f32.mrf.mxu0
        %v4961 = vadd.f32 %v4872, %v4960
        %4962 = vmatmul.bf16.gmra.mxu0 %v4029
        %v4963 = vpop.f32.mrf.mxu0
        %v4964 = vadd.f32 %v4875, %v4963
        %v4965 = vpop.f32.mrf.mxu0
        %v4966 = vadd.f32 %v4877, %v4965
        %4967 = vmatmul.bf16.gmra.mxu0 %v4035
        %v4968 = vpop.f32.mrf.mxu0
        %v4969 = vadd.f32 %v4880, %v4968
        %v4970 = vpop.f32.mrf.mxu0
        %v4971 = vadd.f32 %v4882, %v4970
        %4972 = vmatmul.bf16.gmra.mxu0 %v4041
        %v4973 = vpop.f32.mrf.mxu0
        %v4974 = vadd.f32 %v4885, %v4973
        %v4975 = vpop.f32.mrf.mxu0
        %v4976 = vadd.f32 %v4887, %v4975
        %4977 = vmatmul.bf16.gmra.mxu0 %v4047
        %v4978 = vpop.f32.mrf.mxu0
        %v4979 = vadd.f32 %v4890, %v4978
        %v4980 = vpop.f32.mrf.mxu0
        %v4981 = vadd.f32 %v4892, %v4980
        %4982 = vmatmul.bf16.gmra.mxu0 %v4053
        %v4983 = vpop.f32.mrf.mxu0
        %v4984 = vadd.f32 %v4895, %v4983
        %v4985 = vpop.f32.mrf.mxu0
        %v4986 = vadd.f32 %v4897, %v4985
        %4987 = vdwg.mxu0
        %4988 = vmatpush.bf16.msra.mxu0 %v4518
        %4989 = vmatpush.bf16.msra.mxu0 %v4516
        %4990 = vmatpush.bf16.msra.mxu0 %v4514
        %4991 = vmatpush.bf16.msra.mxu0 %v4512
        %4992 = vmatpush.bf16.msra.mxu0 %v4510
        %4993 = vmatpush.bf16.msra.mxu0 %v4508
        %4994 = vmatpush.bf16.msra.mxu0 %v4506
        %4995 = vmatpush.bf16.msra.mxu0 %v4504
        %4996 = vmatmul.bf16.gmra.mxu0 %v3964
        %v4997 = vpop.f32.mrf.mxu0
        %v4998 = vadd.f32 %v4909, %v4997
        %v4999 = vpop.f32.mrf.mxu0
        %v5000 = vadd.f32 %v4911, %v4999
        %5001 = vmatmul.bf16.gmra.mxu0 %v3970
        %v5002 = vpop.f32.mrf.mxu0
        %v5003 = vadd.f32 %v4914, %v5002
        %v5004 = vpop.f32.mrf.mxu0
        %v5005 = vadd.f32 %v4916, %v5004
        %5006 = vmatmul.bf16.gmra.mxu0 %v3976
        %v5007 = vpop.f32.mrf.mxu0
        %v5008 = vadd.f32 %v4919, %v5007
        %v5009 = vpop.f32.mrf.mxu0
        %v5010 = vadd.f32 %v4921, %v5009
        %5011 = vmatmul.bf16.gmra.mxu0 %v3982
        %v5012 = vpop.f32.mrf.mxu0
        %v5013 = vadd.f32 %v4924, %v5012
        %v5014 = vpop.f32.mrf.mxu0
        %v5015 = vadd.f32 %v4926, %v5014
        %5016 = vmatmul.bf16.gmra.mxu0 %v3988
        %v5017 = vpop.f32.mrf.mxu0
        %v5018 = vadd.f32 %v4929, %v5017
        %v5019 = vpop.f32.mrf.mxu0
        %v5020 = vadd.f32 %v4931, %v5019
        %5021 = vmatmul.bf16.gmra.mxu0 %v3994
        %v5022 = vpop.f32.mrf.mxu0
        %v5023 = vadd.f32 %v4934, %v5022
        %v5024 = vpop.f32.mrf.mxu0
        %v5025 = vadd.f32 %v4936, %v5024
        %5026 = vmatmul.bf16.gmra.mxu0 %v4000
        %v5027 = vpop.f32.mrf.mxu0
        %v5028 = vadd.f32 %v4939, %v5027
        %v5029 = vpop.f32.mrf.mxu0
        %v5030 = vadd.f32 %v4941, %v5029
        %5031 = vmatmul.bf16.gmra.mxu0 %v4006
        %v5032 = vpop.f32.mrf.mxu0
        %v5033 = vadd.f32 %v4944, %v5032
        %v5034 = vpop.f32.mrf.mxu0
        %v5035 = vadd.f32 %v4946, %v5034
        %5036 = vmatmul.bf16.gmra.mxu0 %v4012
        %v5037 = vpop.f32.mrf.mxu0
        %v5038 = vadd.f32 %v4949, %v5037
        %v5039 = vpop.f32.mrf.mxu0
        %v5040 = vadd.f32 %v4951, %v5039
        %5041 = vmatmul.bf16.gmra.mxu0 %v4018
        %v5042 = vpop.f32.mrf.mxu0
        %v5043 = vadd.f32 %v4954, %v5042
        %v5044 = vpop.f32.mrf.mxu0
        %v5045 = vadd.f32 %v4956, %v5044
        %5046 = vmatmul.bf16.gmra.mxu0 %v4024
        %v5047 = vpop.f32.mrf.mxu0
        %v5048 = vadd.f32 %v4959, %v5047
        %v5049 = vpop.f32.mrf.mxu0
        %v5050 = vadd.f32 %v4961, %v5049
        %5051 = vmatmul.bf16.gmra.mxu0 %v4030
        %v5052 = vpop.f32.mrf.mxu0
        %v5053 = vadd.f32 %v4964, %v5052
        %v5054 = vpop.f32.mrf.mxu0
        %v5055 = vadd.f32 %v4966, %v5054
        %5056 = vmatmul.bf16.gmra.mxu0 %v4036
        %v5057 = vpop.f32.mrf.mxu0
        %v5058 = vadd.f32 %v4969, %v5057
        %v5059 = vpop.f32.mrf.mxu0
        %v5060 = vadd.f32 %v4971, %v5059
        %5061 = vmatmul.bf16.gmra.mxu0 %v4042
        %v5062 = vpop.f32.mrf.mxu0
        %v5063 = vadd.f32 %v4974, %v5062
        %v5064 = vpop.f32.mrf.mxu0
        %v5065 = vadd.f32 %v4976, %v5064
        %5066 = vmatmul.bf16.gmra.mxu0 %v4048
        %v5067 = vpop.f32.mrf.mxu0
        %v5068 = vadd.f32 %v4979, %v5067
        %v5069 = vpop.f32.mrf.mxu0
        %v5070 = vadd.f32 %v4981, %v5069
        %5071 = vmatmul.bf16.gmra.mxu0 %v4054
        %v5072 = vpop.f32.mrf.mxu0
        %v5073 = vadd.f32 %v4984, %v5072
        %v5074 = vpop.f32.mrf.mxu0
        %v5075 = vadd.f32 %v4986, %v5074
        %5076 = vdwg.mxu0
        %5077 = vmatpush.bf16.msra.mxu0 %v4534
        %5078 = vmatpush.bf16.msra.mxu0 %v4532
        %5079 = vmatpush.bf16.msra.mxu0 %v4530
        %5080 = vmatpush.bf16.msra.mxu0 %v4528
        %5081 = vmatpush.bf16.msra.mxu0 %v4526
        %5082 = vmatpush.bf16.msra.mxu0 %v4524
        %5083 = vmatpush.bf16.msra.mxu0 %v4522
        %5084 = vmatpush.bf16.msra.mxu0 %v4520
        %5085 = vmatmul.bf16.gmra.mxu0 %v3965
        %v5086 = vpop.f32.mrf.mxu0
        %v5087 = vadd.f32 %v4998, %v5086
        %v5088 = vpop.f32.mrf.mxu0
        %v5089 = vadd.f32 %v5000, %v5088
        %5090 = vmatmul.bf16.gmra.mxu0 %v3971
        %v5091 = vpop.f32.mrf.mxu0
        %v5092 = vadd.f32 %v5003, %v5091
        %v5093 = vpop.f32.mrf.mxu0
        %v5094 = vadd.f32 %v5005, %v5093
        %5095 = vmatmul.bf16.gmra.mxu0 %v3977
        %v5096 = vpop.f32.mrf.mxu0
        %v5097 = vadd.f32 %v5008, %v5096
        %v5098 = vpop.f32.mrf.mxu0
        %v5099 = vadd.f32 %v5010, %v5098
        %5100 = vmatmul.bf16.gmra.mxu0 %v3983
        %v5101 = vpop.f32.mrf.mxu0
        %v5102 = vadd.f32 %v5013, %v5101
        %v5103 = vpop.f32.mrf.mxu0
        %v5104 = vadd.f32 %v5015, %v5103
        %5105 = vmatmul.bf16.gmra.mxu0 %v3989
        %v5106 = vpop.f32.mrf.mxu0
        %v5107 = vadd.f32 %v5018, %v5106
        %v5108 = vpop.f32.mrf.mxu0
        %v5109 = vadd.f32 %v5020, %v5108
        %5110 = vmatmul.bf16.gmra.mxu0 %v3995
        %v5111 = vpop.f32.mrf.mxu0
        %v5112 = vadd.f32 %v5023, %v5111
        %v5113 = vpop.f32.mrf.mxu0
        %v5114 = vadd.f32 %v5025, %v5113
        %5115 = vmatmul.bf16.gmra.mxu0 %v4001
        %v5116 = vpop.f32.mrf.mxu0
        %v5117 = vadd.f32 %v5028, %v5116
        %v5118 = vpop.f32.mrf.mxu0
        %v5119 = vadd.f32 %v5030, %v5118
        %5120 = vmatmul.bf16.gmra.mxu0 %v4007
        %v5121 = vpop.f32.mrf.mxu0
        %v5122 = vadd.f32 %v5033, %v5121
        %v5123 = vpop.f32.mrf.mxu0
        %v5124 = vadd.f32 %v5035, %v5123
        %5125 = vmatmul.bf16.gmra.mxu0 %v4013
        %v5126 = vpop.f32.mrf.mxu0
        %v5127 = vadd.f32 %v5038, %v5126
        %v5128 = vpop.f32.mrf.mxu0
        %v5129 = vadd.f32 %v5040, %v5128
        %5130 = vmatmul.bf16.gmra.mxu0 %v4019
        %v5131 = vpop.f32.mrf.mxu0
        %v5132 = vadd.f32 %v5043, %v5131
        %v5133 = vpop.f32.mrf.mxu0
        %v5134 = vadd.f32 %v5045, %v5133
        %5135 = vmatmul.bf16.gmra.mxu0 %v4025
        %v5136 = vpop.f32.mrf.mxu0
        %v5137 = vadd.f32 %v5048, %v5136
        %v5138 = vpop.f32.mrf.mxu0
        %v5139 = vadd.f32 %v5050, %v5138
        %5140 = vmatmul.bf16.gmra.mxu0 %v4031
        %v5141 = vpop.f32.mrf.mxu0
        %v5142 = vadd.f32 %v5053, %v5141
        %v5143 = vpop.f32.mrf.mxu0
        %v5144 = vadd.f32 %v5055, %v5143
        %5145 = vmatmul.bf16.gmra.mxu0 %v4037
        %v5146 = vpop.f32.mrf.mxu0
        %v5147 = vadd.f32 %v5058, %v5146
        %v5148 = vpop.f32.mrf.mxu0
        %v5149 = vadd.f32 %v5060, %v5148
        %5150 = vmatmul.bf16.gmra.mxu0 %v4043
        %v5151 = vpop.f32.mrf.mxu0
        %v5152 = vadd.f32 %v5063, %v5151
        %v5153 = vpop.f32.mrf.mxu0
        %v5154 = vadd.f32 %v5065, %v5153
        %5155 = vmatmul.bf16.gmra.mxu0 %v4049
        %v5156 = vpop.f32.mrf.mxu0
        %v5157 = vadd.f32 %v5068, %v5156
        %v5158 = vpop.f32.mrf.mxu0
        %v5159 = vadd.f32 %v5070, %v5158
        %5160 = vmatmul.bf16.gmra.mxu0 %v4055
        %v5161 = vpop.f32.mrf.mxu0
        %v5162 = vadd.f32 %v5073, %v5161
        %v5163 = vpop.f32.mrf.mxu0
        %v5164 = vadd.f32 %v5075, %v5163
        %5165 = vdwg.mxu0
        %5166 = vmatpush.bf16.msra.mxu0 %v4455
        %5167 = vmatpush.bf16.msra.mxu0 %v4453
        %5168 = vmatpush.bf16.msra.mxu0 %v4451
        %5169 = vmatpush.bf16.msra.mxu0 %v4449
        %5170 = vmatpush.bf16.msra.mxu0 %v4447
        %5171 = vmatpush.bf16.msra.mxu0 %v4445
        %5172 = vmatpush.bf16.msra.mxu0 %v4443
        %5173 = vmatpush.bf16.msra.mxu0 %v4441
        %5174 = vmatmul.bf16.gmra.mxu0 %v3960
        %v5175 = vpop.f32.mrf.mxu0
        %v5176 = vadd.f32 %v3669, %v5175
        %v5177 = vpop.f32.mrf.mxu0
        %v5178 = vadd.f32 %v3669, %v5177
        %5179 = vmatmul.bf16.gmra.mxu0 %v3966
        %v5180 = vpop.f32.mrf.mxu0
        %v5181 = vadd.f32 %v3669, %v5180
        %v5182 = vpop.f32.mrf.mxu0
        %v5183 = vadd.f32 %v3669, %v5182
        %5184 = vmatmul.bf16.gmra.mxu0 %v3972
        %v5185 = vpop.f32.mrf.mxu0
        %v5186 = vadd.f32 %v3669, %v5185
        %v5187 = vpop.f32.mrf.mxu0
        %v5188 = vadd.f32 %v3669, %v5187
        %5189 = vmatmul.bf16.gmra.mxu0 %v3978
        %v5190 = vpop.f32.mrf.mxu0
        %v5191 = vadd.f32 %v3669, %v5190
        %v5192 = vpop.f32.mrf.mxu0
        %v5193 = vadd.f32 %v3669, %v5192
        %5194 = vmatmul.bf16.gmra.mxu0 %v3984
        %v5195 = vpop.f32.mrf.mxu0
        %v5196 = vadd.f32 %v3669, %v5195
        %v5197 = vpop.f32.mrf.mxu0
        %v5198 = vadd.f32 %v3669, %v5197
        %5199 = vmatmul.bf16.gmra.mxu0 %v3990
        %v5200 = vpop.f32.mrf.mxu0
        %v5201 = vadd.f32 %v3669, %v5200
        %v5202 = vpop.f32.mrf.mxu0
        %v5203 = vadd.f32 %v3669, %v5202
        %5204 = vmatmul.bf16.gmra.mxu0 %v3996
        %v5205 = vpop.f32.mrf.mxu0
        %v5206 = vadd.f32 %v3669, %v5205
        %v5207 = vpop.f32.mrf.mxu0
        %v5208 = vadd.f32 %v3669, %v5207
        %5209 = vmatmul.bf16.gmra.mxu0 %v4002
        %v5210 = vpop.f32.mrf.mxu0
        %v5211 = vadd.f32 %v3669, %v5210
        %v5212 = vpop.f32.mrf.mxu0
        %v5213 = vadd.f32 %v3669, %v5212
        %5214 = vmatmul.bf16.gmra.mxu0 %v4008
        %v5215 = vpop.f32.mrf.mxu0
        %v5216 = vadd.f32 %v3669, %v5215
        %v5217 = vpop.f32.mrf.mxu0
        %v5218 = vadd.f32 %v3669, %v5217
        %5219 = vmatmul.bf16.gmra.mxu0 %v4014
        %v5220 = vpop.f32.mrf.mxu0
        %v5221 = vadd.f32 %v3669, %v5220
        %v5222 = vpop.f32.mrf.mxu0
        %v5223 = vadd.f32 %v3669, %v5222
        %5224 = vmatmul.bf16.gmra.mxu0 %v4020
        %v5225 = vpop.f32.mrf.mxu0
        %v5226 = vadd.f32 %v3669, %v5225
        %v5227 = vpop.f32.mrf.mxu0
        %v5228 = vadd.f32 %v3669, %v5227
        %5229 = vmatmul.bf16.gmra.mxu0 %v4026
        %v5230 = vpop.f32.mrf.mxu0
        %v5231 = vadd.f32 %v3669, %v5230
        %v5232 = vpop.f32.mrf.mxu0
        %v5233 = vadd.f32 %v3669, %v5232
        %5234 = vmatmul.bf16.gmra.mxu0 %v4032
        %v5235 = vpop.f32.mrf.mxu0
        %v5236 = vadd.f32 %v3669, %v5235
        %v5237 = vpop.f32.mrf.mxu0
        %v5238 = vadd.f32 %v3669, %v5237
        %5239 = vmatmul.bf16.gmra.mxu0 %v4038
        %v5240 = vpop.f32.mrf.mxu0
        %v5241 = vadd.f32 %v3669, %v5240
        %v5242 = vpop.f32.mrf.mxu0
        %v5243 = vadd.f32 %v3669, %v5242
        %5244 = vmatmul.bf16.gmra.mxu0 %v4044
        %v5245 = vpop.f32.mrf.mxu0
        %v5246 = vadd.f32 %v3669, %v5245
        %v5247 = vpop.f32.mrf.mxu0
        %v5248 = vadd.f32 %v3669, %v5247
        %5249 = vmatmul.bf16.gmra.mxu0 %v4050
        %v5250 = vpop.f32.mrf.mxu0
        %v5251 = vadd.f32 %v3669, %v5250
        %v5252 = vpop.f32.mrf.mxu0
        %v5253 = vadd.f32 %v3669, %v5252
        %5254 = vdwg.mxu0
        %5255 = vmatpush.bf16.msra.mxu0 %v4471
        %5256 = vmatpush.bf16.msra.mxu0 %v4469
        %5257 = vmatpush.bf16.msra.mxu0 %v4467
        %5258 = vmatpush.bf16.msra.mxu0 %v4465
        %5259 = vmatpush.bf16.msra.mxu0 %v4463
        %5260 = vmatpush.bf16.msra.mxu0 %v4461
        %5261 = vmatpush.bf16.msra.mxu0 %v4459
        %5262 = vmatpush.bf16.msra.mxu0 %v4457
        %5263 = vmatmul.bf16.gmra.mxu0 %v3961
        %v5264 = vpop.f32.mrf.mxu0
        %v5265 = vadd.f32 %v5176, %v5264
        %v5266 = vpop.f32.mrf.mxu0
        %v5267 = vadd.f32 %v5178, %v5266
        %5268 = vmatmul.bf16.gmra.mxu0 %v3967
        %v5269 = vpop.f32.mrf.mxu0
        %v5270 = vadd.f32 %v5181, %v5269
        %v5271 = vpop.f32.mrf.mxu0
        %v5272 = vadd.f32 %v5183, %v5271
        %5273 = vmatmul.bf16.gmra.mxu0 %v3973
        %v5274 = vpop.f32.mrf.mxu0
        %v5275 = vadd.f32 %v5186, %v5274
        %v5276 = vpop.f32.mrf.mxu0
        %v5277 = vadd.f32 %v5188, %v5276
        %5278 = vmatmul.bf16.gmra.mxu0 %v3979
        %v5279 = vpop.f32.mrf.mxu0
        %v5280 = vadd.f32 %v5191, %v5279
        %v5281 = vpop.f32.mrf.mxu0
        %v5282 = vadd.f32 %v5193, %v5281
        %5283 = vmatmul.bf16.gmra.mxu0 %v3985
        %v5284 = vpop.f32.mrf.mxu0
        %v5285 = vadd.f32 %v5196, %v5284
        %v5286 = vpop.f32.mrf.mxu0
        %v5287 = vadd.f32 %v5198, %v5286
        %5288 = vmatmul.bf16.gmra.mxu0 %v3991
        %v5289 = vpop.f32.mrf.mxu0
        %v5290 = vadd.f32 %v5201, %v5289
        %v5291 = vpop.f32.mrf.mxu0
        %v5292 = vadd.f32 %v5203, %v5291
        %5293 = vmatmul.bf16.gmra.mxu0 %v3997
        %v5294 = vpop.f32.mrf.mxu0
        %v5295 = vadd.f32 %v5206, %v5294
        %v5296 = vpop.f32.mrf.mxu0
        %v5297 = vadd.f32 %v5208, %v5296
        %5298 = vmatmul.bf16.gmra.mxu0 %v4003
        %v5299 = vpop.f32.mrf.mxu0
        %v5300 = vadd.f32 %v5211, %v5299
        %v5301 = vpop.f32.mrf.mxu0
        %v5302 = vadd.f32 %v5213, %v5301
        %5303 = vmatmul.bf16.gmra.mxu0 %v4009
        %v5304 = vpop.f32.mrf.mxu0
        %v5305 = vadd.f32 %v5216, %v5304
        %v5306 = vpop.f32.mrf.mxu0
        %v5307 = vadd.f32 %v5218, %v5306
        %5308 = vmatmul.bf16.gmra.mxu0 %v4015
        %v5309 = vpop.f32.mrf.mxu0
        %v5310 = vadd.f32 %v5221, %v5309
        %v5311 = vpop.f32.mrf.mxu0
        %v5312 = vadd.f32 %v5223, %v5311
        %5313 = vmatmul.bf16.gmra.mxu0 %v4021
        %v5314 = vpop.f32.mrf.mxu0
        %v5315 = vadd.f32 %v5226, %v5314
        %v5316 = vpop.f32.mrf.mxu0
        %v5317 = vadd.f32 %v5228, %v5316
        %5318 = vmatmul.bf16.gmra.mxu0 %v4027
        %v5319 = vpop.f32.mrf.mxu0
        %v5320 = vadd.f32 %v5231, %v5319
        %v5321 = vpop.f32.mrf.mxu0
        %v5322 = vadd.f32 %v5233, %v5321
        %5323 = vmatmul.bf16.gmra.mxu0 %v4033
        %v5324 = vpop.f32.mrf.mxu0
        %v5325 = vadd.f32 %v5236, %v5324
        %v5326 = vpop.f32.mrf.mxu0
        %v5327 = vadd.f32 %v5238, %v5326
        %5328 = vmatmul.bf16.gmra.mxu0 %v4039
        %v5329 = vpop.f32.mrf.mxu0
        %v5330 = vadd.f32 %v5241, %v5329
        %v5331 = vpop.f32.mrf.mxu0
        %v5332 = vadd.f32 %v5243, %v5331
        %5333 = vmatmul.bf16.gmra.mxu0 %v4045
        %v5334 = vpop.f32.mrf.mxu0
        %v5335 = vadd.f32 %v5246, %v5334
        %v5336 = vpop.f32.mrf.mxu0
        %v5337 = vadd.f32 %v5248, %v5336
        %5338 = vmatmul.bf16.gmra.mxu0 %v4051
        %v5339 = vpop.f32.mrf.mxu0
        %v5340 = vadd.f32 %v5251, %v5339
        %v5341 = vpop.f32.mrf.mxu0
        %v5342 = vadd.f32 %v5253, %v5341
        %5343 = vdwg.mxu0
        %5344 = vmatpush.bf16.msra.mxu0 %v4487
        %5345 = vmatpush.bf16.msra.mxu0 %v4485
        %5346 = vmatpush.bf16.msra.mxu0 %v4483
        %5347 = vmatpush.bf16.msra.mxu0 %v4481
        %5348 = vmatpush.bf16.msra.mxu0 %v4479
        %5349 = vmatpush.bf16.msra.mxu0 %v4477
        %5350 = vmatpush.bf16.msra.mxu0 %v4475
        %5351 = vmatpush.bf16.msra.mxu0 %v4473
        %5352 = vmatmul.bf16.gmra.mxu0 %v3962
        %v5353 = vpop.f32.mrf.mxu0
        %v5354 = vadd.f32 %v5265, %v5353
        %v5355 = vpop.f32.mrf.mxu0
        %v5356 = vadd.f32 %v5267, %v5355
        %5357 = vmatmul.bf16.gmra.mxu0 %v3968
        %v5358 = vpop.f32.mrf.mxu0
        %v5359 = vadd.f32 %v5270, %v5358
        %v5360 = vpop.f32.mrf.mxu0
        %v5361 = vadd.f32 %v5272, %v5360
        %5362 = vmatmul.bf16.gmra.mxu0 %v3974
        %v5363 = vpop.f32.mrf.mxu0
        %v5364 = vadd.f32 %v5275, %v5363
        %v5365 = vpop.f32.mrf.mxu0
        %v5366 = vadd.f32 %v5277, %v5365
        %5367 = vmatmul.bf16.gmra.mxu0 %v3980
        %v5368 = vpop.f32.mrf.mxu0
        %v5369 = vadd.f32 %v5280, %v5368
        %v5370 = vpop.f32.mrf.mxu0
        %v5371 = vadd.f32 %v5282, %v5370
        %5372 = vmatmul.bf16.gmra.mxu0 %v3986
        %v5373 = vpop.f32.mrf.mxu0
        %v5374 = vadd.f32 %v5285, %v5373
        %v5375 = vpop.f32.mrf.mxu0
        %v5376 = vadd.f32 %v5287, %v5375
        %5377 = vmatmul.bf16.gmra.mxu0 %v3992
        %v5378 = vpop.f32.mrf.mxu0
        %v5379 = vadd.f32 %v5290, %v5378
        %v5380 = vpop.f32.mrf.mxu0
        %v5381 = vadd.f32 %v5292, %v5380
        %5382 = vmatmul.bf16.gmra.mxu0 %v3998
        %v5383 = vpop.f32.mrf.mxu0
        %v5384 = vadd.f32 %v5295, %v5383
        %v5385 = vpop.f32.mrf.mxu0
        %v5386 = vadd.f32 %v5297, %v5385
        %5387 = vmatmul.bf16.gmra.mxu0 %v4004
        %v5388 = vpop.f32.mrf.mxu0
        %v5389 = vadd.f32 %v5300, %v5388
        %v5390 = vpop.f32.mrf.mxu0
        %v5391 = vadd.f32 %v5302, %v5390
        %5392 = vmatmul.bf16.gmra.mxu0 %v4010
        %v5393 = vpop.f32.mrf.mxu0
        %v5394 = vadd.f32 %v5305, %v5393
        %v5395 = vpop.f32.mrf.mxu0
        %v5396 = vadd.f32 %v5307, %v5395
        %5397 = vmatmul.bf16.gmra.mxu0 %v4016
        %v5398 = vpop.f32.mrf.mxu0
        %v5399 = vadd.f32 %v5310, %v5398
        %v5400 = vpop.f32.mrf.mxu0
        %v5401 = vadd.f32 %v5312, %v5400
        %5402 = vmatmul.bf16.gmra.mxu0 %v4022
        %v5403 = vpop.f32.mrf.mxu0
        %v5404 = vadd.f32 %v5315, %v5403
        %v5405 = vpop.f32.mrf.mxu0
        %v5406 = vadd.f32 %v5317, %v5405
        %5407 = vmatmul.bf16.gmra.mxu0 %v4028
        %v5408 = vpop.f32.mrf.mxu0
        %v5409 = vadd.f32 %v5320, %v5408
        %v5410 = vpop.f32.mrf.mxu0
        %v5411 = vadd.f32 %v5322, %v5410
        %5412 = vmatmul.bf16.gmra.mxu0 %v4034
        %v5413 = vpop.f32.mrf.mxu0
        %v5414 = vadd.f32 %v5325, %v5413
        %v5415 = vpop.f32.mrf.mxu0
        %v5416 = vadd.f32 %v5327, %v5415
        %5417 = vmatmul.bf16.gmra.mxu0 %v4040
        %v5418 = vpop.f32.mrf.mxu0
        %v5419 = vadd.f32 %v5330, %v5418
        %v5420 = vpop.f32.mrf.mxu0
        %v5421 = vadd.f32 %v5332, %v5420
        %5422 = vmatmul.bf16.gmra.mxu0 %v4046
        %v5423 = vpop.f32.mrf.mxu0
        %v5424 = vadd.f32 %v5335, %v5423
        %v5425 = vpop.f32.mrf.mxu0
        %v5426 = vadd.f32 %v5337, %v5425
        %5427 = vmatmul.bf16.gmra.mxu0 %v4052
        %v5428 = vpop.f32.mrf.mxu0
        %v5429 = vadd.f32 %v5340, %v5428
        %v5430 = vpop.f32.mrf.mxu0
        %v5431 = vadd.f32 %v5342, %v5430
        %5432 = vdwg.mxu0
        %5433 = vmatpush.bf16.msra.mxu0 %v4503
        %5434 = vmatpush.bf16.msra.mxu0 %v4501
        %5435 = vmatpush.bf16.msra.mxu0 %v4499
        %5436 = vmatpush.bf16.msra.mxu0 %v4497
        %5437 = vmatpush.bf16.msra.mxu0 %v4495
        %5438 = vmatpush.bf16.msra.mxu0 %v4493
        %5439 = vmatpush.bf16.msra.mxu0 %v4491
        %5440 = vmatpush.bf16.msra.mxu0 %v4489
        %5441 = vmatmul.bf16.gmra.mxu0 %v3963
        %v5442 = vpop.f32.mrf.mxu0
        %v5443 = vadd.f32 %v5354, %v5442
        %v5444 = vpop.f32.mrf.mxu0
        %v5445 = vadd.f32 %v5356, %v5444
        %5446 = vmatmul.bf16.gmra.mxu0 %v3969
        %v5447 = vpop.f32.mrf.mxu0
        %v5448 = vadd.f32 %v5359, %v5447
        %v5449 = vpop.f32.mrf.mxu0
        %v5450 = vadd.f32 %v5361, %v5449
        %5451 = vmatmul.bf16.gmra.mxu0 %v3975
        %v5452 = vpop.f32.mrf.mxu0
        %v5453 = vadd.f32 %v5364, %v5452
        %v5454 = vpop.f32.mrf.mxu0
        %v5455 = vadd.f32 %v5366, %v5454
        %5456 = vmatmul.bf16.gmra.mxu0 %v3981
        %v5457 = vpop.f32.mrf.mxu0
        %v5458 = vadd.f32 %v5369, %v5457
        %v5459 = vpop.f32.mrf.mxu0
        %v5460 = vadd.f32 %v5371, %v5459
        %5461 = vmatmul.bf16.gmra.mxu0 %v3987
        %v5462 = vpop.f32.mrf.mxu0
        %v5463 = vadd.f32 %v5374, %v5462
        %v5464 = vpop.f32.mrf.mxu0
        %v5465 = vadd.f32 %v5376, %v5464
        %5466 = vmatmul.bf16.gmra.mxu0 %v3993
        %v5467 = vpop.f32.mrf.mxu0
        %v5468 = vadd.f32 %v5379, %v5467
        %v5469 = vpop.f32.mrf.mxu0
        %v5470 = vadd.f32 %v5381, %v5469
        %5471 = vmatmul.bf16.gmra.mxu0 %v3999
        %v5472 = vpop.f32.mrf.mxu0
        %v5473 = vadd.f32 %v5384, %v5472
        %v5474 = vpop.f32.mrf.mxu0
        %v5475 = vadd.f32 %v5386, %v5474
        %5476 = vmatmul.bf16.gmra.mxu0 %v4005
        %v5477 = vpop.f32.mrf.mxu0
        %v5478 = vadd.f32 %v5389, %v5477
        %v5479 = vpop.f32.mrf.mxu0
        %v5480 = vadd.f32 %v5391, %v5479
        %5481 = vmatmul.bf16.gmra.mxu0 %v4011
        %v5482 = vpop.f32.mrf.mxu0
        %v5483 = vadd.f32 %v5394, %v5482
        %v5484 = vpop.f32.mrf.mxu0
        %v5485 = vadd.f32 %v5396, %v5484
        %5486 = vmatmul.bf16.gmra.mxu0 %v4017
        %v5487 = vpop.f32.mrf.mxu0
        %v5488 = vadd.f32 %v5399, %v5487
        %v5489 = vpop.f32.mrf.mxu0
        %v5490 = vadd.f32 %v5401, %v5489
        %5491 = vmatmul.bf16.gmra.mxu0 %v4023
        %v5492 = vpop.f32.mrf.mxu0
        %v5493 = vadd.f32 %v5404, %v5492
        %v5494 = vpop.f32.mrf.mxu0
        %v5495 = vadd.f32 %v5406, %v5494
        %5496 = vmatmul.bf16.gmra.mxu0 %v4029
        %v5497 = vpop.f32.mrf.mxu0
        %v5498 = vadd.f32 %v5409, %v5497
        %v5499 = vpop.f32.mrf.mxu0
        %v5500 = vadd.f32 %v5411, %v5499
        %5501 = vmatmul.bf16.gmra.mxu0 %v4035
        %v5502 = vpop.f32.mrf.mxu0
        %v5503 = vadd.f32 %v5414, %v5502
        %v5504 = vpop.f32.mrf.mxu0
        %v5505 = vadd.f32 %v5416, %v5504
        %5506 = vmatmul.bf16.gmra.mxu0 %v4041
        %v5507 = vpop.f32.mrf.mxu0
        %v5508 = vadd.f32 %v5419, %v5507
        %v5509 = vpop.f32.mrf.mxu0
        %v5510 = vadd.f32 %v5421, %v5509
        %5511 = vmatmul.bf16.gmra.mxu0 %v4047
        %v5512 = vpop.f32.mrf.mxu0
        %v5513 = vadd.f32 %v5424, %v5512
        %v5514 = vpop.f32.mrf.mxu0
        %v5515 = vadd.f32 %v5426, %v5514
        %5516 = vmatmul.bf16.gmra.mxu0 %v4053
        %v5517 = vpop.f32.mrf.mxu0
        %v5518 = vadd.f32 %v5429, %v5517
        %v5519 = vpop.f32.mrf.mxu0
        %v5520 = vadd.f32 %v5431, %v5519
        %5521 = vdwg.mxu0
        %5522 = vmatpush.bf16.msra.mxu0 %v4519
        %5523 = vmatpush.bf16.msra.mxu0 %v4517
        %5524 = vmatpush.bf16.msra.mxu0 %v4515
        %5525 = vmatpush.bf16.msra.mxu0 %v4513
        %5526 = vmatpush.bf16.msra.mxu0 %v4511
        %5527 = vmatpush.bf16.msra.mxu0 %v4509
        %5528 = vmatpush.bf16.msra.mxu0 %v4507
        %5529 = vmatpush.bf16.msra.mxu0 %v4505
        %5530 = vmatmul.bf16.gmra.mxu0 %v3964
        %v5531 = vpop.f32.mrf.mxu0
        %v5532 = vadd.f32 %v5443, %v5531
        %v5533 = vpop.f32.mrf.mxu0
        %v5534 = vadd.f32 %v5445, %v5533
        %5535 = vmatmul.bf16.gmra.mxu0 %v3970
        %v5536 = vpop.f32.mrf.mxu0
        %v5537 = vadd.f32 %v5448, %v5536
        %v5538 = vpop.f32.mrf.mxu0
        %v5539 = vadd.f32 %v5450, %v5538
        %5540 = vmatmul.bf16.gmra.mxu0 %v3976
        %v5541 = vpop.f32.mrf.mxu0
        %v5542 = vadd.f32 %v5453, %v5541
        %v5543 = vpop.f32.mrf.mxu0
        %v5544 = vadd.f32 %v5455, %v5543
        %5545 = vmatmul.bf16.gmra.mxu0 %v3982
        %v5546 = vpop.f32.mrf.mxu0
        %v5547 = vadd.f32 %v5458, %v5546
        %v5548 = vpop.f32.mrf.mxu0
        %v5549 = vadd.f32 %v5460, %v5548
        %5550 = vmatmul.bf16.gmra.mxu0 %v3988
        %v5551 = vpop.f32.mrf.mxu0
        %v5552 = vadd.f32 %v5463, %v5551
        %v5553 = vpop.f32.mrf.mxu0
        %v5554 = vadd.f32 %v5465, %v5553
        %5555 = vmatmul.bf16.gmra.mxu0 %v3994
        %v5556 = vpop.f32.mrf.mxu0
        %v5557 = vadd.f32 %v5468, %v5556
        %v5558 = vpop.f32.mrf.mxu0
        %v5559 = vadd.f32 %v5470, %v5558
        %5560 = vmatmul.bf16.gmra.mxu0 %v4000
        %v5561 = vpop.f32.mrf.mxu0
        %v5562 = vadd.f32 %v5473, %v5561
        %v5563 = vpop.f32.mrf.mxu0
        %v5564 = vadd.f32 %v5475, %v5563
        %5565 = vmatmul.bf16.gmra.mxu0 %v4006
        %v5566 = vpop.f32.mrf.mxu0
        %v5567 = vadd.f32 %v5478, %v5566
        %v5568 = vpop.f32.mrf.mxu0
        %v5569 = vadd.f32 %v5480, %v5568
        %5570 = vmatmul.bf16.gmra.mxu0 %v4012
        %v5571 = vpop.f32.mrf.mxu0
        %v5572 = vadd.f32 %v5483, %v5571
        %v5573 = vpop.f32.mrf.mxu0
        %v5574 = vadd.f32 %v5485, %v5573
        %5575 = vmatmul.bf16.gmra.mxu0 %v4018
        %v5576 = vpop.f32.mrf.mxu0
        %v5577 = vadd.f32 %v5488, %v5576
        %v5578 = vpop.f32.mrf.mxu0
        %v5579 = vadd.f32 %v5490, %v5578
        %5580 = vmatmul.bf16.gmra.mxu0 %v4024
        %v5581 = vpop.f32.mrf.mxu0
        %v5582 = vadd.f32 %v5493, %v5581
        %v5583 = vpop.f32.mrf.mxu0
        %v5584 = vadd.f32 %v5495, %v5583
        %5585 = vmatmul.bf16.gmra.mxu0 %v4030
        %v5586 = vpop.f32.mrf.mxu0
        %v5587 = vadd.f32 %v5498, %v5586
        %v5588 = vpop.f32.mrf.mxu0
        %v5589 = vadd.f32 %v5500, %v5588
        %5590 = vmatmul.bf16.gmra.mxu0 %v4036
        %v5591 = vpop.f32.mrf.mxu0
        %v5592 = vadd.f32 %v5503, %v5591
        %v5593 = vpop.f32.mrf.mxu0
        %v5594 = vadd.f32 %v5505, %v5593
        %5595 = vmatmul.bf16.gmra.mxu0 %v4042
        %v5596 = vpop.f32.mrf.mxu0
        %v5597 = vadd.f32 %v5508, %v5596
        %v5598 = vpop.f32.mrf.mxu0
        %v5599 = vadd.f32 %v5510, %v5598
        %5600 = vmatmul.bf16.gmra.mxu0 %v4048
        %v5601 = vpop.f32.mrf.mxu0
        %v5602 = vadd.f32 %v5513, %v5601
        %v5603 = vpop.f32.mrf.mxu0
        %v5604 = vadd.f32 %v5515, %v5603
        %5605 = vmatmul.bf16.gmra.mxu0 %v4054
        %v5606 = vpop.f32.mrf.mxu0
        %v5607 = vadd.f32 %v5518, %v5606
        %v5608 = vpop.f32.mrf.mxu0
        %v5609 = vadd.f32 %v5520, %v5608
        %5610 = vdwg.mxu0
        %5611 = vmatpush.bf16.msra.mxu0 %v4535
        %5612 = vmatpush.bf16.msra.mxu0 %v4533
        %5613 = vmatpush.bf16.msra.mxu0 %v4531
        %5614 = vmatpush.bf16.msra.mxu0 %v4529
        %5615 = vmatpush.bf16.msra.mxu0 %v4527
        %5616 = vmatpush.bf16.msra.mxu0 %v4525
        %5617 = vmatpush.bf16.msra.mxu0 %v4523
        %5618 = vmatpush.bf16.msra.mxu0 %v4521
        %5619 = vmatmul.bf16.gmra.mxu0 %v3965
        %v5620 = vpop.f32.mrf.mxu0
        %v5621 = vadd.f32 %v5532, %v5620
        %v5622 = vpop.f32.mrf.mxu0
        %v5623 = vadd.f32 %v5534, %v5622
        %5624 = vmatmul.bf16.gmra.mxu0 %v3971
        %v5625 = vpop.f32.mrf.mxu0
        %v5626 = vadd.f32 %v5537, %v5625
        %v5627 = vpop.f32.mrf.mxu0
        %v5628 = vadd.f32 %v5539, %v5627
        %5629 = vmatmul.bf16.gmra.mxu0 %v3977
        %v5630 = vpop.f32.mrf.mxu0
        %v5631 = vadd.f32 %v5542, %v5630
        %v5632 = vpop.f32.mrf.mxu0
        %v5633 = vadd.f32 %v5544, %v5632
        %5634 = vmatmul.bf16.gmra.mxu0 %v3983
        %v5635 = vpop.f32.mrf.mxu0
        %v5636 = vadd.f32 %v5547, %v5635
        %v5637 = vpop.f32.mrf.mxu0
        %v5638 = vadd.f32 %v5549, %v5637
        %5639 = vmatmul.bf16.gmra.mxu0 %v3989
        %v5640 = vpop.f32.mrf.mxu0
        %v5641 = vadd.f32 %v5552, %v5640
        %v5642 = vpop.f32.mrf.mxu0
        %v5643 = vadd.f32 %v5554, %v5642
        %5644 = vmatmul.bf16.gmra.mxu0 %v3995
        %v5645 = vpop.f32.mrf.mxu0
        %v5646 = vadd.f32 %v5557, %v5645
        %v5647 = vpop.f32.mrf.mxu0
        %v5648 = vadd.f32 %v5559, %v5647
        %5649 = vmatmul.bf16.gmra.mxu0 %v4001
        %v5650 = vpop.f32.mrf.mxu0
        %v5651 = vadd.f32 %v5562, %v5650
        %v5652 = vpop.f32.mrf.mxu0
        %v5653 = vadd.f32 %v5564, %v5652
        %5654 = vmatmul.bf16.gmra.mxu0 %v4007
        %v5655 = vpop.f32.mrf.mxu0
        %v5656 = vadd.f32 %v5567, %v5655
        %v5657 = vpop.f32.mrf.mxu0
        %v5658 = vadd.f32 %v5569, %v5657
        %5659 = vmatmul.bf16.gmra.mxu0 %v4013
        %v5660 = vpop.f32.mrf.mxu0
        %v5661 = vadd.f32 %v5572, %v5660
        %v5662 = vpop.f32.mrf.mxu0
        %v5663 = vadd.f32 %v5574, %v5662
        %5664 = vmatmul.bf16.gmra.mxu0 %v4019
        %v5665 = vpop.f32.mrf.mxu0
        %v5666 = vadd.f32 %v5577, %v5665
        %v5667 = vpop.f32.mrf.mxu0
        %v5668 = vadd.f32 %v5579, %v5667
        %5669 = vmatmul.bf16.gmra.mxu0 %v4025
        %v5670 = vpop.f32.mrf.mxu0
        %v5671 = vadd.f32 %v5582, %v5670
        %v5672 = vpop.f32.mrf.mxu0
        %v5673 = vadd.f32 %v5584, %v5672
        %5674 = vmatmul.bf16.gmra.mxu0 %v4031
        %v5675 = vpop.f32.mrf.mxu0
        %v5676 = vadd.f32 %v5587, %v5675
        %v5677 = vpop.f32.mrf.mxu0
        %v5678 = vadd.f32 %v5589, %v5677
        %5679 = vmatmul.bf16.gmra.mxu0 %v4037
        %v5680 = vpop.f32.mrf.mxu0
        %v5681 = vadd.f32 %v5592, %v5680
        %v5682 = vpop.f32.mrf.mxu0
        %v5683 = vadd.f32 %v5594, %v5682
        %5684 = vmatmul.bf16.gmra.mxu0 %v4043
        %v5685 = vpop.f32.mrf.mxu0
        %v5686 = vadd.f32 %v5597, %v5685
        %v5687 = vpop.f32.mrf.mxu0
        %v5688 = vadd.f32 %v5599, %v5687
        %5689 = vmatmul.bf16.gmra.mxu0 %v4049
        %v5690 = vpop.f32.mrf.mxu0
        %v5691 = vadd.f32 %v5602, %v5690
        %v5692 = vpop.f32.mrf.mxu0
        %v5693 = vadd.f32 %v5604, %v5692
        %5694 = vmatmul.bf16.gmra.mxu0 %v4055
        %v5695 = vpop.f32.mrf.mxu0
        %v5696 = vadd.f32 %v5607, %v5695
        %v5697 = vpop.f32.mrf.mxu0
        %v5698 = vadd.f32 %v5609, %v5697
        %5699 = vdwg.mxu0
        %s5700 = sld [smem:[#allocation11 + %s66]]
        %s5701 = scvt.s32.f32 %s5700
        %v5702 = vld [vmem:[#allocation3] sm:$0xff]
        %v5703 = vld [vmem:[#allocation3 + $0x8] sm:$0xff]
        %v5704 = vld [vmem:[#allocation3 + $0x10] sm:$0xff]
        %v5705 = vld [vmem:[#allocation3 + $0x18] sm:$0xff]
        %v5706 = vld [vmem:[#allocation3 + $0x20] sm:$0xff]
        %v5707 = vld [vmem:[#allocation3 + $0x28] sm:$0xff]
        %v5708 = vld [vmem:[#allocation3 + $0x30] sm:$0xff]
        %v5709 = vld [vmem:[#allocation3 + $0x38] sm:$0xff]
        %v5710 = vld [vmem:[#allocation3 + $0x40] sm:$0xff]
        %v5711 = vld [vmem:[#allocation3 + $0x48] sm:$0xff]
        %v5712 = vld [vmem:[#allocation3 + $0x50] sm:$0xff]
        %v5713 = vld [vmem:[#allocation3 + $0x58] sm:$0xff]
        %v5714 = vld [vmem:[#allocation3 + $0x60] sm:$0xff]
        %v5715 = vld [vmem:[#allocation3 + $0x68] sm:$0xff]
        %v5716 = vld [vmem:[#allocation3 + $0x70] sm:$0xff]
        %v5717 = vld [vmem:[#allocation3 + $0x78] sm:$0xff]
        %v5718 = vld [vmem:[#allocation3 + $0x80] sm:$0xff]
        %v5719 = vld [vmem:[#allocation3 + $0x88] sm:$0xff]
        %v5720 = vld [vmem:[#allocation3 + $0x90] sm:$0xff]
        %v5721 = vld [vmem:[#allocation3 + $0x98] sm:$0xff]
        %v5722 = vld [vmem:[#allocation3 + $0xa0] sm:$0xff]
        %v5723 = vld [vmem:[#allocation3 + $0xa8] sm:$0xff]
        %v5724 = vld [vmem:[#allocation3 + $0xb0] sm:$0xff]
        %v5725 = vld [vmem:[#allocation3 + $0xb8] sm:$0xff]
        %v5726 = vld [vmem:[#allocation3 + $0xc0] sm:$0xff]
        %v5727 = vld [vmem:[#allocation3 + $0xc8] sm:$0xff]
        %v5728 = vld [vmem:[#allocation3 + $0xd0] sm:$0xff]
        %v5729 = vld [vmem:[#allocation3 + $0xd8] sm:$0xff]
        %v5730 = vld [vmem:[#allocation3 + $0xe0] sm:$0xff]
        %v5731 = vld [vmem:[#allocation3 + $0xe8] sm:$0xff]
        %v5732 = vld [vmem:[#allocation3 + $0xf0] sm:$0xff]
        %v5733 = vld [vmem:[#allocation3 + $0xf8] sm:$0xff]
        %v5734 = vld [vmem:[#allocation3 + $0x100] sm:$0xff]
        %v5735 = vld [vmem:[#allocation3 + $0x108] sm:$0xff]
        %v5736 = vld [vmem:[#allocation3 + $0x110] sm:$0xff]
        %v5737 = vld [vmem:[#allocation3 + $0x118] sm:$0xff]
        %v5738 = vld [vmem:[#allocation3 + $0x120] sm:$0xff]
        %v5739 = vld [vmem:[#allocation3 + $0x128] sm:$0xff]
        %v5740 = vld [vmem:[#allocation3 + $0x130] sm:$0xff]
        %v5741 = vld [vmem:[#allocation3 + $0x138] sm:$0xff]
        %v5742 = vld [vmem:[#allocation3 + $0x140] sm:$0xff]
        %v5743 = vld [vmem:[#allocation3 + $0x148] sm:$0xff]
        %v5744 = vld [vmem:[#allocation3 + $0x150] sm:$0xff]
        %v5745 = vld [vmem:[#allocation3 + $0x158] sm:$0xff]
        %v5746 = vld [vmem:[#allocation3 + $0x160] sm:$0xff]
        %v5747 = vld [vmem:[#allocation3 + $0x168] sm:$0xff]
        %v5748 = vld [vmem:[#allocation3 + $0x170] sm:$0xff]
        %v5749 = vld [vmem:[#allocation3 + $0x178] sm:$0xff]
        %v5750 = vld [vmem:[#allocation3 + $0x180] sm:$0xff]
        %v5751 = vld [vmem:[#allocation3 + $0x188] sm:$0xff]
        %v5752 = vld [vmem:[#allocation3 + $0x190] sm:$0xff]
        %v5753 = vld [vmem:[#allocation3 + $0x198] sm:$0xff]
        %v5754 = vld [vmem:[#allocation3 + $0x1a0] sm:$0xff]
        %v5755 = vld [vmem:[#allocation3 + $0x1a8] sm:$0xff]
        %v5756 = vld [vmem:[#allocation3 + $0x1b0] sm:$0xff]
        %v5757 = vld [vmem:[#allocation3 + $0x1b8] sm:$0xff]
        %v5758 = vld [vmem:[#allocation3 + $0x1c0] sm:$0xff]
        %v5759 = vld [vmem:[#allocation3 + $0x1c8] sm:$0xff]
        %v5760 = vld [vmem:[#allocation3 + $0x1d0] sm:$0xff]
        %v5761 = vld [vmem:[#allocation3 + $0x1d8] sm:$0xff]
        %v5762 = vld [vmem:[#allocation3 + $0x1e0] sm:$0xff]
        %v5763 = vld [vmem:[#allocation3 + $0x1e8] sm:$0xff]
        %v5764 = vld [vmem:[#allocation3 + $0x1f0] sm:$0xff]
        %v5765 = vld [vmem:[#allocation3 + $0x1f8] sm:$0xff]
        %v5766 = vstv %s5701
        %v5767 = vmul.f32 %v5766, %v5702
        %v5768 = vmul.f32 %v5766, %v5703
        %v5769 = vmul.f32 %v5766, %v5704
        %v5770 = vmul.f32 %v5766, %v5705
        %v5771 = vmul.f32 %v5766, %v5706
        %v5772 = vmul.f32 %v5766, %v5707
        %v5773 = vmul.f32 %v5766, %v5708
        %v5774 = vmul.f32 %v5766, %v5709
        %v5775 = vmul.f32 %v5766, %v5710
        %v5776 = vmul.f32 %v5766, %v5711
        %v5777 = vmul.f32 %v5766, %v5712
        %v5778 = vmul.f32 %v5766, %v5713
        %v5779 = vmul.f32 %v5766, %v5714
        %v5780 = vmul.f32 %v5766, %v5715
        %v5781 = vmul.f32 %v5766, %v5716
        %v5782 = vmul.f32 %v5766, %v5717
        %v5783 = vmul.f32 %v5766, %v5718
        %v5784 = vmul.f32 %v5766, %v5719
        %v5785 = vmul.f32 %v5766, %v5720
        %v5786 = vmul.f32 %v5766, %v5721
        %v5787 = vmul.f32 %v5766, %v5722
        %v5788 = vmul.f32 %v5766, %v5723
        %v5789 = vmul.f32 %v5766, %v5724
        %v5790 = vmul.f32 %v5766, %v5725
        %v5791 = vmul.f32 %v5766, %v5726
        %v5792 = vmul.f32 %v5766, %v5727
        %v5793 = vmul.f32 %v5766, %v5728
        %v5794 = vmul.f32 %v5766, %v5729
        %v5795 = vmul.f32 %v5766, %v5730
        %v5796 = vmul.f32 %v5766, %v5731
        %v5797 = vmul.f32 %v5766, %v5732
        %v5798 = vmul.f32 %v5766, %v5733
        %v5799 = vmul.f32 %v5766, %v5734
        %v5800 = vmul.f32 %v5766, %v5735
        %v5801 = vmul.f32 %v5766, %v5736
        %v5802 = vmul.f32 %v5766, %v5737
        %v5803 = vmul.f32 %v5766, %v5738
        %v5804 = vmul.f32 %v5766, %v5739
        %v5805 = vmul.f32 %v5766, %v5740
        %v5806 = vmul.f32 %v5766, %v5741
        %v5807 = vmul.f32 %v5766, %v5742
        %v5808 = vmul.f32 %v5766, %v5743
        %v5809 = vmul.f32 %v5766, %v5744
        %v5810 = vmul.f32 %v5766, %v5745
        %v5811 = vmul.f32 %v5766, %v5746
        %v5812 = vmul.f32 %v5766, %v5747
        %v5813 = vmul.f32 %v5766, %v5748
        %v5814 = vmul.f32 %v5766, %v5749
        %v5815 = vmul.f32 %v5766, %v5750
        %v5816 = vmul.f32 %v5766, %v5751
        %v5817 = vmul.f32 %v5766, %v5752
        %v5818 = vmul.f32 %v5766, %v5753
        %v5819 = vmul.f32 %v5766, %v5754
        %v5820 = vmul.f32 %v5766, %v5755
        %v5821 = vmul.f32 %v5766, %v5756
        %v5822 = vmul.f32 %v5766, %v5757
        %v5823 = vmul.f32 %v5766, %v5758
        %v5824 = vmul.f32 %v5766, %v5759
        %v5825 = vmul.f32 %v5766, %v5760
        %v5826 = vmul.f32 %v5766, %v5761
        %v5827 = vmul.f32 %v5766, %v5762
        %v5828 = vmul.f32 %v5766, %v5763
        %v5829 = vmul.f32 %v5766, %v5764
        %v5830 = vmul.f32 %v5766, %v5765
        %v5831 = vadd.f32 %v5087, %v5767
        %v5832 = vadd.f32 %v5621, %v5768
        %v5833 = vadd.f32 %v5089, %v5769
        %v5834 = vadd.f32 %v5623, %v5770
        %v5835 = vadd.f32 %v5092, %v5771
        %v5836 = vadd.f32 %v5626, %v5772
        %v5837 = vadd.f32 %v5094, %v5773
        %v5838 = vadd.f32 %v5628, %v5774
        %v5839 = vadd.f32 %v5097, %v5775
        %v5840 = vadd.f32 %v5631, %v5776
        %v5841 = vadd.f32 %v5099, %v5777
        %v5842 = vadd.f32 %v5633, %v5778
        %v5843 = vadd.f32 %v5102, %v5779
        %v5844 = vadd.f32 %v5636, %v5780
        %v5845 = vadd.f32 %v5104, %v5781
        %v5846 = vadd.f32 %v5638, %v5782
        %v5847 = vadd.f32 %v5107, %v5783
        %v5848 = vadd.f32 %v5641, %v5784
        %v5849 = vadd.f32 %v5109, %v5785
        %v5850 = vadd.f32 %v5643, %v5786
        %v5851 = vadd.f32 %v5112, %v5787
        %v5852 = vadd.f32 %v5646, %v5788
        %v5853 = vadd.f32 %v5114, %v5789
        %v5854 = vadd.f32 %v5648, %v5790
        %v5855 = vadd.f32 %v5117, %v5791
        %v5856 = vadd.f32 %v5651, %v5792
        %v5857 = vadd.f32 %v5119, %v5793
        %v5858 = vadd.f32 %v5653, %v5794
        %v5859 = vadd.f32 %v5122, %v5795
        %v5860 = vadd.f32 %v5656, %v5796
        %v5861 = vadd.f32 %v5124, %v5797
        %v5862 = vadd.f32 %v5658, %v5798
        %v5863 = vadd.f32 %v5127, %v5799
        %v5864 = vadd.f32 %v5661, %v5800
        %v5865 = vadd.f32 %v5129, %v5801
        %v5866 = vadd.f32 %v5663, %v5802
        %v5867 = vadd.f32 %v5132, %v5803
        %v5868 = vadd.f32 %v5666, %v5804
        %v5869 = vadd.f32 %v5134, %v5805
        %v5870 = vadd.f32 %v5668, %v5806
        %v5871 = vadd.f32 %v5137, %v5807
        %v5872 = vadd.f32 %v5671, %v5808
        %v5873 = vadd.f32 %v5139, %v5809
        %v5874 = vadd.f32 %v5673, %v5810
        %v5875 = vadd.f32 %v5142, %v5811
        %v5876 = vadd.f32 %v5676, %v5812
        %v5877 = vadd.f32 %v5144, %v5813
        %v5878 = vadd.f32 %v5678, %v5814
        %v5879 = vadd.f32 %v5147, %v5815
        %v5880 = vadd.f32 %v5681, %v5816
        %v5881 = vadd.f32 %v5149, %v5817
        %v5882 = vadd.f32 %v5683, %v5818
        %v5883 = vadd.f32 %v5152, %v5819
        %v5884 = vadd.f32 %v5686, %v5820
        %v5885 = vadd.f32 %v5154, %v5821
        %v5886 = vadd.f32 %v5688, %v5822
        %v5887 = vadd.f32 %v5157, %v5823
        %v5888 = vadd.f32 %v5691, %v5824
        %v5889 = vadd.f32 %v5159, %v5825
        %v5890 = vadd.f32 %v5693, %v5826
        %v5891 = vadd.f32 %v5162, %v5827
        %v5892 = vadd.f32 %v5696, %v5828
        %v5893 = vadd.f32 %v5164, %v5829
        %v5894 = vadd.f32 %v5698, %v5830
        %s5895 = sld [smem:[#allocation12 + %s66]]
        %s5896 = scvt.s32.f32 %s5895
        %s5897 = ssub.f32 1.0, %s5896
        %v5898 = vstv %s5897
        %v5899 = vmul.f32 %v5831, %v5898
        %v5900 = vmul.f32 %v5832, %v5898
        %v5901 = vmul.f32 %v5833, %v5898
        %v5902 = vmul.f32 %v5834, %v5898
        %v5903 = vmul.f32 %v5835, %v5898
        %v5904 = vmul.f32 %v5836, %v5898
        %v5905 = vmul.f32 %v5837, %v5898
        %v5906 = vmul.f32 %v5838, %v5898
        %v5907 = vmul.f32 %v5839, %v5898
        %v5908 = vmul.f32 %v5840, %v5898
        %v5909 = vmul.f32 %v5841, %v5898
        %v5910 = vmul.f32 %v5842, %v5898
        %v5911 = vmul.f32 %v5843, %v5898
        %v5912 = vmul.f32 %v5844, %v5898
        %v5913 = vmul.f32 %v5845, %v5898
        %v5914 = vmul.f32 %v5846, %v5898
        %v5915 = vmul.f32 %v5847, %v5898
        %v5916 = vmul.f32 %v5848, %v5898
        %v5917 = vmul.f32 %v5849, %v5898
        %v5918 = vmul.f32 %v5850, %v5898
        %v5919 = vmul.f32 %v5851, %v5898
        %v5920 = vmul.f32 %v5852, %v5898
        %v5921 = vmul.f32 %v5853, %v5898
        %v5922 = vmul.f32 %v5854, %v5898
        %v5923 = vmul.f32 %v5855, %v5898
        %v5924 = vmul.f32 %v5856, %v5898
        %v5925 = vmul.f32 %v5857, %v5898
        %v5926 = vmul.f32 %v5858, %v5898
        %v5927 = vmul.f32 %v5859, %v5898
        %v5928 = vmul.f32 %v5860, %v5898
        %v5929 = vmul.f32 %v5861, %v5898
        %v5930 = vmul.f32 %v5862, %v5898
        %v5931 = vmul.f32 %v5863, %v5898
        %v5932 = vmul.f32 %v5864, %v5898
        %v5933 = vmul.f32 %v5865, %v5898
        %v5934 = vmul.f32 %v5866, %v5898
        %v5935 = vmul.f32 %v5867, %v5898
        %v5936 = vmul.f32 %v5868, %v5898
        %v5937 = vmul.f32 %v5869, %v5898
        %v5938 = vmul.f32 %v5870, %v5898
        %v5939 = vmul.f32 %v5871, %v5898
        %v5940 = vmul.f32 %v5872, %v5898
        %v5941 = vmul.f32 %v5873, %v5898
        %v5942 = vmul.f32 %v5874, %v5898
        %v5943 = vmul.f32 %v5875, %v5898
        %v5944 = vmul.f32 %v5876, %v5898
        %v5945 = vmul.f32 %v5877, %v5898
        %v5946 = vmul.f32 %v5878, %v5898
        %v5947 = vmul.f32 %v5879, %v5898
        %v5948 = vmul.f32 %v5880, %v5898
        %v5949 = vmul.f32 %v5881, %v5898
        %v5950 = vmul.f32 %v5882, %v5898
        %v5951 = vmul.f32 %v5883, %v5898
        %v5952 = vmul.f32 %v5884, %v5898
        %v5953 = vmul.f32 %v5885, %v5898
        %v5954 = vmul.f32 %v5886, %v5898
        %v5955 = vmul.f32 %v5887, %v5898
        %v5956 = vmul.f32 %v5888, %v5898
        %v5957 = vmul.f32 %v5889, %v5898
        %v5958 = vmul.f32 %v5890, %v5898
        %v5959 = vmul.f32 %v5891, %v5898
        %v5960 = vmul.f32 %v5892, %v5898
        %v5961 = vmul.f32 %v5893, %v5898
        %v5962 = vmul.f32 %v5894, %v5898
        %v5963 = vmax.f32 %v5831, %v5899
        %v5964 = vmax.f32 %v5832, %v5900
        %v5965 = vmax.f32 %v5833, %v5901
        %v5966 = vmax.f32 %v5834, %v5902
        %v5967 = vmax.f32 %v5835, %v5903
        %v5968 = vmax.f32 %v5836, %v5904
        %v5969 = vmax.f32 %v5837, %v5905
        %v5970 = vmax.f32 %v5838, %v5906
        %v5971 = vmax.f32 %v5839, %v5907
        %v5972 = vmax.f32 %v5840, %v5908
        %v5973 = vmax.f32 %v5841, %v5909
        %v5974 = vmax.f32 %v5842, %v5910
        %v5975 = vmax.f32 %v5843, %v5911
        %v5976 = vmax.f32 %v5844, %v5912
        %v5977 = vmax.f32 %v5845, %v5913
        %v5978 = vmax.f32 %v5846, %v5914
        %v5979 = vmax.f32 %v5847, %v5915
        %v5980 = vmax.f32 %v5848, %v5916
        %v5981 = vmax.f32 %v5849, %v5917
        %v5982 = vmax.f32 %v5850, %v5918
        %v5983 = vmax.f32 %v5851, %v5919
        %v5984 = vmax.f32 %v5852, %v5920
        %v5985 = vmax.f32 %v5853, %v5921
        %v5986 = vmax.f32 %v5854, %v5922
        %v5987 = vmax.f32 %v5855, %v5923
        %v5988 = vmax.f32 %v5856, %v5924
        %v5989 = vmax.f32 %v5857, %v5925
        %v5990 = vmax.f32 %v5858, %v5926
        %v5991 = vmax.f32 %v5859, %v5927
        %v5992 = vmax.f32 %v5860, %v5928
        %v5993 = vmax.f32 %v5861, %v5929
        %v5994 = vmax.f32 %v5862, %v5930
        %v5995 = vmax.f32 %v5863, %v5931
        %v5996 = vmax.f32 %v5864, %v5932
        %v5997 = vmax.f32 %v5865, %v5933
        %v5998 = vmax.f32 %v5866, %v5934
        %v5999 = vmax.f32 %v5867, %v5935
        %v6000 = vmax.f32 %v5868, %v5936
        %v6001 = vmax.f32 %v5869, %v5937
        %v6002 = vmax.f32 %v5870, %v5938
        %v6003 = vmax.f32 %v5871, %v5939
        %v6004 = vmax.f32 %v5872, %v5940
        %v6005 = vmax.f32 %v5873, %v5941
        %v6006 = vmax.f32 %v5874, %v5942
        %v6007 = vmax.f32 %v5875, %v5943
        %v6008 = vmax.f32 %v5876, %v5944
        %v6009 = vmax.f32 %v5877, %v5945
        %v6010 = vmax.f32 %v5878, %v5946
        %v6011 = vmax.f32 %v5879, %v5947
        %v6012 = vmax.f32 %v5880, %v5948
        %v6013 = vmax.f32 %v5881, %v5949
        %v6014 = vmax.f32 %v5882, %v5950
        %v6015 = vmax.f32 %v5883, %v5951
        %v6016 = vmax.f32 %v5884, %v5952
        %v6017 = vmax.f32 %v5885, %v5953
        %v6018 = vmax.f32 %v5886, %v5954
        %v6019 = vmax.f32 %v5887, %v5955
        %v6020 = vmax.f32 %v5888, %v5956
        %v6021 = vmax.f32 %v5889, %v5957
        %v6022 = vmax.f32 %v5890, %v5958
        %v6023 = vmax.f32 %v5891, %v5959
        %v6024 = vmax.f32 %v5892, %v5960
        %v6025 = vmax.f32 %v5893, %v5961
        %v6026 = vmax.f32 %v5894, %v5962
        %s6027 = sld [smem:[#allocation10 + %s66]]
        %p6028 = scmp.eq.s32.totalorder %s6027, 1
        // Predicated region
        $region65: #{resnet20_forward.1} parent=35 // pred_check
          %p6029 = pneg %p6028
        $region66: #{resnet20_forward.1} parent=35 // pred_check_branch
          %6031 = sbr.rel (%p6029) target = $region68
        $region67: #{resnet20_forward.1} parent=35 // pred_region
          %6032 = vst [vmem:[#allocation3] sm:$0xff] %v5963
          %6033 = vst [vmem:[#allocation3 + $0x8] sm:$0xff] %v5964
          %6034 = vst [vmem:[#allocation3 + $0x10] sm:$0xff] %v5965
          %6035 = vst [vmem:[#allocation3 + $0x18] sm:$0xff] %v5966
          %6036 = vst [vmem:[#allocation3 + $0x20] sm:$0xff] %v5967
          %6037 = vst [vmem:[#allocation3 + $0x28] sm:$0xff] %v5968
          %6038 = vst [vmem:[#allocation3 + $0x30] sm:$0xff] %v5969
          %6039 = vst [vmem:[#allocation3 + $0x38] sm:$0xff] %v5970
          %6040 = vst [vmem:[#allocation3 + $0x40] sm:$0xff] %v5971
          %6041 = vst [vmem:[#allocation3 + $0x48] sm:$0xff] %v5972
          %6042 = vst [vmem:[#allocation3 + $0x50] sm:$0xff] %v5973
          %6043 = vst [vmem:[#allocation3 + $0x58] sm:$0xff] %v5974
          %6044 = vst [vmem:[#allocation3 + $0x60] sm:$0xff] %v5975
          %6045 = vst [vmem:[#allocation3 + $0x68] sm:$0xff] %v5976
          %6046 = vst [vmem:[#allocation3 + $0x70] sm:$0xff] %v5977
          %6047 = vst [vmem:[#allocation3 + $0x78] sm:$0xff] %v5978
          %6048 = vst [vmem:[#allocation3 + $0x80] sm:$0xff] %v5979
          %6049 = vst [vmem:[#allocation3 + $0x88] sm:$0xff] %v5980
          %6050 = vst [vmem:[#allocation3 + $0x90] sm:$0xff] %v5981
          %6051 = vst [vmem:[#allocation3 + $0x98] sm:$0xff] %v5982
          %6052 = vst [vmem:[#allocation3 + $0xa0] sm:$0xff] %v5983
          %6053 = vst [vmem:[#allocation3 + $0xa8] sm:$0xff] %v5984
          %6054 = vst [vmem:[#allocation3 + $0xb0] sm:$0xff] %v5985
          %6055 = vst [vmem:[#allocation3 + $0xb8] sm:$0xff] %v5986
          %6056 = vst [vmem:[#allocation3 + $0xc0] sm:$0xff] %v5987
          %6057 = vst [vmem:[#allocation3 + $0xc8] sm:$0xff] %v5988
          %6058 = vst [vmem:[#allocation3 + $0xd0] sm:$0xff] %v5989
          %6059 = vst [vmem:[#allocation3 + $0xd8] sm:$0xff] %v5990
          %6060 = vst [vmem:[#allocation3 + $0xe0] sm:$0xff] %v5991
          %6061 = vst [vmem:[#allocation3 + $0xe8] sm:$0xff] %v5992
          %6062 = vst [vmem:[#allocation3 + $0xf0] sm:$0xff] %v5993
          %6063 = vst [vmem:[#allocation3 + $0xf8] sm:$0xff] %v5994
          %6064 = vst [vmem:[#allocation3 + $0x100] sm:$0xff] %v5995
          %6065 = vst [vmem:[#allocation3 + $0x108] sm:$0xff] %v5996
          %6066 = vst [vmem:[#allocation3 + $0x110] sm:$0xff] %v5997
          %6067 = vst [vmem:[#allocation3 + $0x118] sm:$0xff] %v5998
          %6068 = vst [vmem:[#allocation3 + $0x120] sm:$0xff] %v5999
          %6069 = vst [vmem:[#allocation3 + $0x128] sm:$0xff] %v6000
          %6070 = vst [vmem:[#allocation3 + $0x130] sm:$0xff] %v6001
          %6071 = vst [vmem:[#allocation3 + $0x138] sm:$0xff] %v6002
          %6072 = vst [vmem:[#allocation3 + $0x140] sm:$0xff] %v6003
          %6073 = vst [vmem:[#allocation3 + $0x148] sm:$0xff] %v6004
          %6074 = vst [vmem:[#allocation3 + $0x150] sm:$0xff] %v6005
          %6075 = vst [vmem:[#allocation3 + $0x158] sm:$0xff] %v6006
          %6076 = vst [vmem:[#allocation3 + $0x160] sm:$0xff] %v6007
          %6077 = vst [vmem:[#allocation3 + $0x168] sm:$0xff] %v6008
          %6078 = vst [vmem:[#allocation3 + $0x170] sm:$0xff] %v6009
          %6079 = vst [vmem:[#allocation3 + $0x178] sm:$0xff] %v6010
          %6080 = vst [vmem:[#allocation3 + $0x180] sm:$0xff] %v6011
          %6081 = vst [vmem:[#allocation3 + $0x188] sm:$0xff] %v6012
          %6082 = vst [vmem:[#allocation3 + $0x190] sm:$0xff] %v6013
          %6083 = vst [vmem:[#allocation3 + $0x198] sm:$0xff] %v6014
          %6084 = vst [vmem:[#allocation3 + $0x1a0] sm:$0xff] %v6015
          %6085 = vst [vmem:[#allocation3 + $0x1a8] sm:$0xff] %v6016
          %6086 = vst [vmem:[#allocation3 + $0x1b0] sm:$0xff] %v6017
          %6087 = vst [vmem:[#allocation3 + $0x1b8] sm:$0xff] %v6018
          %6088 = vst [vmem:[#allocation3 + $0x1c0] sm:$0xff] %v6019
          %6089 = vst [vmem:[#allocation3 + $0x1c8] sm:$0xff] %v6020
          %6090 = vst [vmem:[#allocation3 + $0x1d0] sm:$0xff] %v6021
          %6091 = vst [vmem:[#allocation3 + $0x1d8] sm:$0xff] %v6022
          %6092 = vst [vmem:[#allocation3 + $0x1e0] sm:$0xff] %v6023
          %6093 = vst [vmem:[#allocation3 + $0x1e8] sm:$0xff] %v6024
          %6094 = vst [vmem:[#allocation3 + $0x1f0] sm:$0xff] %v6025
          %6095 = vst [vmem:[#allocation3 + $0x1f8] sm:$0xff] %v6026
        $region68: #{resnet20_forward.1} parent=35 // pred_fallthru
          _
        %s6096 = sld [smem:[#allocation10 + %s66]]
        %p6097 = scmp.eq.s32.totalorder %s6096, 0
        // Predicated region
        $region69: #{resnet20_forward.1} parent=35 // pred_check
          %p6098 = pneg %p6097
        $region70: #{resnet20_forward.1} parent=35 // pred_check_branch
          %6100 = sbr.rel (%p6098) target = $region72
        $region71: #{resnet20_forward.1} parent=35 // pred_region
          %6101 = vst [vmem:[#allocation2] sm:$0xff] %v5963
          %6102 = vst [vmem:[#allocation2 + $0x8] sm:$0xff] %v5964
          %6103 = vst [vmem:[#allocation2 + $0x10] sm:$0xff] %v5965
          %6104 = vst [vmem:[#allocation2 + $0x18] sm:$0xff] %v5966
          %6105 = vst [vmem:[#allocation2 + $0x20] sm:$0xff] %v5967
          %6106 = vst [vmem:[#allocation2 + $0x28] sm:$0xff] %v5968
          %6107 = vst [vmem:[#allocation2 + $0x30] sm:$0xff] %v5969
          %6108 = vst [vmem:[#allocation2 + $0x38] sm:$0xff] %v5970
          %6109 = vst [vmem:[#allocation2 + $0x40] sm:$0xff] %v5971
          %6110 = vst [vmem:[#allocation2 + $0x48] sm:$0xff] %v5972
          %6111 = vst [vmem:[#allocation2 + $0x50] sm:$0xff] %v5973
          %6112 = vst [vmem:[#allocation2 + $0x58] sm:$0xff] %v5974
          %6113 = vst [vmem:[#allocation2 + $0x60] sm:$0xff] %v5975
          %6114 = vst [vmem:[#allocation2 + $0x68] sm:$0xff] %v5976
          %6115 = vst [vmem:[#allocation2 + $0x70] sm:$0xff] %v5977
          %6116 = vst [vmem:[#allocation2 + $0x78] sm:$0xff] %v5978
          %6117 = vst [vmem:[#allocation2 + $0x80] sm:$0xff] %v5979
          %6118 = vst [vmem:[#allocation2 + $0x88] sm:$0xff] %v5980
          %6119 = vst [vmem:[#allocation2 + $0x90] sm:$0xff] %v5981
          %6120 = vst [vmem:[#allocation2 + $0x98] sm:$0xff] %v5982
          %6121 = vst [vmem:[#allocation2 + $0xa0] sm:$0xff] %v5983
          %6122 = vst [vmem:[#allocation2 + $0xa8] sm:$0xff] %v5984
          %6123 = vst [vmem:[#allocation2 + $0xb0] sm:$0xff] %v5985
          %6124 = vst [vmem:[#allocation2 + $0xb8] sm:$0xff] %v5986
          %6125 = vst [vmem:[#allocation2 + $0xc0] sm:$0xff] %v5987
          %6126 = vst [vmem:[#allocation2 + $0xc8] sm:$0xff] %v5988
          %6127 = vst [vmem:[#allocation2 + $0xd0] sm:$0xff] %v5989
          %6128 = vst [vmem:[#allocation2 + $0xd8] sm:$0xff] %v5990
          %6129 = vst [vmem:[#allocation2 + $0xe0] sm:$0xff] %v5991
          %6130 = vst [vmem:[#allocation2 + $0xe8] sm:$0xff] %v5992
          %6131 = vst [vmem:[#allocation2 + $0xf0] sm:$0xff] %v5993
          %6132 = vst [vmem:[#allocation2 + $0xf8] sm:$0xff] %v5994
          %6133 = vst [vmem:[#allocation2 + $0x100] sm:$0xff] %v5995
          %6134 = vst [vmem:[#allocation2 + $0x108] sm:$0xff] %v5996
          %6135 = vst [vmem:[#allocation2 + $0x110] sm:$0xff] %v5997
          %6136 = vst [vmem:[#allocation2 + $0x118] sm:$0xff] %v5998
          %6137 = vst [vmem:[#allocation2 + $0x120] sm:$0xff] %v5999
          %6138 = vst [vmem:[#allocation2 + $0x128] sm:$0xff] %v6000
          %6139 = vst [vmem:[#allocation2 + $0x130] sm:$0xff] %v6001
          %6140 = vst [vmem:[#allocation2 + $0x138] sm:$0xff] %v6002
          %6141 = vst [vmem:[#allocation2 + $0x140] sm:$0xff] %v6003
          %6142 = vst [vmem:[#allocation2 + $0x148] sm:$0xff] %v6004
          %6143 = vst [vmem:[#allocation2 + $0x150] sm:$0xff] %v6005
          %6144 = vst [vmem:[#allocation2 + $0x158] sm:$0xff] %v6006
          %6145 = vst [vmem:[#allocation2 + $0x160] sm:$0xff] %v6007
          %6146 = vst [vmem:[#allocation2 + $0x168] sm:$0xff] %v6008
          %6147 = vst [vmem:[#allocation2 + $0x170] sm:$0xff] %v6009
          %6148 = vst [vmem:[#allocation2 + $0x178] sm:$0xff] %v6010
          %6149 = vst [vmem:[#allocation2 + $0x180] sm:$0xff] %v6011
          %6150 = vst [vmem:[#allocation2 + $0x188] sm:$0xff] %v6012
          %6151 = vst [vmem:[#allocation2 + $0x190] sm:$0xff] %v6013
          %6152 = vst [vmem:[#allocation2 + $0x198] sm:$0xff] %v6014
          %6153 = vst [vmem:[#allocation2 + $0x1a0] sm:$0xff] %v6015
          %6154 = vst [vmem:[#allocation2 + $0x1a8] sm:$0xff] %v6016
          %6155 = vst [vmem:[#allocation2 + $0x1b0] sm:$0xff] %v6017
          %6156 = vst [vmem:[#allocation2 + $0x1b8] sm:$0xff] %v6018
          %6157 = vst [vmem:[#allocation2 + $0x1c0] sm:$0xff] %v6019
          %6158 = vst [vmem:[#allocation2 + $0x1c8] sm:$0xff] %v6020
          %6159 = vst [vmem:[#allocation2 + $0x1d0] sm:$0xff] %v6021
          %6160 = vst [vmem:[#allocation2 + $0x1d8] sm:$0xff] %v6022
          %6161 = vst [vmem:[#allocation2 + $0x1e0] sm:$0xff] %v6023
          %6162 = vst [vmem:[#allocation2 + $0x1e8] sm:$0xff] %v6024
          %6163 = vst [vmem:[#allocation2 + $0x1f0] sm:$0xff] %v6025
          %6164 = vst [vmem:[#allocation2 + $0x1f8] sm:$0xff] %v6026
        $region72: #{resnet20_forward.1} parent=35 // pred_fallthru
          _
        %p6165 = scmp.eq.s32.totalorder %s66, 21
        // Predicated region
        $region73: #{resnet20_forward.1} parent=35 // pred_check
          %p6166 = pneg %p6165
        $region74: #{resnet20_forward.1} parent=35 // pred_check_branch
          %6168 = sbr.rel (%p6166) target = $region76
        $region75: #{resnet20_forward.1} parent=35 // pred_region
          %6169 = vst [vmem:[%s11] sm:$0xff] %v5963
          %6170 = vst [vmem:[%s11 + $0x8] sm:$0xff] %v5964
          %6171 = vst [vmem:[%s11 + $0x10] sm:$0xff] %v5965
          %6172 = vst [vmem:[%s11 + $0x18] sm:$0xff] %v5966
          %6173 = vst [vmem:[%s11 + $0x20] sm:$0xff] %v5967
          %6174 = vst [vmem:[%s11 + $0x28] sm:$0xff] %v5968
          %6175 = vst [vmem:[%s11 + $0x30] sm:$0xff] %v5969
          %6176 = vst [vmem:[%s11 + $0x38] sm:$0xff] %v5970
          %6177 = vst [vmem:[%s11 + $0x40] sm:$0xff] %v5971
          %6178 = vst [vmem:[%s11 + $0x48] sm:$0xff] %v5972
          %6179 = vst [vmem:[%s11 + $0x50] sm:$0xff] %v5973
          %6180 = vst [vmem:[%s11 + $0x58] sm:$0xff] %v5974
          %6181 = vst [vmem:[%s11 + $0x60] sm:$0xff] %v5975
          %6182 = vst [vmem:[%s11 + $0x68] sm:$0xff] %v5976
          %6183 = vst [vmem:[%s11 + $0x70] sm:$0xff] %v5977
          %6184 = vst [vmem:[%s11 + $0x78] sm:$0xff] %v5978
          %6185 = vst [vmem:[%s11 + $0x80] sm:$0xff] %v5979
          %6186 = vst [vmem:[%s11 + $0x88] sm:$0xff] %v5980
          %6187 = vst [vmem:[%s11 + $0x90] sm:$0xff] %v5981
          %6188 = vst [vmem:[%s11 + $0x98] sm:$0xff] %v5982
          %6189 = vst [vmem:[%s11 + $0xa0] sm:$0xff] %v5983
          %6190 = vst [vmem:[%s11 + $0xa8] sm:$0xff] %v5984
          %6191 = vst [vmem:[%s11 + $0xb0] sm:$0xff] %v5985
          %6192 = vst [vmem:[%s11 + $0xb8] sm:$0xff] %v5986
          %6193 = vst [vmem:[%s11 + $0xc0] sm:$0xff] %v5987
          %6194 = vst [vmem:[%s11 + $0xc8] sm:$0xff] %v5988
          %6195 = vst [vmem:[%s11 + $0xd0] sm:$0xff] %v5989
          %6196 = vst [vmem:[%s11 + $0xd8] sm:$0xff] %v5990
          %6197 = vst [vmem:[%s11 + $0xe0] sm:$0xff] %v5991
          %6198 = vst [vmem:[%s11 + $0xe8] sm:$0xff] %v5992
          %6199 = vst [vmem:[%s11 + $0xf0] sm:$0xff] %v5993
          %6200 = vst [vmem:[%s11 + $0xf8] sm:$0xff] %v5994
          %6201 = vst [vmem:[%s11 + $0x100] sm:$0xff] %v5995
          %6202 = vst [vmem:[%s11 + $0x108] sm:$0xff] %v5996
          %6203 = vst [vmem:[%s11 + $0x110] sm:$0xff] %v5997
          %6204 = vst [vmem:[%s11 + $0x118] sm:$0xff] %v5998
          %6205 = vst [vmem:[%s11 + $0x120] sm:$0xff] %v5999
          %6206 = vst [vmem:[%s11 + $0x128] sm:$0xff] %v6000
          %6207 = vst [vmem:[%s11 + $0x130] sm:$0xff] %v6001
          %6208 = vst [vmem:[%s11 + $0x138] sm:$0xff] %v6002
          %6209 = vst [vmem:[%s11 + $0x140] sm:$0xff] %v6003
          %6210 = vst [vmem:[%s11 + $0x148] sm:$0xff] %v6004
          %6211 = vst [vmem:[%s11 + $0x150] sm:$0xff] %v6005
          %6212 = vst [vmem:[%s11 + $0x158] sm:$0xff] %v6006
          %6213 = vst [vmem:[%s11 + $0x160] sm:$0xff] %v6007
          %6214 = vst [vmem:[%s11 + $0x168] sm:$0xff] %v6008
          %6215 = vst [vmem:[%s11 + $0x170] sm:$0xff] %v6009
          %6216 = vst [vmem:[%s11 + $0x178] sm:$0xff] %v6010
          %6217 = vst [vmem:[%s11 + $0x180] sm:$0xff] %v6011
          %6218 = vst [vmem:[%s11 + $0x188] sm:$0xff] %v6012
          %6219 = vst [vmem:[%s11 + $0x190] sm:$0xff] %v6013
          %6220 = vst [vmem:[%s11 + $0x198] sm:$0xff] %v6014
          %6221 = vst [vmem:[%s11 + $0x1a0] sm:$0xff] %v6015
          %6222 = vst [vmem:[%s11 + $0x1a8] sm:$0xff] %v6016
          %6223 = vst [vmem:[%s11 + $0x1b0] sm:$0xff] %v6017
          %6224 = vst [vmem:[%s11 + $0x1b8] sm:$0xff] %v6018
          %6225 = vst [vmem:[%s11 + $0x1c0] sm:$0xff] %v6019
          %6226 = vst [vmem:[%s11 + $0x1c8] sm:$0xff] %v6020
          %6227 = vst [vmem:[%s11 + $0x1d0] sm:$0xff] %v6021
          %6228 = vst [vmem:[%s11 + $0x1d8] sm:$0xff] %v6022
          %6229 = vst [vmem:[%s11 + $0x1e0] sm:$0xff] %v6023
          %6230 = vst [vmem:[%s11 + $0x1e8] sm:$0xff] %v6024
          %6231 = vst [vmem:[%s11 + $0x1f0] sm:$0xff] %v6025
          %6232 = vst [vmem:[%s11 + $0x1f8] sm:$0xff] %v6026
        $region76: #{resnet20_forward.1} parent=35 // pred_fallthru
          _
        // Predicated region
        $region77: #{resnet20_forward.1} parent=35 // pred_check
          %p6233 = pneg %p180
        $region78: #{resnet20_forward.1} parent=35 // pred_check_branch
          %6235 = sbr.rel (%p6233) target = $region80
        $region79: #{resnet20_forward.1} parent=35 // pred_region
          _
        $region80: #{resnet20_forward.1} parent=35 // pred_fallthru
          _
        // Predicated region
        $region81: #{resnet20_forward.1} parent=35 // pred_check
          %p6236 = pneg %p180
        $region82: #{resnet20_forward.1} parent=35 // pred_check_branch
          %6238 = sbr.rel (%p6236) target = $region84
        $region83: #{resnet20_forward.1} parent=35 // pred_region
          _
        $region84: #{resnet20_forward.1} parent=35 // pred_fallthru
          _
      $region36: #{resnet20_forward.1} parent=5 // pred_fallthru
        _
      %p6239 = scmp.le.s32.totalorder 2, %s61
      // Predicated region
      $region85: #{resnet20_forward.1} parent=5 // pred_check
        %p6240 = pneg %p6239
      $region86: #{resnet20_forward.1} parent=5 // pred_check_branch
        %6242 = sbr.rel (%p6240) target = $region88
      $region87: #{resnet20_forward.1} parent=5 // pred_region
        %s6243 = ssub.s32 %s61, 2
      $region88: #{resnet20_forward.1} parent=5 // pred_fallthru
        _
    $region6: #{resnet20_forward.1} parent=1 // loop_footer
      %s65 = sadd.s32 1, %s61
    $region7: #{resnet20_forward.1} parent=1 // loop_footer_branch
      %60 = sbr.rel target = $region3
    $region8: #{resnet20_forward.1} parent=1 // loop_exit
      _
    %6244 = vsyncpa [#allocation14], 1
    %s6245 = scalar_lea.sflag [#allocation14], 1
    %6246 = vsyncpa %s6245, 1
    %6247 = vsyncpa [#allocation16], 1
    %s6248 = scalar_lea.sflag [#allocation16], 1
    %6249 = vsyncpa %s6248, 1

</llo_original>
